<compile_context>
chip_gen: v5e
topology: v5e:2x2
jax: 0.10.0
libtpu: 0.0.40
codegen_flags: <defaults>
</compile_context>

<pallas_src>
import jax
import jax.numpy as jnp
from jax.experimental import pallas as pl
from jax.experimental.pallas import tpu as pltpu

IN_DIM = 784
OUT_DIM = 10
HEAD_PAD = 128  # padded head width -> lane-dense (unmasked) logits stores


def _round_up(n, m):
    return -(-n // m) * m


def mlp_kernel(slope_ref, x_ref, w_ref, wh_ref, bh_ref, logits_ref, rep_ref):
    slope = slope_ref[0, 0]                      # f32 scalar from SMEM
    act = x_ref[...].astype(jnp.float32)         # (tile_b, 784)

    num_layers = w_ref.shape[0]                  # static
    # Fully unrolled hidden layers; weights are VMEM-resident bf16.
    for l in range(num_layers):
        h = jnp.dot(act.astype(jnp.bfloat16), w_ref[l],
                    preferred_element_type=jnp.float32)
        act = jnp.where(h >= 0, h, slope * h)    # leaky_relu

    rep_ref[...] = act.astype(rep_ref.dtype)

    logits = jnp.dot(act.astype(jnp.bfloat16), wh_ref[...],
                     preferred_element_type=jnp.float32)
    logits_ref[...] = (logits + bh_ref[...]).astype(logits_ref.dtype)


def mlp_forward(x, slope, w_stack, wh, bh, *, max_batch_tile=512):
    """x: (B, 784) f32, slope: scalar,
    w_stack: (L, 784, 784) bf16 (in,out layout), wh: (784, 10) bf16,
    bh: (10,) f32.  Returns (logits (B,10) f32, rep (B,784) f32)."""
    num_layers = w_stack.shape[0]
    batch = x.shape[0]

    # Batch tile: whole (sublane-rounded) batch if small, else a fixed tile.
    if batch <= max_batch_tile:
        tile_b = _round_up(max(batch, 8), 8)
        padded_b = tile_b
    else:
        tile_b = max_batch_tile
        padded_b = _round_up(batch, tile_b)
    num_tiles = padded_b // tile_b

    x_p = x if padded_b == batch else (
        jnp.zeros((padded_b, IN_DIM), x.dtype).at[:batch].set(x))

    slope_arr = jnp.asarray(slope, jnp.float32).reshape(1, 1)

    # Zero-pad head weight/bias to 128 output lanes (lane-dense logits store).
    wh_p = jnp.zeros((IN_DIM, HEAD_PAD), wh.dtype).at[:, :OUT_DIM].set(wh)
    bh_p = jnp.zeros((1, HEAD_PAD), jnp.float32).at[0, :OUT_DIM].set(
        bh.astype(jnp.float32))

    grid_spec = pltpu.PrefetchScalarGridSpec(
        num_scalar_prefetch=0,
        grid=(num_tiles,),
        in_specs=[
            pl.BlockSpec(memory_space=pltpu.MemorySpace.SMEM),               # slope
            pl.BlockSpec((tile_b, IN_DIM), lambda b: (b, 0)),                # x tile
            # Constant index maps -> weights DMA'd once, VMEM-resident.
            pl.BlockSpec((num_layers, IN_DIM, IN_DIM), lambda b: (0, 0, 0)),  # W stack
            pl.BlockSpec((IN_DIM, HEAD_PAD), lambda b: (0, 0)),              # head W (padded)
            pl.BlockSpec((1, HEAD_PAD), lambda b: (0, 0)),                   # head b (padded)
        ],
        out_specs=[
            pl.BlockSpec((tile_b, HEAD_PAD), lambda b: (b, 0)),              # logits (padded)
            pl.BlockSpec((tile_b, IN_DIM), lambda b: (b, 0)),                # rep
        ],
    )

    logits_p, rep_p = pl.pallas_call(
        mlp_kernel,
        grid_spec=grid_spec,
        out_shape=(
            jax.ShapeDtypeStruct((padded_b, HEAD_PAD), jnp.float32),
            jax.ShapeDtypeStruct((padded_b, IN_DIM), jnp.float32),
        ),
        compiler_params=pltpu.CompilerParams(
            dimension_semantics=("parallel",),          # shard batch tiles across TCs (v7x)
            vmem_limit_bytes=48 * 1024 * 1024,          # safe on v7x (64 MiB) and v5e/v6e
        ),
    )(slope_arr, x_p, w_stack, wh_p, bh_p)

    return logits_p[:batch, :OUT_DIM], rep_p[:batch]


def mlp_reference(x, slope, w_stack_bf16, wh_bf16, bh):
    """Pure-JAX reference in f32 using the same bf16-valued weights."""
    act = x.astype(jnp.float32)
    for l in range(w_stack_bf16.shape[0]):
        h = jnp.dot(act, w_stack_bf16[l].astype(jnp.float32),
                    preferred_element_type=jnp.float32)
        act = jnp.where(h >= 0, h, slope * h)
    logits = jnp.dot(act, wh_bf16.astype(jnp.float32),
                     preferred_element_type=jnp.float32) + bh
    return logits, act


if __name__ == "__main__":
    num_layers = 3
    batch = 8
    slope = 0.1

    key = jax.random.PRNGKey(0)
    kx, kw, kwh, kbh = jax.random.split(key, 4)

    # Deterministic parameter init (PyTorch-style uniform ±1/sqrt(fan_in)).
    bound = 1.0 / jnp.sqrt(jnp.float32(IN_DIM))
    x = jax.random.normal(kx, (batch, IN_DIM), dtype=jnp.float32)
    # Stored already transposed to (in, out); bf16 in HBM for halved weight DMA.
    w_stack = jax.random.uniform(kw, (num_layers, IN_DIM, IN_DIM),
                                 dtype=jnp.float32, minval=-bound,
                                 maxval=bound).astype(jnp.bfloat16)
    wh = jax.random.uniform(kwh, (IN_DIM, OUT_DIM),
                            dtype=jnp.float32, minval=-bound,
                            maxval=bound).astype(jnp.bfloat16)
    bh = jax.random.uniform(kbh, (OUT_DIM,),
                            dtype=jnp.float32, minval=-bound, maxval=bound)

    logits, rep = mlp_forward(x, slope, w_stack, wh, bh)
    jax.block_until_ready((logits, rep))

    ref_logits, ref_rep = mlp_reference(x, slope, w_stack, wh, bh)
    assert logits.shape == (batch, OUT_DIM) and rep.shape == (batch, IN_DIM)
    # bf16 matmul inputs vs f32 reference of the same bf16 weights.
    assert jnp.allclose(logits, ref_logits, rtol=2e-2, atol=2e-2)
    assert jnp.allclose(rep, ref_rep, rtol=2e-2, atol=2e-2)

    print("KERNEL_OK")
</pallas_src>

<mosaic_0001>
module attributes {stable_mosaic.version = 11 : i64} {
  func.func @mlp_kernel(%arg0: i32, %arg1: memref<1x1xf32, #tpu.memory_space<smem>>, %arg2: memref<8x784xf32, #tpu.memory_space<vmem>>, %arg3: memref<3x784x784xbf16, #tpu.memory_space<vmem>>, %arg4: memref<784x128xbf16, #tpu.memory_space<vmem>>, %arg5: memref<1x128xf32, #tpu.memory_space<vmem>>, %arg6: memref<8x128xf32, #tpu.memory_space<vmem>>, %arg7: memref<8x784xf32, #tpu.memory_space<vmem>>) attributes {dimension_semantics = [#tpu.dimension_semantics<parallel>], iteration_bounds = array<i64: 1>, scalar_prefetch = 0 : i64, scratch_operands = 0 : i64, tpu.core_type = #tpu.core_type<tc>, window_params = [{transform_indices = @transform_0, window_bounds = array<i64: 1, 1>}, {transform_indices = @transform_1, window_bounds = array<i64: 8, 784>}, {pipeline_mode = #tpu.pipeline_mode<synchronous>, transform_indices = @transform_2, window_bounds = array<i64: 3, 784, 784>}, {pipeline_mode = #tpu.pipeline_mode<synchronous>, transform_indices = @transform_3, window_bounds = array<i64: 784, 128>}, {pipeline_mode = #tpu.pipeline_mode<synchronous>, transform_indices = @transform_4, window_bounds = array<i64: 1, 128>}, {transform_indices = @transform_5, window_bounds = array<i64: 8, 128>}, {transform_indices = @transform_6, window_bounds = array<i64: 8, 784>}]} {
    %c0 = arith.constant 0 : index
    %c0_0 = arith.constant 0 : index
    %0 = memref.load %arg1[%c0, %c0_0] : memref<1x1xf32, #tpu.memory_space<smem>>
    %c0_1 = arith.constant 0 : index
    %c0_2 = arith.constant 0 : index
    %1 = vector.load %arg2[%c0_1, %c0_2] : memref<8x784xf32, #tpu.memory_space<vmem>>, vector<8x784xf32>
    %2 = arith.truncf %1 : vector<8x784xf32> to vector<8x784xbf16>
    %c0_3 = arith.constant 0 : index
    %c0_4 = arith.constant 0 : index
    %c0_5 = arith.constant 0 : index
    %3 = vector.load %arg3[%c0_3, %c0_4, %c0_5] : memref<3x784x784xbf16, #tpu.memory_space<vmem>>, vector<1x784x784xbf16>
    %4 = vector.shape_cast %3 : vector<1x784x784xbf16> to vector<784x784xbf16>
    %cst = arith.constant dense<0.000000e+00> : vector<8x784xf32>
    %5 = tpu.matmul %2, %4, %cst {dimension_numbers = #tpu.dot_dimension_numbers<[1], [0], [0], [1], [0, 0, 1, 1], [], []>} : vector<8x784xbf16>, vector<784x784xbf16>, vector<8x784xf32> -> vector<8x784xf32>
    %cst_6 = arith.constant 0.000000e+00 : f32
    %6 = vector.broadcast %cst_6 : f32 to vector<8x784xf32>
    %7 = arith.cmpf oge, %5, %6 : vector<8x784xf32>
    %8 = vector.broadcast %0 : f32 to vector<8x784xf32>
    %9 = arith.mulf %8, %5 : vector<8x784xf32>
    %10 = arith.select %7, %5, %9 : vector<8x784xi1>, vector<8x784xf32>
    %11 = arith.truncf %10 : vector<8x784xf32> to vector<8x784xbf16>
    %c1 = arith.constant 1 : index
    %c0_7 = arith.constant 0 : index
    %c0_8 = arith.constant 0 : index
    %12 = vector.load %arg3[%c1, %c0_7, %c0_8] : memref<3x784x784xbf16, #tpu.memory_space<vmem>>, vector<1x784x784xbf16>
    %13 = vector.shape_cast %12 : vector<1x784x784xbf16> to vector<784x784xbf16>
    %cst_9 = arith.constant dense<0.000000e+00> : vector<8x784xf32>
    %14 = tpu.matmul %11, %13, %cst_9 {dimension_numbers = #tpu.dot_dimension_numbers<[1], [0], [0], [1], [0, 0, 1, 1], [], []>} : vector<8x784xbf16>, vector<784x784xbf16>, vector<8x784xf32> -> vector<8x784xf32>
    %cst_10 = arith.constant 0.000000e+00 : f32
    %15 = vector.broadcast %cst_10 : f32 to vector<8x784xf32>
    %16 = arith.cmpf oge, %14, %15 : vector<8x784xf32>
    %17 = vector.broadcast %0 : f32 to vector<8x784xf32>
    %18 = arith.mulf %17, %14 : vector<8x784xf32>
    %19 = arith.select %16, %14, %18 : vector<8x784xi1>, vector<8x784xf32>
    %20 = arith.truncf %19 : vector<8x784xf32> to vector<8x784xbf16>
    %c2 = arith.constant 2 : index
    %c0_11 = arith.constant 0 : index
    %c0_12 = arith.constant 0 : index
    %21 = vector.load %arg3[%c2, %c0_11, %c0_12] : memref<3x784x784xbf16, #tpu.memory_space<vmem>>, vector<1x784x784xbf16>
    %22 = vector.shape_cast %21 : vector<1x784x784xbf16> to vector<784x784xbf16>
    %cst_13 = arith.constant dense<0.000000e+00> : vector<8x784xf32>
    %23 = tpu.matmul %20, %22, %cst_13 {dimension_numbers = #tpu.dot_dimension_numbers<[1], [0], [0], [1], [0, 0, 1, 1], [], []>} : vector<8x784xbf16>, vector<784x784xbf16>, vector<8x784xf32> -> vector<8x784xf32>
    %cst_14 = arith.constant 0.000000e+00 : f32
    %24 = vector.broadcast %cst_14 : f32 to vector<8x784xf32>
    %25 = arith.cmpf oge, %23, %24 : vector<8x784xf32>
    %26 = vector.broadcast %0 : f32 to vector<8x784xf32>
    %27 = arith.mulf %26, %23 : vector<8x784xf32>
    %28 = arith.select %25, %23, %27 : vector<8x784xi1>, vector<8x784xf32>
    %c0_15 = arith.constant 0 : index
    %c0_16 = arith.constant 0 : index
    %29 = vector.load %arg7[%c0_15, %c0_16] : memref<8x784xf32, #tpu.memory_space<vmem>>, vector<8x784xf32>
    tpu.vector_store %arg7[%c0_15, %c0_16], %28 {strides = array<i32>} : memref<8x784xf32, #tpu.memory_space<vmem>>, vector<8x784xf32>,
    %30 = arith.truncf %28 : vector<8x784xf32> to vector<8x784xbf16>
    %c0_17 = arith.constant 0 : index
    %c0_18 = arith.constant 0 : index
    %31 = vector.load %arg4[%c0_17, %c0_18] : memref<784x128xbf16, #tpu.memory_space<vmem>>, vector<784x128xbf16>
    %cst_19 = arith.constant dense<0.000000e+00> : vector<8x128xf32>
    %32 = tpu.matmul %30, %31, %cst_19 {dimension_numbers = #tpu.dot_dimension_numbers<[1], [0], [0], [1], [0, 0, 1, 1], [], []>} : vector<8x784xbf16>, vector<784x128xbf16>, vector<8x128xf32> -> vector<8x128xf32>
    %c0_20 = arith.constant 0 : index
    %c0_21 = arith.constant 0 : index
    %33 = vector.load %arg5[%c0_20, %c0_21] : memref<1x128xf32, #tpu.memory_space<vmem>>, vector<1x128xf32>
    %34 = vector.broadcast %33 : vector<1x128xf32> to vector<8x128xf32>
    %35 = arith.addf %32, %34 : vector<8x128xf32>
    %c0_22 = arith.constant 0 : index
    %c0_23 = arith.constant 0 : index
    %36 = vector.load %arg6[%c0_22, %c0_23] : memref<8x128xf32, #tpu.memory_space<vmem>>, vector<8x128xf32>
    tpu.vector_store %arg6[%c0_22, %c0_23], %35 {strides = array<i32>} : memref<8x128xf32, #tpu.memory_space<vmem>>, vector<8x128xf32>,
    return
  }
  func.func @transform_0(%arg0: i32) -> (i32, i32) {
    %c0_i32 = arith.constant 0 : i32
    %c0_i32_0 = arith.constant 0 : i32
    %c0_i32_1 = arith.constant 0 : i32
    return %c0_i32, %c0_i32_0 : i32, i32
  }
  func.func @transform_1(%arg0: i32) -> (i32, i32) {
    %c0_i32 = arith.constant 0 : i32
    %c0_i32_0 = arith.constant 0 : i32
    return %arg0, %c0_i32 : i32, i32
  }
  func.func @transform_2(%arg0: i32) -> (i32, i32, i32) {
    %c0_i32 = arith.constant 0 : i32
    %c0_i32_0 = arith.constant 0 : i32
    %c0_i32_1 = arith.constant 0 : i32
    %c0_i32_2 = arith.constant 0 : i32
    return %c0_i32, %c0_i32_0, %c0_i32_1 : i32, i32, i32
  }
  func.func @transform_3(%arg0: i32) -> (i32, i32) {
    %c0_i32 = arith.constant 0 : i32
    %c0_i32_0 = arith.constant 0 : i32
    %c0_i32_1 = arith.constant 0 : i32
    return %c0_i32, %c0_i32_0 : i32, i32
  }
  func.func @transform_4(%arg0: i32) -> (i32, i32) {
    %c0_i32 = arith.constant 0 : i32
    %c0_i32_0 = arith.constant 0 : i32
    %c0_i32_1 = arith.constant 0 : i32
    return %c0_i32, %c0_i32_0 : i32, i32
  }
  func.func @transform_5(%arg0: i32) -> (i32, i32) {
    %c0_i32 = arith.constant 0 : i32
    %c0_i32_0 = arith.constant 0 : i32
    return %arg0, %c0_i32 : i32, i32
  }
  func.func @transform_6(%arg0: i32) -> (i32, i32) {
    %c0_i32 = arith.constant 0 : i32
    %c0_i32_0 = arith.constant 0 : i32
    return %arg0, %c0_i32 : i32, i32
  }
}

</mosaic_0001>

<llo_original>
// kernel: tpu_custom_call.1
$region0: #{tpu_custom_call.1}
  #allocation0 [shape = 'u32[]', space=smem, size = 0x4, offset = 0x4, fixed_abs, tag = 'smem constant byte address 0x4 - core index']
  #allocation1 [shape = 'u32[72,128]{1,0:T(1,128)}', space=vmem, size = 0x9000, scoped, tag = 'internal scratch']
  #allocation2 [shape = 'f32[1,1]{1,0:T(1,128)S(6)}', space=smem, size = 0x200, scoped, tag = 'scoped memory for tpu_custom_call.1']
  %s0 = inlined_call_operand.<no memory space> [shape: f32[1,1], index: 0, kind: input, shape index: {}]
  %s1 = inlined_call_operand.hbm [shape: f32[8,784], index: 1, kind: input, shape index: {}]
  %s2 = inlined_call_operand.hbm [shape: bf16[3,784,784], index: 2, kind: input, shape index: {}]
  %s3 = inlined_call_operand.hbm [shape: bf16[784,128], index: 3, kind: input, shape index: {}]
  %s4 = inlined_call_operand.hbm [shape: f32[1,128], index: 4, kind: input, shape index: {}]
  %s5 = inlined_call_operand.hbm [shape: f32[8,128], index: 5, kind: output, shape index: {0}]
  %s6 = inlined_call_operand.hbm [shape: f32[8,784], index: 6, kind: output, shape index: {1}]
  %7 = xla_tuple %s5, %s6
  %s8 = sld [smem:[#allocation0]]
  $region54: #{tpu_custom_call.1} parent=0
    _
  %s10 = ssub.s32 1, %s8
  %s11 = scalar_select 0, %s10, %s8
  %12 = sst [smem:[#allocation2]] %s0
  $region1: #{tpu_custom_call.1} parent=0
    #allocation3 [shape = 'u8[28672]{0}', space=vmem, size = 0x7000, scoped, tag = 'input window, operand 1, single buffered']
    #allocation4 [shape = 's32[1]{0}', space=sflag, size = 0x4, scoped, tag = 'scoped memory for tpu_custom_call.1']
    #allocation5 [shape = 's32[1]{0}', space=sflag, size = 0x4, scoped, tag = 'scoped memory for tpu_custom_call.1']
    #allocation6 [shape = 'u8[4214784]{0}', space=vmem, size = 0x405000, scoped, tag = 'input window, operand 2, single buffered']
    #allocation7 [shape = 's32[1]{0}', space=sflag, size = 0x4, scoped, tag = 'scoped memory for tpu_custom_call.1']
    #allocation8 [shape = 'u8[200704]{0}', space=vmem, size = 0x31000, scoped, tag = 'input window, operand 3, single buffered']
    #allocation9 [shape = 'u8[512]{0}', space=vmem, size = 0x400, scoped, tag = 'input window, operand 4, single buffered']
    #allocation10 [shape = 's32[1]{0}', space=sflag, size = 0x4, scoped, tag = 'scoped memory for tpu_custom_call.1']
    #allocation11 [shape = 'u8[4096]{0}', space=vmem, size = 0x1000, scoped, tag = 'output window, operand 0, single buffered']
    #allocation12 [shape = 'u8[28672]{0}', space=vmem, size = 0x7000, scoped, tag = 'output window, operand 1, single buffered']
    #allocation13 [shape = 's32[1]{0}', space=sflag, size = 0x4, scoped, tag = 'scoped memory for tpu_custom_call.1']
    %13 = vsyncpa [#allocation4], 0
    %14 = vsyncpa [#allocation7], 0
    %15 = vsyncpa [#allocation10], 0
    %16 = vsyncpa [#allocation5], 0
    %17 = vsyncpa [#allocation13], 0
    // Predicated region
    $region2: #{tpu_custom_call.1} parent=1 // pred_check
      _
    $region3: #{tpu_custom_call.1} parent=1 // pred_check_branch
      %19 = sbr.rel (0) target = $region5
    $region4: #{tpu_custom_call.1} parent=1 // pred_region
      _
    $region5: #{tpu_custom_call.1} parent=1 // pred_fallthru
      _
    // Predicated region
    $region6: #{tpu_custom_call.1} parent=1 // pred_check
      _
    $region7: #{tpu_custom_call.1} parent=1 // pred_check_branch
      %21 = sbr.rel (0) target = $region9
    $region8: #{tpu_custom_call.1} parent=1 // pred_region
      %23 = vsyncadd [#allocation4], 0
      %s25 = sshll.u32 %s1, 4
      %s26 = int_to_ptr.hbm [resolvable:$true] %s25
      %s27 = sshll.u32 [#allocation3], 4
      %s28 = int_to_ptr.vmem [resolvable:$true] %s27
      %30 = dma.hbm_to_vmem [thread:$0]  %s26, 896, %s28, [#allocation4]
    $region9: #{tpu_custom_call.1} parent=1 // pred_fallthru
      _
    // Predicated region
    $region10: #{tpu_custom_call.1} parent=1 // pred_check
      _
    $region11: #{tpu_custom_call.1} parent=1 // pred_check_branch
      %32 = sbr.rel (0) target = $region13
    $region12: #{tpu_custom_call.1} parent=1 // pred_region
      %34 = vsyncadd [#allocation7], 0
      %s35 = sshll.u32 %s2, 4
      %s36 = int_to_ptr.hbm [resolvable:$true] %s35
      %s37 = sshll.u32 [#allocation6], 4
      %s38 = int_to_ptr.vmem [resolvable:$true] %s37
      %43 = dma.hbm_to_vmem [thread:$0]  %s36, 131712, %s38, [#allocation7], 448, 448, 28
    $region13: #{tpu_custom_call.1} parent=1 // pred_fallthru
      _
    // Predicated region
    $region14: #{tpu_custom_call.1} parent=1 // pred_check
      _
    $region15: #{tpu_custom_call.1} parent=1 // pred_check_branch
      %45 = sbr.rel (0) target = $region17
    $region16: #{tpu_custom_call.1} parent=1 // pred_region
      %47 = vsyncadd [#allocation7], 0
      %s48 = sshll.u32 %s3, 4
      %s49 = int_to_ptr.hbm [resolvable:$true] %s48
      %s50 = sshll.u32 [#allocation8], 4
      %s51 = int_to_ptr.vmem [resolvable:$true] %s50
      %56 = dma.hbm_to_vmem [thread:$0]  %s49, 6272, %s51, [#allocation7], 64, 64, 4
    $region17: #{tpu_custom_call.1} parent=1 // pred_fallthru
      _
    // Predicated region
    $region18: #{tpu_custom_call.1} parent=1 // pred_check
      _
    $region19: #{tpu_custom_call.1} parent=1 // pred_check_branch
      %58 = sbr.rel (0) target = $region21
    $region20: #{tpu_custom_call.1} parent=1 // pred_region
      %60 = vsyncadd [#allocation10], 0
      %s62 = sshll.u32 %s4, 4
      %s63 = int_to_ptr.hbm [resolvable:$true] %s62
      %s64 = sshll.u32 [#allocation9], 4
      %s65 = int_to_ptr.vmem [resolvable:$true] %s64
      %67 = dma.hbm_to_vmem [thread:$0]  %s63, 16, %s65, [#allocation10]
    $region21: #{tpu_custom_call.1} parent=1 // pred_fallthru
      _
    // Predicated region
    $region22: #{tpu_custom_call.1} parent=1 // pred_check
      _
    $region23: #{tpu_custom_call.1} parent=1 // pred_check_branch
      %69 = sbr.rel (0) target = $region25
    $region24: #{tpu_custom_call.1} parent=1 // pred_region
      %71 = dma.done [#allocation4], 896
    $region25: #{tpu_custom_call.1} parent=1 // pred_fallthru
      _
    // Predicated region
    $region26: #{tpu_custom_call.1} parent=1 // pred_check
      _
    $region27: #{tpu_custom_call.1} parent=1 // pred_check_branch
      %73 = sbr.rel (0) target = $region29
    $region28: #{tpu_custom_call.1} parent=1 // pred_region
      %75 = dma.done [#allocation7], 131712
    $region29: #{tpu_custom_call.1} parent=1 // pred_fallthru
      _
    // Predicated region
    $region30: #{tpu_custom_call.1} parent=1 // pred_check
      _
    $region31: #{tpu_custom_call.1} parent=1 // pred_check_branch
      %77 = sbr.rel (0) target = $region33
    $region32: #{tpu_custom_call.1} parent=1 // pred_region
      %79 = dma.done [#allocation7], 6272
    $region33: #{tpu_custom_call.1} parent=1 // pred_fallthru
      _
    // Predicated region
    $region34: #{tpu_custom_call.1} parent=1 // pred_check
      _
    $region35: #{tpu_custom_call.1} parent=1 // pred_check_branch
      %81 = sbr.rel (0) target = $region37
    $region36: #{tpu_custom_call.1} parent=1 // pred_region
      %83 = dma.done [#allocation10], 16
    $region37: #{tpu_custom_call.1} parent=1 // pred_fallthru
      _
    %s85 = sld [smem:[#allocation2]]
    %v86 = vld [vmem:[#allocation3] sm:$0xff]
    %v87 = vld [vmem:[#allocation3 + $0x8] sm:$0xff]
    %v88 = vld [vmem:[#allocation3 + $0x10] sm:$0xff]
    %v89 = vld [vmem:[#allocation3 + $0x18] sm:$0xff]
    %v90 = vld [vmem:[#allocation3 + $0x20] sm:$0xff]
    %v91 = vld [vmem:[#allocation3 + $0x28] sm:$0xff]
    %v92 = vld [vmem:[#allocation3 + $0x30] sm:$0xff]
    %v93 = vpack.c.bf16 %v86, %v86
    %v94 = vpack.c.bf16 %v87, %v87
    %v95 = vpack.c.bf16 %v88, %v88
    %v96 = vpack.c.bf16 %v89, %v89
    %v97 = vpack.c.bf16 %v90, %v90
    %v98 = vpack.c.bf16 %v91, %v91
    %v99 = vpack.c.bf16 %v92, %v92
    %v100 = vld [vmem:[#allocation6] sm:$0xff]
    %v101 = vld [vmem:[#allocation6 + $0x8] sm:$0xff]
    %v102 = vld [vmem:[#allocation6 + $0x10] sm:$0xff]
    %v103 = vld [vmem:[#allocation6 + $0x18] sm:$0xf]
    %v104 = vld [vmem:[#allocation6 + $0x1c] sm:$0xff]
    %v105 = vld [vmem:[#allocation6 + $0x24] sm:$0xff]
    %v106 = vld [vmem:[#allocation6 + $0x2c] sm:$0xff]
    %v107 = vld [vmem:[#allocation6 + $0x34] sm:$0xf]
    %v108 = vld [vmem:[#allocation6 + $0x38] sm:$0xff]
    %v109 = vld [vmem:[#allocation6 + $0x40] sm:$0xff]
    %v110 = vld [vmem:[#allocation6 + $0x48] sm:$0xff]
    %v111 = vld [vmem:[#allocation6 + $0x50] sm:$0xf]
    %v112 = vld [vmem:[#allocation6 + $0x54] sm:$0xff]
    %v113 = vld [vmem:[#allocation6 + $0x5c] sm:$0xff]
    %v114 = vld [vmem:[#allocation6 + $0x64] sm:$0xff]
    %v115 = vld [vmem:[#allocation6 + $0x6c] sm:$0xf]
    %v116 = vld [vmem:[#allocation6 + $0x70] sm:$0xff]
    %v117 = vld [vmem:[#allocation6 + $0x78] sm:$0xff]
    %v118 = vld [vmem:[#allocation6 + $0x80] sm:$0xff]
    %v119 = vld [vmem:[#allocation6 + $0x88] sm:$0xf]
    %v120 = vld [vmem:[#allocation6 + $0x8c] sm:$0xff]
    %v121 = vld [vmem:[#allocation6 + $0x94] sm:$0xff]
    %v122 = vld [vmem:[#allocation6 + $0x9c] sm:$0xff]
    %v123 = vld [vmem:[#allocation6 + $0xa4] sm:$0xf]
    %v124 = vld [vmem:[#allocation6 + $0xa8] sm:$0xff]
    %v125 = vld [vmem:[#allocation6 + $0xb0] sm:$0xff]
    %v126 = vld [vmem:[#allocation6 + $0xb8] sm:$0xff]
    %v127 = vld [vmem:[#allocation6 + $0xc0] sm:$0xf]
    %v128 = vld [vmem:[#allocation6 + $0xc4] sm:$0xff]
    %v129 = vld [vmem:[#allocation6 + $0xcc] sm:$0xff]
    %v130 = vld [vmem:[#allocation6 + $0xd4] sm:$0xff]
    %v131 = vld [vmem:[#allocation6 + $0xdc] sm:$0xf]
    %v132 = vld [vmem:[#allocation6 + $0xe0] sm:$0xff]
    %v133 = vld [vmem:[#allocation6 + $0xe8] sm:$0xff]
    %v134 = vld [vmem:[#allocation6 + $0xf0] sm:$0xff]
    %v135 = vld [vmem:[#allocation6 + $0xf8] sm:$0xf]
    %v136 = vld [vmem:[#allocation6 + $0xfc] sm:$0xff]
    %v137 = vld [vmem:[#allocation6 + $0x104] sm:$0xff]
    %v138 = vld [vmem:[#allocation6 + $0x10c] sm:$0xff]
    %v139 = vld [vmem:[#allocation6 + $0x114] sm:$0xf]
    %v140 = vld [vmem:[#allocation6 + $0x118] sm:$0xff]
    %v141 = vld [vmem:[#allocation6 + $0x120] sm:$0xff]
    %v142 = vld [vmem:[#allocation6 + $0x128] sm:$0xff]
    %v143 = vld [vmem:[#allocation6 + $0x130] sm:$0xf]
    %v144 = vld [vmem:[#allocation6 + $0x134] sm:$0xff]
    %v145 = vld [vmem:[#allocation6 + $0x13c] sm:$0xff]
    %v146 = vld [vmem:[#allocation6 + $0x144] sm:$0xff]
    %v147 = vld [vmem:[#allocation6 + $0x14c] sm:$0xf]
    %v148 = vld [vmem:[#allocation6 + $0x150] sm:$0xff]
    %v149 = vld [vmem:[#allocation6 + $0x158] sm:$0xff]
    %v150 = vld [vmem:[#allocation6 + $0x160] sm:$0xff]
    %v151 = vld [vmem:[#allocation6 + $0x168] sm:$0xf]
    %v152 = vld [vmem:[#allocation6 + $0x16c] sm:$0xff]
    %v153 = vld [vmem:[#allocation6 + $0x174] sm:$0xff]
    %v154 = vld [vmem:[#allocation6 + $0x17c] sm:$0xff]
    %v155 = vld [vmem:[#allocation6 + $0x184] sm:$0xf]
    %v156 = vld [vmem:[#allocation6 + $0x188] sm:$0xff]
    %v157 = vld [vmem:[#allocation6 + $0x190] sm:$0xff]
    %v158 = vld [vmem:[#allocation6 + $0x198] sm:$0xff]
    %v159 = vld [vmem:[#allocation6 + $0x1a0] sm:$0xf]
    %v160 = vld [vmem:[#allocation6 + $0x1a4] sm:$0xff]
    %v161 = vld [vmem:[#allocation6 + $0x1ac] sm:$0xff]
    %v162 = vld [vmem:[#allocation6 + $0x1b4] sm:$0xff]
    %v163 = vld [vmem:[#allocation6 + $0x1bc] sm:$0xf]
    %v164 = vld [vmem:[#allocation6 + $0x1c0] sm:$0xff]
    %v165 = vld [vmem:[#allocation6 + $0x1c8] sm:$0xff]
    %v166 = vld [vmem:[#allocation6 + $0x1d0] sm:$0xff]
    %v167 = vld [vmem:[#allocation6 + $0x1d8] sm:$0xf]
    %v168 = vld [vmem:[#allocation6 + $0x1dc] sm:$0xff]
    %v169 = vld [vmem:[#allocation6 + $0x1e4] sm:$0xff]
    %v170 = vld [vmem:[#allocation6 + $0x1ec] sm:$0xff]
    %v171 = vld [vmem:[#allocation6 + $0x1f4] sm:$0xf]
    %v172 = vld [vmem:[#allocation6 + $0x1f8] sm:$0xff]
    %v173 = vld [vmem:[#allocation6 + $0x200] sm:$0xff]
    %v174 = vld [vmem:[#allocation6 + $0x208] sm:$0xff]
    %v175 = vld [vmem:[#allocation6 + $0x210] sm:$0xf]
    %v176 = vld [vmem:[#allocation6 + $0x214] sm:$0xff]
    %v177 = vld [vmem:[#allocation6 + $0x21c] sm:$0xff]
    %v178 = vld [vmem:[#allocation6 + $0x224] sm:$0xff]
    %v179 = vld [vmem:[#allocation6 + $0x22c] sm:$0xf]
    %v180 = vld [vmem:[#allocation6 + $0x230] sm:$0xff]
    %v181 = vld [vmem:[#allocation6 + $0x238] sm:$0xff]
    %v182 = vld [vmem:[#allocation6 + $0x240] sm:$0xff]
    %v183 = vld [vmem:[#allocation6 + $0x248] sm:$0xf]
    %v184 = vld [vmem:[#allocation6 + $0x24c] sm:$0xff]
    %v185 = vld [vmem:[#allocation6 + $0x254] sm:$0xff]
    %v186 = vld [vmem:[#allocation6 + $0x25c] sm:$0xff]
    %v187 = vld [vmem:[#allocation6 + $0x264] sm:$0xf]
    %v188 = vld [vmem:[#allocation6 + $0x268] sm:$0xff]
    %v189 = vld [vmem:[#allocation6 + $0x270] sm:$0xff]
    %v190 = vld [vmem:[#allocation6 + $0x278] sm:$0xff]
    %v191 = vld [vmem:[#allocation6 + $0x280] sm:$0xf]
    %v192 = vld [vmem:[#allocation6 + $0x284] sm:$0xff]
    %v193 = vld [vmem:[#allocation6 + $0x28c] sm:$0xff]
    %v194 = vld [vmem:[#allocation6 + $0x294] sm:$0xff]
    %v195 = vld [vmem:[#allocation6 + $0x29c] sm:$0xf]
    %v196 = vld [vmem:[#allocation6 + $0x2a0] sm:$0xff]
    %v197 = vld [vmem:[#allocation6 + $0x2a8] sm:$0xff]
    %v198 = vld [vmem:[#allocation6 + $0x2b0] sm:$0xff]
    %v199 = vld [vmem:[#allocation6 + $0x2b8] sm:$0xf]
    %v200 = vld [vmem:[#allocation6 + $0x2bc] sm:$0xff]
    %v201 = vld [vmem:[#allocation6 + $0x2c4] sm:$0xff]
    %v202 = vld [vmem:[#allocation6 + $0x2cc] sm:$0xff]
    %v203 = vld [vmem:[#allocation6 + $0x2d4] sm:$0xf]
    %v204 = vld [vmem:[#allocation6 + $0x2d8] sm:$0xff]
    %v205 = vld [vmem:[#allocation6 + $0x2e0] sm:$0xff]
    %v206 = vld [vmem:[#allocation6 + $0x2e8] sm:$0xff]
    %v207 = vld [vmem:[#allocation6 + $0x2f0] sm:$0xf]
    %v208 = vld [vmem:[#allocation6 + $0x2f4] sm:$0xff]
    %v209 = vld [vmem:[#allocation6 + $0x2fc] sm:$0xff]
    %v210 = vld [vmem:[#allocation6 + $0x304] sm:$0xff]
    %v211 = vld [vmem:[#allocation6 + $0x30c] sm:$0xf]
    %v212 = vld [vmem:[#allocation6 + $0x310] sm:$0xff]
    %v213 = vld [vmem:[#allocation6 + $0x318] sm:$0xff]
    %v214 = vld [vmem:[#allocation6 + $0x320] sm:$0xff]
    %v215 = vld [vmem:[#allocation6 + $0x328] sm:$0xf]
    %v216 = vld [vmem:[#allocation6 + $0x32c] sm:$0xff]
    %v217 = vld [vmem:[#allocation6 + $0x334] sm:$0xff]
    %v218 = vld [vmem:[#allocation6 + $0x33c] sm:$0xff]
    %v219 = vld [vmem:[#allocation6 + $0x344] sm:$0xf]
    %v220 = vld [vmem:[#allocation6 + $0x348] sm:$0xff]
    %v221 = vld [vmem:[#allocation6 + $0x350] sm:$0xff]
    %v222 = vld [vmem:[#allocation6 + $0x358] sm:$0xff]
    %v223 = vld [vmem:[#allocation6 + $0x360] sm:$0xf]
    %v224 = vld [vmem:[#allocation6 + $0x364] sm:$0xff]
    %v225 = vld [vmem:[#allocation6 + $0x36c] sm:$0xff]
    %v226 = vld [vmem:[#allocation6 + $0x374] sm:$0xff]
    %v227 = vld [vmem:[#allocation6 + $0x37c] sm:$0xf]
    %v228 = vld [vmem:[#allocation6 + $0x380] sm:$0xff]
    %v229 = vld [vmem:[#allocation6 + $0x388] sm:$0xff]
    %v230 = vld [vmem:[#allocation6 + $0x390] sm:$0xff]
    %v231 = vld [vmem:[#allocation6 + $0x398] sm:$0xf]
    %v232 = vld [vmem:[#allocation6 + $0x39c] sm:$0xff]
    %v233 = vld [vmem:[#allocation6 + $0x3a4] sm:$0xff]
    %v234 = vld [vmem:[#allocation6 + $0x3ac] sm:$0xff]
    %v235 = vld [vmem:[#allocation6 + $0x3b4] sm:$0xf]
    %v236 = vld [vmem:[#allocation6 + $0x3b8] sm:$0xff]
    %v237 = vld [vmem:[#allocation6 + $0x3c0] sm:$0xff]
    %v238 = vld [vmem:[#allocation6 + $0x3c8] sm:$0xff]
    %v239 = vld [vmem:[#allocation6 + $0x3d0] sm:$0xf]
    %v240 = vld [vmem:[#allocation6 + $0x3d4] sm:$0xff]
    %v241 = vld [vmem:[#allocation6 + $0x3dc] sm:$0xff]
    %v242 = vld [vmem:[#allocation6 + $0x3e4] sm:$0xff]
    %v243 = vld [vmem:[#allocation6 + $0x3ec] sm:$0xf]
    %v244 = vld [vmem:[#allocation6 + $0x3f0] sm:$0xff]
    %v245 = vld [vmem:[#allocation6 + $0x3f8] sm:$0xff]
    %v246 = vld [vmem:[#allocation6 + $0x400] sm:$0xff]
    %v247 = vld [vmem:[#allocation6 + $0x408] sm:$0xf]
    %v248 = vld [vmem:[#allocation6 + $0x40c] sm:$0xff]
    %v249 = vld [vmem:[#allocation6 + $0x414] sm:$0xff]
    %v250 = vld [vmem:[#allocation6 + $0x41c] sm:$0xff]
    %v251 = vld [vmem:[#allocation6 + $0x424] sm:$0xf]
    %v252 = vld [vmem:[#allocation6 + $0x428] sm:$0xff]
    %v253 = vld [vmem:[#allocation6 + $0x430] sm:$0xff]
    %v254 = vld [vmem:[#allocation6 + $0x438] sm:$0xff]
    %v255 = vld [vmem:[#allocation6 + $0x440] sm:$0xf]
    %v256 = vld [vmem:[#allocation6 + $0x444] sm:$0xff]
    %v257 = vld [vmem:[#allocation6 + $0x44c] sm:$0xff]
    %v258 = vld [vmem:[#allocation6 + $0x454] sm:$0xff]
    %v259 = vld [vmem:[#allocation6 + $0x45c] sm:$0xf]
    %v260 = vld [vmem:[#allocation6 + $0x460] sm:$0xff]
    %v261 = vld [vmem:[#allocation6 + $0x468] sm:$0xff]
    %v262 = vld [vmem:[#allocation6 + $0x470] sm:$0xff]
    %v263 = vld [vmem:[#allocation6 + $0x478] sm:$0xf]
    %v264 = vld [vmem:[#allocation6 + $0x47c] sm:$0xff]
    %v265 = vld [vmem:[#allocation6 + $0x484] sm:$0xff]
    %v266 = vld [vmem:[#allocation6 + $0x48c] sm:$0xff]
    %v267 = vld [vmem:[#allocation6 + $0x494] sm:$0xf]
    %v268 = vld [vmem:[#allocation6 + $0x498] sm:$0xff]
    %v269 = vld [vmem:[#allocation6 + $0x4a0] sm:$0xff]
    %v270 = vld [vmem:[#allocation6 + $0x4a8] sm:$0xff]
    %v271 = vld [vmem:[#allocation6 + $0x4b0] sm:$0xf]
    %v272 = vld [vmem:[#allocation6 + $0x4b4] sm:$0xff]
    %v273 = vld [vmem:[#allocation6 + $0x4bc] sm:$0xff]
    %v274 = vld [vmem:[#allocation6 + $0x4c4] sm:$0xff]
    %v275 = vld [vmem:[#allocation6 + $0x4cc] sm:$0xf]
    %v276 = vld [vmem:[#allocation6 + $0x4d0] sm:$0xff]
    %v277 = vld [vmem:[#allocation6 + $0x4d8] sm:$0xff]
    %v278 = vld [vmem:[#allocation6 + $0x4e0] sm:$0xff]
    %v279 = vld [vmem:[#allocation6 + $0x4e8] sm:$0xf]
    %v280 = vld [vmem:[#allocation6 + $0x4ec] sm:$0xff]
    %v281 = vld [vmem:[#allocation6 + $0x4f4] sm:$0xff]
    %v282 = vld [vmem:[#allocation6 + $0x4fc] sm:$0xff]
    %v283 = vld [vmem:[#allocation6 + $0x504] sm:$0xf]
    %v284 = vld [vmem:[#allocation6 + $0x508] sm:$0xff]
    %v285 = vld [vmem:[#allocation6 + $0x510] sm:$0xff]
    %v286 = vld [vmem:[#allocation6 + $0x518] sm:$0xff]
    %v287 = vld [vmem:[#allocation6 + $0x520] sm:$0xf]
    %v288 = vld [vmem:[#allocation6 + $0x524] sm:$0xff]
    %v289 = vld [vmem:[#allocation6 + $0x52c] sm:$0xff]
    %v290 = vld [vmem:[#allocation6 + $0x534] sm:$0xff]
    %v291 = vld [vmem:[#allocation6 + $0x53c] sm:$0xf]
    %v292 = vld [vmem:[#allocation6 + $0x540] sm:$0xff]
    %v293 = vld [vmem:[#allocation6 + $0x548] sm:$0xff]
    %v294 = vld [vmem:[#allocation6 + $0x550] sm:$0xff]
    %v295 = vld [vmem:[#allocation6 + $0x558] sm:$0xf]
    %v296 = vld [vmem:[#allocation6 + $0x55c] sm:$0xff]
    %v297 = vld [vmem:[#allocation6 + $0x564] sm:$0xff]
    %v298 = vld [vmem:[#allocation6 + $0x56c] sm:$0xff]
    %v299 = vld [vmem:[#allocation6 + $0x574] sm:$0xf]
    %v300 = vld [vmem:[#allocation6 + $0x578] sm:$0xff]
    %v301 = vld [vmem:[#allocation6 + $0x580] sm:$0xff]
    %v302 = vld [vmem:[#allocation6 + $0x588] sm:$0xff]
    %v303 = vld [vmem:[#allocation6 + $0x590] sm:$0xf]
    %v304 = vld [vmem:[#allocation6 + $0x594] sm:$0xff]
    %v305 = vld [vmem:[#allocation6 + $0x59c] sm:$0xff]
    %v306 = vld [vmem:[#allocation6 + $0x5a4] sm:$0xff]
    %v307 = vld [vmem:[#allocation6 + $0x5ac] sm:$0xf]
    %v308 = vld [vmem:[#allocation6 + $0x5b0] sm:$0xff]
    %v309 = vld [vmem:[#allocation6 + $0x5b8] sm:$0xff]
    %v310 = vld [vmem:[#allocation6 + $0x5c0] sm:$0xff]
    %v311 = vld [vmem:[#allocation6 + $0x5c8] sm:$0xf]
    %v312 = vld [vmem:[#allocation6 + $0x5cc] sm:$0xff]
    %v313 = vld [vmem:[#allocation6 + $0x5d4] sm:$0xff]
    %v314 = vld [vmem:[#allocation6 + $0x5dc] sm:$0xff]
    %v315 = vld [vmem:[#allocation6 + $0x5e4] sm:$0xf]
    %v316 = vld [vmem:[#allocation6 + $0x5e8] sm:$0xff]
    %v317 = vld [vmem:[#allocation6 + $0x5f0] sm:$0xff]
    %v318 = vld [vmem:[#allocation6 + $0x5f8] sm:$0xff]
    %v319 = vld [vmem:[#allocation6 + $0x600] sm:$0xf]
    %v320 = vld [vmem:[#allocation6 + $0x604] sm:$0xff]
    %v321 = vld [vmem:[#allocation6 + $0x60c] sm:$0xff]
    %v322 = vld [vmem:[#allocation6 + $0x614] sm:$0xff]
    %v323 = vld [vmem:[#allocation6 + $0x61c] sm:$0xf]
    %v324 = vld [vmem:[#allocation6 + $0x620] sm:$0xff]
    %v325 = vld [vmem:[#allocation6 + $0x628] sm:$0xff]
    %v326 = vld [vmem:[#allocation6 + $0x630] sm:$0xff]
    %v327 = vld [vmem:[#allocation6 + $0x638] sm:$0xf]
    %v328 = vld [vmem:[#allocation6 + $0x63c] sm:$0xff]
    %v329 = vld [vmem:[#allocation6 + $0x644] sm:$0xff]
    %v330 = vld [vmem:[#allocation6 + $0x64c] sm:$0xff]
    %v331 = vld [vmem:[#allocation6 + $0x654] sm:$0xf]
    %v332 = vld [vmem:[#allocation6 + $0x658] sm:$0xff]
    %v333 = vld [vmem:[#allocation6 + $0x660] sm:$0xff]
    %v334 = vld [vmem:[#allocation6 + $0x668] sm:$0xff]
    %v335 = vld [vmem:[#allocation6 + $0x670] sm:$0xf]
    %v336 = vld [vmem:[#allocation6 + $0x674] sm:$0xff]
    %v337 = vld [vmem:[#allocation6 + $0x67c] sm:$0xff]
    %v338 = vld [vmem:[#allocation6 + $0x684] sm:$0xff]
    %v339 = vld [vmem:[#allocation6 + $0x68c] sm:$0xf]
    %v340 = vld [vmem:[#allocation6 + $0x690] sm:$0xff]
    %v341 = vld [vmem:[#allocation6 + $0x698] sm:$0xff]
    %v342 = vld [vmem:[#allocation6 + $0x6a0] sm:$0xff]
    %v343 = vld [vmem:[#allocation6 + $0x6a8] sm:$0xf]
    %v344 = vld [vmem:[#allocation6 + $0x6ac] sm:$0xff]
    %v345 = vld [vmem:[#allocation6 + $0x6b4] sm:$0xff]
    %v346 = vld [vmem:[#allocation6 + $0x6bc] sm:$0xff]
    %v347 = vld [vmem:[#allocation6 + $0x6c4] sm:$0xf]
    %v348 = vld [vmem:[#allocation6 + $0x6c8] sm:$0xff]
    %v349 = vld [vmem:[#allocation6 + $0x6d0] sm:$0xff]
    %v350 = vld [vmem:[#allocation6 + $0x6d8] sm:$0xff]
    %v351 = vld [vmem:[#allocation6 + $0x6e0] sm:$0xf]
    %v352 = vld [vmem:[#allocation6 + $0x6e4] sm:$0xff]
    %v353 = vld [vmem:[#allocation6 + $0x6ec] sm:$0xff]
    %v354 = vld [vmem:[#allocation6 + $0x6f4] sm:$0xff]
    %v355 = vld [vmem:[#allocation6 + $0x6fc] sm:$0xf]
    %v356 = vld [vmem:[#allocation6 + $0x700] sm:$0xff]
    %v357 = vld [vmem:[#allocation6 + $0x708] sm:$0xff]
    %v358 = vld [vmem:[#allocation6 + $0x710] sm:$0xff]
    %v359 = vld [vmem:[#allocation6 + $0x718] sm:$0xf]
    %v360 = vld [vmem:[#allocation6 + $0x71c] sm:$0xff]
    %v361 = vld [vmem:[#allocation6 + $0x724] sm:$0xff]
    %v362 = vld [vmem:[#allocation6 + $0x72c] sm:$0xff]
    %v363 = vld [vmem:[#allocation6 + $0x734] sm:$0xf]
    %v364 = vld [vmem:[#allocation6 + $0x738] sm:$0xff]
    %v365 = vld [vmem:[#allocation6 + $0x740] sm:$0xff]
    %v366 = vld [vmem:[#allocation6 + $0x748] sm:$0xff]
    %v367 = vld [vmem:[#allocation6 + $0x750] sm:$0xf]
    %v368 = vld [vmem:[#allocation6 + $0x754] sm:$0xff]
    %v369 = vld [vmem:[#allocation6 + $0x75c] sm:$0xff]
    %v370 = vld [vmem:[#allocation6 + $0x764] sm:$0xff]
    %v371 = vld [vmem:[#allocation6 + $0x76c] sm:$0xf]
    %v372 = vld [vmem:[#allocation6 + $0x770] sm:$0xff]
    %v373 = vld [vmem:[#allocation6 + $0x778] sm:$0xff]
    %v374 = vld [vmem:[#allocation6 + $0x780] sm:$0xff]
    %v375 = vld [vmem:[#allocation6 + $0x788] sm:$0xf]
    %v376 = vld [vmem:[#allocation6 + $0x78c] sm:$0xff]
    %v377 = vld [vmem:[#allocation6 + $0x794] sm:$0xff]
    %v378 = vld [vmem:[#allocation6 + $0x79c] sm:$0xff]
    %v379 = vld [vmem:[#allocation6 + $0x7a4] sm:$0xf]
    %v380 = vld [vmem:[#allocation6 + $0x7a8] sm:$0xff]
    %v381 = vld [vmem:[#allocation6 + $0x7b0] sm:$0xff]
    %v382 = vld [vmem:[#allocation6 + $0x7b8] sm:$0xff]
    %v383 = vld [vmem:[#allocation6 + $0x7c0] sm:$0xf]
    %v384 = vld [vmem:[#allocation6 + $0x7c4] sm:$0xff]
    %v385 = vld [vmem:[#allocation6 + $0x7cc] sm:$0xff]
    %v386 = vld [vmem:[#allocation6 + $0x7d4] sm:$0xff]
    %v387 = vld [vmem:[#allocation6 + $0x7dc] sm:$0xf]
    %v388 = vld [vmem:[#allocation6 + $0x7e0] sm:$0xff]
    %v389 = vld [vmem:[#allocation6 + $0x7e8] sm:$0xff]
    %v390 = vld [vmem:[#allocation6 + $0x7f0] sm:$0xff]
    %v391 = vld [vmem:[#allocation6 + $0x7f8] sm:$0xf]
    %v392 = vld [vmem:[#allocation6 + $0x7fc] sm:$0xff]
    %v393 = vld [vmem:[#allocation6 + $0x804] sm:$0xff]
    %v394 = vld [vmem:[#allocation6 + $0x80c] sm:$0xff]
    %v395 = vld [vmem:[#allocation6 + $0x814] sm:$0xf]
    %v396 = vld [vmem:[#allocation6 + $0x818] sm:$0xff]
    %v397 = vld [vmem:[#allocation6 + $0x820] sm:$0xff]
    %v398 = vld [vmem:[#allocation6 + $0x828] sm:$0xff]
    %v399 = vld [vmem:[#allocation6 + $0x830] sm:$0xf]
    %v400 = vld [vmem:[#allocation6 + $0x834] sm:$0xff]
    %v401 = vld [vmem:[#allocation6 + $0x83c] sm:$0xff]
    %v402 = vld [vmem:[#allocation6 + $0x844] sm:$0xff]
    %v403 = vld [vmem:[#allocation6 + $0x84c] sm:$0xf]
    %v404 = vld [vmem:[#allocation6 + $0x850] sm:$0xff]
    %v405 = vld [vmem:[#allocation6 + $0x858] sm:$0xff]
    %v406 = vld [vmem:[#allocation6 + $0x860] sm:$0xff]
    %v407 = vld [vmem:[#allocation6 + $0x868] sm:$0xf]
    %v408 = vld [vmem:[#allocation6 + $0x86c] sm:$0xff]
    %v409 = vld [vmem:[#allocation6 + $0x874] sm:$0xff]
    %v410 = vld [vmem:[#allocation6 + $0x87c] sm:$0xff]
    %v411 = vld [vmem:[#allocation6 + $0x884] sm:$0xf]
    %v412 = vld [vmem:[#allocation6 + $0x888] sm:$0xff]
    %v413 = vld [vmem:[#allocation6 + $0x890] sm:$0xff]
    %v414 = vld [vmem:[#allocation6 + $0x898] sm:$0xff]
    %v415 = vld [vmem:[#allocation6 + $0x8a0] sm:$0xf]
    %v416 = vld [vmem:[#allocation6 + $0x8a4] sm:$0xff]
    %v417 = vld [vmem:[#allocation6 + $0x8ac] sm:$0xff]
    %v418 = vld [vmem:[#allocation6 + $0x8b4] sm:$0xff]
    %v419 = vld [vmem:[#allocation6 + $0x8bc] sm:$0xf]
    %v420 = vld [vmem:[#allocation6 + $0x8c0] sm:$0xff]
    %v421 = vld [vmem:[#allocation6 + $0x8c8] sm:$0xff]
    %v422 = vld [vmem:[#allocation6 + $0x8d0] sm:$0xff]
    %v423 = vld [vmem:[#allocation6 + $0x8d8] sm:$0xf]
    %v424 = vld [vmem:[#allocation6 + $0x8dc] sm:$0xff]
    %v425 = vld [vmem:[#allocation6 + $0x8e4] sm:$0xff]
    %v426 = vld [vmem:[#allocation6 + $0x8ec] sm:$0xff]
    %v427 = vld [vmem:[#allocation6 + $0x8f4] sm:$0xf]
    %v428 = vld [vmem:[#allocation6 + $0x8f8] sm:$0xff]
    %v429 = vld [vmem:[#allocation6 + $0x900] sm:$0xff]
    %v430 = vld [vmem:[#allocation6 + $0x908] sm:$0xff]
    %v431 = vld [vmem:[#allocation6 + $0x910] sm:$0xf]
    %v432 = vld [vmem:[#allocation6 + $0x914] sm:$0xff]
    %v433 = vld [vmem:[#allocation6 + $0x91c] sm:$0xff]
    %v434 = vld [vmem:[#allocation6 + $0x924] sm:$0xff]
    %v435 = vld [vmem:[#allocation6 + $0x92c] sm:$0xf]
    %v436 = vld [vmem:[#allocation6 + $0x930] sm:$0xff]
    %v437 = vld [vmem:[#allocation6 + $0x938] sm:$0xff]
    %v438 = vld [vmem:[#allocation6 + $0x940] sm:$0xff]
    %v439 = vld [vmem:[#allocation6 + $0x948] sm:$0xf]
    %v440 = vld [vmem:[#allocation6 + $0x94c] sm:$0xff]
    %v441 = vld [vmem:[#allocation6 + $0x954] sm:$0xff]
    %v442 = vld [vmem:[#allocation6 + $0x95c] sm:$0xff]
    %v443 = vld [vmem:[#allocation6 + $0x964] sm:$0xf]
    %v444 = vld [vmem:[#allocation6 + $0x968] sm:$0xff]
    %v445 = vld [vmem:[#allocation6 + $0x970] sm:$0xff]
    %v446 = vld [vmem:[#allocation6 + $0x978] sm:$0xff]
    %v447 = vld [vmem:[#allocation6 + $0x980] sm:$0xf]
    %v448 = vld [vmem:[#allocation6 + $0x984] sm:$0xff]
    %v449 = vld [vmem:[#allocation6 + $0x98c] sm:$0xff]
    %v450 = vld [vmem:[#allocation6 + $0x994] sm:$0xff]
    %v451 = vld [vmem:[#allocation6 + $0x99c] sm:$0xf]
    %v452 = vld [vmem:[#allocation6 + $0x9a0] sm:$0xff]
    %v453 = vld [vmem:[#allocation6 + $0x9a8] sm:$0xff]
    %v454 = vld [vmem:[#allocation6 + $0x9b0] sm:$0xff]
    %v455 = vld [vmem:[#allocation6 + $0x9b8] sm:$0xf]
    %v456 = vld [vmem:[#allocation6 + $0x9bc] sm:$0xff]
    %v457 = vld [vmem:[#allocation6 + $0x9c4] sm:$0xff]
    %v458 = vld [vmem:[#allocation6 + $0x9cc] sm:$0xff]
    %v459 = vld [vmem:[#allocation6 + $0x9d4] sm:$0xf]
    %v460 = vld [vmem:[#allocation6 + $0x9d8] sm:$0xff]
    %v461 = vld [vmem:[#allocation6 + $0x9e0] sm:$0xff]
    %v462 = vld [vmem:[#allocation6 + $0x9e8] sm:$0xff]
    %v463 = vld [vmem:[#allocation6 + $0x9f0] sm:$0xf]
    %v464 = vld [vmem:[#allocation6 + $0x9f4] sm:$0xff]
    %v465 = vld [vmem:[#allocation6 + $0x9fc] sm:$0xff]
    %v466 = vld [vmem:[#allocation6 + $0xa04] sm:$0xff]
    %v467 = vld [vmem:[#allocation6 + $0xa0c] sm:$0xf]
    %v468 = vld [vmem:[#allocation6 + $0xa10] sm:$0xff]
    %v469 = vld [vmem:[#allocation6 + $0xa18] sm:$0xff]
    %v470 = vld [vmem:[#allocation6 + $0xa20] sm:$0xff]
    %v471 = vld [vmem:[#allocation6 + $0xa28] sm:$0xf]
    %v472 = vld [vmem:[#allocation6 + $0xa2c] sm:$0xff]
    %v473 = vld [vmem:[#allocation6 + $0xa34] sm:$0xff]
    %v474 = vld [vmem:[#allocation6 + $0xa3c] sm:$0xff]
    %v475 = vld [vmem:[#allocation6 + $0xa44] sm:$0xf]
    %v476 = vld [vmem:[#allocation6 + $0xa48] sm:$0xff]
    %v477 = vld [vmem:[#allocation6 + $0xa50] sm:$0xff]
    %v478 = vld [vmem:[#allocation6 + $0xa58] sm:$0xff]
    %v479 = vld [vmem:[#allocation6 + $0xa60] sm:$0xf]
    %v480 = vld [vmem:[#allocation6 + $0xa64] sm:$0xff]
    %v481 = vld [vmem:[#allocation6 + $0xa6c] sm:$0xff]
    %v482 = vld [vmem:[#allocation6 + $0xa74] sm:$0xff]
    %v483 = vld [vmem:[#allocation6 + $0xa7c] sm:$0xf]
    %v484 = vld [vmem:[#allocation6 + $0xa80] sm:$0xff]
    %v485 = vld [vmem:[#allocation6 + $0xa88] sm:$0xff]
    %v486 = vld [vmem:[#allocation6 + $0xa90] sm:$0xff]
    %v487 = vld [vmem:[#allocation6 + $0xa98] sm:$0xf]
    %v488 = vld [vmem:[#allocation6 + $0xa9c] sm:$0xff]
    %v489 = vld [vmem:[#allocation6 + $0xaa4] sm:$0xff]
    %v490 = vld [vmem:[#allocation6 + $0xaac] sm:$0xff]
    %v491 = vld [vmem:[#allocation6 + $0xab4] sm:$0xf]
    %v884 = vunpack.c.l.b16 %v100
    %v885 = vunpack.c.h.b16 %v100
    %v886 = vunpack.c.l.b16 %v101
    %v887 = vunpack.c.h.b16 %v101
    %v888 = vunpack.c.l.b16 %v102
    %v889 = vunpack.c.h.b16 %v102
    %v890 = vunpack.c.l.b16 %v103
    %v891 = vunpack.c.l.b16 %v104
    %v892 = vunpack.c.h.b16 %v104
    %v893 = vunpack.c.l.b16 %v105
    %v894 = vunpack.c.h.b16 %v105
    %v895 = vunpack.c.l.b16 %v106
    %v896 = vunpack.c.h.b16 %v106
    %v897 = vunpack.c.l.b16 %v107
    %v898 = vunpack.c.l.b16 %v108
    %v899 = vunpack.c.h.b16 %v108
    %v900 = vunpack.c.l.b16 %v109
    %v901 = vunpack.c.h.b16 %v109
    %v902 = vunpack.c.l.b16 %v110
    %v903 = vunpack.c.h.b16 %v110
    %v904 = vunpack.c.l.b16 %v111
    %v905 = vunpack.c.l.b16 %v112
    %v906 = vunpack.c.h.b16 %v112
    %v907 = vunpack.c.l.b16 %v113
    %v908 = vunpack.c.h.b16 %v113
    %v909 = vunpack.c.l.b16 %v114
    %v910 = vunpack.c.h.b16 %v114
    %v911 = vunpack.c.l.b16 %v115
    %v912 = vunpack.c.l.b16 %v116
    %v913 = vunpack.c.h.b16 %v116
    %v914 = vunpack.c.l.b16 %v117
    %v915 = vunpack.c.h.b16 %v117
    %v916 = vunpack.c.l.b16 %v118
    %v917 = vunpack.c.h.b16 %v118
    %v918 = vunpack.c.l.b16 %v119
    %v919 = vunpack.c.l.b16 %v120
    %v920 = vunpack.c.h.b16 %v120
    %v921 = vunpack.c.l.b16 %v121
    %v922 = vunpack.c.h.b16 %v121
    %v923 = vunpack.c.l.b16 %v122
    %v924 = vunpack.c.h.b16 %v122
    %v925 = vunpack.c.l.b16 %v123
    %v926 = vunpack.c.l.b16 %v124
    %v927 = vunpack.c.h.b16 %v124
    %v928 = vunpack.c.l.b16 %v125
    %v929 = vunpack.c.h.b16 %v125
    %v930 = vunpack.c.l.b16 %v126
    %v931 = vunpack.c.h.b16 %v126
    %v932 = vunpack.c.l.b16 %v127
    %v933 = vunpack.c.l.b16 %v128
    %v934 = vunpack.c.h.b16 %v128
    %v935 = vunpack.c.l.b16 %v129
    %v936 = vunpack.c.h.b16 %v129
    %v937 = vunpack.c.l.b16 %v130
    %v938 = vunpack.c.h.b16 %v130
    %v939 = vunpack.c.l.b16 %v131
    %v940 = vunpack.c.l.b16 %v132
    %v941 = vunpack.c.h.b16 %v132
    %v942 = vunpack.c.l.b16 %v133
    %v943 = vunpack.c.h.b16 %v133
    %v944 = vunpack.c.l.b16 %v134
    %v945 = vunpack.c.h.b16 %v134
    %v946 = vunpack.c.l.b16 %v135
    %v947 = vunpack.c.l.b16 %v136
    %v948 = vunpack.c.h.b16 %v136
    %v949 = vunpack.c.l.b16 %v137
    %v950 = vunpack.c.h.b16 %v137
    %v951 = vunpack.c.l.b16 %v138
    %v952 = vunpack.c.h.b16 %v138
    %v953 = vunpack.c.l.b16 %v139
    %v954 = vunpack.c.l.b16 %v140
    %v955 = vunpack.c.h.b16 %v140
    %v956 = vunpack.c.l.b16 %v141
    %v957 = vunpack.c.h.b16 %v141
    %v958 = vunpack.c.l.b16 %v142
    %v959 = vunpack.c.h.b16 %v142
    %v960 = vunpack.c.l.b16 %v143
    %v961 = vunpack.c.l.b16 %v144
    %v962 = vunpack.c.h.b16 %v144
    %v963 = vunpack.c.l.b16 %v145
    %v964 = vunpack.c.h.b16 %v145
    %v965 = vunpack.c.l.b16 %v146
    %v966 = vunpack.c.h.b16 %v146
    %v967 = vunpack.c.l.b16 %v147
    %v968 = vunpack.c.l.b16 %v148
    %v969 = vunpack.c.h.b16 %v148
    %v970 = vunpack.c.l.b16 %v149
    %v971 = vunpack.c.h.b16 %v149
    %v972 = vunpack.c.l.b16 %v150
    %v973 = vunpack.c.h.b16 %v150
    %v974 = vunpack.c.l.b16 %v151
    %v975 = vunpack.c.l.b16 %v152
    %v976 = vunpack.c.h.b16 %v152
    %v977 = vunpack.c.l.b16 %v153
    %v978 = vunpack.c.h.b16 %v153
    %v979 = vunpack.c.l.b16 %v154
    %v980 = vunpack.c.h.b16 %v154
    %v981 = vunpack.c.l.b16 %v155
    %v982 = vunpack.c.l.b16 %v156
    %v983 = vunpack.c.h.b16 %v156
    %v984 = vunpack.c.l.b16 %v157
    %v985 = vunpack.c.h.b16 %v157
    %v986 = vunpack.c.l.b16 %v158
    %v987 = vunpack.c.h.b16 %v158
    %v988 = vunpack.c.l.b16 %v159
    %v989 = vunpack.c.l.b16 %v160
    %v990 = vunpack.c.h.b16 %v160
    %v991 = vunpack.c.l.b16 %v161
    %v992 = vunpack.c.h.b16 %v161
    %v993 = vunpack.c.l.b16 %v162
    %v994 = vunpack.c.h.b16 %v162
    %v995 = vunpack.c.l.b16 %v163
    %v996 = vunpack.c.l.b16 %v164
    %v997 = vunpack.c.h.b16 %v164
    %v998 = vunpack.c.l.b16 %v165
    %v999 = vunpack.c.h.b16 %v165
    %v1000 = vunpack.c.l.b16 %v166
    %v1001 = vunpack.c.h.b16 %v166
    %v1002 = vunpack.c.l.b16 %v167
    %v1003 = vunpack.c.l.b16 %v168
    %v1004 = vunpack.c.h.b16 %v168
    %v1005 = vunpack.c.l.b16 %v169
    %v1006 = vunpack.c.h.b16 %v169
    %v1007 = vunpack.c.l.b16 %v170
    %v1008 = vunpack.c.h.b16 %v170
    %v1009 = vunpack.c.l.b16 %v171
    %v1010 = vunpack.c.l.b16 %v172
    %v1011 = vunpack.c.h.b16 %v172
    %v1012 = vunpack.c.l.b16 %v173
    %v1013 = vunpack.c.h.b16 %v173
    %v1014 = vunpack.c.l.b16 %v174
    %v1015 = vunpack.c.h.b16 %v174
    %v1016 = vunpack.c.l.b16 %v175
    %v1017 = vunpack.c.l.b16 %v176
    %v1018 = vunpack.c.h.b16 %v176
    %v1019 = vunpack.c.l.b16 %v177
    %v1020 = vunpack.c.h.b16 %v177
    %v1021 = vunpack.c.l.b16 %v178
    %v1022 = vunpack.c.h.b16 %v178
    %v1023 = vunpack.c.l.b16 %v179
    %v1024 = vunpack.c.l.b16 %v180
    %v1025 = vunpack.c.h.b16 %v180
    %v1026 = vunpack.c.l.b16 %v181
    %v1027 = vunpack.c.h.b16 %v181
    %v1028 = vunpack.c.l.b16 %v182
    %v1029 = vunpack.c.h.b16 %v182
    %v1030 = vunpack.c.l.b16 %v183
    %v1031 = vunpack.c.l.b16 %v184
    %v1032 = vunpack.c.h.b16 %v184
    %v1033 = vunpack.c.l.b16 %v185
    %v1034 = vunpack.c.h.b16 %v185
    %v1035 = vunpack.c.l.b16 %v186
    %v1036 = vunpack.c.h.b16 %v186
    %v1037 = vunpack.c.l.b16 %v187
    %v1038 = vunpack.c.l.b16 %v188
    %v1039 = vunpack.c.h.b16 %v188
    %v1040 = vunpack.c.l.b16 %v189
    %v1041 = vunpack.c.h.b16 %v189
    %v1042 = vunpack.c.l.b16 %v190
    %v1043 = vunpack.c.h.b16 %v190
    %v1044 = vunpack.c.l.b16 %v191
    %v1045 = vunpack.c.l.b16 %v192
    %v1046 = vunpack.c.h.b16 %v192
    %v1047 = vunpack.c.l.b16 %v193
    %v1048 = vunpack.c.h.b16 %v193
    %v1049 = vunpack.c.l.b16 %v194
    %v1050 = vunpack.c.h.b16 %v194
    %v1051 = vunpack.c.l.b16 %v195
    %v1052 = vunpack.c.l.b16 %v196
    %v1053 = vunpack.c.h.b16 %v196
    %v1054 = vunpack.c.l.b16 %v197
    %v1055 = vunpack.c.h.b16 %v197
    %v1056 = vunpack.c.l.b16 %v198
    %v1057 = vunpack.c.h.b16 %v198
    %v1058 = vunpack.c.l.b16 %v199
    %v1059 = vunpack.c.l.b16 %v200
    %v1060 = vunpack.c.h.b16 %v200
    %v1061 = vunpack.c.l.b16 %v201
    %v1062 = vunpack.c.h.b16 %v201
    %v1063 = vunpack.c.l.b16 %v202
    %v1064 = vunpack.c.h.b16 %v202
    %v1065 = vunpack.c.l.b16 %v203
    %v1066 = vunpack.c.l.b16 %v204
    %v1067 = vunpack.c.h.b16 %v204
    %v1068 = vunpack.c.l.b16 %v205
    %v1069 = vunpack.c.h.b16 %v205
    %v1070 = vunpack.c.l.b16 %v206
    %v1071 = vunpack.c.h.b16 %v206
    %v1072 = vunpack.c.l.b16 %v207
    %v1073 = vunpack.c.l.b16 %v208
    %v1074 = vunpack.c.h.b16 %v208
    %v1075 = vunpack.c.l.b16 %v209
    %v1076 = vunpack.c.h.b16 %v209
    %v1077 = vunpack.c.l.b16 %v210
    %v1078 = vunpack.c.h.b16 %v210
    %v1079 = vunpack.c.l.b16 %v211
    %v1080 = vunpack.c.l.b16 %v212
    %v1081 = vunpack.c.h.b16 %v212
    %v1082 = vunpack.c.l.b16 %v213
    %v1083 = vunpack.c.h.b16 %v213
    %v1084 = vunpack.c.l.b16 %v214
    %v1085 = vunpack.c.h.b16 %v214
    %v1086 = vunpack.c.l.b16 %v215
    %v1087 = vunpack.c.l.b16 %v216
    %v1088 = vunpack.c.h.b16 %v216
    %v1089 = vunpack.c.l.b16 %v217
    %v1090 = vunpack.c.h.b16 %v217
    %v1091 = vunpack.c.l.b16 %v218
    %v1092 = vunpack.c.h.b16 %v218
    %v1093 = vunpack.c.l.b16 %v219
    %v1094 = vunpack.c.l.b16 %v220
    %v1095 = vunpack.c.h.b16 %v220
    %v1096 = vunpack.c.l.b16 %v221
    %v1097 = vunpack.c.h.b16 %v221
    %v1098 = vunpack.c.l.b16 %v222
    %v1099 = vunpack.c.h.b16 %v222
    %v1100 = vunpack.c.l.b16 %v223
    %v1101 = vunpack.c.l.b16 %v224
    %v1102 = vunpack.c.h.b16 %v224
    %v1103 = vunpack.c.l.b16 %v225
    %v1104 = vunpack.c.h.b16 %v225
    %v1105 = vunpack.c.l.b16 %v226
    %v1106 = vunpack.c.h.b16 %v226
    %v1107 = vunpack.c.l.b16 %v227
    %v1108 = vunpack.c.l.b16 %v228
    %v1109 = vunpack.c.h.b16 %v228
    %v1110 = vunpack.c.l.b16 %v229
    %v1111 = vunpack.c.h.b16 %v229
    %v1112 = vunpack.c.l.b16 %v230
    %v1113 = vunpack.c.h.b16 %v230
    %v1114 = vunpack.c.l.b16 %v231
    %v1115 = vunpack.c.l.b16 %v232
    %v1116 = vunpack.c.h.b16 %v232
    %v1117 = vunpack.c.l.b16 %v233
    %v1118 = vunpack.c.h.b16 %v233
    %v1119 = vunpack.c.l.b16 %v234
    %v1120 = vunpack.c.h.b16 %v234
    %v1121 = vunpack.c.l.b16 %v235
    %v1122 = vunpack.c.l.b16 %v236
    %v1123 = vunpack.c.h.b16 %v236
    %v1124 = vunpack.c.l.b16 %v237
    %v1125 = vunpack.c.h.b16 %v237
    %v1126 = vunpack.c.l.b16 %v238
    %v1127 = vunpack.c.h.b16 %v238
    %v1128 = vunpack.c.l.b16 %v239
    %v1129 = vunpack.c.l.b16 %v240
    %v1130 = vunpack.c.h.b16 %v240
    %v1131 = vunpack.c.l.b16 %v241
    %v1132 = vunpack.c.h.b16 %v241
    %v1133 = vunpack.c.l.b16 %v242
    %v1134 = vunpack.c.h.b16 %v242
    %v1135 = vunpack.c.l.b16 %v243
    %v1136 = vunpack.c.l.b16 %v244
    %v1137 = vunpack.c.h.b16 %v244
    %v1138 = vunpack.c.l.b16 %v245
    %v1139 = vunpack.c.h.b16 %v245
    %v1140 = vunpack.c.l.b16 %v246
    %v1141 = vunpack.c.h.b16 %v246
    %v1142 = vunpack.c.l.b16 %v247
    %v1143 = vunpack.c.l.b16 %v248
    %v1144 = vunpack.c.h.b16 %v248
    %v1145 = vunpack.c.l.b16 %v249
    %v1146 = vunpack.c.h.b16 %v249
    %v1147 = vunpack.c.l.b16 %v250
    %v1148 = vunpack.c.h.b16 %v250
    %v1149 = vunpack.c.l.b16 %v251
    %v1150 = vunpack.c.l.b16 %v252
    %v1151 = vunpack.c.h.b16 %v252
    %v1152 = vunpack.c.l.b16 %v253
    %v1153 = vunpack.c.h.b16 %v253
    %v1154 = vunpack.c.l.b16 %v254
    %v1155 = vunpack.c.h.b16 %v254
    %v1156 = vunpack.c.l.b16 %v255
    %v1157 = vunpack.c.l.b16 %v256
    %v1158 = vunpack.c.h.b16 %v256
    %v1159 = vunpack.c.l.b16 %v257
    %v1160 = vunpack.c.h.b16 %v257
    %v1161 = vunpack.c.l.b16 %v258
    %v1162 = vunpack.c.h.b16 %v258
    %v1163 = vunpack.c.l.b16 %v259
    %v1164 = vunpack.c.l.b16 %v260
    %v1165 = vunpack.c.h.b16 %v260
    %v1166 = vunpack.c.l.b16 %v261
    %v1167 = vunpack.c.h.b16 %v261
    %v1168 = vunpack.c.l.b16 %v262
    %v1169 = vunpack.c.h.b16 %v262
    %v1170 = vunpack.c.l.b16 %v263
    %v1171 = vunpack.c.l.b16 %v264
    %v1172 = vunpack.c.h.b16 %v264
    %v1173 = vunpack.c.l.b16 %v265
    %v1174 = vunpack.c.h.b16 %v265
    %v1175 = vunpack.c.l.b16 %v266
    %v1176 = vunpack.c.h.b16 %v266
    %v1177 = vunpack.c.l.b16 %v267
    %v1178 = vunpack.c.l.b16 %v268
    %v1179 = vunpack.c.h.b16 %v268
    %v1180 = vunpack.c.l.b16 %v269
    %v1181 = vunpack.c.h.b16 %v269
    %v1182 = vunpack.c.l.b16 %v270
    %v1183 = vunpack.c.h.b16 %v270
    %v1184 = vunpack.c.l.b16 %v271
    %v1185 = vunpack.c.l.b16 %v272
    %v1186 = vunpack.c.h.b16 %v272
    %v1187 = vunpack.c.l.b16 %v273
    %v1188 = vunpack.c.h.b16 %v273
    %v1189 = vunpack.c.l.b16 %v274
    %v1190 = vunpack.c.h.b16 %v274
    %v1191 = vunpack.c.l.b16 %v275
    %v1192 = vunpack.c.l.b16 %v276
    %v1193 = vunpack.c.h.b16 %v276
    %v1194 = vunpack.c.l.b16 %v277
    %v1195 = vunpack.c.h.b16 %v277
    %v1196 = vunpack.c.l.b16 %v278
    %v1197 = vunpack.c.h.b16 %v278
    %v1198 = vunpack.c.l.b16 %v279
    %v1199 = vunpack.c.l.b16 %v280
    %v1200 = vunpack.c.h.b16 %v280
    %v1201 = vunpack.c.l.b16 %v281
    %v1202 = vunpack.c.h.b16 %v281
    %v1203 = vunpack.c.l.b16 %v282
    %v1204 = vunpack.c.h.b16 %v282
    %v1205 = vunpack.c.l.b16 %v283
    %v1206 = vunpack.c.l.b16 %v284
    %v1207 = vunpack.c.h.b16 %v284
    %v1208 = vunpack.c.l.b16 %v285
    %v1209 = vunpack.c.h.b16 %v285
    %v1210 = vunpack.c.l.b16 %v286
    %v1211 = vunpack.c.h.b16 %v286
    %v1212 = vunpack.c.l.b16 %v287
    %v1213 = vunpack.c.l.b16 %v288
    %v1214 = vunpack.c.h.b16 %v288
    %v1215 = vunpack.c.l.b16 %v289
    %v1216 = vunpack.c.h.b16 %v289
    %v1217 = vunpack.c.l.b16 %v290
    %v1218 = vunpack.c.h.b16 %v290
    %v1219 = vunpack.c.l.b16 %v291
    %v1220 = vunpack.c.l.b16 %v292
    %v1221 = vunpack.c.h.b16 %v292
    %v1222 = vunpack.c.l.b16 %v293
    %v1223 = vunpack.c.h.b16 %v293
    %v1224 = vunpack.c.l.b16 %v294
    %v1225 = vunpack.c.h.b16 %v294
    %v1226 = vunpack.c.l.b16 %v295
    %v1227 = vunpack.c.l.b16 %v296
    %v1228 = vunpack.c.h.b16 %v296
    %v1229 = vunpack.c.l.b16 %v297
    %v1230 = vunpack.c.h.b16 %v297
    %v1231 = vunpack.c.l.b16 %v298
    %v1232 = vunpack.c.h.b16 %v298
    %v1233 = vunpack.c.l.b16 %v299
    %v1234 = vunpack.c.l.b16 %v300
    %v1235 = vunpack.c.h.b16 %v300
    %v1236 = vunpack.c.l.b16 %v301
    %v1237 = vunpack.c.h.b16 %v301
    %v1238 = vunpack.c.l.b16 %v302
    %v1239 = vunpack.c.h.b16 %v302
    %v1240 = vunpack.c.l.b16 %v303
    %v1241 = vunpack.c.l.b16 %v304
    %v1242 = vunpack.c.h.b16 %v304
    %v1243 = vunpack.c.l.b16 %v305
    %v1244 = vunpack.c.h.b16 %v305
    %v1245 = vunpack.c.l.b16 %v306
    %v1246 = vunpack.c.h.b16 %v306
    %v1247 = vunpack.c.l.b16 %v307
    %v1248 = vunpack.c.l.b16 %v308
    %v1249 = vunpack.c.h.b16 %v308
    %v1250 = vunpack.c.l.b16 %v309
    %v1251 = vunpack.c.h.b16 %v309
    %v1252 = vunpack.c.l.b16 %v310
    %v1253 = vunpack.c.h.b16 %v310
    %v1254 = vunpack.c.l.b16 %v311
    %v1255 = vunpack.c.l.b16 %v312
    %v1256 = vunpack.c.h.b16 %v312
    %v1257 = vunpack.c.l.b16 %v313
    %v1258 = vunpack.c.h.b16 %v313
    %v1259 = vunpack.c.l.b16 %v314
    %v1260 = vunpack.c.h.b16 %v314
    %v1261 = vunpack.c.l.b16 %v315
    %v1262 = vunpack.c.l.b16 %v316
    %v1263 = vunpack.c.h.b16 %v316
    %v1264 = vunpack.c.l.b16 %v317
    %v1265 = vunpack.c.h.b16 %v317
    %v1266 = vunpack.c.l.b16 %v318
    %v1267 = vunpack.c.h.b16 %v318
    %v1268 = vunpack.c.l.b16 %v319
    %v1269 = vunpack.c.l.b16 %v320
    %v1270 = vunpack.c.h.b16 %v320
    %v1271 = vunpack.c.l.b16 %v321
    %v1272 = vunpack.c.h.b16 %v321
    %v1273 = vunpack.c.l.b16 %v322
    %v1274 = vunpack.c.h.b16 %v322
    %v1275 = vunpack.c.l.b16 %v323
    %v1276 = vunpack.c.l.b16 %v324
    %v1277 = vunpack.c.h.b16 %v324
    %v1278 = vunpack.c.l.b16 %v325
    %v1279 = vunpack.c.h.b16 %v325
    %v1280 = vunpack.c.l.b16 %v326
    %v1281 = vunpack.c.h.b16 %v326
    %v1282 = vunpack.c.l.b16 %v327
    %v1283 = vunpack.c.l.b16 %v328
    %v1284 = vunpack.c.h.b16 %v328
    %v1285 = vunpack.c.l.b16 %v329
    %v1286 = vunpack.c.h.b16 %v329
    %v1287 = vunpack.c.l.b16 %v330
    %v1288 = vunpack.c.h.b16 %v330
    %v1289 = vunpack.c.l.b16 %v331
    %v1290 = vunpack.c.l.b16 %v332
    %v1291 = vunpack.c.h.b16 %v332
    %v1292 = vunpack.c.l.b16 %v333
    %v1293 = vunpack.c.h.b16 %v333
    %v1294 = vunpack.c.l.b16 %v334
    %v1295 = vunpack.c.h.b16 %v334
    %v1296 = vunpack.c.l.b16 %v335
    %v1297 = vunpack.c.l.b16 %v336
    %v1298 = vunpack.c.h.b16 %v336
    %v1299 = vunpack.c.l.b16 %v337
    %v1300 = vunpack.c.h.b16 %v337
    %v1301 = vunpack.c.l.b16 %v338
    %v1302 = vunpack.c.h.b16 %v338
    %v1303 = vunpack.c.l.b16 %v339
    %v1304 = vunpack.c.l.b16 %v340
    %v1305 = vunpack.c.h.b16 %v340
    %v1306 = vunpack.c.l.b16 %v341
    %v1307 = vunpack.c.h.b16 %v341
    %v1308 = vunpack.c.l.b16 %v342
    %v1309 = vunpack.c.h.b16 %v342
    %v1310 = vunpack.c.l.b16 %v343
    %v1311 = vunpack.c.l.b16 %v344
    %v1312 = vunpack.c.h.b16 %v344
    %v1313 = vunpack.c.l.b16 %v345
    %v1314 = vunpack.c.h.b16 %v345
    %v1315 = vunpack.c.l.b16 %v346
    %v1316 = vunpack.c.h.b16 %v346
    %v1317 = vunpack.c.l.b16 %v347
    %v1318 = vunpack.c.l.b16 %v348
    %v1319 = vunpack.c.h.b16 %v348
    %v1320 = vunpack.c.l.b16 %v349
    %v1321 = vunpack.c.h.b16 %v349
    %v1322 = vunpack.c.l.b16 %v350
    %v1323 = vunpack.c.h.b16 %v350
    %v1324 = vunpack.c.l.b16 %v351
    %v1325 = vunpack.c.l.b16 %v352
    %v1326 = vunpack.c.h.b16 %v352
    %v1327 = vunpack.c.l.b16 %v353
    %v1328 = vunpack.c.h.b16 %v353
    %v1329 = vunpack.c.l.b16 %v354
    %v1330 = vunpack.c.h.b16 %v354
    %v1331 = vunpack.c.l.b16 %v355
    %v1332 = vunpack.c.l.b16 %v356
    %v1333 = vunpack.c.h.b16 %v356
    %v1334 = vunpack.c.l.b16 %v357
    %v1335 = vunpack.c.h.b16 %v357
    %v1336 = vunpack.c.l.b16 %v358
    %v1337 = vunpack.c.h.b16 %v358
    %v1338 = vunpack.c.l.b16 %v359
    %v1339 = vunpack.c.l.b16 %v360
    %v1340 = vunpack.c.h.b16 %v360
    %v1341 = vunpack.c.l.b16 %v361
    %v1342 = vunpack.c.h.b16 %v361
    %v1343 = vunpack.c.l.b16 %v362
    %v1344 = vunpack.c.h.b16 %v362
    %v1345 = vunpack.c.l.b16 %v363
    %v1346 = vunpack.c.l.b16 %v364
    %v1347 = vunpack.c.h.b16 %v364
    %v1348 = vunpack.c.l.b16 %v365
    %v1349 = vunpack.c.h.b16 %v365
    %v1350 = vunpack.c.l.b16 %v366
    %v1351 = vunpack.c.h.b16 %v366
    %v1352 = vunpack.c.l.b16 %v367
    %v1353 = vunpack.c.l.b16 %v368
    %v1354 = vunpack.c.h.b16 %v368
    %v1355 = vunpack.c.l.b16 %v369
    %v1356 = vunpack.c.h.b16 %v369
    %v1357 = vunpack.c.l.b16 %v370
    %v1358 = vunpack.c.h.b16 %v370
    %v1359 = vunpack.c.l.b16 %v371
    %v1360 = vunpack.c.l.b16 %v372
    %v1361 = vunpack.c.h.b16 %v372
    %v1362 = vunpack.c.l.b16 %v373
    %v1363 = vunpack.c.h.b16 %v373
    %v1364 = vunpack.c.l.b16 %v374
    %v1365 = vunpack.c.h.b16 %v374
    %v1366 = vunpack.c.l.b16 %v375
    %v1367 = vunpack.c.l.b16 %v376
    %v1368 = vunpack.c.h.b16 %v376
    %v1369 = vunpack.c.l.b16 %v377
    %v1370 = vunpack.c.h.b16 %v377
    %v1371 = vunpack.c.l.b16 %v378
    %v1372 = vunpack.c.h.b16 %v378
    %v1373 = vunpack.c.l.b16 %v379
    %v1374 = vunpack.c.l.b16 %v380
    %v1375 = vunpack.c.h.b16 %v380
    %v1376 = vunpack.c.l.b16 %v381
    %v1377 = vunpack.c.h.b16 %v381
    %v1378 = vunpack.c.l.b16 %v382
    %v1379 = vunpack.c.h.b16 %v382
    %v1380 = vunpack.c.l.b16 %v383
    %v1381 = vunpack.c.l.b16 %v384
    %v1382 = vunpack.c.h.b16 %v384
    %v1383 = vunpack.c.l.b16 %v385
    %v1384 = vunpack.c.h.b16 %v385
    %v1385 = vunpack.c.l.b16 %v386
    %v1386 = vunpack.c.h.b16 %v386
    %v1387 = vunpack.c.l.b16 %v387
    %v1388 = vunpack.c.l.b16 %v388
    %v1389 = vunpack.c.h.b16 %v388
    %v1390 = vunpack.c.l.b16 %v389
    %v1391 = vunpack.c.h.b16 %v389
    %v1392 = vunpack.c.l.b16 %v390
    %v1393 = vunpack.c.h.b16 %v390
    %v1394 = vunpack.c.l.b16 %v391
    %v1395 = vunpack.c.l.b16 %v392
    %v1396 = vunpack.c.h.b16 %v392
    %v1397 = vunpack.c.l.b16 %v393
    %v1398 = vunpack.c.h.b16 %v393
    %v1399 = vunpack.c.l.b16 %v394
    %v1400 = vunpack.c.h.b16 %v394
    %v1401 = vunpack.c.l.b16 %v395
    %v1402 = vunpack.c.l.b16 %v396
    %v1403 = vunpack.c.h.b16 %v396
    %v1404 = vunpack.c.l.b16 %v397
    %v1405 = vunpack.c.h.b16 %v397
    %v1406 = vunpack.c.l.b16 %v398
    %v1407 = vunpack.c.h.b16 %v398
    %v1408 = vunpack.c.l.b16 %v399
    %v1409 = vunpack.c.l.b16 %v400
    %v1410 = vunpack.c.h.b16 %v400
    %v1411 = vunpack.c.l.b16 %v401
    %v1412 = vunpack.c.h.b16 %v401
    %v1413 = vunpack.c.l.b16 %v402
    %v1414 = vunpack.c.h.b16 %v402
    %v1415 = vunpack.c.l.b16 %v403
    %v1416 = vunpack.c.l.b16 %v404
    %v1417 = vunpack.c.h.b16 %v404
    %v1418 = vunpack.c.l.b16 %v405
    %v1419 = vunpack.c.h.b16 %v405
    %v1420 = vunpack.c.l.b16 %v406
    %v1421 = vunpack.c.h.b16 %v406
    %v1422 = vunpack.c.l.b16 %v407
    %v1423 = vunpack.c.l.b16 %v408
    %v1424 = vunpack.c.h.b16 %v408
    %v1425 = vunpack.c.l.b16 %v409
    %v1426 = vunpack.c.h.b16 %v409
    %v1427 = vunpack.c.l.b16 %v410
    %v1428 = vunpack.c.h.b16 %v410
    %v1429 = vunpack.c.l.b16 %v411
    %v1430 = vunpack.c.l.b16 %v412
    %v1431 = vunpack.c.h.b16 %v412
    %v1432 = vunpack.c.l.b16 %v413
    %v1433 = vunpack.c.h.b16 %v413
    %v1434 = vunpack.c.l.b16 %v414
    %v1435 = vunpack.c.h.b16 %v414
    %v1436 = vunpack.c.l.b16 %v415
    %v1437 = vunpack.c.l.b16 %v416
    %v1438 = vunpack.c.h.b16 %v416
    %v1439 = vunpack.c.l.b16 %v417
    %v1440 = vunpack.c.h.b16 %v417
    %v1441 = vunpack.c.l.b16 %v418
    %v1442 = vunpack.c.h.b16 %v418
    %v1443 = vunpack.c.l.b16 %v419
    %v1444 = vunpack.c.l.b16 %v420
    %v1445 = vunpack.c.h.b16 %v420
    %v1446 = vunpack.c.l.b16 %v421
    %v1447 = vunpack.c.h.b16 %v421
    %v1448 = vunpack.c.l.b16 %v422
    %v1449 = vunpack.c.h.b16 %v422
    %v1450 = vunpack.c.l.b16 %v423
    %v1451 = vunpack.c.l.b16 %v424
    %v1452 = vunpack.c.h.b16 %v424
    %v1453 = vunpack.c.l.b16 %v425
    %v1454 = vunpack.c.h.b16 %v425
    %v1455 = vunpack.c.l.b16 %v426
    %v1456 = vunpack.c.h.b16 %v426
    %v1457 = vunpack.c.l.b16 %v427
    %v1458 = vunpack.c.l.b16 %v428
    %v1459 = vunpack.c.h.b16 %v428
    %v1460 = vunpack.c.l.b16 %v429
    %v1461 = vunpack.c.h.b16 %v429
    %v1462 = vunpack.c.l.b16 %v430
    %v1463 = vunpack.c.h.b16 %v430
    %v1464 = vunpack.c.l.b16 %v431
    %v1465 = vunpack.c.l.b16 %v432
    %v1466 = vunpack.c.h.b16 %v432
    %v1467 = vunpack.c.l.b16 %v433
    %v1468 = vunpack.c.h.b16 %v433
    %v1469 = vunpack.c.l.b16 %v434
    %v1470 = vunpack.c.h.b16 %v434
    %v1471 = vunpack.c.l.b16 %v435
    %v1472 = vunpack.c.l.b16 %v436
    %v1473 = vunpack.c.h.b16 %v436
    %v1474 = vunpack.c.l.b16 %v437
    %v1475 = vunpack.c.h.b16 %v437
    %v1476 = vunpack.c.l.b16 %v438
    %v1477 = vunpack.c.h.b16 %v438
    %v1478 = vunpack.c.l.b16 %v439
    %v1479 = vunpack.c.l.b16 %v440
    %v1480 = vunpack.c.h.b16 %v440
    %v1481 = vunpack.c.l.b16 %v441
    %v1482 = vunpack.c.h.b16 %v441
    %v1483 = vunpack.c.l.b16 %v442
    %v1484 = vunpack.c.h.b16 %v442
    %v1485 = vunpack.c.l.b16 %v443
    %v1486 = vunpack.c.l.b16 %v444
    %v1487 = vunpack.c.h.b16 %v444
    %v1488 = vunpack.c.l.b16 %v445
    %v1489 = vunpack.c.h.b16 %v445
    %v1490 = vunpack.c.l.b16 %v446
    %v1491 = vunpack.c.h.b16 %v446
    %v1492 = vunpack.c.l.b16 %v447
    %v1493 = vunpack.c.l.b16 %v448
    %v1494 = vunpack.c.h.b16 %v448
    %v1495 = vunpack.c.l.b16 %v449
    %v1496 = vunpack.c.h.b16 %v449
    %v1497 = vunpack.c.l.b16 %v450
    %v1498 = vunpack.c.h.b16 %v450
    %v1499 = vunpack.c.l.b16 %v451
    %v1500 = vunpack.c.l.b16 %v452
    %v1501 = vunpack.c.h.b16 %v452
    %v1502 = vunpack.c.l.b16 %v453
    %v1503 = vunpack.c.h.b16 %v453
    %v1504 = vunpack.c.l.b16 %v454
    %v1505 = vunpack.c.h.b16 %v454
    %v1506 = vunpack.c.l.b16 %v455
    %v1507 = vunpack.c.l.b16 %v456
    %v1508 = vunpack.c.h.b16 %v456
    %v1509 = vunpack.c.l.b16 %v457
    %v1510 = vunpack.c.h.b16 %v457
    %v1511 = vunpack.c.l.b16 %v458
    %v1512 = vunpack.c.h.b16 %v458
    %v1513 = vunpack.c.l.b16 %v459
    %v1514 = vunpack.c.l.b16 %v460
    %v1515 = vunpack.c.h.b16 %v460
    %v1516 = vunpack.c.l.b16 %v461
    %v1517 = vunpack.c.h.b16 %v461
    %v1518 = vunpack.c.l.b16 %v462
    %v1519 = vunpack.c.h.b16 %v462
    %v1520 = vunpack.c.l.b16 %v463
    %v1521 = vunpack.c.l.b16 %v464
    %v1522 = vunpack.c.h.b16 %v464
    %v1523 = vunpack.c.l.b16 %v465
    %v1524 = vunpack.c.h.b16 %v465
    %v1525 = vunpack.c.l.b16 %v466
    %v1526 = vunpack.c.h.b16 %v466
    %v1527 = vunpack.c.l.b16 %v467
    %v1528 = vunpack.c.l.b16 %v468
    %v1529 = vunpack.c.h.b16 %v468
    %v1530 = vunpack.c.l.b16 %v469
    %v1531 = vunpack.c.h.b16 %v469
    %v1532 = vunpack.c.l.b16 %v470
    %v1533 = vunpack.c.h.b16 %v470
    %v1534 = vunpack.c.l.b16 %v471
    %v1535 = vunpack.c.l.b16 %v472
    %v1536 = vunpack.c.h.b16 %v472
    %v1537 = vunpack.c.l.b16 %v473
    %v1538 = vunpack.c.h.b16 %v473
    %v1539 = vunpack.c.l.b16 %v474
    %v1540 = vunpack.c.h.b16 %v474
    %v1541 = vunpack.c.l.b16 %v475
    %v1542 = vunpack.c.l.b16 %v476
    %v1543 = vunpack.c.h.b16 %v476
    %v1544 = vunpack.c.l.b16 %v477
    %v1545 = vunpack.c.h.b16 %v477
    %v1546 = vunpack.c.l.b16 %v478
    %v1547 = vunpack.c.h.b16 %v478
    %v1548 = vunpack.c.l.b16 %v479
    %v1549 = vunpack.c.l.b16 %v480
    %v1550 = vunpack.c.h.b16 %v480
    %v1551 = vunpack.c.l.b16 %v481
    %v1552 = vunpack.c.h.b16 %v481
    %v1553 = vunpack.c.l.b16 %v482
    %v1554 = vunpack.c.h.b16 %v482
    %v1555 = vunpack.c.l.b16 %v483
    %v1556 = vunpack.c.l.b16 %v484
    %v1557 = vunpack.c.h.b16 %v484
    %v1558 = vunpack.c.l.b16 %v485
    %v1559 = vunpack.c.h.b16 %v485
    %v1560 = vunpack.c.l.b16 %v486
    %v1561 = vunpack.c.h.b16 %v486
    %v1562 = vunpack.c.l.b16 %v487
    %v1563 = vunpack.c.l.b16 %v488
    %v1564 = vunpack.c.h.b16 %v488
    %v1565 = vunpack.c.l.b16 %v489
    %v1566 = vunpack.c.h.b16 %v489
    %v1567 = vunpack.c.l.b16 %v490
    %v1568 = vunpack.c.h.b16 %v490
    %v1569 = vunpack.c.l.b16 %v491
    %v1570 = vpack.c.b16 %v891, %v884
    %v1571 = vpack.c.b16 %v892, %v885
    %v1572 = vpack.c.b16 %v893, %v886
    %v1573 = vpack.c.b16 %v894, %v887
    %v1574 = vpack.c.b16 %v895, %v888
    %v1575 = vpack.c.b16 %v896, %v889
    %v1576 = vpack.c.b16 %v897, %v890
    %v1577 = vpack.c.b16 %v905, %v898
    %v1578 = vpack.c.b16 %v906, %v899
    %v1579 = vpack.c.b16 %v907, %v900
    %v1580 = vpack.c.b16 %v908, %v901
    %v1581 = vpack.c.b16 %v909, %v902
    %v1582 = vpack.c.b16 %v910, %v903
    %v1583 = vpack.c.b16 %v911, %v904
    %v1584 = vpack.c.b16 %v919, %v912
    %v1585 = vpack.c.b16 %v920, %v913
    %v1586 = vpack.c.b16 %v921, %v914
    %v1587 = vpack.c.b16 %v922, %v915
    %v1588 = vpack.c.b16 %v923, %v916
    %v1589 = vpack.c.b16 %v924, %v917
    %v1590 = vpack.c.b16 %v925, %v918
    %v1591 = vpack.c.b16 %v933, %v926
    %v1592 = vpack.c.b16 %v934, %v927
    %v1593 = vpack.c.b16 %v935, %v928
    %v1594 = vpack.c.b16 %v936, %v929
    %v1595 = vpack.c.b16 %v937, %v930
    %v1596 = vpack.c.b16 %v938, %v931
    %v1597 = vpack.c.b16 %v939, %v932
    %v1598 = vpack.c.b16 %v947, %v940
    %v1599 = vpack.c.b16 %v948, %v941
    %v1600 = vpack.c.b16 %v949, %v942
    %v1601 = vpack.c.b16 %v950, %v943
    %v1602 = vpack.c.b16 %v951, %v944
    %v1603 = vpack.c.b16 %v952, %v945
    %v1604 = vpack.c.b16 %v953, %v946
    %v1605 = vpack.c.b16 %v961, %v954
    %v1606 = vpack.c.b16 %v962, %v955
    %v1607 = vpack.c.b16 %v963, %v956
    %v1608 = vpack.c.b16 %v964, %v957
    %v1609 = vpack.c.b16 %v965, %v958
    %v1610 = vpack.c.b16 %v966, %v959
    %v1611 = vpack.c.b16 %v967, %v960
    %v1612 = vpack.c.b16 %v975, %v968
    %v1613 = vpack.c.b16 %v976, %v969
    %v1614 = vpack.c.b16 %v977, %v970
    %v1615 = vpack.c.b16 %v978, %v971
    %v1616 = vpack.c.b16 %v979, %v972
    %v1617 = vpack.c.b16 %v980, %v973
    %v1618 = vpack.c.b16 %v981, %v974
    %v1619 = vpack.c.b16 %v989, %v982
    %v1620 = vpack.c.b16 %v990, %v983
    %v1621 = vpack.c.b16 %v991, %v984
    %v1622 = vpack.c.b16 %v992, %v985
    %v1623 = vpack.c.b16 %v993, %v986
    %v1624 = vpack.c.b16 %v994, %v987
    %v1625 = vpack.c.b16 %v995, %v988
    %v1626 = vpack.c.b16 %v1003, %v996
    %v1627 = vpack.c.b16 %v1004, %v997
    %v1628 = vpack.c.b16 %v1005, %v998
    %v1629 = vpack.c.b16 %v1006, %v999
    %v1630 = vpack.c.b16 %v1007, %v1000
    %v1631 = vpack.c.b16 %v1008, %v1001
    %v1632 = vpack.c.b16 %v1009, %v1002
    %v1633 = vpack.c.b16 %v1017, %v1010
    %v1634 = vpack.c.b16 %v1018, %v1011
    %v1635 = vpack.c.b16 %v1019, %v1012
    %v1636 = vpack.c.b16 %v1020, %v1013
    %v1637 = vpack.c.b16 %v1021, %v1014
    %v1638 = vpack.c.b16 %v1022, %v1015
    %v1639 = vpack.c.b16 %v1023, %v1016
    %v1640 = vpack.c.b16 %v1031, %v1024
    %v1641 = vpack.c.b16 %v1032, %v1025
    %v1642 = vpack.c.b16 %v1033, %v1026
    %v1643 = vpack.c.b16 %v1034, %v1027
    %v1644 = vpack.c.b16 %v1035, %v1028
    %v1645 = vpack.c.b16 %v1036, %v1029
    %v1646 = vpack.c.b16 %v1037, %v1030
    %v1647 = vpack.c.b16 %v1045, %v1038
    %v1648 = vpack.c.b16 %v1046, %v1039
    %v1649 = vpack.c.b16 %v1047, %v1040
    %v1650 = vpack.c.b16 %v1048, %v1041
    %v1651 = vpack.c.b16 %v1049, %v1042
    %v1652 = vpack.c.b16 %v1050, %v1043
    %v1653 = vpack.c.b16 %v1051, %v1044
    %v1654 = vpack.c.b16 %v1059, %v1052
    %v1655 = vpack.c.b16 %v1060, %v1053
    %v1656 = vpack.c.b16 %v1061, %v1054
    %v1657 = vpack.c.b16 %v1062, %v1055
    %v1658 = vpack.c.b16 %v1063, %v1056
    %v1659 = vpack.c.b16 %v1064, %v1057
    %v1660 = vpack.c.b16 %v1065, %v1058
    %v1661 = vpack.c.b16 %v1073, %v1066
    %v1662 = vpack.c.b16 %v1074, %v1067
    %v1663 = vpack.c.b16 %v1075, %v1068
    %v1664 = vpack.c.b16 %v1076, %v1069
    %v1665 = vpack.c.b16 %v1077, %v1070
    %v1666 = vpack.c.b16 %v1078, %v1071
    %v1667 = vpack.c.b16 %v1079, %v1072
    %v1668 = vpack.c.b16 %v1087, %v1080
    %v1669 = vpack.c.b16 %v1088, %v1081
    %v1670 = vpack.c.b16 %v1089, %v1082
    %v1671 = vpack.c.b16 %v1090, %v1083
    %v1672 = vpack.c.b16 %v1091, %v1084
    %v1673 = vpack.c.b16 %v1092, %v1085
    %v1674 = vpack.c.b16 %v1093, %v1086
    %v1675 = vpack.c.b16 %v1101, %v1094
    %v1676 = vpack.c.b16 %v1102, %v1095
    %v1677 = vpack.c.b16 %v1103, %v1096
    %v1678 = vpack.c.b16 %v1104, %v1097
    %v1679 = vpack.c.b16 %v1105, %v1098
    %v1680 = vpack.c.b16 %v1106, %v1099
    %v1681 = vpack.c.b16 %v1107, %v1100
    %v1682 = vpack.c.b16 %v1115, %v1108
    %v1683 = vpack.c.b16 %v1116, %v1109
    %v1684 = vpack.c.b16 %v1117, %v1110
    %v1685 = vpack.c.b16 %v1118, %v1111
    %v1686 = vpack.c.b16 %v1119, %v1112
    %v1687 = vpack.c.b16 %v1120, %v1113
    %v1688 = vpack.c.b16 %v1121, %v1114
    %v1689 = vpack.c.b16 %v1129, %v1122
    %v1690 = vpack.c.b16 %v1130, %v1123
    %v1691 = vpack.c.b16 %v1131, %v1124
    %v1692 = vpack.c.b16 %v1132, %v1125
    %v1693 = vpack.c.b16 %v1133, %v1126
    %v1694 = vpack.c.b16 %v1134, %v1127
    %v1695 = vpack.c.b16 %v1135, %v1128
    %v1696 = vpack.c.b16 %v1143, %v1136
    %v1697 = vpack.c.b16 %v1144, %v1137
    %v1698 = vpack.c.b16 %v1145, %v1138
    %v1699 = vpack.c.b16 %v1146, %v1139
    %v1700 = vpack.c.b16 %v1147, %v1140
    %v1701 = vpack.c.b16 %v1148, %v1141
    %v1702 = vpack.c.b16 %v1149, %v1142
    %v1703 = vpack.c.b16 %v1157, %v1150
    %v1704 = vpack.c.b16 %v1158, %v1151
    %v1705 = vpack.c.b16 %v1159, %v1152
    %v1706 = vpack.c.b16 %v1160, %v1153
    %v1707 = vpack.c.b16 %v1161, %v1154
    %v1708 = vpack.c.b16 %v1162, %v1155
    %v1709 = vpack.c.b16 %v1163, %v1156
    %v1710 = vpack.c.b16 %v1171, %v1164
    %v1711 = vpack.c.b16 %v1172, %v1165
    %v1712 = vpack.c.b16 %v1173, %v1166
    %v1713 = vpack.c.b16 %v1174, %v1167
    %v1714 = vpack.c.b16 %v1175, %v1168
    %v1715 = vpack.c.b16 %v1176, %v1169
    %v1716 = vpack.c.b16 %v1177, %v1170
    %v1717 = vpack.c.b16 %v1185, %v1178
    %v1718 = vpack.c.b16 %v1186, %v1179
    %v1719 = vpack.c.b16 %v1187, %v1180
    %v1720 = vpack.c.b16 %v1188, %v1181
    %v1721 = vpack.c.b16 %v1189, %v1182
    %v1722 = vpack.c.b16 %v1190, %v1183
    %v1723 = vpack.c.b16 %v1191, %v1184
    %v1724 = vpack.c.b16 %v1199, %v1192
    %v1725 = vpack.c.b16 %v1200, %v1193
    %v1726 = vpack.c.b16 %v1201, %v1194
    %v1727 = vpack.c.b16 %v1202, %v1195
    %v1728 = vpack.c.b16 %v1203, %v1196
    %v1729 = vpack.c.b16 %v1204, %v1197
    %v1730 = vpack.c.b16 %v1205, %v1198
    %v1731 = vpack.c.b16 %v1213, %v1206
    %v1732 = vpack.c.b16 %v1214, %v1207
    %v1733 = vpack.c.b16 %v1215, %v1208
    %v1734 = vpack.c.b16 %v1216, %v1209
    %v1735 = vpack.c.b16 %v1217, %v1210
    %v1736 = vpack.c.b16 %v1218, %v1211
    %v1737 = vpack.c.b16 %v1219, %v1212
    %v1738 = vpack.c.b16 %v1227, %v1220
    %v1739 = vpack.c.b16 %v1228, %v1221
    %v1740 = vpack.c.b16 %v1229, %v1222
    %v1741 = vpack.c.b16 %v1230, %v1223
    %v1742 = vpack.c.b16 %v1231, %v1224
    %v1743 = vpack.c.b16 %v1232, %v1225
    %v1744 = vpack.c.b16 %v1233, %v1226
    %v1745 = vpack.c.b16 %v1241, %v1234
    %v1746 = vpack.c.b16 %v1242, %v1235
    %v1747 = vpack.c.b16 %v1243, %v1236
    %v1748 = vpack.c.b16 %v1244, %v1237
    %v1749 = vpack.c.b16 %v1245, %v1238
    %v1750 = vpack.c.b16 %v1246, %v1239
    %v1751 = vpack.c.b16 %v1247, %v1240
    %v1752 = vpack.c.b16 %v1255, %v1248
    %v1753 = vpack.c.b16 %v1256, %v1249
    %v1754 = vpack.c.b16 %v1257, %v1250
    %v1755 = vpack.c.b16 %v1258, %v1251
    %v1756 = vpack.c.b16 %v1259, %v1252
    %v1757 = vpack.c.b16 %v1260, %v1253
    %v1758 = vpack.c.b16 %v1261, %v1254
    %v1759 = vpack.c.b16 %v1269, %v1262
    %v1760 = vpack.c.b16 %v1270, %v1263
    %v1761 = vpack.c.b16 %v1271, %v1264
    %v1762 = vpack.c.b16 %v1272, %v1265
    %v1763 = vpack.c.b16 %v1273, %v1266
    %v1764 = vpack.c.b16 %v1274, %v1267
    %v1765 = vpack.c.b16 %v1275, %v1268
    %v1766 = vpack.c.b16 %v1283, %v1276
    %v1767 = vpack.c.b16 %v1284, %v1277
    %v1768 = vpack.c.b16 %v1285, %v1278
    %v1769 = vpack.c.b16 %v1286, %v1279
    %v1770 = vpack.c.b16 %v1287, %v1280
    %v1771 = vpack.c.b16 %v1288, %v1281
    %v1772 = vpack.c.b16 %v1289, %v1282
    %v1773 = vpack.c.b16 %v1297, %v1290
    %v1774 = vpack.c.b16 %v1298, %v1291
    %v1775 = vpack.c.b16 %v1299, %v1292
    %v1776 = vpack.c.b16 %v1300, %v1293
    %v1777 = vpack.c.b16 %v1301, %v1294
    %v1778 = vpack.c.b16 %v1302, %v1295
    %v1779 = vpack.c.b16 %v1303, %v1296
    %v1780 = vpack.c.b16 %v1311, %v1304
    %v1781 = vpack.c.b16 %v1312, %v1305
    %v1782 = vpack.c.b16 %v1313, %v1306
    %v1783 = vpack.c.b16 %v1314, %v1307
    %v1784 = vpack.c.b16 %v1315, %v1308
    %v1785 = vpack.c.b16 %v1316, %v1309
    %v1786 = vpack.c.b16 %v1317, %v1310
    %v1787 = vpack.c.b16 %v1325, %v1318
    %v1788 = vpack.c.b16 %v1326, %v1319
    %v1789 = vpack.c.b16 %v1327, %v1320
    %v1790 = vpack.c.b16 %v1328, %v1321
    %v1791 = vpack.c.b16 %v1329, %v1322
    %v1792 = vpack.c.b16 %v1330, %v1323
    %v1793 = vpack.c.b16 %v1331, %v1324
    %v1794 = vpack.c.b16 %v1339, %v1332
    %v1795 = vpack.c.b16 %v1340, %v1333
    %v1796 = vpack.c.b16 %v1341, %v1334
    %v1797 = vpack.c.b16 %v1342, %v1335
    %v1798 = vpack.c.b16 %v1343, %v1336
    %v1799 = vpack.c.b16 %v1344, %v1337
    %v1800 = vpack.c.b16 %v1345, %v1338
    %v1801 = vpack.c.b16 %v1353, %v1346
    %v1802 = vpack.c.b16 %v1354, %v1347
    %v1803 = vpack.c.b16 %v1355, %v1348
    %v1804 = vpack.c.b16 %v1356, %v1349
    %v1805 = vpack.c.b16 %v1357, %v1350
    %v1806 = vpack.c.b16 %v1358, %v1351
    %v1807 = vpack.c.b16 %v1359, %v1352
    %v1808 = vpack.c.b16 %v1367, %v1360
    %v1809 = vpack.c.b16 %v1368, %v1361
    %v1810 = vpack.c.b16 %v1369, %v1362
    %v1811 = vpack.c.b16 %v1370, %v1363
    %v1812 = vpack.c.b16 %v1371, %v1364
    %v1813 = vpack.c.b16 %v1372, %v1365
    %v1814 = vpack.c.b16 %v1373, %v1366
    %v1815 = vpack.c.b16 %v1381, %v1374
    %v1816 = vpack.c.b16 %v1382, %v1375
    %v1817 = vpack.c.b16 %v1383, %v1376
    %v1818 = vpack.c.b16 %v1384, %v1377
    %v1819 = vpack.c.b16 %v1385, %v1378
    %v1820 = vpack.c.b16 %v1386, %v1379
    %v1821 = vpack.c.b16 %v1387, %v1380
    %v1822 = vpack.c.b16 %v1395, %v1388
    %v1823 = vpack.c.b16 %v1396, %v1389
    %v1824 = vpack.c.b16 %v1397, %v1390
    %v1825 = vpack.c.b16 %v1398, %v1391
    %v1826 = vpack.c.b16 %v1399, %v1392
    %v1827 = vpack.c.b16 %v1400, %v1393
    %v1828 = vpack.c.b16 %v1401, %v1394
    %v1829 = vpack.c.b16 %v1409, %v1402
    %v1830 = vpack.c.b16 %v1410, %v1403
    %v1831 = vpack.c.b16 %v1411, %v1404
    %v1832 = vpack.c.b16 %v1412, %v1405
    %v1833 = vpack.c.b16 %v1413, %v1406
    %v1834 = vpack.c.b16 %v1414, %v1407
    %v1835 = vpack.c.b16 %v1415, %v1408
    %v1836 = vpack.c.b16 %v1423, %v1416
    %v1837 = vpack.c.b16 %v1424, %v1417
    %v1838 = vpack.c.b16 %v1425, %v1418
    %v1839 = vpack.c.b16 %v1426, %v1419
    %v1840 = vpack.c.b16 %v1427, %v1420
    %v1841 = vpack.c.b16 %v1428, %v1421
    %v1842 = vpack.c.b16 %v1429, %v1422
    %v1843 = vpack.c.b16 %v1437, %v1430
    %v1844 = vpack.c.b16 %v1438, %v1431
    %v1845 = vpack.c.b16 %v1439, %v1432
    %v1846 = vpack.c.b16 %v1440, %v1433
    %v1847 = vpack.c.b16 %v1441, %v1434
    %v1848 = vpack.c.b16 %v1442, %v1435
    %v1849 = vpack.c.b16 %v1443, %v1436
    %v1850 = vpack.c.b16 %v1451, %v1444
    %v1851 = vpack.c.b16 %v1452, %v1445
    %v1852 = vpack.c.b16 %v1453, %v1446
    %v1853 = vpack.c.b16 %v1454, %v1447
    %v1854 = vpack.c.b16 %v1455, %v1448
    %v1855 = vpack.c.b16 %v1456, %v1449
    %v1856 = vpack.c.b16 %v1457, %v1450
    %v1857 = vpack.c.b16 %v1465, %v1458
    %v1858 = vpack.c.b16 %v1466, %v1459
    %v1859 = vpack.c.b16 %v1467, %v1460
    %v1860 = vpack.c.b16 %v1468, %v1461
    %v1861 = vpack.c.b16 %v1469, %v1462
    %v1862 = vpack.c.b16 %v1470, %v1463
    %v1863 = vpack.c.b16 %v1471, %v1464
    %v1864 = vpack.c.b16 %v1479, %v1472
    %v1865 = vpack.c.b16 %v1480, %v1473
    %v1866 = vpack.c.b16 %v1481, %v1474
    %v1867 = vpack.c.b16 %v1482, %v1475
    %v1868 = vpack.c.b16 %v1483, %v1476
    %v1869 = vpack.c.b16 %v1484, %v1477
    %v1870 = vpack.c.b16 %v1485, %v1478
    %v1871 = vpack.c.b16 %v1493, %v1486
    %v1872 = vpack.c.b16 %v1494, %v1487
    %v1873 = vpack.c.b16 %v1495, %v1488
    %v1874 = vpack.c.b16 %v1496, %v1489
    %v1875 = vpack.c.b16 %v1497, %v1490
    %v1876 = vpack.c.b16 %v1498, %v1491
    %v1877 = vpack.c.b16 %v1499, %v1492
    %v1878 = vpack.c.b16 %v1507, %v1500
    %v1879 = vpack.c.b16 %v1508, %v1501
    %v1880 = vpack.c.b16 %v1509, %v1502
    %v1881 = vpack.c.b16 %v1510, %v1503
    %v1882 = vpack.c.b16 %v1511, %v1504
    %v1883 = vpack.c.b16 %v1512, %v1505
    %v1884 = vpack.c.b16 %v1513, %v1506
    %v1885 = vpack.c.b16 %v1521, %v1514
    %v1886 = vpack.c.b16 %v1522, %v1515
    %v1887 = vpack.c.b16 %v1523, %v1516
    %v1888 = vpack.c.b16 %v1524, %v1517
    %v1889 = vpack.c.b16 %v1525, %v1518
    %v1890 = vpack.c.b16 %v1526, %v1519
    %v1891 = vpack.c.b16 %v1527, %v1520
    %v1892 = vpack.c.b16 %v1535, %v1528
    %v1893 = vpack.c.b16 %v1536, %v1529
    %v1894 = vpack.c.b16 %v1537, %v1530
    %v1895 = vpack.c.b16 %v1538, %v1531
    %v1896 = vpack.c.b16 %v1539, %v1532
    %v1897 = vpack.c.b16 %v1540, %v1533
    %v1898 = vpack.c.b16 %v1541, %v1534
    %v1899 = vpack.c.b16 %v1549, %v1542
    %v1900 = vpack.c.b16 %v1550, %v1543
    %v1901 = vpack.c.b16 %v1551, %v1544
    %v1902 = vpack.c.b16 %v1552, %v1545
    %v1903 = vpack.c.b16 %v1553, %v1546
    %v1904 = vpack.c.b16 %v1554, %v1547
    %v1905 = vpack.c.b16 %v1555, %v1548
    %v1906 = vpack.c.b16 %v1563, %v1556
    %v1907 = vpack.c.b16 %v1564, %v1557
    %v1908 = vpack.c.b16 %v1565, %v1558
    %v1909 = vpack.c.b16 %v1566, %v1559
    %v1910 = vpack.c.b16 %v1567, %v1560
    %v1911 = vpack.c.b16 %v1568, %v1561
    %v1912 = vpack.c.b16 %v1569, %v1562
    %vm2256 = vcmask 130048
    %v2258 = vsel %vm2256, %v99, 0
    %2260 = vmatpush.bf16.msra.mxu0 %v1619
    %2261 = vmatpush.bf16.msra.mxu0 %v1612
    %2262 = vmatpush.bf16.msra.mxu0 %v1605
    %2263 = vmatpush.bf16.msra.mxu0 %v1598
    %2264 = vmatpush.bf16.msra.mxu0 %v1591
    %2265 = vmatpush.bf16.msra.mxu0 %v1584
    %2266 = vmatpush.bf16.msra.mxu0 %v1577
    %2267 = vmatpush.bf16.msra.mxu0 %v1570
    %2268 = vmatmul.bf16.gmra.mxu0 %v93
    %v2269 = vpop.f32.mrf.mxu0
    %v2270 = vadd.f32 0.0, %v2269
    %v2271 = vpop.f32.mrf.mxu0
    %2272 = vdwg.mxu0
    %2273 = vmatpush.bf16.msra.mxu0 %v1675
    %2274 = vmatpush.bf16.msra.mxu0 %v1668
    %2275 = vmatpush.bf16.msra.mxu0 %v1661
    %2276 = vmatpush.bf16.msra.mxu0 %v1654
    %2277 = vmatpush.bf16.msra.mxu0 %v1647
    %2278 = vmatpush.bf16.msra.mxu0 %v1640
    %2279 = vmatpush.bf16.msra.mxu0 %v1633
    %2280 = vmatpush.bf16.msra.mxu0 %v1626
    %2281 = vmatmul.bf16.gmra.mxu0 %v94
    %v2282 = vpop.f32.mrf.mxu0
    %v2283 = vadd.f32 %v2270, %v2282
    %v2284 = vpop.f32.mrf.mxu0
    %2285 = vdwg.mxu0
    %2286 = vmatpush.bf16.msra.mxu0 %v1731
    %2287 = vmatpush.bf16.msra.mxu0 %v1724
    %2288 = vmatpush.bf16.msra.mxu0 %v1717
    %2289 = vmatpush.bf16.msra.mxu0 %v1710
    %2290 = vmatpush.bf16.msra.mxu0 %v1703
    %2291 = vmatpush.bf16.msra.mxu0 %v1696
    %2292 = vmatpush.bf16.msra.mxu0 %v1689
    %2293 = vmatpush.bf16.msra.mxu0 %v1682
    %2294 = vmatmul.bf16.gmra.mxu0 %v95
    %v2295 = vpop.f32.mrf.mxu0
    %v2296 = vadd.f32 %v2283, %v2295
    %v2297 = vpop.f32.mrf.mxu0
    %2298 = vdwg.mxu0
    %2299 = vmatpush.bf16.msra.mxu0 %v1787
    %2300 = vmatpush.bf16.msra.mxu0 %v1780
    %2301 = vmatpush.bf16.msra.mxu0 %v1773
    %2302 = vmatpush.bf16.msra.mxu0 %v1766
    %2303 = vmatpush.bf16.msra.mxu0 %v1759
    %2304 = vmatpush.bf16.msra.mxu0 %v1752
    %2305 = vmatpush.bf16.msra.mxu0 %v1745
    %2306 = vmatpush.bf16.msra.mxu0 %v1738
    %2307 = vmatmul.bf16.gmra.mxu0 %v96
    %v2308 = vpop.f32.mrf.mxu0
    %v2309 = vadd.f32 %v2296, %v2308
    %v2310 = vpop.f32.mrf.mxu0
    %2311 = vdwg.mxu0
    %2312 = vmatpush.bf16.msra.mxu0 %v1843
    %2313 = vmatpush.bf16.msra.mxu0 %v1836
    %2314 = vmatpush.bf16.msra.mxu0 %v1829
    %2315 = vmatpush.bf16.msra.mxu0 %v1822
    %2316 = vmatpush.bf16.msra.mxu0 %v1815
    %2317 = vmatpush.bf16.msra.mxu0 %v1808
    %2318 = vmatpush.bf16.msra.mxu0 %v1801
    %2319 = vmatpush.bf16.msra.mxu0 %v1794
    %2320 = vmatmul.bf16.gmra.mxu0 %v97
    %v2321 = vpop.f32.mrf.mxu0
    %v2322 = vadd.f32 %v2309, %v2321
    %v2323 = vpop.f32.mrf.mxu0
    %2324 = vdwg.mxu0
    %2325 = vmatpush.bf16.msra.mxu0 %v1899
    %2326 = vmatpush.bf16.msra.mxu0 %v1892
    %2327 = vmatpush.bf16.msra.mxu0 %v1885
    %2328 = vmatpush.bf16.msra.mxu0 %v1878
    %2329 = vmatpush.bf16.msra.mxu0 %v1871
    %2330 = vmatpush.bf16.msra.mxu0 %v1864
    %2331 = vmatpush.bf16.msra.mxu0 %v1857
    %2332 = vmatpush.bf16.msra.mxu0 %v1850
    %2333 = vmatmul.bf16.gmra.mxu0 %v98
    %v2334 = vpop.f32.mrf.mxu0
    %v2335 = vadd.f32 %v2322, %v2334
    %v2336 = vpop.f32.mrf.mxu0
    %2337 = vdwg.mxu0
    %2338 = vmatpush.bf16.msra.mxu0 0
    %2339 = vmatpush.bf16.msra.mxu0 0
    %2340 = vmatpush.bf16.msra.mxu0 0
    %2341 = vmatpush.bf16.msra.mxu0 0
    %2342 = vmatpush.bf16.msra.mxu0 0
    %2343 = vmatpush.bf16.msra.mxu0 0
    %2344 = vmatpush.bf16.msra.mxu0 0
    %2345 = vmatpush.bf16.msra.mxu0 %v1906
    %2346 = vmatmul.bf16.gmra.mxu0 %v2258
    %v2347 = vpop.f32.mrf.mxu0
    %v2348 = vadd.f32 %v2335, %v2347
    %v2349 = vpop.f32.mrf.mxu0
    %2350 = vdwg.mxu0
    %2351 = vmatpush.bf16.msra.mxu0 %v1620
    %2352 = vmatpush.bf16.msra.mxu0 %v1613
    %2353 = vmatpush.bf16.msra.mxu0 %v1606
    %2354 = vmatpush.bf16.msra.mxu0 %v1599
    %2355 = vmatpush.bf16.msra.mxu0 %v1592
    %2356 = vmatpush.bf16.msra.mxu0 %v1585
    %2357 = vmatpush.bf16.msra.mxu0 %v1578
    %2358 = vmatpush.bf16.msra.mxu0 %v1571
    %2359 = vmatmul.bf16.gmra.mxu0 %v93
    %v2360 = vpop.f32.mrf.mxu0
    %v2361 = vadd.f32 0.0, %v2360
    %v2362 = vpop.f32.mrf.mxu0
    %2363 = vdwg.mxu0
    %2364 = vmatpush.bf16.msra.mxu0 %v1676
    %2365 = vmatpush.bf16.msra.mxu0 %v1669
    %2366 = vmatpush.bf16.msra.mxu0 %v1662
    %2367 = vmatpush.bf16.msra.mxu0 %v1655
    %2368 = vmatpush.bf16.msra.mxu0 %v1648
    %2369 = vmatpush.bf16.msra.mxu0 %v1641
    %2370 = vmatpush.bf16.msra.mxu0 %v1634
    %2371 = vmatpush.bf16.msra.mxu0 %v1627
    %2372 = vmatmul.bf16.gmra.mxu0 %v94
    %v2373 = vpop.f32.mrf.mxu0
    %v2374 = vadd.f32 %v2361, %v2373
    %v2375 = vpop.f32.mrf.mxu0
    %2376 = vdwg.mxu0
    %2377 = vmatpush.bf16.msra.mxu0 %v1732
    %2378 = vmatpush.bf16.msra.mxu0 %v1725
    %2379 = vmatpush.bf16.msra.mxu0 %v1718
    %2380 = vmatpush.bf16.msra.mxu0 %v1711
    %2381 = vmatpush.bf16.msra.mxu0 %v1704
    %2382 = vmatpush.bf16.msra.mxu0 %v1697
    %2383 = vmatpush.bf16.msra.mxu0 %v1690
    %2384 = vmatpush.bf16.msra.mxu0 %v1683
    %2385 = vmatmul.bf16.gmra.mxu0 %v95
    %v2386 = vpop.f32.mrf.mxu0
    %v2387 = vadd.f32 %v2374, %v2386
    %v2388 = vpop.f32.mrf.mxu0
    %2389 = vdwg.mxu0
    %2390 = vmatpush.bf16.msra.mxu0 %v1788
    %2391 = vmatpush.bf16.msra.mxu0 %v1781
    %2392 = vmatpush.bf16.msra.mxu0 %v1774
    %2393 = vmatpush.bf16.msra.mxu0 %v1767
    %2394 = vmatpush.bf16.msra.mxu0 %v1760
    %2395 = vmatpush.bf16.msra.mxu0 %v1753
    %2396 = vmatpush.bf16.msra.mxu0 %v1746
    %2397 = vmatpush.bf16.msra.mxu0 %v1739
    %2398 = vmatmul.bf16.gmra.mxu0 %v96
    %v2399 = vpop.f32.mrf.mxu0
    %v2400 = vadd.f32 %v2387, %v2399
    %v2401 = vpop.f32.mrf.mxu0
    %2402 = vdwg.mxu0
    %2403 = vmatpush.bf16.msra.mxu0 %v1844
    %2404 = vmatpush.bf16.msra.mxu0 %v1837
    %2405 = vmatpush.bf16.msra.mxu0 %v1830
    %2406 = vmatpush.bf16.msra.mxu0 %v1823
    %2407 = vmatpush.bf16.msra.mxu0 %v1816
    %2408 = vmatpush.bf16.msra.mxu0 %v1809
    %2409 = vmatpush.bf16.msra.mxu0 %v1802
    %2410 = vmatpush.bf16.msra.mxu0 %v1795
    %2411 = vmatmul.bf16.gmra.mxu0 %v97
    %v2412 = vpop.f32.mrf.mxu0
    %v2413 = vadd.f32 %v2400, %v2412
    %v2414 = vpop.f32.mrf.mxu0
    %2415 = vdwg.mxu0
    %2416 = vmatpush.bf16.msra.mxu0 %v1900
    %2417 = vmatpush.bf16.msra.mxu0 %v1893
    %2418 = vmatpush.bf16.msra.mxu0 %v1886
    %2419 = vmatpush.bf16.msra.mxu0 %v1879
    %2420 = vmatpush.bf16.msra.mxu0 %v1872
    %2421 = vmatpush.bf16.msra.mxu0 %v1865
    %2422 = vmatpush.bf16.msra.mxu0 %v1858
    %2423 = vmatpush.bf16.msra.mxu0 %v1851
    %2424 = vmatmul.bf16.gmra.mxu0 %v98
    %v2425 = vpop.f32.mrf.mxu0
    %v2426 = vadd.f32 %v2413, %v2425
    %v2427 = vpop.f32.mrf.mxu0
    %2428 = vdwg.mxu0
    %2429 = vmatpush.bf16.msra.mxu0 0
    %2430 = vmatpush.bf16.msra.mxu0 0
    %2431 = vmatpush.bf16.msra.mxu0 0
    %2432 = vmatpush.bf16.msra.mxu0 0
    %2433 = vmatpush.bf16.msra.mxu0 0
    %2434 = vmatpush.bf16.msra.mxu0 0
    %2435 = vmatpush.bf16.msra.mxu0 0
    %2436 = vmatpush.bf16.msra.mxu0 %v1907
    %2437 = vmatmul.bf16.gmra.mxu0 %v2258
    %v2438 = vpop.f32.mrf.mxu0
    %v2439 = vadd.f32 %v2426, %v2438
    %v2440 = vpop.f32.mrf.mxu0
    %2441 = vdwg.mxu0
    %2442 = vmatpush.bf16.msra.mxu0 %v1621
    %2443 = vmatpush.bf16.msra.mxu0 %v1614
    %2444 = vmatpush.bf16.msra.mxu0 %v1607
    %2445 = vmatpush.bf16.msra.mxu0 %v1600
    %2446 = vmatpush.bf16.msra.mxu0 %v1593
    %2447 = vmatpush.bf16.msra.mxu0 %v1586
    %2448 = vmatpush.bf16.msra.mxu0 %v1579
    %2449 = vmatpush.bf16.msra.mxu0 %v1572
    %2450 = vmatmul.bf16.gmra.mxu0 %v93
    %v2451 = vpop.f32.mrf.mxu0
    %v2452 = vadd.f32 0.0, %v2451
    %v2453 = vpop.f32.mrf.mxu0
    %2454 = vdwg.mxu0
    %2455 = vmatpush.bf16.msra.mxu0 %v1677
    %2456 = vmatpush.bf16.msra.mxu0 %v1670
    %2457 = vmatpush.bf16.msra.mxu0 %v1663
    %2458 = vmatpush.bf16.msra.mxu0 %v1656
    %2459 = vmatpush.bf16.msra.mxu0 %v1649
    %2460 = vmatpush.bf16.msra.mxu0 %v1642
    %2461 = vmatpush.bf16.msra.mxu0 %v1635
    %2462 = vmatpush.bf16.msra.mxu0 %v1628
    %2463 = vmatmul.bf16.gmra.mxu0 %v94
    %v2464 = vpop.f32.mrf.mxu0
    %v2465 = vadd.f32 %v2452, %v2464
    %v2466 = vpop.f32.mrf.mxu0
    %2467 = vdwg.mxu0
    %2468 = vmatpush.bf16.msra.mxu0 %v1733
    %2469 = vmatpush.bf16.msra.mxu0 %v1726
    %2470 = vmatpush.bf16.msra.mxu0 %v1719
    %2471 = vmatpush.bf16.msra.mxu0 %v1712
    %2472 = vmatpush.bf16.msra.mxu0 %v1705
    %2473 = vmatpush.bf16.msra.mxu0 %v1698
    %2474 = vmatpush.bf16.msra.mxu0 %v1691
    %2475 = vmatpush.bf16.msra.mxu0 %v1684
    %2476 = vmatmul.bf16.gmra.mxu0 %v95
    %v2477 = vpop.f32.mrf.mxu0
    %v2478 = vadd.f32 %v2465, %v2477
    %v2479 = vpop.f32.mrf.mxu0
    %2480 = vdwg.mxu0
    %2481 = vmatpush.bf16.msra.mxu0 %v1789
    %2482 = vmatpush.bf16.msra.mxu0 %v1782
    %2483 = vmatpush.bf16.msra.mxu0 %v1775
    %2484 = vmatpush.bf16.msra.mxu0 %v1768
    %2485 = vmatpush.bf16.msra.mxu0 %v1761
    %2486 = vmatpush.bf16.msra.mxu0 %v1754
    %2487 = vmatpush.bf16.msra.mxu0 %v1747
    %2488 = vmatpush.bf16.msra.mxu0 %v1740
    %2489 = vmatmul.bf16.gmra.mxu0 %v96
    %v2490 = vpop.f32.mrf.mxu0
    %v2491 = vadd.f32 %v2478, %v2490
    %v2492 = vpop.f32.mrf.mxu0
    %2493 = vdwg.mxu0
    %2494 = vmatpush.bf16.msra.mxu0 %v1845
    %2495 = vmatpush.bf16.msra.mxu0 %v1838
    %2496 = vmatpush.bf16.msra.mxu0 %v1831
    %2497 = vmatpush.bf16.msra.mxu0 %v1824
    %2498 = vmatpush.bf16.msra.mxu0 %v1817
    %2499 = vmatpush.bf16.msra.mxu0 %v1810
    %2500 = vmatpush.bf16.msra.mxu0 %v1803
    %2501 = vmatpush.bf16.msra.mxu0 %v1796
    %2502 = vmatmul.bf16.gmra.mxu0 %v97
    %v2503 = vpop.f32.mrf.mxu0
    %v2504 = vadd.f32 %v2491, %v2503
    %v2505 = vpop.f32.mrf.mxu0
    %2506 = vdwg.mxu0
    %2507 = vmatpush.bf16.msra.mxu0 %v1901
    %2508 = vmatpush.bf16.msra.mxu0 %v1894
    %2509 = vmatpush.bf16.msra.mxu0 %v1887
    %2510 = vmatpush.bf16.msra.mxu0 %v1880
    %2511 = vmatpush.bf16.msra.mxu0 %v1873
    %2512 = vmatpush.bf16.msra.mxu0 %v1866
    %2513 = vmatpush.bf16.msra.mxu0 %v1859
    %2514 = vmatpush.bf16.msra.mxu0 %v1852
    %2515 = vmatmul.bf16.gmra.mxu0 %v98
    %v2516 = vpop.f32.mrf.mxu0
    %v2517 = vadd.f32 %v2504, %v2516
    %v2518 = vpop.f32.mrf.mxu0
    %2519 = vdwg.mxu0
    %2520 = vmatpush.bf16.msra.mxu0 0
    %2521 = vmatpush.bf16.msra.mxu0 0
    %2522 = vmatpush.bf16.msra.mxu0 0
    %2523 = vmatpush.bf16.msra.mxu0 0
    %2524 = vmatpush.bf16.msra.mxu0 0
    %2525 = vmatpush.bf16.msra.mxu0 0
    %2526 = vmatpush.bf16.msra.mxu0 0
    %2527 = vmatpush.bf16.msra.mxu0 %v1908
    %2528 = vmatmul.bf16.gmra.mxu0 %v2258
    %v2529 = vpop.f32.mrf.mxu0
    %v2530 = vadd.f32 %v2517, %v2529
    %v2531 = vpop.f32.mrf.mxu0
    %2532 = vdwg.mxu0
    %2533 = vmatpush.bf16.msra.mxu0 %v1622
    %2534 = vmatpush.bf16.msra.mxu0 %v1615
    %2535 = vmatpush.bf16.msra.mxu0 %v1608
    %2536 = vmatpush.bf16.msra.mxu0 %v1601
    %2537 = vmatpush.bf16.msra.mxu0 %v1594
    %2538 = vmatpush.bf16.msra.mxu0 %v1587
    %2539 = vmatpush.bf16.msra.mxu0 %v1580
    %2540 = vmatpush.bf16.msra.mxu0 %v1573
    %2541 = vmatmul.bf16.gmra.mxu0 %v93
    %v2542 = vpop.f32.mrf.mxu0
    %v2543 = vadd.f32 0.0, %v2542
    %v2544 = vpop.f32.mrf.mxu0
    %2545 = vdwg.mxu0
    %2546 = vmatpush.bf16.msra.mxu0 %v1678
    %2547 = vmatpush.bf16.msra.mxu0 %v1671
    %2548 = vmatpush.bf16.msra.mxu0 %v1664
    %2549 = vmatpush.bf16.msra.mxu0 %v1657
    %2550 = vmatpush.bf16.msra.mxu0 %v1650
    %2551 = vmatpush.bf16.msra.mxu0 %v1643
    %2552 = vmatpush.bf16.msra.mxu0 %v1636
    %2553 = vmatpush.bf16.msra.mxu0 %v1629
    %2554 = vmatmul.bf16.gmra.mxu0 %v94
    %v2555 = vpop.f32.mrf.mxu0
    %v2556 = vadd.f32 %v2543, %v2555
    %v2557 = vpop.f32.mrf.mxu0
    %2558 = vdwg.mxu0
    %2559 = vmatpush.bf16.msra.mxu0 %v1734
    %2560 = vmatpush.bf16.msra.mxu0 %v1727
    %2561 = vmatpush.bf16.msra.mxu0 %v1720
    %2562 = vmatpush.bf16.msra.mxu0 %v1713
    %2563 = vmatpush.bf16.msra.mxu0 %v1706
    %2564 = vmatpush.bf16.msra.mxu0 %v1699
    %2565 = vmatpush.bf16.msra.mxu0 %v1692
    %2566 = vmatpush.bf16.msra.mxu0 %v1685
    %2567 = vmatmul.bf16.gmra.mxu0 %v95
    %v2568 = vpop.f32.mrf.mxu0
    %v2569 = vadd.f32 %v2556, %v2568
    %v2570 = vpop.f32.mrf.mxu0
    %2571 = vdwg.mxu0
    %2572 = vmatpush.bf16.msra.mxu0 %v1790
    %2573 = vmatpush.bf16.msra.mxu0 %v1783
    %2574 = vmatpush.bf16.msra.mxu0 %v1776
    %2575 = vmatpush.bf16.msra.mxu0 %v1769
    %2576 = vmatpush.bf16.msra.mxu0 %v1762
    %2577 = vmatpush.bf16.msra.mxu0 %v1755
    %2578 = vmatpush.bf16.msra.mxu0 %v1748
    %2579 = vmatpush.bf16.msra.mxu0 %v1741
    %2580 = vmatmul.bf16.gmra.mxu0 %v96
    %v2581 = vpop.f32.mrf.mxu0
    %v2582 = vadd.f32 %v2569, %v2581
    %v2583 = vpop.f32.mrf.mxu0
    %2584 = vdwg.mxu0
    %2585 = vmatpush.bf16.msra.mxu0 %v1846
    %2586 = vmatpush.bf16.msra.mxu0 %v1839
    %2587 = vmatpush.bf16.msra.mxu0 %v1832
    %2588 = vmatpush.bf16.msra.mxu0 %v1825
    %2589 = vmatpush.bf16.msra.mxu0 %v1818
    %2590 = vmatpush.bf16.msra.mxu0 %v1811
    %2591 = vmatpush.bf16.msra.mxu0 %v1804
    %2592 = vmatpush.bf16.msra.mxu0 %v1797
    %2593 = vmatmul.bf16.gmra.mxu0 %v97
    %v2594 = vpop.f32.mrf.mxu0
    %v2595 = vadd.f32 %v2582, %v2594
    %v2596 = vpop.f32.mrf.mxu0
    %2597 = vdwg.mxu0
    %2598 = vmatpush.bf16.msra.mxu0 %v1902
    %2599 = vmatpush.bf16.msra.mxu0 %v1895
    %2600 = vmatpush.bf16.msra.mxu0 %v1888
    %2601 = vmatpush.bf16.msra.mxu0 %v1881
    %2602 = vmatpush.bf16.msra.mxu0 %v1874
    %2603 = vmatpush.bf16.msra.mxu0 %v1867
    %2604 = vmatpush.bf16.msra.mxu0 %v1860
    %2605 = vmatpush.bf16.msra.mxu0 %v1853
    %2606 = vmatmul.bf16.gmra.mxu0 %v98
    %v2607 = vpop.f32.mrf.mxu0
    %v2608 = vadd.f32 %v2595, %v2607
    %v2609 = vpop.f32.mrf.mxu0
    %2610 = vdwg.mxu0
    %2611 = vmatpush.bf16.msra.mxu0 0
    %2612 = vmatpush.bf16.msra.mxu0 0
    %2613 = vmatpush.bf16.msra.mxu0 0
    %2614 = vmatpush.bf16.msra.mxu0 0
    %2615 = vmatpush.bf16.msra.mxu0 0
    %2616 = vmatpush.bf16.msra.mxu0 0
    %2617 = vmatpush.bf16.msra.mxu0 0
    %2618 = vmatpush.bf16.msra.mxu0 %v1909
    %2619 = vmatmul.bf16.gmra.mxu0 %v2258
    %v2620 = vpop.f32.mrf.mxu0
    %v2621 = vadd.f32 %v2608, %v2620
    %v2622 = vpop.f32.mrf.mxu0
    %2623 = vdwg.mxu0
    %2624 = vmatpush.bf16.msra.mxu0 %v1623
    %2625 = vmatpush.bf16.msra.mxu0 %v1616
    %2626 = vmatpush.bf16.msra.mxu0 %v1609
    %2627 = vmatpush.bf16.msra.mxu0 %v1602
    %2628 = vmatpush.bf16.msra.mxu0 %v1595
    %2629 = vmatpush.bf16.msra.mxu0 %v1588
    %2630 = vmatpush.bf16.msra.mxu0 %v1581
    %2631 = vmatpush.bf16.msra.mxu0 %v1574
    %2632 = vmatmul.bf16.gmra.mxu0 %v93
    %v2633 = vpop.f32.mrf.mxu0
    %v2634 = vadd.f32 0.0, %v2633
    %v2635 = vpop.f32.mrf.mxu0
    %2636 = vdwg.mxu0
    %2637 = vmatpush.bf16.msra.mxu0 %v1679
    %2638 = vmatpush.bf16.msra.mxu0 %v1672
    %2639 = vmatpush.bf16.msra.mxu0 %v1665
    %2640 = vmatpush.bf16.msra.mxu0 %v1658
    %2641 = vmatpush.bf16.msra.mxu0 %v1651
    %2642 = vmatpush.bf16.msra.mxu0 %v1644
    %2643 = vmatpush.bf16.msra.mxu0 %v1637
    %2644 = vmatpush.bf16.msra.mxu0 %v1630
    %2645 = vmatmul.bf16.gmra.mxu0 %v94
    %v2646 = vpop.f32.mrf.mxu0
    %v2647 = vadd.f32 %v2634, %v2646
    %v2648 = vpop.f32.mrf.mxu0
    %2649 = vdwg.mxu0
    %2650 = vmatpush.bf16.msra.mxu0 %v1735
    %2651 = vmatpush.bf16.msra.mxu0 %v1728
    %2652 = vmatpush.bf16.msra.mxu0 %v1721
    %2653 = vmatpush.bf16.msra.mxu0 %v1714
    %2654 = vmatpush.bf16.msra.mxu0 %v1707
    %2655 = vmatpush.bf16.msra.mxu0 %v1700
    %2656 = vmatpush.bf16.msra.mxu0 %v1693
    %2657 = vmatpush.bf16.msra.mxu0 %v1686
    %2658 = vmatmul.bf16.gmra.mxu0 %v95
    %v2659 = vpop.f32.mrf.mxu0
    %v2660 = vadd.f32 %v2647, %v2659
    %v2661 = vpop.f32.mrf.mxu0
    %2662 = vdwg.mxu0
    %2663 = vmatpush.bf16.msra.mxu0 %v1791
    %2664 = vmatpush.bf16.msra.mxu0 %v1784
    %2665 = vmatpush.bf16.msra.mxu0 %v1777
    %2666 = vmatpush.bf16.msra.mxu0 %v1770
    %2667 = vmatpush.bf16.msra.mxu0 %v1763
    %2668 = vmatpush.bf16.msra.mxu0 %v1756
    %2669 = vmatpush.bf16.msra.mxu0 %v1749
    %2670 = vmatpush.bf16.msra.mxu0 %v1742
    %2671 = vmatmul.bf16.gmra.mxu0 %v96
    %v2672 = vpop.f32.mrf.mxu0
    %v2673 = vadd.f32 %v2660, %v2672
    %v2674 = vpop.f32.mrf.mxu0
    %2675 = vdwg.mxu0
    %2676 = vmatpush.bf16.msra.mxu0 %v1847
    %2677 = vmatpush.bf16.msra.mxu0 %v1840
    %2678 = vmatpush.bf16.msra.mxu0 %v1833
    %2679 = vmatpush.bf16.msra.mxu0 %v1826
    %2680 = vmatpush.bf16.msra.mxu0 %v1819
    %2681 = vmatpush.bf16.msra.mxu0 %v1812
    %2682 = vmatpush.bf16.msra.mxu0 %v1805
    %2683 = vmatpush.bf16.msra.mxu0 %v1798
    %2684 = vmatmul.bf16.gmra.mxu0 %v97
    %v2685 = vpop.f32.mrf.mxu0
    %v2686 = vadd.f32 %v2673, %v2685
    %v2687 = vpop.f32.mrf.mxu0
    %2688 = vdwg.mxu0
    %2689 = vmatpush.bf16.msra.mxu0 %v1903
    %2690 = vmatpush.bf16.msra.mxu0 %v1896
    %2691 = vmatpush.bf16.msra.mxu0 %v1889
    %2692 = vmatpush.bf16.msra.mxu0 %v1882
    %2693 = vmatpush.bf16.msra.mxu0 %v1875
    %2694 = vmatpush.bf16.msra.mxu0 %v1868
    %2695 = vmatpush.bf16.msra.mxu0 %v1861
    %2696 = vmatpush.bf16.msra.mxu0 %v1854
    %2697 = vmatmul.bf16.gmra.mxu0 %v98
    %v2698 = vpop.f32.mrf.mxu0
    %v2699 = vadd.f32 %v2686, %v2698
    %v2700 = vpop.f32.mrf.mxu0
    %2701 = vdwg.mxu0
    %2702 = vmatpush.bf16.msra.mxu0 0
    %2703 = vmatpush.bf16.msra.mxu0 0
    %2704 = vmatpush.bf16.msra.mxu0 0
    %2705 = vmatpush.bf16.msra.mxu0 0
    %2706 = vmatpush.bf16.msra.mxu0 0
    %2707 = vmatpush.bf16.msra.mxu0 0
    %2708 = vmatpush.bf16.msra.mxu0 0
    %2709 = vmatpush.bf16.msra.mxu0 %v1910
    %2710 = vmatmul.bf16.gmra.mxu0 %v2258
    %v2711 = vpop.f32.mrf.mxu0
    %v2712 = vadd.f32 %v2699, %v2711
    %v2713 = vpop.f32.mrf.mxu0
    %2714 = vdwg.mxu0
    %2715 = vmatpush.bf16.msra.mxu0 %v1624
    %2716 = vmatpush.bf16.msra.mxu0 %v1617
    %2717 = vmatpush.bf16.msra.mxu0 %v1610
    %2718 = vmatpush.bf16.msra.mxu0 %v1603
    %2719 = vmatpush.bf16.msra.mxu0 %v1596
    %2720 = vmatpush.bf16.msra.mxu0 %v1589
    %2721 = vmatpush.bf16.msra.mxu0 %v1582
    %2722 = vmatpush.bf16.msra.mxu0 %v1575
    %2723 = vmatmul.bf16.gmra.mxu0 %v93
    %v2724 = vpop.f32.mrf.mxu0
    %v2725 = vadd.f32 0.0, %v2724
    %v2726 = vpop.f32.mrf.mxu0
    %2727 = vdwg.mxu0
    %2728 = vmatpush.bf16.msra.mxu0 %v1680
    %2729 = vmatpush.bf16.msra.mxu0 %v1673
    %2730 = vmatpush.bf16.msra.mxu0 %v1666
    %2731 = vmatpush.bf16.msra.mxu0 %v1659
    %2732 = vmatpush.bf16.msra.mxu0 %v1652
    %2733 = vmatpush.bf16.msra.mxu0 %v1645
    %2734 = vmatpush.bf16.msra.mxu0 %v1638
    %2735 = vmatpush.bf16.msra.mxu0 %v1631
    %2736 = vmatmul.bf16.gmra.mxu0 %v94
    %v2737 = vpop.f32.mrf.mxu0
    %v2738 = vadd.f32 %v2725, %v2737
    %v2739 = vpop.f32.mrf.mxu0
    %2740 = vdwg.mxu0
    %2741 = vmatpush.bf16.msra.mxu0 %v1736
    %2742 = vmatpush.bf16.msra.mxu0 %v1729
    %2743 = vmatpush.bf16.msra.mxu0 %v1722
    %2744 = vmatpush.bf16.msra.mxu0 %v1715
    %2745 = vmatpush.bf16.msra.mxu0 %v1708
    %2746 = vmatpush.bf16.msra.mxu0 %v1701
    %2747 = vmatpush.bf16.msra.mxu0 %v1694
    %2748 = vmatpush.bf16.msra.mxu0 %v1687
    %2749 = vmatmul.bf16.gmra.mxu0 %v95
    %v2750 = vpop.f32.mrf.mxu0
    %v2751 = vadd.f32 %v2738, %v2750
    %v2752 = vpop.f32.mrf.mxu0
    %2753 = vdwg.mxu0
    %2754 = vmatpush.bf16.msra.mxu0 %v1792
    %2755 = vmatpush.bf16.msra.mxu0 %v1785
    %2756 = vmatpush.bf16.msra.mxu0 %v1778
    %2757 = vmatpush.bf16.msra.mxu0 %v1771
    %2758 = vmatpush.bf16.msra.mxu0 %v1764
    %2759 = vmatpush.bf16.msra.mxu0 %v1757
    %2760 = vmatpush.bf16.msra.mxu0 %v1750
    %2761 = vmatpush.bf16.msra.mxu0 %v1743
    %2762 = vmatmul.bf16.gmra.mxu0 %v96
    %v2763 = vpop.f32.mrf.mxu0
    %v2764 = vadd.f32 %v2751, %v2763
    %v2765 = vpop.f32.mrf.mxu0
    %2766 = vdwg.mxu0
    %2767 = vmatpush.bf16.msra.mxu0 %v1848
    %2768 = vmatpush.bf16.msra.mxu0 %v1841
    %2769 = vmatpush.bf16.msra.mxu0 %v1834
    %2770 = vmatpush.bf16.msra.mxu0 %v1827
    %2771 = vmatpush.bf16.msra.mxu0 %v1820
    %2772 = vmatpush.bf16.msra.mxu0 %v1813
    %2773 = vmatpush.bf16.msra.mxu0 %v1806
    %2774 = vmatpush.bf16.msra.mxu0 %v1799
    %2775 = vmatmul.bf16.gmra.mxu0 %v97
    %v2776 = vpop.f32.mrf.mxu0
    %v2777 = vadd.f32 %v2764, %v2776
    %v2778 = vpop.f32.mrf.mxu0
    %2779 = vdwg.mxu0
    %2780 = vmatpush.bf16.msra.mxu0 %v1904
    %2781 = vmatpush.bf16.msra.mxu0 %v1897
    %2782 = vmatpush.bf16.msra.mxu0 %v1890
    %2783 = vmatpush.bf16.msra.mxu0 %v1883
    %2784 = vmatpush.bf16.msra.mxu0 %v1876
    %2785 = vmatpush.bf16.msra.mxu0 %v1869
    %2786 = vmatpush.bf16.msra.mxu0 %v1862
    %2787 = vmatpush.bf16.msra.mxu0 %v1855
    %2788 = vmatmul.bf16.gmra.mxu0 %v98
    %v2789 = vpop.f32.mrf.mxu0
    %v2790 = vadd.f32 %v2777, %v2789
    %v2791 = vpop.f32.mrf.mxu0
    %2792 = vdwg.mxu0
    %2793 = vmatpush.bf16.msra.mxu0 0
    %2794 = vmatpush.bf16.msra.mxu0 0
    %2795 = vmatpush.bf16.msra.mxu0 0
    %2796 = vmatpush.bf16.msra.mxu0 0
    %2797 = vmatpush.bf16.msra.mxu0 0
    %2798 = vmatpush.bf16.msra.mxu0 0
    %2799 = vmatpush.bf16.msra.mxu0 0
    %2800 = vmatpush.bf16.msra.mxu0 %v1911
    %2801 = vmatmul.bf16.gmra.mxu0 %v2258
    %v2802 = vpop.f32.mrf.mxu0
    %v2803 = vadd.f32 %v2790, %v2802
    %v2804 = vpop.f32.mrf.mxu0
    %2805 = vdwg.mxu0
    %2806 = vmatpush.bf16.msra.mxu0 %v1625
    %2807 = vmatpush.bf16.msra.mxu0 %v1618
    %2808 = vmatpush.bf16.msra.mxu0 %v1611
    %2809 = vmatpush.bf16.msra.mxu0 %v1604
    %2810 = vmatpush.bf16.msra.mxu0 %v1597
    %2811 = vmatpush.bf16.msra.mxu0 %v1590
    %2812 = vmatpush.bf16.msra.mxu0 %v1583
    %2813 = vmatpush.bf16.msra.mxu0 %v1576
    %2814 = vmatmul.bf16.gmra.mxu0 %v93
    %v2815 = vpop.f32.mrf.mxu0
    %v2816 = vadd.f32 0.0, %v2815
    %v2817 = vpop.f32.mrf.mxu0
    %2818 = vdwg.mxu0
    %2819 = vmatpush.bf16.msra.mxu0 %v1681
    %2820 = vmatpush.bf16.msra.mxu0 %v1674
    %2821 = vmatpush.bf16.msra.mxu0 %v1667
    %2822 = vmatpush.bf16.msra.mxu0 %v1660
    %2823 = vmatpush.bf16.msra.mxu0 %v1653
    %2824 = vmatpush.bf16.msra.mxu0 %v1646
    %2825 = vmatpush.bf16.msra.mxu0 %v1639
    %2826 = vmatpush.bf16.msra.mxu0 %v1632
    %2827 = vmatmul.bf16.gmra.mxu0 %v94
    %v2828 = vpop.f32.mrf.mxu0
    %v2829 = vadd.f32 %v2816, %v2828
    %v2830 = vpop.f32.mrf.mxu0
    %2831 = vdwg.mxu0
    %2832 = vmatpush.bf16.msra.mxu0 %v1737
    %2833 = vmatpush.bf16.msra.mxu0 %v1730
    %2834 = vmatpush.bf16.msra.mxu0 %v1723
    %2835 = vmatpush.bf16.msra.mxu0 %v1716
    %2836 = vmatpush.bf16.msra.mxu0 %v1709
    %2837 = vmatpush.bf16.msra.mxu0 %v1702
    %2838 = vmatpush.bf16.msra.mxu0 %v1695
    %2839 = vmatpush.bf16.msra.mxu0 %v1688
    %2840 = vmatmul.bf16.gmra.mxu0 %v95
    %v2841 = vpop.f32.mrf.mxu0
    %v2842 = vadd.f32 %v2829, %v2841
    %v2843 = vpop.f32.mrf.mxu0
    %2844 = vdwg.mxu0
    %2845 = vmatpush.bf16.msra.mxu0 %v1793
    %2846 = vmatpush.bf16.msra.mxu0 %v1786
    %2847 = vmatpush.bf16.msra.mxu0 %v1779
    %2848 = vmatpush.bf16.msra.mxu0 %v1772
    %2849 = vmatpush.bf16.msra.mxu0 %v1765
    %2850 = vmatpush.bf16.msra.mxu0 %v1758
    %2851 = vmatpush.bf16.msra.mxu0 %v1751
    %2852 = vmatpush.bf16.msra.mxu0 %v1744
    %2853 = vmatmul.bf16.gmra.mxu0 %v96
    %v2854 = vpop.f32.mrf.mxu0
    %v2855 = vadd.f32 %v2842, %v2854
    %v2856 = vpop.f32.mrf.mxu0
    %2857 = vdwg.mxu0
    %2858 = vmatpush.bf16.msra.mxu0 %v1849
    %2859 = vmatpush.bf16.msra.mxu0 %v1842
    %2860 = vmatpush.bf16.msra.mxu0 %v1835
    %2861 = vmatpush.bf16.msra.mxu0 %v1828
    %2862 = vmatpush.bf16.msra.mxu0 %v1821
    %2863 = vmatpush.bf16.msra.mxu0 %v1814
    %2864 = vmatpush.bf16.msra.mxu0 %v1807
    %2865 = vmatpush.bf16.msra.mxu0 %v1800
    %2866 = vmatmul.bf16.gmra.mxu0 %v97
    %v2867 = vpop.f32.mrf.mxu0
    %v2868 = vadd.f32 %v2855, %v2867
    %v2869 = vpop.f32.mrf.mxu0
    %2870 = vdwg.mxu0
    %2871 = vmatpush.bf16.msra.mxu0 %v1905
    %2872 = vmatpush.bf16.msra.mxu0 %v1898
    %2873 = vmatpush.bf16.msra.mxu0 %v1891
    %2874 = vmatpush.bf16.msra.mxu0 %v1884
    %2875 = vmatpush.bf16.msra.mxu0 %v1877
    %2876 = vmatpush.bf16.msra.mxu0 %v1870
    %2877 = vmatpush.bf16.msra.mxu0 %v1863
    %2878 = vmatpush.bf16.msra.mxu0 %v1856
    %2879 = vmatmul.bf16.gmra.mxu0 %v98
    %v2880 = vpop.f32.mrf.mxu0
    %v2881 = vadd.f32 %v2868, %v2880
    %v2882 = vpop.f32.mrf.mxu0
    %2883 = vdwg.mxu0
    %2884 = vmatpush.bf16.msra.mxu0 0
    %2885 = vmatpush.bf16.msra.mxu0 0
    %2886 = vmatpush.bf16.msra.mxu0 0
    %2887 = vmatpush.bf16.msra.mxu0 0
    %2888 = vmatpush.bf16.msra.mxu0 0
    %2889 = vmatpush.bf16.msra.mxu0 0
    %2890 = vmatpush.bf16.msra.mxu0 0
    %2891 = vmatpush.bf16.msra.mxu0 %v1912
    %2892 = vmatmul.bf16.gmra.mxu0 %v2258
    %v2893 = vpop.f32.mrf.mxu0
    %v2894 = vadd.f32 %v2881, %v2893
    %v2895 = vpop.f32.mrf.mxu0
    %2896 = vdwg.mxu0
    %vm2897 = vcmp.ge.f32.partialorder %v2348, 0.0
    %vm2898 = vcmp.ge.f32.partialorder %v2439, 0.0
    %vm2899 = vcmp.ge.f32.partialorder %v2530, 0.0
    %vm2900 = vcmp.ge.f32.partialorder %v2621, 0.0
    %vm2901 = vcmp.ge.f32.partialorder %v2712, 0.0
    %vm2902 = vcmp.ge.f32.partialorder %v2803, 0.0
    %vm2903 = vcmp.ge.f32.partialorder %v2894, 0.0
    %v2904 = vstv %s85
    %v2905 = vmul.f32 %v2904, %v2348
    %v2906 = vmul.f32 %v2904, %v2439
    %v2907 = vmul.f32 %v2904, %v2530
    %v2908 = vmul.f32 %v2904, %v2621
    %v2909 = vmul.f32 %v2904, %v2712
    %v2910 = vmul.f32 %v2904, %v2803
    %v2911 = vmul.f32 %v2904, %v2894
    %v2912 = vsel %vm2897, %v2348, %v2905
    %v2913 = vsel %vm2898, %v2439, %v2906
    %v2914 = vsel %vm2899, %v2530, %v2907
    %v2915 = vsel %vm2900, %v2621, %v2908
    %v2916 = vsel %vm2901, %v2712, %v2909
    %v2917 = vsel %vm2902, %v2803, %v2910
    %v2918 = vsel %vm2903, %v2894, %v2911
    %v2919 = vpack.c.bf16 %v2912, %v2912
    %v2920 = vpack.c.bf16 %v2913, %v2913
    %v2921 = vpack.c.bf16 %v2914, %v2914
    %v2922 = vpack.c.bf16 %v2915, %v2915
    %v2923 = vpack.c.bf16 %v2916, %v2916
    %v2924 = vpack.c.bf16 %v2917, %v2917
    %v2925 = vpack.c.bf16 %v2918, %v2918
    %s2926 = scalar_lea.vmem [#allocation6], 2744
    %v2927 = vld [vmem:[%s2926] sm:$0xff]
    %v2928 = vld [vmem:[%s2926 + $0x8] sm:$0xff]
    %v2929 = vld [vmem:[%s2926 + $0x10] sm:$0xff]
    %v2930 = vld [vmem:[%s2926 + $0x18] sm:$0xf]
    %v2931 = vld [vmem:[%s2926 + $0x1c] sm:$0xff]
    %v2932 = vld [vmem:[%s2926 + $0x24] sm:$0xff]
    %v2933 = vld [vmem:[%s2926 + $0x2c] sm:$0xff]
    %v2934 = vld [vmem:[%s2926 + $0x34] sm:$0xf]
    %v2935 = vld [vmem:[%s2926 + $0x38] sm:$0xff]
    %v2936 = vld [vmem:[%s2926 + $0x40] sm:$0xff]
    %v2937 = vld [vmem:[%s2926 + $0x48] sm:$0xff]
    %v2938 = vld [vmem:[%s2926 + $0x50] sm:$0xf]
    %v2939 = vld [vmem:[%s2926 + $0x54] sm:$0xff]
    %v2940 = vld [vmem:[%s2926 + $0x5c] sm:$0xff]
    %v2941 = vld [vmem:[%s2926 + $0x64] sm:$0xff]
    %v2942 = vld [vmem:[%s2926 + $0x6c] sm:$0xf]
    %v2943 = vld [vmem:[%s2926 + $0x70] sm:$0xff]
    %v2944 = vld [vmem:[%s2926 + $0x78] sm:$0xff]
    %v2945 = vld [vmem:[%s2926 + $0x80] sm:$0xff]
    %v2946 = vld [vmem:[%s2926 + $0x88] sm:$0xf]
    %v2947 = vld [vmem:[%s2926 + $0x8c] sm:$0xff]
    %v2948 = vld [vmem:[%s2926 + $0x94] sm:$0xff]
    %v2949 = vld [vmem:[%s2926 + $0x9c] sm:$0xff]
    %v2950 = vld [vmem:[%s2926 + $0xa4] sm:$0xf]
    %v2951 = vld [vmem:[%s2926 + $0xa8] sm:$0xff]
    %v2952 = vld [vmem:[%s2926 + $0xb0] sm:$0xff]
    %v2953 = vld [vmem:[%s2926 + $0xb8] sm:$0xff]
    %v2954 = vld [vmem:[%s2926 + $0xc0] sm:$0xf]
    %v2955 = vld [vmem:[%s2926 + $0xc4] sm:$0xff]
    %v2956 = vld [vmem:[%s2926 + $0xcc] sm:$0xff]
    %v2957 = vld [vmem:[%s2926 + $0xd4] sm:$0xff]
    %v2958 = vld [vmem:[%s2926 + $0xdc] sm:$0xf]
    %v2959 = vld [vmem:[%s2926 + $0xe0] sm:$0xff]
    %v2960 = vld [vmem:[%s2926 + $0xe8] sm:$0xff]
    %v2961 = vld [vmem:[%s2926 + $0xf0] sm:$0xff]
    %v2962 = vld [vmem:[%s2926 + $0xf8] sm:$0xf]
    %v2963 = vld [vmem:[%s2926 + $0xfc] sm:$0xff]
    %v2964 = vld [vmem:[%s2926 + $0x104] sm:$0xff]
    %v2965 = vld [vmem:[%s2926 + $0x10c] sm:$0xff]
    %v2966 = vld [vmem:[%s2926 + $0x114] sm:$0xf]
    %v2967 = vld [vmem:[%s2926 + $0x118] sm:$0xff]
    %v2968 = vld [vmem:[%s2926 + $0x120] sm:$0xff]
    %v2969 = vld [vmem:[%s2926 + $0x128] sm:$0xff]
    %v2970 = vld [vmem:[%s2926 + $0x130] sm:$0xf]
    %v2971 = vld [vmem:[%s2926 + $0x134] sm:$0xff]
    %v2972 = vld [vmem:[%s2926 + $0x13c] sm:$0xff]
    %v2973 = vld [vmem:[%s2926 + $0x144] sm:$0xff]
    %v2974 = vld [vmem:[%s2926 + $0x14c] sm:$0xf]
    %v2975 = vld [vmem:[%s2926 + $0x150] sm:$0xff]
    %v2976 = vld [vmem:[%s2926 + $0x158] sm:$0xff]
    %v2977 = vld [vmem:[%s2926 + $0x160] sm:$0xff]
    %v2978 = vld [vmem:[%s2926 + $0x168] sm:$0xf]
    %v2979 = vld [vmem:[%s2926 + $0x16c] sm:$0xff]
    %v2980 = vld [vmem:[%s2926 + $0x174] sm:$0xff]
    %v2981 = vld [vmem:[%s2926 + $0x17c] sm:$0xff]
    %v2982 = vld [vmem:[%s2926 + $0x184] sm:$0xf]
    %v2983 = vld [vmem:[%s2926 + $0x188] sm:$0xff]
    %v2984 = vld [vmem:[%s2926 + $0x190] sm:$0xff]
    %v2985 = vld [vmem:[%s2926 + $0x198] sm:$0xff]
    %v2986 = vld [vmem:[%s2926 + $0x1a0] sm:$0xf]
    %v2987 = vld [vmem:[%s2926 + $0x1a4] sm:$0xff]
    %v2988 = vld [vmem:[%s2926 + $0x1ac] sm:$0xff]
    %v2989 = vld [vmem:[%s2926 + $0x1b4] sm:$0xff]
    %v2990 = vld [vmem:[%s2926 + $0x1bc] sm:$0xf]
    %v2991 = vld [vmem:[%s2926 + $0x1c0] sm:$0xff]
    %v2992 = vld [vmem:[%s2926 + $0x1c8] sm:$0xff]
    %v2993 = vld [vmem:[%s2926 + $0x1d0] sm:$0xff]
    %v2994 = vld [vmem:[%s2926 + $0x1d8] sm:$0xf]
    %v2995 = vld [vmem:[%s2926 + $0x1dc] sm:$0xff]
    %v2996 = vld [vmem:[%s2926 + $0x1e4] sm:$0xff]
    %v2997 = vld [vmem:[%s2926 + $0x1ec] sm:$0xff]
    %v2998 = vld [vmem:[%s2926 + $0x1f4] sm:$0xf]
    %v2999 = vld [vmem:[%s2926 + $0x1f8] sm:$0xff]
    %v3000 = vld [vmem:[%s2926 + $0x200] sm:$0xff]
    %v3001 = vld [vmem:[%s2926 + $0x208] sm:$0xff]
    %v3002 = vld [vmem:[%s2926 + $0x210] sm:$0xf]
    %v3003 = vld [vmem:[%s2926 + $0x214] sm:$0xff]
    %v3004 = vld [vmem:[%s2926 + $0x21c] sm:$0xff]
    %v3005 = vld [vmem:[%s2926 + $0x224] sm:$0xff]
    %v3006 = vld [vmem:[%s2926 + $0x22c] sm:$0xf]
    %v3007 = vld [vmem:[%s2926 + $0x230] sm:$0xff]
    %v3008 = vld [vmem:[%s2926 + $0x238] sm:$0xff]
    %v3009 = vld [vmem:[%s2926 + $0x240] sm:$0xff]
    %v3010 = vld [vmem:[%s2926 + $0x248] sm:$0xf]
    %v3011 = vld [vmem:[%s2926 + $0x24c] sm:$0xff]
    %v3012 = vld [vmem:[%s2926 + $0x254] sm:$0xff]
    %v3013 = vld [vmem:[%s2926 + $0x25c] sm:$0xff]
    %v3014 = vld [vmem:[%s2926 + $0x264] sm:$0xf]
    %v3015 = vld [vmem:[%s2926 + $0x268] sm:$0xff]
    %v3016 = vld [vmem:[%s2926 + $0x270] sm:$0xff]
    %v3017 = vld [vmem:[%s2926 + $0x278] sm:$0xff]
    %v3018 = vld [vmem:[%s2926 + $0x280] sm:$0xf]
    %v3019 = vld [vmem:[%s2926 + $0x284] sm:$0xff]
    %v3020 = vld [vmem:[%s2926 + $0x28c] sm:$0xff]
    %v3021 = vld [vmem:[%s2926 + $0x294] sm:$0xff]
    %v3022 = vld [vmem:[%s2926 + $0x29c] sm:$0xf]
    %v3023 = vld [vmem:[%s2926 + $0x2a0] sm:$0xff]
    %v3024 = vld [vmem:[%s2926 + $0x2a8] sm:$0xff]
    %v3025 = vld [vmem:[%s2926 + $0x2b0] sm:$0xff]
    %v3026 = vld [vmem:[%s2926 + $0x2b8] sm:$0xf]
    %v3027 = vld [vmem:[%s2926 + $0x2bc] sm:$0xff]
    %v3028 = vld [vmem:[%s2926 + $0x2c4] sm:$0xff]
    %v3029 = vld [vmem:[%s2926 + $0x2cc] sm:$0xff]
    %v3030 = vld [vmem:[%s2926 + $0x2d4] sm:$0xf]
    %v3031 = vld [vmem:[%s2926 + $0x2d8] sm:$0xff]
    %v3032 = vld [vmem:[%s2926 + $0x2e0] sm:$0xff]
    %v3033 = vld [vmem:[%s2926 + $0x2e8] sm:$0xff]
    %v3034 = vld [vmem:[%s2926 + $0x2f0] sm:$0xf]
    %v3035 = vld [vmem:[%s2926 + $0x2f4] sm:$0xff]
    %v3036 = vld [vmem:[%s2926 + $0x2fc] sm:$0xff]
    %v3037 = vld [vmem:[%s2926 + $0x304] sm:$0xff]
    %v3038 = vld [vmem:[%s2926 + $0x30c] sm:$0xf]
    %v3039 = vld [vmem:[%s2926 + $0x310] sm:$0xff]
    %v3040 = vld [vmem:[%s2926 + $0x318] sm:$0xff]
    %v3041 = vld [vmem:[%s2926 + $0x320] sm:$0xff]
    %v3042 = vld [vmem:[%s2926 + $0x328] sm:$0xf]
    %v3043 = vld [vmem:[%s2926 + $0x32c] sm:$0xff]
    %v3044 = vld [vmem:[%s2926 + $0x334] sm:$0xff]
    %v3045 = vld [vmem:[%s2926 + $0x33c] sm:$0xff]
    %v3046 = vld [vmem:[%s2926 + $0x344] sm:$0xf]
    %v3047 = vld [vmem:[%s2926 + $0x348] sm:$0xff]
    %v3048 = vld [vmem:[%s2926 + $0x350] sm:$0xff]
    %v3049 = vld [vmem:[%s2926 + $0x358] sm:$0xff]
    %v3050 = vld [vmem:[%s2926 + $0x360] sm:$0xf]
    %v3051 = vld [vmem:[%s2926 + $0x364] sm:$0xff]
    %v3052 = vld [vmem:[%s2926 + $0x36c] sm:$0xff]
    %v3053 = vld [vmem:[%s2926 + $0x374] sm:$0xff]
    %v3054 = vld [vmem:[%s2926 + $0x37c] sm:$0xf]
    %v3055 = vld [vmem:[%s2926 + $0x380] sm:$0xff]
    %v3056 = vld [vmem:[%s2926 + $0x388] sm:$0xff]
    %v3057 = vld [vmem:[%s2926 + $0x390] sm:$0xff]
    %v3058 = vld [vmem:[%s2926 + $0x398] sm:$0xf]
    %v3059 = vld [vmem:[%s2926 + $0x39c] sm:$0xff]
    %v3060 = vld [vmem:[%s2926 + $0x3a4] sm:$0xff]
    %v3061 = vld [vmem:[%s2926 + $0x3ac] sm:$0xff]
    %v3062 = vld [vmem:[%s2926 + $0x3b4] sm:$0xf]
    %v3063 = vld [vmem:[%s2926 + $0x3b8] sm:$0xff]
    %v3064 = vld [vmem:[%s2926 + $0x3c0] sm:$0xff]
    %v3065 = vld [vmem:[%s2926 + $0x3c8] sm:$0xff]
    %v3066 = vld [vmem:[%s2926 + $0x3d0] sm:$0xf]
    %v3067 = vld [vmem:[%s2926 + $0x3d4] sm:$0xff]
    %v3068 = vld [vmem:[%s2926 + $0x3dc] sm:$0xff]
    %v3069 = vld [vmem:[%s2926 + $0x3e4] sm:$0xff]
    %v3070 = vld [vmem:[%s2926 + $0x3ec] sm:$0xf]
    %v3071 = vld [vmem:[%s2926 + $0x3f0] sm:$0xff]
    %v3072 = vld [vmem:[%s2926 + $0x3f8] sm:$0xff]
    %v3073 = vld [vmem:[%s2926 + $0x400] sm:$0xff]
    %v3074 = vld [vmem:[%s2926 + $0x408] sm:$0xf]
    %v3075 = vld [vmem:[%s2926 + $0x40c] sm:$0xff]
    %v3076 = vld [vmem:[%s2926 + $0x414] sm:$0xff]
    %v3077 = vld [vmem:[%s2926 + $0x41c] sm:$0xff]
    %v3078 = vld [vmem:[%s2926 + $0x424] sm:$0xf]
    %v3079 = vld [vmem:[%s2926 + $0x428] sm:$0xff]
    %v3080 = vld [vmem:[%s2926 + $0x430] sm:$0xff]
    %v3081 = vld [vmem:[%s2926 + $0x438] sm:$0xff]
    %v3082 = vld [vmem:[%s2926 + $0x440] sm:$0xf]
    %v3083 = vld [vmem:[%s2926 + $0x444] sm:$0xff]
    %v3084 = vld [vmem:[%s2926 + $0x44c] sm:$0xff]
    %v3085 = vld [vmem:[%s2926 + $0x454] sm:$0xff]
    %v3086 = vld [vmem:[%s2926 + $0x45c] sm:$0xf]
    %v3087 = vld [vmem:[%s2926 + $0x460] sm:$0xff]
    %v3088 = vld [vmem:[%s2926 + $0x468] sm:$0xff]
    %v3089 = vld [vmem:[%s2926 + $0x470] sm:$0xff]
    %v3090 = vld [vmem:[%s2926 + $0x478] sm:$0xf]
    %v3091 = vld [vmem:[%s2926 + $0x47c] sm:$0xff]
    %v3092 = vld [vmem:[%s2926 + $0x484] sm:$0xff]
    %v3093 = vld [vmem:[%s2926 + $0x48c] sm:$0xff]
    %v3094 = vld [vmem:[%s2926 + $0x494] sm:$0xf]
    %v3095 = vld [vmem:[%s2926 + $0x498] sm:$0xff]
    %v3096 = vld [vmem:[%s2926 + $0x4a0] sm:$0xff]
    %v3097 = vld [vmem:[%s2926 + $0x4a8] sm:$0xff]
    %v3098 = vld [vmem:[%s2926 + $0x4b0] sm:$0xf]
    %v3099 = vld [vmem:[%s2926 + $0x4b4] sm:$0xff]
    %v3100 = vld [vmem:[%s2926 + $0x4bc] sm:$0xff]
    %v3101 = vld [vmem:[%s2926 + $0x4c4] sm:$0xff]
    %v3102 = vld [vmem:[%s2926 + $0x4cc] sm:$0xf]
    %v3103 = vld [vmem:[%s2926 + $0x4d0] sm:$0xff]
    %v3104 = vld [vmem:[%s2926 + $0x4d8] sm:$0xff]
    %v3105 = vld [vmem:[%s2926 + $0x4e0] sm:$0xff]
    %v3106 = vld [vmem:[%s2926 + $0x4e8] sm:$0xf]
    %v3107 = vld [vmem:[%s2926 + $0x4ec] sm:$0xff]
    %v3108 = vld [vmem:[%s2926 + $0x4f4] sm:$0xff]
    %v3109 = vld [vmem:[%s2926 + $0x4fc] sm:$0xff]
    %v3110 = vld [vmem:[%s2926 + $0x504] sm:$0xf]
    %v3111 = vld [vmem:[%s2926 + $0x508] sm:$0xff]
    %v3112 = vld [vmem:[%s2926 + $0x510] sm:$0xff]
    %v3113 = vld [vmem:[%s2926 + $0x518] sm:$0xff]
    %v3114 = vld [vmem:[%s2926 + $0x520] sm:$0xf]
    %v3115 = vld [vmem:[%s2926 + $0x524] sm:$0xff]
    %v3116 = vld [vmem:[%s2926 + $0x52c] sm:$0xff]
    %v3117 = vld [vmem:[%s2926 + $0x534] sm:$0xff]
    %v3118 = vld [vmem:[%s2926 + $0x53c] sm:$0xf]
    %v3119 = vld [vmem:[%s2926 + $0x540] sm:$0xff]
    %v3120 = vld [vmem:[%s2926 + $0x548] sm:$0xff]
    %v3121 = vld [vmem:[%s2926 + $0x550] sm:$0xff]
    %v3122 = vld [vmem:[%s2926 + $0x558] sm:$0xf]
    %v3123 = vld [vmem:[%s2926 + $0x55c] sm:$0xff]
    %v3124 = vld [vmem:[%s2926 + $0x564] sm:$0xff]
    %v3125 = vld [vmem:[%s2926 + $0x56c] sm:$0xff]
    %v3126 = vld [vmem:[%s2926 + $0x574] sm:$0xf]
    %v3127 = vld [vmem:[%s2926 + $0x578] sm:$0xff]
    %v3128 = vld [vmem:[%s2926 + $0x580] sm:$0xff]
    %v3129 = vld [vmem:[%s2926 + $0x588] sm:$0xff]
    %v3130 = vld [vmem:[%s2926 + $0x590] sm:$0xf]
    %v3131 = vld [vmem:[%s2926 + $0x594] sm:$0xff]
    %v3132 = vld [vmem:[%s2926 + $0x59c] sm:$0xff]
    %v3133 = vld [vmem:[%s2926 + $0x5a4] sm:$0xff]
    %v3134 = vld [vmem:[%s2926 + $0x5ac] sm:$0xf]
    %v3135 = vld [vmem:[%s2926 + $0x5b0] sm:$0xff]
    %v3136 = vld [vmem:[%s2926 + $0x5b8] sm:$0xff]
    %v3137 = vld [vmem:[%s2926 + $0x5c0] sm:$0xff]
    %v3138 = vld [vmem:[%s2926 + $0x5c8] sm:$0xf]
    %v3139 = vld [vmem:[%s2926 + $0x5cc] sm:$0xff]
    %v3140 = vld [vmem:[%s2926 + $0x5d4] sm:$0xff]
    %v3141 = vld [vmem:[%s2926 + $0x5dc] sm:$0xff]
    %v3142 = vld [vmem:[%s2926 + $0x5e4] sm:$0xf]
    %v3143 = vld [vmem:[%s2926 + $0x5e8] sm:$0xff]
    %v3144 = vld [vmem:[%s2926 + $0x5f0] sm:$0xff]
    %v3145 = vld [vmem:[%s2926 + $0x5f8] sm:$0xff]
    %v3146 = vld [vmem:[%s2926 + $0x600] sm:$0xf]
    %v3147 = vld [vmem:[%s2926 + $0x604] sm:$0xff]
    %v3148 = vld [vmem:[%s2926 + $0x60c] sm:$0xff]
    %v3149 = vld [vmem:[%s2926 + $0x614] sm:$0xff]
    %v3150 = vld [vmem:[%s2926 + $0x61c] sm:$0xf]
    %v3151 = vld [vmem:[%s2926 + $0x620] sm:$0xff]
    %v3152 = vld [vmem:[%s2926 + $0x628] sm:$0xff]
    %v3153 = vld [vmem:[%s2926 + $0x630] sm:$0xff]
    %v3154 = vld [vmem:[%s2926 + $0x638] sm:$0xf]
    %v3155 = vld [vmem:[%s2926 + $0x63c] sm:$0xff]
    %v3156 = vld [vmem:[%s2926 + $0x644] sm:$0xff]
    %v3157 = vld [vmem:[%s2926 + $0x64c] sm:$0xff]
    %v3158 = vld [vmem:[%s2926 + $0x654] sm:$0xf]
    %v3159 = vld [vmem:[%s2926 + $0x658] sm:$0xff]
    %v3160 = vld [vmem:[%s2926 + $0x660] sm:$0xff]
    %v3161 = vld [vmem:[%s2926 + $0x668] sm:$0xff]
    %v3162 = vld [vmem:[%s2926 + $0x670] sm:$0xf]
    %v3163 = vld [vmem:[%s2926 + $0x674] sm:$0xff]
    %v3164 = vld [vmem:[%s2926 + $0x67c] sm:$0xff]
    %v3165 = vld [vmem:[%s2926 + $0x684] sm:$0xff]
    %v3166 = vld [vmem:[%s2926 + $0x68c] sm:$0xf]
    %v3167 = vld [vmem:[%s2926 + $0x690] sm:$0xff]
    %v3168 = vld [vmem:[%s2926 + $0x698] sm:$0xff]
    %v3169 = vld [vmem:[%s2926 + $0x6a0] sm:$0xff]
    %v3170 = vld [vmem:[%s2926 + $0x6a8] sm:$0xf]
    %v3171 = vld [vmem:[%s2926 + $0x6ac] sm:$0xff]
    %v3172 = vld [vmem:[%s2926 + $0x6b4] sm:$0xff]
    %v3173 = vld [vmem:[%s2926 + $0x6bc] sm:$0xff]
    %v3174 = vld [vmem:[%s2926 + $0x6c4] sm:$0xf]
    %v3175 = vld [vmem:[%s2926 + $0x6c8] sm:$0xff]
    %v3176 = vld [vmem:[%s2926 + $0x6d0] sm:$0xff]
    %v3177 = vld [vmem:[%s2926 + $0x6d8] sm:$0xff]
    %v3178 = vld [vmem:[%s2926 + $0x6e0] sm:$0xf]
    %v3179 = vld [vmem:[%s2926 + $0x6e4] sm:$0xff]
    %v3180 = vld [vmem:[%s2926 + $0x6ec] sm:$0xff]
    %v3181 = vld [vmem:[%s2926 + $0x6f4] sm:$0xff]
    %v3182 = vld [vmem:[%s2926 + $0x6fc] sm:$0xf]
    %v3183 = vld [vmem:[%s2926 + $0x700] sm:$0xff]
    %v3184 = vld [vmem:[%s2926 + $0x708] sm:$0xff]
    %v3185 = vld [vmem:[%s2926 + $0x710] sm:$0xff]
    %v3186 = vld [vmem:[%s2926 + $0x718] sm:$0xf]
    %v3187 = vld [vmem:[%s2926 + $0x71c] sm:$0xff]
    %v3188 = vld [vmem:[%s2926 + $0x724] sm:$0xff]
    %v3189 = vld [vmem:[%s2926 + $0x72c] sm:$0xff]
    %v3190 = vld [vmem:[%s2926 + $0x734] sm:$0xf]
    %v3191 = vld [vmem:[%s2926 + $0x738] sm:$0xff]
    %v3192 = vld [vmem:[%s2926 + $0x740] sm:$0xff]
    %v3193 = vld [vmem:[%s2926 + $0x748] sm:$0xff]
    %v3194 = vld [vmem:[%s2926 + $0x750] sm:$0xf]
    %v3195 = vld [vmem:[%s2926 + $0x754] sm:$0xff]
    %v3196 = vld [vmem:[%s2926 + $0x75c] sm:$0xff]
    %v3197 = vld [vmem:[%s2926 + $0x764] sm:$0xff]
    %v3198 = vld [vmem:[%s2926 + $0x76c] sm:$0xf]
    %v3199 = vld [vmem:[%s2926 + $0x770] sm:$0xff]
    %v3200 = vld [vmem:[%s2926 + $0x778] sm:$0xff]
    %v3201 = vld [vmem:[%s2926 + $0x780] sm:$0xff]
    %v3202 = vld [vmem:[%s2926 + $0x788] sm:$0xf]
    %v3203 = vld [vmem:[%s2926 + $0x78c] sm:$0xff]
    %v3204 = vld [vmem:[%s2926 + $0x794] sm:$0xff]
    %v3205 = vld [vmem:[%s2926 + $0x79c] sm:$0xff]
    %v3206 = vld [vmem:[%s2926 + $0x7a4] sm:$0xf]
    %v3207 = vld [vmem:[%s2926 + $0x7a8] sm:$0xff]
    %v3208 = vld [vmem:[%s2926 + $0x7b0] sm:$0xff]
    %v3209 = vld [vmem:[%s2926 + $0x7b8] sm:$0xff]
    %v3210 = vld [vmem:[%s2926 + $0x7c0] sm:$0xf]
    %v3211 = vld [vmem:[%s2926 + $0x7c4] sm:$0xff]
    %v3212 = vld [vmem:[%s2926 + $0x7cc] sm:$0xff]
    %v3213 = vld [vmem:[%s2926 + $0x7d4] sm:$0xff]
    %v3214 = vld [vmem:[%s2926 + $0x7dc] sm:$0xf]
    %v3215 = vld [vmem:[%s2926 + $0x7e0] sm:$0xff]
    %v3216 = vld [vmem:[%s2926 + $0x7e8] sm:$0xff]
    %v3217 = vld [vmem:[%s2926 + $0x7f0] sm:$0xff]
    %v3218 = vld [vmem:[%s2926 + $0x7f8] sm:$0xf]
    %v3219 = vld [vmem:[%s2926 + $0x7fc] sm:$0xff]
    %v3220 = vld [vmem:[%s2926 + $0x804] sm:$0xff]
    %v3221 = vld [vmem:[%s2926 + $0x80c] sm:$0xff]
    %v3222 = vld [vmem:[%s2926 + $0x814] sm:$0xf]
    %v3223 = vld [vmem:[%s2926 + $0x818] sm:$0xff]
    %v3224 = vld [vmem:[%s2926 + $0x820] sm:$0xff]
    %v3225 = vld [vmem:[%s2926 + $0x828] sm:$0xff]
    %v3226 = vld [vmem:[%s2926 + $0x830] sm:$0xf]
    %v3227 = vld [vmem:[%s2926 + $0x834] sm:$0xff]
    %v3228 = vld [vmem:[%s2926 + $0x83c] sm:$0xff]
    %v3229 = vld [vmem:[%s2926 + $0x844] sm:$0xff]
    %v3230 = vld [vmem:[%s2926 + $0x84c] sm:$0xf]
    %v3231 = vld [vmem:[%s2926 + $0x850] sm:$0xff]
    %v3232 = vld [vmem:[%s2926 + $0x858] sm:$0xff]
    %v3233 = vld [vmem:[%s2926 + $0x860] sm:$0xff]
    %v3234 = vld [vmem:[%s2926 + $0x868] sm:$0xf]
    %v3235 = vld [vmem:[%s2926 + $0x86c] sm:$0xff]
    %v3236 = vld [vmem:[%s2926 + $0x874] sm:$0xff]
    %v3237 = vld [vmem:[%s2926 + $0x87c] sm:$0xff]
    %v3238 = vld [vmem:[%s2926 + $0x884] sm:$0xf]
    %v3239 = vld [vmem:[%s2926 + $0x888] sm:$0xff]
    %v3240 = vld [vmem:[%s2926 + $0x890] sm:$0xff]
    %v3241 = vld [vmem:[%s2926 + $0x898] sm:$0xff]
    %v3242 = vld [vmem:[%s2926 + $0x8a0] sm:$0xf]
    %v3243 = vld [vmem:[%s2926 + $0x8a4] sm:$0xff]
    %v3244 = vld [vmem:[%s2926 + $0x8ac] sm:$0xff]
    %v3245 = vld [vmem:[%s2926 + $0x8b4] sm:$0xff]
    %v3246 = vld [vmem:[%s2926 + $0x8bc] sm:$0xf]
    %v3247 = vld [vmem:[%s2926 + $0x8c0] sm:$0xff]
    %v3248 = vld [vmem:[%s2926 + $0x8c8] sm:$0xff]
    %v3249 = vld [vmem:[%s2926 + $0x8d0] sm:$0xff]
    %v3250 = vld [vmem:[%s2926 + $0x8d8] sm:$0xf]
    %v3251 = vld [vmem:[%s2926 + $0x8dc] sm:$0xff]
    %v3252 = vld [vmem:[%s2926 + $0x8e4] sm:$0xff]
    %v3253 = vld [vmem:[%s2926 + $0x8ec] sm:$0xff]
    %v3254 = vld [vmem:[%s2926 + $0x8f4] sm:$0xf]
    %v3255 = vld [vmem:[%s2926 + $0x8f8] sm:$0xff]
    %v3256 = vld [vmem:[%s2926 + $0x900] sm:$0xff]
    %v3257 = vld [vmem:[%s2926 + $0x908] sm:$0xff]
    %v3258 = vld [vmem:[%s2926 + $0x910] sm:$0xf]
    %v3259 = vld [vmem:[%s2926 + $0x914] sm:$0xff]
    %v3260 = vld [vmem:[%s2926 + $0x91c] sm:$0xff]
    %v3261 = vld [vmem:[%s2926 + $0x924] sm:$0xff]
    %v3262 = vld [vmem:[%s2926 + $0x92c] sm:$0xf]
    %v3263 = vld [vmem:[%s2926 + $0x930] sm:$0xff]
    %v3264 = vld [vmem:[%s2926 + $0x938] sm:$0xff]
    %v3265 = vld [vmem:[%s2926 + $0x940] sm:$0xff]
    %v3266 = vld [vmem:[%s2926 + $0x948] sm:$0xf]
    %v3267 = vld [vmem:[%s2926 + $0x94c] sm:$0xff]
    %v3268 = vld [vmem:[%s2926 + $0x954] sm:$0xff]
    %v3269 = vld [vmem:[%s2926 + $0x95c] sm:$0xff]
    %v3270 = vld [vmem:[%s2926 + $0x964] sm:$0xf]
    %v3271 = vld [vmem:[%s2926 + $0x968] sm:$0xff]
    %v3272 = vld [vmem:[%s2926 + $0x970] sm:$0xff]
    %v3273 = vld [vmem:[%s2926 + $0x978] sm:$0xff]
    %v3274 = vld [vmem:[%s2926 + $0x980] sm:$0xf]
    %v3275 = vld [vmem:[%s2926 + $0x984] sm:$0xff]
    %v3276 = vld [vmem:[%s2926 + $0x98c] sm:$0xff]
    %v3277 = vld [vmem:[%s2926 + $0x994] sm:$0xff]
    %v3278 = vld [vmem:[%s2926 + $0x99c] sm:$0xf]
    %v3279 = vld [vmem:[%s2926 + $0x9a0] sm:$0xff]
    %v3280 = vld [vmem:[%s2926 + $0x9a8] sm:$0xff]
    %v3281 = vld [vmem:[%s2926 + $0x9b0] sm:$0xff]
    %v3282 = vld [vmem:[%s2926 + $0x9b8] sm:$0xf]
    %v3283 = vld [vmem:[%s2926 + $0x9bc] sm:$0xff]
    %v3284 = vld [vmem:[%s2926 + $0x9c4] sm:$0xff]
    %v3285 = vld [vmem:[%s2926 + $0x9cc] sm:$0xff]
    %v3286 = vld [vmem:[%s2926 + $0x9d4] sm:$0xf]
    %v3287 = vld [vmem:[%s2926 + $0x9d8] sm:$0xff]
    %v3288 = vld [vmem:[%s2926 + $0x9e0] sm:$0xff]
    %v3289 = vld [vmem:[%s2926 + $0x9e8] sm:$0xff]
    %v3290 = vld [vmem:[%s2926 + $0x9f0] sm:$0xf]
    %v3291 = vld [vmem:[%s2926 + $0x9f4] sm:$0xff]
    %v3292 = vld [vmem:[%s2926 + $0x9fc] sm:$0xff]
    %v3293 = vld [vmem:[%s2926 + $0xa04] sm:$0xff]
    %v3294 = vld [vmem:[%s2926 + $0xa0c] sm:$0xf]
    %v3295 = vld [vmem:[%s2926 + $0xa10] sm:$0xff]
    %v3296 = vld [vmem:[%s2926 + $0xa18] sm:$0xff]
    %v3297 = vld [vmem:[%s2926 + $0xa20] sm:$0xff]
    %v3298 = vld [vmem:[%s2926 + $0xa28] sm:$0xf]
    %v3299 = vld [vmem:[%s2926 + $0xa2c] sm:$0xff]
    %v3300 = vld [vmem:[%s2926 + $0xa34] sm:$0xff]
    %v3301 = vld [vmem:[%s2926 + $0xa3c] sm:$0xff]
    %v3302 = vld [vmem:[%s2926 + $0xa44] sm:$0xf]
    %v3303 = vld [vmem:[%s2926 + $0xa48] sm:$0xff]
    %v3304 = vld [vmem:[%s2926 + $0xa50] sm:$0xff]
    %v3305 = vld [vmem:[%s2926 + $0xa58] sm:$0xff]
    %v3306 = vld [vmem:[%s2926 + $0xa60] sm:$0xf]
    %v3307 = vld [vmem:[%s2926 + $0xa64] sm:$0xff]
    %v3308 = vld [vmem:[%s2926 + $0xa6c] sm:$0xff]
    %v3309 = vld [vmem:[%s2926 + $0xa74] sm:$0xff]
    %v3310 = vld [vmem:[%s2926 + $0xa7c] sm:$0xf]
    %v3311 = vld [vmem:[%s2926 + $0xa80] sm:$0xff]
    %v3312 = vld [vmem:[%s2926 + $0xa88] sm:$0xff]
    %v3313 = vld [vmem:[%s2926 + $0xa90] sm:$0xff]
    %v3314 = vld [vmem:[%s2926 + $0xa98] sm:$0xf]
    %v3315 = vld [vmem:[%s2926 + $0xa9c] sm:$0xff]
    %v3316 = vld [vmem:[%s2926 + $0xaa4] sm:$0xff]
    %v3317 = vld [vmem:[%s2926 + $0xaac] sm:$0xff]
    %v3318 = vld [vmem:[%s2926 + $0xab4] sm:$0xf]
    %v3711 = vunpack.c.l.b16 %v2927
    %v3712 = vunpack.c.h.b16 %v2927
    %v3713 = vunpack.c.l.b16 %v2928
    %v3714 = vunpack.c.h.b16 %v2928
    %v3715 = vunpack.c.l.b16 %v2929
    %v3716 = vunpack.c.h.b16 %v2929
    %v3717 = vunpack.c.l.b16 %v2930
    %v3718 = vunpack.c.l.b16 %v2931
    %v3719 = vunpack.c.h.b16 %v2931
    %v3720 = vunpack.c.l.b16 %v2932
    %v3721 = vunpack.c.h.b16 %v2932
    %v3722 = vunpack.c.l.b16 %v2933
    %v3723 = vunpack.c.h.b16 %v2933
    %v3724 = vunpack.c.l.b16 %v2934
    %v3725 = vunpack.c.l.b16 %v2935
    %v3726 = vunpack.c.h.b16 %v2935
    %v3727 = vunpack.c.l.b16 %v2936
    %v3728 = vunpack.c.h.b16 %v2936
    %v3729 = vunpack.c.l.b16 %v2937
    %v3730 = vunpack.c.h.b16 %v2937
    %v3731 = vunpack.c.l.b16 %v2938
    %v3732 = vunpack.c.l.b16 %v2939
    %v3733 = vunpack.c.h.b16 %v2939
    %v3734 = vunpack.c.l.b16 %v2940
    %v3735 = vunpack.c.h.b16 %v2940
    %v3736 = vunpack.c.l.b16 %v2941
    %v3737 = vunpack.c.h.b16 %v2941
    %v3738 = vunpack.c.l.b16 %v2942
    %v3739 = vunpack.c.l.b16 %v2943
    %v3740 = vunpack.c.h.b16 %v2943
    %v3741 = vunpack.c.l.b16 %v2944
    %v3742 = vunpack.c.h.b16 %v2944
    %v3743 = vunpack.c.l.b16 %v2945
    %v3744 = vunpack.c.h.b16 %v2945
    %v3745 = vunpack.c.l.b16 %v2946
    %v3746 = vunpack.c.l.b16 %v2947
    %v3747 = vunpack.c.h.b16 %v2947
    %v3748 = vunpack.c.l.b16 %v2948
    %v3749 = vunpack.c.h.b16 %v2948
    %v3750 = vunpack.c.l.b16 %v2949
    %v3751 = vunpack.c.h.b16 %v2949
    %v3752 = vunpack.c.l.b16 %v2950
    %v3753 = vunpack.c.l.b16 %v2951
    %v3754 = vunpack.c.h.b16 %v2951
    %v3755 = vunpack.c.l.b16 %v2952
    %v3756 = vunpack.c.h.b16 %v2952
    %v3757 = vunpack.c.l.b16 %v2953
    %v3758 = vunpack.c.h.b16 %v2953
    %v3759 = vunpack.c.l.b16 %v2954
    %v3760 = vunpack.c.l.b16 %v2955
    %v3761 = vunpack.c.h.b16 %v2955
    %v3762 = vunpack.c.l.b16 %v2956
    %v3763 = vunpack.c.h.b16 %v2956
    %v3764 = vunpack.c.l.b16 %v2957
    %v3765 = vunpack.c.h.b16 %v2957
    %v3766 = vunpack.c.l.b16 %v2958
    %v3767 = vunpack.c.l.b16 %v2959
    %v3768 = vunpack.c.h.b16 %v2959
    %v3769 = vunpack.c.l.b16 %v2960
    %v3770 = vunpack.c.h.b16 %v2960
    %v3771 = vunpack.c.l.b16 %v2961
    %v3772 = vunpack.c.h.b16 %v2961
    %v3773 = vunpack.c.l.b16 %v2962
    %v3774 = vunpack.c.l.b16 %v2963
    %v3775 = vunpack.c.h.b16 %v2963
    %v3776 = vunpack.c.l.b16 %v2964
    %v3777 = vunpack.c.h.b16 %v2964
    %v3778 = vunpack.c.l.b16 %v2965
    %v3779 = vunpack.c.h.b16 %v2965
    %v3780 = vunpack.c.l.b16 %v2966
    %v3781 = vunpack.c.l.b16 %v2967
    %v3782 = vunpack.c.h.b16 %v2967
    %v3783 = vunpack.c.l.b16 %v2968
    %v3784 = vunpack.c.h.b16 %v2968
    %v3785 = vunpack.c.l.b16 %v2969
    %v3786 = vunpack.c.h.b16 %v2969
    %v3787 = vunpack.c.l.b16 %v2970
    %v3788 = vunpack.c.l.b16 %v2971
    %v3789 = vunpack.c.h.b16 %v2971
    %v3790 = vunpack.c.l.b16 %v2972
    %v3791 = vunpack.c.h.b16 %v2972
    %v3792 = vunpack.c.l.b16 %v2973
    %v3793 = vunpack.c.h.b16 %v2973
    %v3794 = vunpack.c.l.b16 %v2974
    %v3795 = vunpack.c.l.b16 %v2975
    %v3796 = vunpack.c.h.b16 %v2975
    %v3797 = vunpack.c.l.b16 %v2976
    %v3798 = vunpack.c.h.b16 %v2976
    %v3799 = vunpack.c.l.b16 %v2977
    %v3800 = vunpack.c.h.b16 %v2977
    %v3801 = vunpack.c.l.b16 %v2978
    %v3802 = vunpack.c.l.b16 %v2979
    %v3803 = vunpack.c.h.b16 %v2979
    %v3804 = vunpack.c.l.b16 %v2980
    %v3805 = vunpack.c.h.b16 %v2980
    %v3806 = vunpack.c.l.b16 %v2981
    %v3807 = vunpack.c.h.b16 %v2981
    %v3808 = vunpack.c.l.b16 %v2982
    %v3809 = vunpack.c.l.b16 %v2983
    %v3810 = vunpack.c.h.b16 %v2983
    %v3811 = vunpack.c.l.b16 %v2984
    %v3812 = vunpack.c.h.b16 %v2984
    %v3813 = vunpack.c.l.b16 %v2985
    %v3814 = vunpack.c.h.b16 %v2985
    %v3815 = vunpack.c.l.b16 %v2986
    %v3816 = vunpack.c.l.b16 %v2987
    %v3817 = vunpack.c.h.b16 %v2987
    %v3818 = vunpack.c.l.b16 %v2988
    %v3819 = vunpack.c.h.b16 %v2988
    %v3820 = vunpack.c.l.b16 %v2989
    %v3821 = vunpack.c.h.b16 %v2989
    %v3822 = vunpack.c.l.b16 %v2990
    %v3823 = vunpack.c.l.b16 %v2991
    %v3824 = vunpack.c.h.b16 %v2991
    %v3825 = vunpack.c.l.b16 %v2992
    %v3826 = vunpack.c.h.b16 %v2992
    %v3827 = vunpack.c.l.b16 %v2993
    %v3828 = vunpack.c.h.b16 %v2993
    %v3829 = vunpack.c.l.b16 %v2994
    %v3830 = vunpack.c.l.b16 %v2995
    %v3831 = vunpack.c.h.b16 %v2995
    %v3832 = vunpack.c.l.b16 %v2996
    %v3833 = vunpack.c.h.b16 %v2996
    %v3834 = vunpack.c.l.b16 %v2997
    %v3835 = vunpack.c.h.b16 %v2997
    %v3836 = vunpack.c.l.b16 %v2998
    %v3837 = vunpack.c.l.b16 %v2999
    %v3838 = vunpack.c.h.b16 %v2999
    %v3839 = vunpack.c.l.b16 %v3000
    %v3840 = vunpack.c.h.b16 %v3000
    %v3841 = vunpack.c.l.b16 %v3001
    %v3842 = vunpack.c.h.b16 %v3001
    %v3843 = vunpack.c.l.b16 %v3002
    %v3844 = vunpack.c.l.b16 %v3003
    %v3845 = vunpack.c.h.b16 %v3003
    %v3846 = vunpack.c.l.b16 %v3004
    %v3847 = vunpack.c.h.b16 %v3004
    %v3848 = vunpack.c.l.b16 %v3005
    %v3849 = vunpack.c.h.b16 %v3005
    %v3850 = vunpack.c.l.b16 %v3006
    %v3851 = vunpack.c.l.b16 %v3007
    %v3852 = vunpack.c.h.b16 %v3007
    %v3853 = vunpack.c.l.b16 %v3008
    %v3854 = vunpack.c.h.b16 %v3008
    %v3855 = vunpack.c.l.b16 %v3009
    %v3856 = vunpack.c.h.b16 %v3009
    %v3857 = vunpack.c.l.b16 %v3010
    %v3858 = vunpack.c.l.b16 %v3011
    %v3859 = vunpack.c.h.b16 %v3011
    %v3860 = vunpack.c.l.b16 %v3012
    %v3861 = vunpack.c.h.b16 %v3012
    %v3862 = vunpack.c.l.b16 %v3013
    %v3863 = vunpack.c.h.b16 %v3013
    %v3864 = vunpack.c.l.b16 %v3014
    %v3865 = vunpack.c.l.b16 %v3015
    %v3866 = vunpack.c.h.b16 %v3015
    %v3867 = vunpack.c.l.b16 %v3016
    %v3868 = vunpack.c.h.b16 %v3016
    %v3869 = vunpack.c.l.b16 %v3017
    %v3870 = vunpack.c.h.b16 %v3017
    %v3871 = vunpack.c.l.b16 %v3018
    %v3872 = vunpack.c.l.b16 %v3019
    %v3873 = vunpack.c.h.b16 %v3019
    %v3874 = vunpack.c.l.b16 %v3020
    %v3875 = vunpack.c.h.b16 %v3020
    %v3876 = vunpack.c.l.b16 %v3021
    %v3877 = vunpack.c.h.b16 %v3021
    %v3878 = vunpack.c.l.b16 %v3022
    %v3879 = vunpack.c.l.b16 %v3023
    %v3880 = vunpack.c.h.b16 %v3023
    %v3881 = vunpack.c.l.b16 %v3024
    %v3882 = vunpack.c.h.b16 %v3024
    %v3883 = vunpack.c.l.b16 %v3025
    %v3884 = vunpack.c.h.b16 %v3025
    %v3885 = vunpack.c.l.b16 %v3026
    %v3886 = vunpack.c.l.b16 %v3027
    %v3887 = vunpack.c.h.b16 %v3027
    %v3888 = vunpack.c.l.b16 %v3028
    %v3889 = vunpack.c.h.b16 %v3028
    %v3890 = vunpack.c.l.b16 %v3029
    %v3891 = vunpack.c.h.b16 %v3029
    %v3892 = vunpack.c.l.b16 %v3030
    %v3893 = vunpack.c.l.b16 %v3031
    %v3894 = vunpack.c.h.b16 %v3031
    %v3895 = vunpack.c.l.b16 %v3032
    %v3896 = vunpack.c.h.b16 %v3032
    %v3897 = vunpack.c.l.b16 %v3033
    %v3898 = vunpack.c.h.b16 %v3033
    %v3899 = vunpack.c.l.b16 %v3034
    %v3900 = vunpack.c.l.b16 %v3035
    %v3901 = vunpack.c.h.b16 %v3035
    %v3902 = vunpack.c.l.b16 %v3036
    %v3903 = vunpack.c.h.b16 %v3036
    %v3904 = vunpack.c.l.b16 %v3037
    %v3905 = vunpack.c.h.b16 %v3037
    %v3906 = vunpack.c.l.b16 %v3038
    %v3907 = vunpack.c.l.b16 %v3039
    %v3908 = vunpack.c.h.b16 %v3039
    %v3909 = vunpack.c.l.b16 %v3040
    %v3910 = vunpack.c.h.b16 %v3040
    %v3911 = vunpack.c.l.b16 %v3041
    %v3912 = vunpack.c.h.b16 %v3041
    %v3913 = vunpack.c.l.b16 %v3042
    %v3914 = vunpack.c.l.b16 %v3043
    %v3915 = vunpack.c.h.b16 %v3043
    %v3916 = vunpack.c.l.b16 %v3044
    %v3917 = vunpack.c.h.b16 %v3044
    %v3918 = vunpack.c.l.b16 %v3045
    %v3919 = vunpack.c.h.b16 %v3045
    %v3920 = vunpack.c.l.b16 %v3046
    %v3921 = vunpack.c.l.b16 %v3047
    %v3922 = vunpack.c.h.b16 %v3047
    %v3923 = vunpack.c.l.b16 %v3048
    %v3924 = vunpack.c.h.b16 %v3048
    %v3925 = vunpack.c.l.b16 %v3049
    %v3926 = vunpack.c.h.b16 %v3049
    %v3927 = vunpack.c.l.b16 %v3050
    %v3928 = vunpack.c.l.b16 %v3051
    %v3929 = vunpack.c.h.b16 %v3051
    %v3930 = vunpack.c.l.b16 %v3052
    %v3931 = vunpack.c.h.b16 %v3052
    %v3932 = vunpack.c.l.b16 %v3053
    %v3933 = vunpack.c.h.b16 %v3053
    %v3934 = vunpack.c.l.b16 %v3054
    %v3935 = vunpack.c.l.b16 %v3055
    %v3936 = vunpack.c.h.b16 %v3055
    %v3937 = vunpack.c.l.b16 %v3056
    %v3938 = vunpack.c.h.b16 %v3056
    %v3939 = vunpack.c.l.b16 %v3057
    %v3940 = vunpack.c.h.b16 %v3057
    %v3941 = vunpack.c.l.b16 %v3058
    %v3942 = vunpack.c.l.b16 %v3059
    %v3943 = vunpack.c.h.b16 %v3059
    %v3944 = vunpack.c.l.b16 %v3060
    %v3945 = vunpack.c.h.b16 %v3060
    %v3946 = vunpack.c.l.b16 %v3061
    %v3947 = vunpack.c.h.b16 %v3061
    %v3948 = vunpack.c.l.b16 %v3062
    %v3949 = vunpack.c.l.b16 %v3063
    %v3950 = vunpack.c.h.b16 %v3063
    %v3951 = vunpack.c.l.b16 %v3064
    %v3952 = vunpack.c.h.b16 %v3064
    %v3953 = vunpack.c.l.b16 %v3065
    %v3954 = vunpack.c.h.b16 %v3065
    %v3955 = vunpack.c.l.b16 %v3066
    %v3956 = vunpack.c.l.b16 %v3067
    %v3957 = vunpack.c.h.b16 %v3067
    %v3958 = vunpack.c.l.b16 %v3068
    %v3959 = vunpack.c.h.b16 %v3068
    %v3960 = vunpack.c.l.b16 %v3069
    %v3961 = vunpack.c.h.b16 %v3069
    %v3962 = vunpack.c.l.b16 %v3070
    %v3963 = vunpack.c.l.b16 %v3071
    %v3964 = vunpack.c.h.b16 %v3071
    %v3965 = vunpack.c.l.b16 %v3072
    %v3966 = vunpack.c.h.b16 %v3072
    %v3967 = vunpack.c.l.b16 %v3073
    %v3968 = vunpack.c.h.b16 %v3073
    %v3969 = vunpack.c.l.b16 %v3074
    %v3970 = vunpack.c.l.b16 %v3075
    %v3971 = vunpack.c.h.b16 %v3075
    %v3972 = vunpack.c.l.b16 %v3076
    %v3973 = vunpack.c.h.b16 %v3076
    %v3974 = vunpack.c.l.b16 %v3077
    %v3975 = vunpack.c.h.b16 %v3077
    %v3976 = vunpack.c.l.b16 %v3078
    %v3977 = vunpack.c.l.b16 %v3079
    %v3978 = vunpack.c.h.b16 %v3079
    %v3979 = vunpack.c.l.b16 %v3080
    %v3980 = vunpack.c.h.b16 %v3080
    %v3981 = vunpack.c.l.b16 %v3081
    %v3982 = vunpack.c.h.b16 %v3081
    %v3983 = vunpack.c.l.b16 %v3082
    %v3984 = vunpack.c.l.b16 %v3083
    %v3985 = vunpack.c.h.b16 %v3083
    %v3986 = vunpack.c.l.b16 %v3084
    %v3987 = vunpack.c.h.b16 %v3084
    %v3988 = vunpack.c.l.b16 %v3085
    %v3989 = vunpack.c.h.b16 %v3085
    %v3990 = vunpack.c.l.b16 %v3086
    %v3991 = vunpack.c.l.b16 %v3087
    %v3992 = vunpack.c.h.b16 %v3087
    %v3993 = vunpack.c.l.b16 %v3088
    %v3994 = vunpack.c.h.b16 %v3088
    %v3995 = vunpack.c.l.b16 %v3089
    %v3996 = vunpack.c.h.b16 %v3089
    %v3997 = vunpack.c.l.b16 %v3090
    %v3998 = vunpack.c.l.b16 %v3091
    %v3999 = vunpack.c.h.b16 %v3091
    %v4000 = vunpack.c.l.b16 %v3092
    %v4001 = vunpack.c.h.b16 %v3092
    %v4002 = vunpack.c.l.b16 %v3093
    %v4003 = vunpack.c.h.b16 %v3093
    %v4004 = vunpack.c.l.b16 %v3094
    %v4005 = vunpack.c.l.b16 %v3095
    %v4006 = vunpack.c.h.b16 %v3095
    %v4007 = vunpack.c.l.b16 %v3096
    %v4008 = vunpack.c.h.b16 %v3096
    %v4009 = vunpack.c.l.b16 %v3097
    %v4010 = vunpack.c.h.b16 %v3097
    %v4011 = vunpack.c.l.b16 %v3098
    %v4012 = vunpack.c.l.b16 %v3099
    %v4013 = vunpack.c.h.b16 %v3099
    %v4014 = vunpack.c.l.b16 %v3100
    %v4015 = vunpack.c.h.b16 %v3100
    %v4016 = vunpack.c.l.b16 %v3101
    %v4017 = vunpack.c.h.b16 %v3101
    %v4018 = vunpack.c.l.b16 %v3102
    %v4019 = vunpack.c.l.b16 %v3103
    %v4020 = vunpack.c.h.b16 %v3103
    %v4021 = vunpack.c.l.b16 %v3104
    %v4022 = vunpack.c.h.b16 %v3104
    %v4023 = vunpack.c.l.b16 %v3105
    %v4024 = vunpack.c.h.b16 %v3105
    %v4025 = vunpack.c.l.b16 %v3106
    %v4026 = vunpack.c.l.b16 %v3107
    %v4027 = vunpack.c.h.b16 %v3107
    %v4028 = vunpack.c.l.b16 %v3108
    %v4029 = vunpack.c.h.b16 %v3108
    %v4030 = vunpack.c.l.b16 %v3109
    %v4031 = vunpack.c.h.b16 %v3109
    %v4032 = vunpack.c.l.b16 %v3110
    %v4033 = vunpack.c.l.b16 %v3111
    %v4034 = vunpack.c.h.b16 %v3111
    %v4035 = vunpack.c.l.b16 %v3112
    %v4036 = vunpack.c.h.b16 %v3112
    %v4037 = vunpack.c.l.b16 %v3113
    %v4038 = vunpack.c.h.b16 %v3113
    %v4039 = vunpack.c.l.b16 %v3114
    %v4040 = vunpack.c.l.b16 %v3115
    %v4041 = vunpack.c.h.b16 %v3115
    %v4042 = vunpack.c.l.b16 %v3116
    %v4043 = vunpack.c.h.b16 %v3116
    %v4044 = vunpack.c.l.b16 %v3117
    %v4045 = vunpack.c.h.b16 %v3117
    %v4046 = vunpack.c.l.b16 %v3118
    %v4047 = vunpack.c.l.b16 %v3119
    %v4048 = vunpack.c.h.b16 %v3119
    %v4049 = vunpack.c.l.b16 %v3120
    %v4050 = vunpack.c.h.b16 %v3120
    %v4051 = vunpack.c.l.b16 %v3121
    %v4052 = vunpack.c.h.b16 %v3121
    %v4053 = vunpack.c.l.b16 %v3122
    %v4054 = vunpack.c.l.b16 %v3123
    %v4055 = vunpack.c.h.b16 %v3123
    %v4056 = vunpack.c.l.b16 %v3124
    %v4057 = vunpack.c.h.b16 %v3124
    %v4058 = vunpack.c.l.b16 %v3125
    %v4059 = vunpack.c.h.b16 %v3125
    %v4060 = vunpack.c.l.b16 %v3126
    %v4061 = vunpack.c.l.b16 %v3127
    %v4062 = vunpack.c.h.b16 %v3127
    %v4063 = vunpack.c.l.b16 %v3128
    %v4064 = vunpack.c.h.b16 %v3128
    %v4065 = vunpack.c.l.b16 %v3129
    %v4066 = vunpack.c.h.b16 %v3129
    %v4067 = vunpack.c.l.b16 %v3130
    %v4068 = vunpack.c.l.b16 %v3131
    %v4069 = vunpack.c.h.b16 %v3131
    %v4070 = vunpack.c.l.b16 %v3132
    %v4071 = vunpack.c.h.b16 %v3132
    %v4072 = vunpack.c.l.b16 %v3133
    %v4073 = vunpack.c.h.b16 %v3133
    %v4074 = vunpack.c.l.b16 %v3134
    %v4075 = vunpack.c.l.b16 %v3135
    %v4076 = vunpack.c.h.b16 %v3135
    %v4077 = vunpack.c.l.b16 %v3136
    %v4078 = vunpack.c.h.b16 %v3136
    %v4079 = vunpack.c.l.b16 %v3137
    %v4080 = vunpack.c.h.b16 %v3137
    %v4081 = vunpack.c.l.b16 %v3138
    %v4082 = vunpack.c.l.b16 %v3139
    %v4083 = vunpack.c.h.b16 %v3139
    %v4084 = vunpack.c.l.b16 %v3140
    %v4085 = vunpack.c.h.b16 %v3140
    %v4086 = vunpack.c.l.b16 %v3141
    %v4087 = vunpack.c.h.b16 %v3141
    %v4088 = vunpack.c.l.b16 %v3142
    %v4089 = vunpack.c.l.b16 %v3143
    %v4090 = vunpack.c.h.b16 %v3143
    %v4091 = vunpack.c.l.b16 %v3144
    %v4092 = vunpack.c.h.b16 %v3144
    %v4093 = vunpack.c.l.b16 %v3145
    %v4094 = vunpack.c.h.b16 %v3145
    %v4095 = vunpack.c.l.b16 %v3146
    %v4096 = vunpack.c.l.b16 %v3147
    %v4097 = vunpack.c.h.b16 %v3147
    %v4098 = vunpack.c.l.b16 %v3148
    %v4099 = vunpack.c.h.b16 %v3148
    %v4100 = vunpack.c.l.b16 %v3149
    %v4101 = vunpack.c.h.b16 %v3149
    %v4102 = vunpack.c.l.b16 %v3150
    %v4103 = vunpack.c.l.b16 %v3151
    %v4104 = vunpack.c.h.b16 %v3151
    %v4105 = vunpack.c.l.b16 %v3152
    %v4106 = vunpack.c.h.b16 %v3152
    %v4107 = vunpack.c.l.b16 %v3153
    %v4108 = vunpack.c.h.b16 %v3153
    %v4109 = vunpack.c.l.b16 %v3154
    %v4110 = vunpack.c.l.b16 %v3155
    %v4111 = vunpack.c.h.b16 %v3155
    %v4112 = vunpack.c.l.b16 %v3156
    %v4113 = vunpack.c.h.b16 %v3156
    %v4114 = vunpack.c.l.b16 %v3157
    %v4115 = vunpack.c.h.b16 %v3157
    %v4116 = vunpack.c.l.b16 %v3158
    %v4117 = vunpack.c.l.b16 %v3159
    %v4118 = vunpack.c.h.b16 %v3159
    %v4119 = vunpack.c.l.b16 %v3160
    %v4120 = vunpack.c.h.b16 %v3160
    %v4121 = vunpack.c.l.b16 %v3161
    %v4122 = vunpack.c.h.b16 %v3161
    %v4123 = vunpack.c.l.b16 %v3162
    %v4124 = vunpack.c.l.b16 %v3163
    %v4125 = vunpack.c.h.b16 %v3163
    %v4126 = vunpack.c.l.b16 %v3164
    %v4127 = vunpack.c.h.b16 %v3164
    %v4128 = vunpack.c.l.b16 %v3165
    %v4129 = vunpack.c.h.b16 %v3165
    %v4130 = vunpack.c.l.b16 %v3166
    %v4131 = vunpack.c.l.b16 %v3167
    %v4132 = vunpack.c.h.b16 %v3167
    %v4133 = vunpack.c.l.b16 %v3168
    %v4134 = vunpack.c.h.b16 %v3168
    %v4135 = vunpack.c.l.b16 %v3169
    %v4136 = vunpack.c.h.b16 %v3169
    %v4137 = vunpack.c.l.b16 %v3170
    %v4138 = vunpack.c.l.b16 %v3171
    %v4139 = vunpack.c.h.b16 %v3171
    %v4140 = vunpack.c.l.b16 %v3172
    %v4141 = vunpack.c.h.b16 %v3172
    %v4142 = vunpack.c.l.b16 %v3173
    %v4143 = vunpack.c.h.b16 %v3173
    %v4144 = vunpack.c.l.b16 %v3174
    %v4145 = vunpack.c.l.b16 %v3175
    %v4146 = vunpack.c.h.b16 %v3175
    %v4147 = vunpack.c.l.b16 %v3176
    %v4148 = vunpack.c.h.b16 %v3176
    %v4149 = vunpack.c.l.b16 %v3177
    %v4150 = vunpack.c.h.b16 %v3177
    %v4151 = vunpack.c.l.b16 %v3178
    %v4152 = vunpack.c.l.b16 %v3179
    %v4153 = vunpack.c.h.b16 %v3179
    %v4154 = vunpack.c.l.b16 %v3180
    %v4155 = vunpack.c.h.b16 %v3180
    %v4156 = vunpack.c.l.b16 %v3181
    %v4157 = vunpack.c.h.b16 %v3181
    %v4158 = vunpack.c.l.b16 %v3182
    %v4159 = vunpack.c.l.b16 %v3183
    %v4160 = vunpack.c.h.b16 %v3183
    %v4161 = vunpack.c.l.b16 %v3184
    %v4162 = vunpack.c.h.b16 %v3184
    %v4163 = vunpack.c.l.b16 %v3185
    %v4164 = vunpack.c.h.b16 %v3185
    %v4165 = vunpack.c.l.b16 %v3186
    %v4166 = vunpack.c.l.b16 %v3187
    %v4167 = vunpack.c.h.b16 %v3187
    %v4168 = vunpack.c.l.b16 %v3188
    %v4169 = vunpack.c.h.b16 %v3188
    %v4170 = vunpack.c.l.b16 %v3189
    %v4171 = vunpack.c.h.b16 %v3189
    %v4172 = vunpack.c.l.b16 %v3190
    %v4173 = vunpack.c.l.b16 %v3191
    %v4174 = vunpack.c.h.b16 %v3191
    %v4175 = vunpack.c.l.b16 %v3192
    %v4176 = vunpack.c.h.b16 %v3192
    %v4177 = vunpack.c.l.b16 %v3193
    %v4178 = vunpack.c.h.b16 %v3193
    %v4179 = vunpack.c.l.b16 %v3194
    %v4180 = vunpack.c.l.b16 %v3195
    %v4181 = vunpack.c.h.b16 %v3195
    %v4182 = vunpack.c.l.b16 %v3196
    %v4183 = vunpack.c.h.b16 %v3196
    %v4184 = vunpack.c.l.b16 %v3197
    %v4185 = vunpack.c.h.b16 %v3197
    %v4186 = vunpack.c.l.b16 %v3198
    %v4187 = vunpack.c.l.b16 %v3199
    %v4188 = vunpack.c.h.b16 %v3199
    %v4189 = vunpack.c.l.b16 %v3200
    %v4190 = vunpack.c.h.b16 %v3200
    %v4191 = vunpack.c.l.b16 %v3201
    %v4192 = vunpack.c.h.b16 %v3201
    %v4193 = vunpack.c.l.b16 %v3202
    %v4194 = vunpack.c.l.b16 %v3203
    %v4195 = vunpack.c.h.b16 %v3203
    %v4196 = vunpack.c.l.b16 %v3204
    %v4197 = vunpack.c.h.b16 %v3204
    %v4198 = vunpack.c.l.b16 %v3205
    %v4199 = vunpack.c.h.b16 %v3205
    %v4200 = vunpack.c.l.b16 %v3206
    %v4201 = vunpack.c.l.b16 %v3207
    %v4202 = vunpack.c.h.b16 %v3207
    %v4203 = vunpack.c.l.b16 %v3208
    %v4204 = vunpack.c.h.b16 %v3208
    %v4205 = vunpack.c.l.b16 %v3209
    %v4206 = vunpack.c.h.b16 %v3209
    %v4207 = vunpack.c.l.b16 %v3210
    %v4208 = vunpack.c.l.b16 %v3211
    %v4209 = vunpack.c.h.b16 %v3211
    %v4210 = vunpack.c.l.b16 %v3212
    %v4211 = vunpack.c.h.b16 %v3212
    %v4212 = vunpack.c.l.b16 %v3213
    %v4213 = vunpack.c.h.b16 %v3213
    %v4214 = vunpack.c.l.b16 %v3214
    %v4215 = vunpack.c.l.b16 %v3215
    %v4216 = vunpack.c.h.b16 %v3215
    %v4217 = vunpack.c.l.b16 %v3216
    %v4218 = vunpack.c.h.b16 %v3216
    %v4219 = vunpack.c.l.b16 %v3217
    %v4220 = vunpack.c.h.b16 %v3217
    %v4221 = vunpack.c.l.b16 %v3218
    %v4222 = vunpack.c.l.b16 %v3219
    %v4223 = vunpack.c.h.b16 %v3219
    %v4224 = vunpack.c.l.b16 %v3220
    %v4225 = vunpack.c.h.b16 %v3220
    %v4226 = vunpack.c.l.b16 %v3221
    %v4227 = vunpack.c.h.b16 %v3221
    %v4228 = vunpack.c.l.b16 %v3222
    %v4229 = vunpack.c.l.b16 %v3223
    %v4230 = vunpack.c.h.b16 %v3223
    %v4231 = vunpack.c.l.b16 %v3224
    %v4232 = vunpack.c.h.b16 %v3224
    %v4233 = vunpack.c.l.b16 %v3225
    %v4234 = vunpack.c.h.b16 %v3225
    %v4235 = vunpack.c.l.b16 %v3226
    %v4236 = vunpack.c.l.b16 %v3227
    %v4237 = vunpack.c.h.b16 %v3227
    %v4238 = vunpack.c.l.b16 %v3228
    %v4239 = vunpack.c.h.b16 %v3228
    %v4240 = vunpack.c.l.b16 %v3229
    %v4241 = vunpack.c.h.b16 %v3229
    %v4242 = vunpack.c.l.b16 %v3230
    %v4243 = vunpack.c.l.b16 %v3231
    %v4244 = vunpack.c.h.b16 %v3231
    %v4245 = vunpack.c.l.b16 %v3232
    %v4246 = vunpack.c.h.b16 %v3232
    %v4247 = vunpack.c.l.b16 %v3233
    %v4248 = vunpack.c.h.b16 %v3233
    %v4249 = vunpack.c.l.b16 %v3234
    %v4250 = vunpack.c.l.b16 %v3235
    %v4251 = vunpack.c.h.b16 %v3235
    %v4252 = vunpack.c.l.b16 %v3236
    %v4253 = vunpack.c.h.b16 %v3236
    %v4254 = vunpack.c.l.b16 %v3237
    %v4255 = vunpack.c.h.b16 %v3237
    %v4256 = vunpack.c.l.b16 %v3238
    %v4257 = vunpack.c.l.b16 %v3239
    %v4258 = vunpack.c.h.b16 %v3239
    %v4259 = vunpack.c.l.b16 %v3240
    %v4260 = vunpack.c.h.b16 %v3240
    %v4261 = vunpack.c.l.b16 %v3241
    %v4262 = vunpack.c.h.b16 %v3241
    %v4263 = vunpack.c.l.b16 %v3242
    %v4264 = vunpack.c.l.b16 %v3243
    %v4265 = vunpack.c.h.b16 %v3243
    %v4266 = vunpack.c.l.b16 %v3244
    %v4267 = vunpack.c.h.b16 %v3244
    %v4268 = vunpack.c.l.b16 %v3245
    %v4269 = vunpack.c.h.b16 %v3245
    %v4270 = vunpack.c.l.b16 %v3246
    %v4271 = vunpack.c.l.b16 %v3247
    %v4272 = vunpack.c.h.b16 %v3247
    %v4273 = vunpack.c.l.b16 %v3248
    %v4274 = vunpack.c.h.b16 %v3248
    %v4275 = vunpack.c.l.b16 %v3249
    %v4276 = vunpack.c.h.b16 %v3249
    %v4277 = vunpack.c.l.b16 %v3250
    %v4278 = vunpack.c.l.b16 %v3251
    %v4279 = vunpack.c.h.b16 %v3251
    %v4280 = vunpack.c.l.b16 %v3252
    %v4281 = vunpack.c.h.b16 %v3252
    %v4282 = vunpack.c.l.b16 %v3253
    %v4283 = vunpack.c.h.b16 %v3253
    %v4284 = vunpack.c.l.b16 %v3254
    %v4285 = vunpack.c.l.b16 %v3255
    %v4286 = vunpack.c.h.b16 %v3255
    %v4287 = vunpack.c.l.b16 %v3256
    %v4288 = vunpack.c.h.b16 %v3256
    %v4289 = vunpack.c.l.b16 %v3257
    %v4290 = vunpack.c.h.b16 %v3257
    %v4291 = vunpack.c.l.b16 %v3258
    %v4292 = vunpack.c.l.b16 %v3259
    %v4293 = vunpack.c.h.b16 %v3259
    %v4294 = vunpack.c.l.b16 %v3260
    %v4295 = vunpack.c.h.b16 %v3260
    %v4296 = vunpack.c.l.b16 %v3261
    %v4297 = vunpack.c.h.b16 %v3261
    %v4298 = vunpack.c.l.b16 %v3262
    %v4299 = vunpack.c.l.b16 %v3263
    %v4300 = vunpack.c.h.b16 %v3263
    %v4301 = vunpack.c.l.b16 %v3264
    %v4302 = vunpack.c.h.b16 %v3264
    %v4303 = vunpack.c.l.b16 %v3265
    %v4304 = vunpack.c.h.b16 %v3265
    %v4305 = vunpack.c.l.b16 %v3266
    %v4306 = vunpack.c.l.b16 %v3267
    %v4307 = vunpack.c.h.b16 %v3267
    %v4308 = vunpack.c.l.b16 %v3268
    %v4309 = vunpack.c.h.b16 %v3268
    %v4310 = vunpack.c.l.b16 %v3269
    %v4311 = vunpack.c.h.b16 %v3269
    %v4312 = vunpack.c.l.b16 %v3270
    %v4313 = vunpack.c.l.b16 %v3271
    %v4314 = vunpack.c.h.b16 %v3271
    %v4315 = vunpack.c.l.b16 %v3272
    %v4316 = vunpack.c.h.b16 %v3272
    %v4317 = vunpack.c.l.b16 %v3273
    %v4318 = vunpack.c.h.b16 %v3273
    %v4319 = vunpack.c.l.b16 %v3274
    %v4320 = vunpack.c.l.b16 %v3275
    %v4321 = vunpack.c.h.b16 %v3275
    %v4322 = vunpack.c.l.b16 %v3276
    %v4323 = vunpack.c.h.b16 %v3276
    %v4324 = vunpack.c.l.b16 %v3277
    %v4325 = vunpack.c.h.b16 %v3277
    %v4326 = vunpack.c.l.b16 %v3278
    %v4327 = vunpack.c.l.b16 %v3279
    %v4328 = vunpack.c.h.b16 %v3279
    %v4329 = vunpack.c.l.b16 %v3280
    %v4330 = vunpack.c.h.b16 %v3280
    %v4331 = vunpack.c.l.b16 %v3281
    %v4332 = vunpack.c.h.b16 %v3281
    %v4333 = vunpack.c.l.b16 %v3282
    %v4334 = vunpack.c.l.b16 %v3283
    %v4335 = vunpack.c.h.b16 %v3283
    %v4336 = vunpack.c.l.b16 %v3284
    %v4337 = vunpack.c.h.b16 %v3284
    %v4338 = vunpack.c.l.b16 %v3285
    %v4339 = vunpack.c.h.b16 %v3285
    %v4340 = vunpack.c.l.b16 %v3286
    %v4341 = vunpack.c.l.b16 %v3287
    %v4342 = vunpack.c.h.b16 %v3287
    %v4343 = vunpack.c.l.b16 %v3288
    %v4344 = vunpack.c.h.b16 %v3288
    %v4345 = vunpack.c.l.b16 %v3289
    %v4346 = vunpack.c.h.b16 %v3289
    %v4347 = vunpack.c.l.b16 %v3290
    %v4348 = vunpack.c.l.b16 %v3291
    %v4349 = vunpack.c.h.b16 %v3291
    %v4350 = vunpack.c.l.b16 %v3292
    %v4351 = vunpack.c.h.b16 %v3292
    %v4352 = vunpack.c.l.b16 %v3293
    %v4353 = vunpack.c.h.b16 %v3293
    %v4354 = vunpack.c.l.b16 %v3294
    %v4355 = vunpack.c.l.b16 %v3295
    %v4356 = vunpack.c.h.b16 %v3295
    %v4357 = vunpack.c.l.b16 %v3296
    %v4358 = vunpack.c.h.b16 %v3296
    %v4359 = vunpack.c.l.b16 %v3297
    %v4360 = vunpack.c.h.b16 %v3297
    %v4361 = vunpack.c.l.b16 %v3298
    %v4362 = vunpack.c.l.b16 %v3299
    %v4363 = vunpack.c.h.b16 %v3299
    %v4364 = vunpack.c.l.b16 %v3300
    %v4365 = vunpack.c.h.b16 %v3300
    %v4366 = vunpack.c.l.b16 %v3301
    %v4367 = vunpack.c.h.b16 %v3301
    %v4368 = vunpack.c.l.b16 %v3302
    %v4369 = vunpack.c.l.b16 %v3303
    %v4370 = vunpack.c.h.b16 %v3303
    %v4371 = vunpack.c.l.b16 %v3304
    %v4372 = vunpack.c.h.b16 %v3304
    %v4373 = vunpack.c.l.b16 %v3305
    %v4374 = vunpack.c.h.b16 %v3305
    %v4375 = vunpack.c.l.b16 %v3306
    %v4376 = vunpack.c.l.b16 %v3307
    %v4377 = vunpack.c.h.b16 %v3307
    %v4378 = vunpack.c.l.b16 %v3308
    %v4379 = vunpack.c.h.b16 %v3308
    %v4380 = vunpack.c.l.b16 %v3309
    %v4381 = vunpack.c.h.b16 %v3309
    %v4382 = vunpack.c.l.b16 %v3310
    %v4383 = vunpack.c.l.b16 %v3311
    %v4384 = vunpack.c.h.b16 %v3311
    %v4385 = vunpack.c.l.b16 %v3312
    %v4386 = vunpack.c.h.b16 %v3312
    %v4387 = vunpack.c.l.b16 %v3313
    %v4388 = vunpack.c.h.b16 %v3313
    %v4389 = vunpack.c.l.b16 %v3314
    %v4390 = vunpack.c.l.b16 %v3315
    %v4391 = vunpack.c.h.b16 %v3315
    %v4392 = vunpack.c.l.b16 %v3316
    %v4393 = vunpack.c.h.b16 %v3316
    %v4394 = vunpack.c.l.b16 %v3317
    %v4395 = vunpack.c.h.b16 %v3317
    %v4396 = vunpack.c.l.b16 %v3318
    %v4397 = vpack.c.b16 %v3718, %v3711
    %v4398 = vpack.c.b16 %v3719, %v3712
    %v4399 = vpack.c.b16 %v3720, %v3713
    %v4400 = vpack.c.b16 %v3721, %v3714
    %v4401 = vpack.c.b16 %v3722, %v3715
    %v4402 = vpack.c.b16 %v3723, %v3716
    %v4403 = vpack.c.b16 %v3724, %v3717
    %v4404 = vpack.c.b16 %v3732, %v3725
    %v4405 = vpack.c.b16 %v3733, %v3726
    %v4406 = vpack.c.b16 %v3734, %v3727
    %v4407 = vpack.c.b16 %v3735, %v3728
    %v4408 = vpack.c.b16 %v3736, %v3729
    %v4409 = vpack.c.b16 %v3737, %v3730
    %v4410 = vpack.c.b16 %v3738, %v3731
    %v4411 = vpack.c.b16 %v3746, %v3739
    %v4412 = vpack.c.b16 %v3747, %v3740
    %v4413 = vpack.c.b16 %v3748, %v3741
    %v4414 = vpack.c.b16 %v3749, %v3742
    %v4415 = vpack.c.b16 %v3750, %v3743
    %v4416 = vpack.c.b16 %v3751, %v3744
    %v4417 = vpack.c.b16 %v3752, %v3745
    %v4418 = vpack.c.b16 %v3760, %v3753
    %v4419 = vpack.c.b16 %v3761, %v3754
    %v4420 = vpack.c.b16 %v3762, %v3755
    %v4421 = vpack.c.b16 %v3763, %v3756
    %v4422 = vpack.c.b16 %v3764, %v3757
    %v4423 = vpack.c.b16 %v3765, %v3758
    %v4424 = vpack.c.b16 %v3766, %v3759
    %v4425 = vpack.c.b16 %v3774, %v3767
    %v4426 = vpack.c.b16 %v3775, %v3768
    %v4427 = vpack.c.b16 %v3776, %v3769
    %v4428 = vpack.c.b16 %v3777, %v3770
    %v4429 = vpack.c.b16 %v3778, %v3771
    %v4430 = vpack.c.b16 %v3779, %v3772
    %v4431 = vpack.c.b16 %v3780, %v3773
    %v4432 = vpack.c.b16 %v3788, %v3781
    %v4433 = vpack.c.b16 %v3789, %v3782
    %v4434 = vpack.c.b16 %v3790, %v3783
    %v4435 = vpack.c.b16 %v3791, %v3784
    %v4436 = vpack.c.b16 %v3792, %v3785
    %v4437 = vpack.c.b16 %v3793, %v3786
    %v4438 = vpack.c.b16 %v3794, %v3787
    %v4439 = vpack.c.b16 %v3802, %v3795
    %v4440 = vpack.c.b16 %v3803, %v3796
    %v4441 = vpack.c.b16 %v3804, %v3797
    %v4442 = vpack.c.b16 %v3805, %v3798
    %v4443 = vpack.c.b16 %v3806, %v3799
    %v4444 = vpack.c.b16 %v3807, %v3800
    %v4445 = vpack.c.b16 %v3808, %v3801
    %v4446 = vpack.c.b16 %v3816, %v3809
    %v4447 = vpack.c.b16 %v3817, %v3810
    %v4448 = vpack.c.b16 %v3818, %v3811
    %v4449 = vpack.c.b16 %v3819, %v3812
    %v4450 = vpack.c.b16 %v3820, %v3813
    %v4451 = vpack.c.b16 %v3821, %v3814
    %v4452 = vpack.c.b16 %v3822, %v3815
    %v4453 = vpack.c.b16 %v3830, %v3823
    %v4454 = vpack.c.b16 %v3831, %v3824
    %v4455 = vpack.c.b16 %v3832, %v3825
    %v4456 = vpack.c.b16 %v3833, %v3826
    %v4457 = vpack.c.b16 %v3834, %v3827
    %v4458 = vpack.c.b16 %v3835, %v3828
    %v4459 = vpack.c.b16 %v3836, %v3829
    %v4460 = vpack.c.b16 %v3844, %v3837
    %v4461 = vpack.c.b16 %v3845, %v3838
    %v4462 = vpack.c.b16 %v3846, %v3839
    %v4463 = vpack.c.b16 %v3847, %v3840
    %v4464 = vpack.c.b16 %v3848, %v3841
    %v4465 = vpack.c.b16 %v3849, %v3842
    %v4466 = vpack.c.b16 %v3850, %v3843
    %v4467 = vpack.c.b16 %v3858, %v3851
    %v4468 = vpack.c.b16 %v3859, %v3852
    %v4469 = vpack.c.b16 %v3860, %v3853
    %v4470 = vpack.c.b16 %v3861, %v3854
    %v4471 = vpack.c.b16 %v3862, %v3855
    %v4472 = vpack.c.b16 %v3863, %v3856
    %v4473 = vpack.c.b16 %v3864, %v3857
    %v4474 = vpack.c.b16 %v3872, %v3865
    %v4475 = vpack.c.b16 %v3873, %v3866
    %v4476 = vpack.c.b16 %v3874, %v3867
    %v4477 = vpack.c.b16 %v3875, %v3868
    %v4478 = vpack.c.b16 %v3876, %v3869
    %v4479 = vpack.c.b16 %v3877, %v3870
    %v4480 = vpack.c.b16 %v3878, %v3871
    %v4481 = vpack.c.b16 %v3886, %v3879
    %v4482 = vpack.c.b16 %v3887, %v3880
    %v4483 = vpack.c.b16 %v3888, %v3881
    %v4484 = vpack.c.b16 %v3889, %v3882
    %v4485 = vpack.c.b16 %v3890, %v3883
    %v4486 = vpack.c.b16 %v3891, %v3884
    %v4487 = vpack.c.b16 %v3892, %v3885
    %v4488 = vpack.c.b16 %v3900, %v3893
    %v4489 = vpack.c.b16 %v3901, %v3894
    %v4490 = vpack.c.b16 %v3902, %v3895
    %v4491 = vpack.c.b16 %v3903, %v3896
    %v4492 = vpack.c.b16 %v3904, %v3897
    %v4493 = vpack.c.b16 %v3905, %v3898
    %v4494 = vpack.c.b16 %v3906, %v3899
    %v4495 = vpack.c.b16 %v3914, %v3907
    %v4496 = vpack.c.b16 %v3915, %v3908
    %v4497 = vpack.c.b16 %v3916, %v3909
    %v4498 = vpack.c.b16 %v3917, %v3910
    %v4499 = vpack.c.b16 %v3918, %v3911
    %v4500 = vpack.c.b16 %v3919, %v3912
    %v4501 = vpack.c.b16 %v3920, %v3913
    %v4502 = vpack.c.b16 %v3928, %v3921
    %v4503 = vpack.c.b16 %v3929, %v3922
    %v4504 = vpack.c.b16 %v3930, %v3923
    %v4505 = vpack.c.b16 %v3931, %v3924
    %v4506 = vpack.c.b16 %v3932, %v3925
    %v4507 = vpack.c.b16 %v3933, %v3926
    %v4508 = vpack.c.b16 %v3934, %v3927
    %v4509 = vpack.c.b16 %v3942, %v3935
    %v4510 = vpack.c.b16 %v3943, %v3936
    %v4511 = vpack.c.b16 %v3944, %v3937
    %v4512 = vpack.c.b16 %v3945, %v3938
    %v4513 = vpack.c.b16 %v3946, %v3939
    %v4514 = vpack.c.b16 %v3947, %v3940
    %v4515 = vpack.c.b16 %v3948, %v3941
    %v4516 = vpack.c.b16 %v3956, %v3949
    %v4517 = vpack.c.b16 %v3957, %v3950
    %v4518 = vpack.c.b16 %v3958, %v3951
    %v4519 = vpack.c.b16 %v3959, %v3952
    %v4520 = vpack.c.b16 %v3960, %v3953
    %v4521 = vpack.c.b16 %v3961, %v3954
    %v4522 = vpack.c.b16 %v3962, %v3955
    %v4523 = vpack.c.b16 %v3970, %v3963
    %v4524 = vpack.c.b16 %v3971, %v3964
    %v4525 = vpack.c.b16 %v3972, %v3965
    %v4526 = vpack.c.b16 %v3973, %v3966
    %v4527 = vpack.c.b16 %v3974, %v3967
    %v4528 = vpack.c.b16 %v3975, %v3968
    %v4529 = vpack.c.b16 %v3976, %v3969
    %v4530 = vpack.c.b16 %v3984, %v3977
    %v4531 = vpack.c.b16 %v3985, %v3978
    %v4532 = vpack.c.b16 %v3986, %v3979
    %v4533 = vpack.c.b16 %v3987, %v3980
    %v4534 = vpack.c.b16 %v3988, %v3981
    %v4535 = vpack.c.b16 %v3989, %v3982
    %v4536 = vpack.c.b16 %v3990, %v3983
    %v4537 = vpack.c.b16 %v3998, %v3991
    %v4538 = vpack.c.b16 %v3999, %v3992
    %v4539 = vpack.c.b16 %v4000, %v3993
    %v4540 = vpack.c.b16 %v4001, %v3994
    %v4541 = vpack.c.b16 %v4002, %v3995
    %v4542 = vpack.c.b16 %v4003, %v3996
    %v4543 = vpack.c.b16 %v4004, %v3997
    %v4544 = vpack.c.b16 %v4012, %v4005
    %v4545 = vpack.c.b16 %v4013, %v4006
    %v4546 = vpack.c.b16 %v4014, %v4007
    %v4547 = vpack.c.b16 %v4015, %v4008
    %v4548 = vpack.c.b16 %v4016, %v4009
    %v4549 = vpack.c.b16 %v4017, %v4010
    %v4550 = vpack.c.b16 %v4018, %v4011
    %v4551 = vpack.c.b16 %v4026, %v4019
    %v4552 = vpack.c.b16 %v4027, %v4020
    %v4553 = vpack.c.b16 %v4028, %v4021
    %v4554 = vpack.c.b16 %v4029, %v4022
    %v4555 = vpack.c.b16 %v4030, %v4023
    %v4556 = vpack.c.b16 %v4031, %v4024
    %v4557 = vpack.c.b16 %v4032, %v4025
    %v4558 = vpack.c.b16 %v4040, %v4033
    %v4559 = vpack.c.b16 %v4041, %v4034
    %v4560 = vpack.c.b16 %v4042, %v4035
    %v4561 = vpack.c.b16 %v4043, %v4036
    %v4562 = vpack.c.b16 %v4044, %v4037
    %v4563 = vpack.c.b16 %v4045, %v4038
    %v4564 = vpack.c.b16 %v4046, %v4039
    %v4565 = vpack.c.b16 %v4054, %v4047
    %v4566 = vpack.c.b16 %v4055, %v4048
    %v4567 = vpack.c.b16 %v4056, %v4049
    %v4568 = vpack.c.b16 %v4057, %v4050
    %v4569 = vpack.c.b16 %v4058, %v4051
    %v4570 = vpack.c.b16 %v4059, %v4052
    %v4571 = vpack.c.b16 %v4060, %v4053
    %v4572 = vpack.c.b16 %v4068, %v4061
    %v4573 = vpack.c.b16 %v4069, %v4062
    %v4574 = vpack.c.b16 %v4070, %v4063
    %v4575 = vpack.c.b16 %v4071, %v4064
    %v4576 = vpack.c.b16 %v4072, %v4065
    %v4577 = vpack.c.b16 %v4073, %v4066
    %v4578 = vpack.c.b16 %v4074, %v4067
    %v4579 = vpack.c.b16 %v4082, %v4075
    %v4580 = vpack.c.b16 %v4083, %v4076
    %v4581 = vpack.c.b16 %v4084, %v4077
    %v4582 = vpack.c.b16 %v4085, %v4078
    %v4583 = vpack.c.b16 %v4086, %v4079
    %v4584 = vpack.c.b16 %v4087, %v4080
    %v4585 = vpack.c.b16 %v4088, %v4081
    %v4586 = vpack.c.b16 %v4096, %v4089
    %v4587 = vpack.c.b16 %v4097, %v4090
    %v4588 = vpack.c.b16 %v4098, %v4091
    %v4589 = vpack.c.b16 %v4099, %v4092
    %v4590 = vpack.c.b16 %v4100, %v4093
    %v4591 = vpack.c.b16 %v4101, %v4094
    %v4592 = vpack.c.b16 %v4102, %v4095
    %v4593 = vpack.c.b16 %v4110, %v4103
    %v4594 = vpack.c.b16 %v4111, %v4104
    %v4595 = vpack.c.b16 %v4112, %v4105
    %v4596 = vpack.c.b16 %v4113, %v4106
    %v4597 = vpack.c.b16 %v4114, %v4107
    %v4598 = vpack.c.b16 %v4115, %v4108
    %v4599 = vpack.c.b16 %v4116, %v4109
    %v4600 = vpack.c.b16 %v4124, %v4117
    %v4601 = vpack.c.b16 %v4125, %v4118
    %v4602 = vpack.c.b16 %v4126, %v4119
    %v4603 = vpack.c.b16 %v4127, %v4120
    %v4604 = vpack.c.b16 %v4128, %v4121
    %v4605 = vpack.c.b16 %v4129, %v4122
    %v4606 = vpack.c.b16 %v4130, %v4123
    %v4607 = vpack.c.b16 %v4138, %v4131
    %v4608 = vpack.c.b16 %v4139, %v4132
    %v4609 = vpack.c.b16 %v4140, %v4133
    %v4610 = vpack.c.b16 %v4141, %v4134
    %v4611 = vpack.c.b16 %v4142, %v4135
    %v4612 = vpack.c.b16 %v4143, %v4136
    %v4613 = vpack.c.b16 %v4144, %v4137
    %v4614 = vpack.c.b16 %v4152, %v4145
    %v4615 = vpack.c.b16 %v4153, %v4146
    %v4616 = vpack.c.b16 %v4154, %v4147
    %v4617 = vpack.c.b16 %v4155, %v4148
    %v4618 = vpack.c.b16 %v4156, %v4149
    %v4619 = vpack.c.b16 %v4157, %v4150
    %v4620 = vpack.c.b16 %v4158, %v4151
    %v4621 = vpack.c.b16 %v4166, %v4159
    %v4622 = vpack.c.b16 %v4167, %v4160
    %v4623 = vpack.c.b16 %v4168, %v4161
    %v4624 = vpack.c.b16 %v4169, %v4162
    %v4625 = vpack.c.b16 %v4170, %v4163
    %v4626 = vpack.c.b16 %v4171, %v4164
    %v4627 = vpack.c.b16 %v4172, %v4165
    %v4628 = vpack.c.b16 %v4180, %v4173
    %v4629 = vpack.c.b16 %v4181, %v4174
    %v4630 = vpack.c.b16 %v4182, %v4175
    %v4631 = vpack.c.b16 %v4183, %v4176
    %v4632 = vpack.c.b16 %v4184, %v4177
    %v4633 = vpack.c.b16 %v4185, %v4178
    %v4634 = vpack.c.b16 %v4186, %v4179
    %v4635 = vpack.c.b16 %v4194, %v4187
    %v4636 = vpack.c.b16 %v4195, %v4188
    %v4637 = vpack.c.b16 %v4196, %v4189
    %v4638 = vpack.c.b16 %v4197, %v4190
    %v4639 = vpack.c.b16 %v4198, %v4191
    %v4640 = vpack.c.b16 %v4199, %v4192
    %v4641 = vpack.c.b16 %v4200, %v4193
    %v4642 = vpack.c.b16 %v4208, %v4201
    %v4643 = vpack.c.b16 %v4209, %v4202
    %v4644 = vpack.c.b16 %v4210, %v4203
    %v4645 = vpack.c.b16 %v4211, %v4204
    %v4646 = vpack.c.b16 %v4212, %v4205
    %v4647 = vpack.c.b16 %v4213, %v4206
    %v4648 = vpack.c.b16 %v4214, %v4207
    %v4649 = vpack.c.b16 %v4222, %v4215
    %v4650 = vpack.c.b16 %v4223, %v4216
    %v4651 = vpack.c.b16 %v4224, %v4217
    %v4652 = vpack.c.b16 %v4225, %v4218
    %v4653 = vpack.c.b16 %v4226, %v4219
    %v4654 = vpack.c.b16 %v4227, %v4220
    %v4655 = vpack.c.b16 %v4228, %v4221
    %v4656 = vpack.c.b16 %v4236, %v4229
    %v4657 = vpack.c.b16 %v4237, %v4230
    %v4658 = vpack.c.b16 %v4238, %v4231
    %v4659 = vpack.c.b16 %v4239, %v4232
    %v4660 = vpack.c.b16 %v4240, %v4233
    %v4661 = vpack.c.b16 %v4241, %v4234
    %v4662 = vpack.c.b16 %v4242, %v4235
    %v4663 = vpack.c.b16 %v4250, %v4243
    %v4664 = vpack.c.b16 %v4251, %v4244
    %v4665 = vpack.c.b16 %v4252, %v4245
    %v4666 = vpack.c.b16 %v4253, %v4246
    %v4667 = vpack.c.b16 %v4254, %v4247
    %v4668 = vpack.c.b16 %v4255, %v4248
    %v4669 = vpack.c.b16 %v4256, %v4249
    %v4670 = vpack.c.b16 %v4264, %v4257
    %v4671 = vpack.c.b16 %v4265, %v4258
    %v4672 = vpack.c.b16 %v4266, %v4259
    %v4673 = vpack.c.b16 %v4267, %v4260
    %v4674 = vpack.c.b16 %v4268, %v4261
    %v4675 = vpack.c.b16 %v4269, %v4262
    %v4676 = vpack.c.b16 %v4270, %v4263
    %v4677 = vpack.c.b16 %v4278, %v4271
    %v4678 = vpack.c.b16 %v4279, %v4272
    %v4679 = vpack.c.b16 %v4280, %v4273
    %v4680 = vpack.c.b16 %v4281, %v4274
    %v4681 = vpack.c.b16 %v4282, %v4275
    %v4682 = vpack.c.b16 %v4283, %v4276
    %v4683 = vpack.c.b16 %v4284, %v4277
    %v4684 = vpack.c.b16 %v4292, %v4285
    %v4685 = vpack.c.b16 %v4293, %v4286
    %v4686 = vpack.c.b16 %v4294, %v4287
    %v4687 = vpack.c.b16 %v4295, %v4288
    %v4688 = vpack.c.b16 %v4296, %v4289
    %v4689 = vpack.c.b16 %v4297, %v4290
    %v4690 = vpack.c.b16 %v4298, %v4291
    %v4691 = vpack.c.b16 %v4306, %v4299
    %v4692 = vpack.c.b16 %v4307, %v4300
    %v4693 = vpack.c.b16 %v4308, %v4301
    %v4694 = vpack.c.b16 %v4309, %v4302
    %v4695 = vpack.c.b16 %v4310, %v4303
    %v4696 = vpack.c.b16 %v4311, %v4304
    %v4697 = vpack.c.b16 %v4312, %v4305
    %v4698 = vpack.c.b16 %v4320, %v4313
    %v4699 = vpack.c.b16 %v4321, %v4314
    %v4700 = vpack.c.b16 %v4322, %v4315
    %v4701 = vpack.c.b16 %v4323, %v4316
    %v4702 = vpack.c.b16 %v4324, %v4317
    %v4703 = vpack.c.b16 %v4325, %v4318
    %v4704 = vpack.c.b16 %v4326, %v4319
    %v4705 = vpack.c.b16 %v4334, %v4327
    %v4706 = vpack.c.b16 %v4335, %v4328
    %v4707 = vpack.c.b16 %v4336, %v4329
    %v4708 = vpack.c.b16 %v4337, %v4330
    %v4709 = vpack.c.b16 %v4338, %v4331
    %v4710 = vpack.c.b16 %v4339, %v4332
    %v4711 = vpack.c.b16 %v4340, %v4333
    %v4712 = vpack.c.b16 %v4348, %v4341
    %v4713 = vpack.c.b16 %v4349, %v4342
    %v4714 = vpack.c.b16 %v4350, %v4343
    %v4715 = vpack.c.b16 %v4351, %v4344
    %v4716 = vpack.c.b16 %v4352, %v4345
    %v4717 = vpack.c.b16 %v4353, %v4346
    %v4718 = vpack.c.b16 %v4354, %v4347
    %v4719 = vpack.c.b16 %v4362, %v4355
    %v4720 = vpack.c.b16 %v4363, %v4356
    %v4721 = vpack.c.b16 %v4364, %v4357
    %v4722 = vpack.c.b16 %v4365, %v4358
    %v4723 = vpack.c.b16 %v4366, %v4359
    %v4724 = vpack.c.b16 %v4367, %v4360
    %v4725 = vpack.c.b16 %v4368, %v4361
    %v4726 = vpack.c.b16 %v4376, %v4369
    %v4727 = vpack.c.b16 %v4377, %v4370
    %v4728 = vpack.c.b16 %v4378, %v4371
    %v4729 = vpack.c.b16 %v4379, %v4372
    %v4730 = vpack.c.b16 %v4380, %v4373
    %v4731 = vpack.c.b16 %v4381, %v4374
    %v4732 = vpack.c.b16 %v4382, %v4375
    %v4733 = vpack.c.b16 %v4390, %v4383
    %v4734 = vpack.c.b16 %v4391, %v4384
    %v4735 = vpack.c.b16 %v4392, %v4385
    %v4736 = vpack.c.b16 %v4393, %v4386
    %v4737 = vpack.c.b16 %v4394, %v4387
    %v4738 = vpack.c.b16 %v4395, %v4388
    %v4739 = vpack.c.b16 %v4396, %v4389
    %v5084 = vsel %vm2256, %v2925, 0
    %5086 = vmatpush.bf16.msra.mxu0 %v4446
    %5087 = vmatpush.bf16.msra.mxu0 %v4439
    %5088 = vmatpush.bf16.msra.mxu0 %v4432
    %5089 = vmatpush.bf16.msra.mxu0 %v4425
    %5090 = vmatpush.bf16.msra.mxu0 %v4418
    %5091 = vmatpush.bf16.msra.mxu0 %v4411
    %5092 = vmatpush.bf16.msra.mxu0 %v4404
    %5093 = vmatpush.bf16.msra.mxu0 %v4397
    %5094 = vmatmul.bf16.gmra.mxu0 %v2919
    %v5095 = vpop.f32.mrf.mxu0
    %v5096 = vadd.f32 0.0, %v5095
    %v5097 = vpop.f32.mrf.mxu0
    %5098 = vdwg.mxu0
    %5099 = vmatpush.bf16.msra.mxu0 %v4502
    %5100 = vmatpush.bf16.msra.mxu0 %v4495
    %5101 = vmatpush.bf16.msra.mxu0 %v4488
    %5102 = vmatpush.bf16.msra.mxu0 %v4481
    %5103 = vmatpush.bf16.msra.mxu0 %v4474
    %5104 = vmatpush.bf16.msra.mxu0 %v4467
    %5105 = vmatpush.bf16.msra.mxu0 %v4460
    %5106 = vmatpush.bf16.msra.mxu0 %v4453
    %5107 = vmatmul.bf16.gmra.mxu0 %v2920
    %v5108 = vpop.f32.mrf.mxu0
    %v5109 = vadd.f32 %v5096, %v5108
    %v5110 = vpop.f32.mrf.mxu0
    %5111 = vdwg.mxu0
    %5112 = vmatpush.bf16.msra.mxu0 %v4558
    %5113 = vmatpush.bf16.msra.mxu0 %v4551
    %5114 = vmatpush.bf16.msra.mxu0 %v4544
    %5115 = vmatpush.bf16.msra.mxu0 %v4537
    %5116 = vmatpush.bf16.msra.mxu0 %v4530
    %5117 = vmatpush.bf16.msra.mxu0 %v4523
    %5118 = vmatpush.bf16.msra.mxu0 %v4516
    %5119 = vmatpush.bf16.msra.mxu0 %v4509
    %5120 = vmatmul.bf16.gmra.mxu0 %v2921
    %v5121 = vpop.f32.mrf.mxu0
    %v5122 = vadd.f32 %v5109, %v5121
    %v5123 = vpop.f32.mrf.mxu0
    %5124 = vdwg.mxu0
    %5125 = vmatpush.bf16.msra.mxu0 %v4614
    %5126 = vmatpush.bf16.msra.mxu0 %v4607
    %5127 = vmatpush.bf16.msra.mxu0 %v4600
    %5128 = vmatpush.bf16.msra.mxu0 %v4593
    %5129 = vmatpush.bf16.msra.mxu0 %v4586
    %5130 = vmatpush.bf16.msra.mxu0 %v4579
    %5131 = vmatpush.bf16.msra.mxu0 %v4572
    %5132 = vmatpush.bf16.msra.mxu0 %v4565
    %5133 = vmatmul.bf16.gmra.mxu0 %v2922
    %v5134 = vpop.f32.mrf.mxu0
    %v5135 = vadd.f32 %v5122, %v5134
    %v5136 = vpop.f32.mrf.mxu0
    %5137 = vdwg.mxu0
    %5138 = vmatpush.bf16.msra.mxu0 %v4670
    %5139 = vmatpush.bf16.msra.mxu0 %v4663
    %5140 = vmatpush.bf16.msra.mxu0 %v4656
    %5141 = vmatpush.bf16.msra.mxu0 %v4649
    %5142 = vmatpush.bf16.msra.mxu0 %v4642
    %5143 = vmatpush.bf16.msra.mxu0 %v4635
    %5144 = vmatpush.bf16.msra.mxu0 %v4628
    %5145 = vmatpush.bf16.msra.mxu0 %v4621
    %5146 = vmatmul.bf16.gmra.mxu0 %v2923
    %v5147 = vpop.f32.mrf.mxu0
    %v5148 = vadd.f32 %v5135, %v5147
    %v5149 = vpop.f32.mrf.mxu0
    %5150 = vdwg.mxu0
    %5151 = vmatpush.bf16.msra.mxu0 %v4726
    %5152 = vmatpush.bf16.msra.mxu0 %v4719
    %5153 = vmatpush.bf16.msra.mxu0 %v4712
    %5154 = vmatpush.bf16.msra.mxu0 %v4705
    %5155 = vmatpush.bf16.msra.mxu0 %v4698
    %5156 = vmatpush.bf16.msra.mxu0 %v4691
    %5157 = vmatpush.bf16.msra.mxu0 %v4684
    %5158 = vmatpush.bf16.msra.mxu0 %v4677
    %5159 = vmatmul.bf16.gmra.mxu0 %v2924
    %v5160 = vpop.f32.mrf.mxu0
    %v5161 = vadd.f32 %v5148, %v5160
    %v5162 = vpop.f32.mrf.mxu0
    %5163 = vdwg.mxu0
    %5164 = vmatpush.bf16.msra.mxu0 0
    %5165 = vmatpush.bf16.msra.mxu0 0
    %5166 = vmatpush.bf16.msra.mxu0 0
    %5167 = vmatpush.bf16.msra.mxu0 0
    %5168 = vmatpush.bf16.msra.mxu0 0
    %5169 = vmatpush.bf16.msra.mxu0 0
    %5170 = vmatpush.bf16.msra.mxu0 0
    %5171 = vmatpush.bf16.msra.mxu0 %v4733
    %5172 = vmatmul.bf16.gmra.mxu0 %v5084
    %v5173 = vpop.f32.mrf.mxu0
    %v5174 = vadd.f32 %v5161, %v5173
    %v5175 = vpop.f32.mrf.mxu0
    %5176 = vdwg.mxu0
    %5177 = vmatpush.bf16.msra.mxu0 %v4447
    %5178 = vmatpush.bf16.msra.mxu0 %v4440
    %5179 = vmatpush.bf16.msra.mxu0 %v4433
    %5180 = vmatpush.bf16.msra.mxu0 %v4426
    %5181 = vmatpush.bf16.msra.mxu0 %v4419
    %5182 = vmatpush.bf16.msra.mxu0 %v4412
    %5183 = vmatpush.bf16.msra.mxu0 %v4405
    %5184 = vmatpush.bf16.msra.mxu0 %v4398
    %5185 = vmatmul.bf16.gmra.mxu0 %v2919
    %v5186 = vpop.f32.mrf.mxu0
    %v5187 = vadd.f32 0.0, %v5186
    %v5188 = vpop.f32.mrf.mxu0
    %5189 = vdwg.mxu0
    %5190 = vmatpush.bf16.msra.mxu0 %v4503
    %5191 = vmatpush.bf16.msra.mxu0 %v4496
    %5192 = vmatpush.bf16.msra.mxu0 %v4489
    %5193 = vmatpush.bf16.msra.mxu0 %v4482
    %5194 = vmatpush.bf16.msra.mxu0 %v4475
    %5195 = vmatpush.bf16.msra.mxu0 %v4468
    %5196 = vmatpush.bf16.msra.mxu0 %v4461
    %5197 = vmatpush.bf16.msra.mxu0 %v4454
    %5198 = vmatmul.bf16.gmra.mxu0 %v2920
    %v5199 = vpop.f32.mrf.mxu0
    %v5200 = vadd.f32 %v5187, %v5199
    %v5201 = vpop.f32.mrf.mxu0
    %5202 = vdwg.mxu0
    %5203 = vmatpush.bf16.msra.mxu0 %v4559
    %5204 = vmatpush.bf16.msra.mxu0 %v4552
    %5205 = vmatpush.bf16.msra.mxu0 %v4545
    %5206 = vmatpush.bf16.msra.mxu0 %v4538
    %5207 = vmatpush.bf16.msra.mxu0 %v4531
    %5208 = vmatpush.bf16.msra.mxu0 %v4524
    %5209 = vmatpush.bf16.msra.mxu0 %v4517
    %5210 = vmatpush.bf16.msra.mxu0 %v4510
    %5211 = vmatmul.bf16.gmra.mxu0 %v2921
    %v5212 = vpop.f32.mrf.mxu0
    %v5213 = vadd.f32 %v5200, %v5212
    %v5214 = vpop.f32.mrf.mxu0
    %5215 = vdwg.mxu0
    %5216 = vmatpush.bf16.msra.mxu0 %v4615
    %5217 = vmatpush.bf16.msra.mxu0 %v4608
    %5218 = vmatpush.bf16.msra.mxu0 %v4601
    %5219 = vmatpush.bf16.msra.mxu0 %v4594
    %5220 = vmatpush.bf16.msra.mxu0 %v4587
    %5221 = vmatpush.bf16.msra.mxu0 %v4580
    %5222 = vmatpush.bf16.msra.mxu0 %v4573
    %5223 = vmatpush.bf16.msra.mxu0 %v4566
    %5224 = vmatmul.bf16.gmra.mxu0 %v2922
    %v5225 = vpop.f32.mrf.mxu0
    %v5226 = vadd.f32 %v5213, %v5225
    %v5227 = vpop.f32.mrf.mxu0
    %5228 = vdwg.mxu0
    %5229 = vmatpush.bf16.msra.mxu0 %v4671
    %5230 = vmatpush.bf16.msra.mxu0 %v4664
    %5231 = vmatpush.bf16.msra.mxu0 %v4657
    %5232 = vmatpush.bf16.msra.mxu0 %v4650
    %5233 = vmatpush.bf16.msra.mxu0 %v4643
    %5234 = vmatpush.bf16.msra.mxu0 %v4636
    %5235 = vmatpush.bf16.msra.mxu0 %v4629
    %5236 = vmatpush.bf16.msra.mxu0 %v4622
    %5237 = vmatmul.bf16.gmra.mxu0 %v2923
    %v5238 = vpop.f32.mrf.mxu0
    %v5239 = vadd.f32 %v5226, %v5238
    %v5240 = vpop.f32.mrf.mxu0
    %5241 = vdwg.mxu0
    %5242 = vmatpush.bf16.msra.mxu0 %v4727
    %5243 = vmatpush.bf16.msra.mxu0 %v4720
    %5244 = vmatpush.bf16.msra.mxu0 %v4713
    %5245 = vmatpush.bf16.msra.mxu0 %v4706
    %5246 = vmatpush.bf16.msra.mxu0 %v4699
    %5247 = vmatpush.bf16.msra.mxu0 %v4692
    %5248 = vmatpush.bf16.msra.mxu0 %v4685
    %5249 = vmatpush.bf16.msra.mxu0 %v4678
    %5250 = vmatmul.bf16.gmra.mxu0 %v2924
    %v5251 = vpop.f32.mrf.mxu0
    %v5252 = vadd.f32 %v5239, %v5251
    %v5253 = vpop.f32.mrf.mxu0
    %5254 = vdwg.mxu0
    %5255 = vmatpush.bf16.msra.mxu0 0
    %5256 = vmatpush.bf16.msra.mxu0 0
    %5257 = vmatpush.bf16.msra.mxu0 0
    %5258 = vmatpush.bf16.msra.mxu0 0
    %5259 = vmatpush.bf16.msra.mxu0 0
    %5260 = vmatpush.bf16.msra.mxu0 0
    %5261 = vmatpush.bf16.msra.mxu0 0
    %5262 = vmatpush.bf16.msra.mxu0 %v4734
    %5263 = vmatmul.bf16.gmra.mxu0 %v5084
    %v5264 = vpop.f32.mrf.mxu0
    %v5265 = vadd.f32 %v5252, %v5264
    %v5266 = vpop.f32.mrf.mxu0
    %5267 = vdwg.mxu0
    %5268 = vmatpush.bf16.msra.mxu0 %v4448
    %5269 = vmatpush.bf16.msra.mxu0 %v4441
    %5270 = vmatpush.bf16.msra.mxu0 %v4434
    %5271 = vmatpush.bf16.msra.mxu0 %v4427
    %5272 = vmatpush.bf16.msra.mxu0 %v4420
    %5273 = vmatpush.bf16.msra.mxu0 %v4413
    %5274 = vmatpush.bf16.msra.mxu0 %v4406
    %5275 = vmatpush.bf16.msra.mxu0 %v4399
    %5276 = vmatmul.bf16.gmra.mxu0 %v2919
    %v5277 = vpop.f32.mrf.mxu0
    %v5278 = vadd.f32 0.0, %v5277
    %v5279 = vpop.f32.mrf.mxu0
    %5280 = vdwg.mxu0
    %5281 = vmatpush.bf16.msra.mxu0 %v4504
    %5282 = vmatpush.bf16.msra.mxu0 %v4497
    %5283 = vmatpush.bf16.msra.mxu0 %v4490
    %5284 = vmatpush.bf16.msra.mxu0 %v4483
    %5285 = vmatpush.bf16.msra.mxu0 %v4476
    %5286 = vmatpush.bf16.msra.mxu0 %v4469
    %5287 = vmatpush.bf16.msra.mxu0 %v4462
    %5288 = vmatpush.bf16.msra.mxu0 %v4455
    %5289 = vmatmul.bf16.gmra.mxu0 %v2920
    %v5290 = vpop.f32.mrf.mxu0
    %v5291 = vadd.f32 %v5278, %v5290
    %v5292 = vpop.f32.mrf.mxu0
    %5293 = vdwg.mxu0
    %5294 = vmatpush.bf16.msra.mxu0 %v4560
    %5295 = vmatpush.bf16.msra.mxu0 %v4553
    %5296 = vmatpush.bf16.msra.mxu0 %v4546
    %5297 = vmatpush.bf16.msra.mxu0 %v4539
    %5298 = vmatpush.bf16.msra.mxu0 %v4532
    %5299 = vmatpush.bf16.msra.mxu0 %v4525
    %5300 = vmatpush.bf16.msra.mxu0 %v4518
    %5301 = vmatpush.bf16.msra.mxu0 %v4511
    %5302 = vmatmul.bf16.gmra.mxu0 %v2921
    %v5303 = vpop.f32.mrf.mxu0
    %v5304 = vadd.f32 %v5291, %v5303
    %v5305 = vpop.f32.mrf.mxu0
    %5306 = vdwg.mxu0
    %5307 = vmatpush.bf16.msra.mxu0 %v4616
    %5308 = vmatpush.bf16.msra.mxu0 %v4609
    %5309 = vmatpush.bf16.msra.mxu0 %v4602
    %5310 = vmatpush.bf16.msra.mxu0 %v4595
    %5311 = vmatpush.bf16.msra.mxu0 %v4588
    %5312 = vmatpush.bf16.msra.mxu0 %v4581
    %5313 = vmatpush.bf16.msra.mxu0 %v4574
    %5314 = vmatpush.bf16.msra.mxu0 %v4567
    %5315 = vmatmul.bf16.gmra.mxu0 %v2922
    %v5316 = vpop.f32.mrf.mxu0
    %v5317 = vadd.f32 %v5304, %v5316
    %v5318 = vpop.f32.mrf.mxu0
    %5319 = vdwg.mxu0
    %5320 = vmatpush.bf16.msra.mxu0 %v4672
    %5321 = vmatpush.bf16.msra.mxu0 %v4665
    %5322 = vmatpush.bf16.msra.mxu0 %v4658
    %5323 = vmatpush.bf16.msra.mxu0 %v4651
    %5324 = vmatpush.bf16.msra.mxu0 %v4644
    %5325 = vmatpush.bf16.msra.mxu0 %v4637
    %5326 = vmatpush.bf16.msra.mxu0 %v4630
    %5327 = vmatpush.bf16.msra.mxu0 %v4623
    %5328 = vmatmul.bf16.gmra.mxu0 %v2923
    %v5329 = vpop.f32.mrf.mxu0
    %v5330 = vadd.f32 %v5317, %v5329
    %v5331 = vpop.f32.mrf.mxu0
    %5332 = vdwg.mxu0
    %5333 = vmatpush.bf16.msra.mxu0 %v4728
    %5334 = vmatpush.bf16.msra.mxu0 %v4721
    %5335 = vmatpush.bf16.msra.mxu0 %v4714
    %5336 = vmatpush.bf16.msra.mxu0 %v4707
    %5337 = vmatpush.bf16.msra.mxu0 %v4700
    %5338 = vmatpush.bf16.msra.mxu0 %v4693
    %5339 = vmatpush.bf16.msra.mxu0 %v4686
    %5340 = vmatpush.bf16.msra.mxu0 %v4679
    %5341 = vmatmul.bf16.gmra.mxu0 %v2924
    %v5342 = vpop.f32.mrf.mxu0
    %v5343 = vadd.f32 %v5330, %v5342
    %v5344 = vpop.f32.mrf.mxu0
    %5345 = vdwg.mxu0
    %5346 = vmatpush.bf16.msra.mxu0 0
    %5347 = vmatpush.bf16.msra.mxu0 0
    %5348 = vmatpush.bf16.msra.mxu0 0
    %5349 = vmatpush.bf16.msra.mxu0 0
    %5350 = vmatpush.bf16.msra.mxu0 0
    %5351 = vmatpush.bf16.msra.mxu0 0
    %5352 = vmatpush.bf16.msra.mxu0 0
    %5353 = vmatpush.bf16.msra.mxu0 %v4735
    %5354 = vmatmul.bf16.gmra.mxu0 %v5084
    %v5355 = vpop.f32.mrf.mxu0
    %v5356 = vadd.f32 %v5343, %v5355
    %v5357 = vpop.f32.mrf.mxu0
    %5358 = vdwg.mxu0
    %5359 = vmatpush.bf16.msra.mxu0 %v4449
    %5360 = vmatpush.bf16.msra.mxu0 %v4442
    %5361 = vmatpush.bf16.msra.mxu0 %v4435
    %5362 = vmatpush.bf16.msra.mxu0 %v4428
    %5363 = vmatpush.bf16.msra.mxu0 %v4421
    %5364 = vmatpush.bf16.msra.mxu0 %v4414
    %5365 = vmatpush.bf16.msra.mxu0 %v4407
    %5366 = vmatpush.bf16.msra.mxu0 %v4400
    %5367 = vmatmul.bf16.gmra.mxu0 %v2919
    %v5368 = vpop.f32.mrf.mxu0
    %v5369 = vadd.f32 0.0, %v5368
    %v5370 = vpop.f32.mrf.mxu0
    %5371 = vdwg.mxu0
    %5372 = vmatpush.bf16.msra.mxu0 %v4505
    %5373 = vmatpush.bf16.msra.mxu0 %v4498
    %5374 = vmatpush.bf16.msra.mxu0 %v4491
    %5375 = vmatpush.bf16.msra.mxu0 %v4484
    %5376 = vmatpush.bf16.msra.mxu0 %v4477
    %5377 = vmatpush.bf16.msra.mxu0 %v4470
    %5378 = vmatpush.bf16.msra.mxu0 %v4463
    %5379 = vmatpush.bf16.msra.mxu0 %v4456
    %5380 = vmatmul.bf16.gmra.mxu0 %v2920
    %v5381 = vpop.f32.mrf.mxu0
    %v5382 = vadd.f32 %v5369, %v5381
    %v5383 = vpop.f32.mrf.mxu0
    %5384 = vdwg.mxu0
    %5385 = vmatpush.bf16.msra.mxu0 %v4561
    %5386 = vmatpush.bf16.msra.mxu0 %v4554
    %5387 = vmatpush.bf16.msra.mxu0 %v4547
    %5388 = vmatpush.bf16.msra.mxu0 %v4540
    %5389 = vmatpush.bf16.msra.mxu0 %v4533
    %5390 = vmatpush.bf16.msra.mxu0 %v4526
    %5391 = vmatpush.bf16.msra.mxu0 %v4519
    %5392 = vmatpush.bf16.msra.mxu0 %v4512
    %5393 = vmatmul.bf16.gmra.mxu0 %v2921
    %v5394 = vpop.f32.mrf.mxu0
    %v5395 = vadd.f32 %v5382, %v5394
    %v5396 = vpop.f32.mrf.mxu0
    %5397 = vdwg.mxu0
    %5398 = vmatpush.bf16.msra.mxu0 %v4617
    %5399 = vmatpush.bf16.msra.mxu0 %v4610
    %5400 = vmatpush.bf16.msra.mxu0 %v4603
    %5401 = vmatpush.bf16.msra.mxu0 %v4596
    %5402 = vmatpush.bf16.msra.mxu0 %v4589
    %5403 = vmatpush.bf16.msra.mxu0 %v4582
    %5404 = vmatpush.bf16.msra.mxu0 %v4575
    %5405 = vmatpush.bf16.msra.mxu0 %v4568
    %5406 = vmatmul.bf16.gmra.mxu0 %v2922
    %v5407 = vpop.f32.mrf.mxu0
    %v5408 = vadd.f32 %v5395, %v5407
    %v5409 = vpop.f32.mrf.mxu0
    %5410 = vdwg.mxu0
    %5411 = vmatpush.bf16.msra.mxu0 %v4673
    %5412 = vmatpush.bf16.msra.mxu0 %v4666
    %5413 = vmatpush.bf16.msra.mxu0 %v4659
    %5414 = vmatpush.bf16.msra.mxu0 %v4652
    %5415 = vmatpush.bf16.msra.mxu0 %v4645
    %5416 = vmatpush.bf16.msra.mxu0 %v4638
    %5417 = vmatpush.bf16.msra.mxu0 %v4631
    %5418 = vmatpush.bf16.msra.mxu0 %v4624
    %5419 = vmatmul.bf16.gmra.mxu0 %v2923
    %v5420 = vpop.f32.mrf.mxu0
    %v5421 = vadd.f32 %v5408, %v5420
    %v5422 = vpop.f32.mrf.mxu0
    %5423 = vdwg.mxu0
    %5424 = vmatpush.bf16.msra.mxu0 %v4729
    %5425 = vmatpush.bf16.msra.mxu0 %v4722
    %5426 = vmatpush.bf16.msra.mxu0 %v4715
    %5427 = vmatpush.bf16.msra.mxu0 %v4708
    %5428 = vmatpush.bf16.msra.mxu0 %v4701
    %5429 = vmatpush.bf16.msra.mxu0 %v4694
    %5430 = vmatpush.bf16.msra.mxu0 %v4687
    %5431 = vmatpush.bf16.msra.mxu0 %v4680
    %5432 = vmatmul.bf16.gmra.mxu0 %v2924
    %v5433 = vpop.f32.mrf.mxu0
    %v5434 = vadd.f32 %v5421, %v5433
    %v5435 = vpop.f32.mrf.mxu0
    %5436 = vdwg.mxu0
    %5437 = vmatpush.bf16.msra.mxu0 0
    %5438 = vmatpush.bf16.msra.mxu0 0
    %5439 = vmatpush.bf16.msra.mxu0 0
    %5440 = vmatpush.bf16.msra.mxu0 0
    %5441 = vmatpush.bf16.msra.mxu0 0
    %5442 = vmatpush.bf16.msra.mxu0 0
    %5443 = vmatpush.bf16.msra.mxu0 0
    %5444 = vmatpush.bf16.msra.mxu0 %v4736
    %5445 = vmatmul.bf16.gmra.mxu0 %v5084
    %v5446 = vpop.f32.mrf.mxu0
    %v5447 = vadd.f32 %v5434, %v5446
    %v5448 = vpop.f32.mrf.mxu0
    %5449 = vdwg.mxu0
    %5450 = vmatpush.bf16.msra.mxu0 %v4450
    %5451 = vmatpush.bf16.msra.mxu0 %v4443
    %5452 = vmatpush.bf16.msra.mxu0 %v4436
    %5453 = vmatpush.bf16.msra.mxu0 %v4429
    %5454 = vmatpush.bf16.msra.mxu0 %v4422
    %5455 = vmatpush.bf16.msra.mxu0 %v4415
    %5456 = vmatpush.bf16.msra.mxu0 %v4408
    %5457 = vmatpush.bf16.msra.mxu0 %v4401
    %5458 = vmatmul.bf16.gmra.mxu0 %v2919
    %v5459 = vpop.f32.mrf.mxu0
    %v5460 = vadd.f32 0.0, %v5459
    %v5461 = vpop.f32.mrf.mxu0
    %5462 = vdwg.mxu0
    %5463 = vmatpush.bf16.msra.mxu0 %v4506
    %5464 = vmatpush.bf16.msra.mxu0 %v4499
    %5465 = vmatpush.bf16.msra.mxu0 %v4492
    %5466 = vmatpush.bf16.msra.mxu0 %v4485
    %5467 = vmatpush.bf16.msra.mxu0 %v4478
    %5468 = vmatpush.bf16.msra.mxu0 %v4471
    %5469 = vmatpush.bf16.msra.mxu0 %v4464
    %5470 = vmatpush.bf16.msra.mxu0 %v4457
    %5471 = vmatmul.bf16.gmra.mxu0 %v2920
    %v5472 = vpop.f32.mrf.mxu0
    %v5473 = vadd.f32 %v5460, %v5472
    %v5474 = vpop.f32.mrf.mxu0
    %5475 = vdwg.mxu0
    %5476 = vmatpush.bf16.msra.mxu0 %v4562
    %5477 = vmatpush.bf16.msra.mxu0 %v4555
    %5478 = vmatpush.bf16.msra.mxu0 %v4548
    %5479 = vmatpush.bf16.msra.mxu0 %v4541
    %5480 = vmatpush.bf16.msra.mxu0 %v4534
    %5481 = vmatpush.bf16.msra.mxu0 %v4527
    %5482 = vmatpush.bf16.msra.mxu0 %v4520
    %5483 = vmatpush.bf16.msra.mxu0 %v4513
    %5484 = vmatmul.bf16.gmra.mxu0 %v2921
    %v5485 = vpop.f32.mrf.mxu0
    %v5486 = vadd.f32 %v5473, %v5485
    %v5487 = vpop.f32.mrf.mxu0
    %5488 = vdwg.mxu0
    %5489 = vmatpush.bf16.msra.mxu0 %v4618
    %5490 = vmatpush.bf16.msra.mxu0 %v4611
    %5491 = vmatpush.bf16.msra.mxu0 %v4604
    %5492 = vmatpush.bf16.msra.mxu0 %v4597
    %5493 = vmatpush.bf16.msra.mxu0 %v4590
    %5494 = vmatpush.bf16.msra.mxu0 %v4583
    %5495 = vmatpush.bf16.msra.mxu0 %v4576
    %5496 = vmatpush.bf16.msra.mxu0 %v4569
    %5497 = vmatmul.bf16.gmra.mxu0 %v2922
    %v5498 = vpop.f32.mrf.mxu0
    %v5499 = vadd.f32 %v5486, %v5498
    %v5500 = vpop.f32.mrf.mxu0
    %5501 = vdwg.mxu0
    %5502 = vmatpush.bf16.msra.mxu0 %v4674
    %5503 = vmatpush.bf16.msra.mxu0 %v4667
    %5504 = vmatpush.bf16.msra.mxu0 %v4660
    %5505 = vmatpush.bf16.msra.mxu0 %v4653
    %5506 = vmatpush.bf16.msra.mxu0 %v4646
    %5507 = vmatpush.bf16.msra.mxu0 %v4639
    %5508 = vmatpush.bf16.msra.mxu0 %v4632
    %5509 = vmatpush.bf16.msra.mxu0 %v4625
    %5510 = vmatmul.bf16.gmra.mxu0 %v2923
    %v5511 = vpop.f32.mrf.mxu0
    %v5512 = vadd.f32 %v5499, %v5511
    %v5513 = vpop.f32.mrf.mxu0
    %5514 = vdwg.mxu0
    %5515 = vmatpush.bf16.msra.mxu0 %v4730
    %5516 = vmatpush.bf16.msra.mxu0 %v4723
    %5517 = vmatpush.bf16.msra.mxu0 %v4716
    %5518 = vmatpush.bf16.msra.mxu0 %v4709
    %5519 = vmatpush.bf16.msra.mxu0 %v4702
    %5520 = vmatpush.bf16.msra.mxu0 %v4695
    %5521 = vmatpush.bf16.msra.mxu0 %v4688
    %5522 = vmatpush.bf16.msra.mxu0 %v4681
    %5523 = vmatmul.bf16.gmra.mxu0 %v2924
    %v5524 = vpop.f32.mrf.mxu0
    %v5525 = vadd.f32 %v5512, %v5524
    %v5526 = vpop.f32.mrf.mxu0
    %5527 = vdwg.mxu0
    %5528 = vmatpush.bf16.msra.mxu0 0
    %5529 = vmatpush.bf16.msra.mxu0 0
    %5530 = vmatpush.bf16.msra.mxu0 0
    %5531 = vmatpush.bf16.msra.mxu0 0
    %5532 = vmatpush.bf16.msra.mxu0 0
    %5533 = vmatpush.bf16.msra.mxu0 0
    %5534 = vmatpush.bf16.msra.mxu0 0
    %5535 = vmatpush.bf16.msra.mxu0 %v4737
    %5536 = vmatmul.bf16.gmra.mxu0 %v5084
    %v5537 = vpop.f32.mrf.mxu0
    %v5538 = vadd.f32 %v5525, %v5537
    %v5539 = vpop.f32.mrf.mxu0
    %5540 = vdwg.mxu0
    %5541 = vmatpush.bf16.msra.mxu0 %v4451
    %5542 = vmatpush.bf16.msra.mxu0 %v4444
    %5543 = vmatpush.bf16.msra.mxu0 %v4437
    %5544 = vmatpush.bf16.msra.mxu0 %v4430
    %5545 = vmatpush.bf16.msra.mxu0 %v4423
    %5546 = vmatpush.bf16.msra.mxu0 %v4416
    %5547 = vmatpush.bf16.msra.mxu0 %v4409
    %5548 = vmatpush.bf16.msra.mxu0 %v4402
    %5549 = vmatmul.bf16.gmra.mxu0 %v2919
    %v5550 = vpop.f32.mrf.mxu0
    %v5551 = vadd.f32 0.0, %v5550
    %v5552 = vpop.f32.mrf.mxu0
    %5553 = vdwg.mxu0
    %5554 = vmatpush.bf16.msra.mxu0 %v4507
    %5555 = vmatpush.bf16.msra.mxu0 %v4500
    %5556 = vmatpush.bf16.msra.mxu0 %v4493
    %5557 = vmatpush.bf16.msra.mxu0 %v4486
    %5558 = vmatpush.bf16.msra.mxu0 %v4479
    %5559 = vmatpush.bf16.msra.mxu0 %v4472
    %5560 = vmatpush.bf16.msra.mxu0 %v4465
    %5561 = vmatpush.bf16.msra.mxu0 %v4458
    %5562 = vmatmul.bf16.gmra.mxu0 %v2920
    %v5563 = vpop.f32.mrf.mxu0
    %v5564 = vadd.f32 %v5551, %v5563
    %v5565 = vpop.f32.mrf.mxu0
    %5566 = vdwg.mxu0
    %5567 = vmatpush.bf16.msra.mxu0 %v4563
    %5568 = vmatpush.bf16.msra.mxu0 %v4556
    %5569 = vmatpush.bf16.msra.mxu0 %v4549
    %5570 = vmatpush.bf16.msra.mxu0 %v4542
    %5571 = vmatpush.bf16.msra.mxu0 %v4535
    %5572 = vmatpush.bf16.msra.mxu0 %v4528
    %5573 = vmatpush.bf16.msra.mxu0 %v4521
    %5574 = vmatpush.bf16.msra.mxu0 %v4514
    %5575 = vmatmul.bf16.gmra.mxu0 %v2921
    %v5576 = vpop.f32.mrf.mxu0
    %v5577 = vadd.f32 %v5564, %v5576
    %v5578 = vpop.f32.mrf.mxu0
    %5579 = vdwg.mxu0
    %5580 = vmatpush.bf16.msra.mxu0 %v4619
    %5581 = vmatpush.bf16.msra.mxu0 %v4612
    %5582 = vmatpush.bf16.msra.mxu0 %v4605
    %5583 = vmatpush.bf16.msra.mxu0 %v4598
    %5584 = vmatpush.bf16.msra.mxu0 %v4591
    %5585 = vmatpush.bf16.msra.mxu0 %v4584
    %5586 = vmatpush.bf16.msra.mxu0 %v4577
    %5587 = vmatpush.bf16.msra.mxu0 %v4570
    %5588 = vmatmul.bf16.gmra.mxu0 %v2922
    %v5589 = vpop.f32.mrf.mxu0
    %v5590 = vadd.f32 %v5577, %v5589
    %v5591 = vpop.f32.mrf.mxu0
    %5592 = vdwg.mxu0
    %5593 = vmatpush.bf16.msra.mxu0 %v4675
    %5594 = vmatpush.bf16.msra.mxu0 %v4668
    %5595 = vmatpush.bf16.msra.mxu0 %v4661
    %5596 = vmatpush.bf16.msra.mxu0 %v4654
    %5597 = vmatpush.bf16.msra.mxu0 %v4647
    %5598 = vmatpush.bf16.msra.mxu0 %v4640
    %5599 = vmatpush.bf16.msra.mxu0 %v4633
    %5600 = vmatpush.bf16.msra.mxu0 %v4626
    %5601 = vmatmul.bf16.gmra.mxu0 %v2923
    %v5602 = vpop.f32.mrf.mxu0
    %v5603 = vadd.f32 %v5590, %v5602
    %v5604 = vpop.f32.mrf.mxu0
    %5605 = vdwg.mxu0
    %5606 = vmatpush.bf16.msra.mxu0 %v4731
    %5607 = vmatpush.bf16.msra.mxu0 %v4724
    %5608 = vmatpush.bf16.msra.mxu0 %v4717
    %5609 = vmatpush.bf16.msra.mxu0 %v4710
    %5610 = vmatpush.bf16.msra.mxu0 %v4703
    %5611 = vmatpush.bf16.msra.mxu0 %v4696
    %5612 = vmatpush.bf16.msra.mxu0 %v4689
    %5613 = vmatpush.bf16.msra.mxu0 %v4682
    %5614 = vmatmul.bf16.gmra.mxu0 %v2924
    %v5615 = vpop.f32.mrf.mxu0
    %v5616 = vadd.f32 %v5603, %v5615
    %v5617 = vpop.f32.mrf.mxu0
    %5618 = vdwg.mxu0
    %5619 = vmatpush.bf16.msra.mxu0 0
    %5620 = vmatpush.bf16.msra.mxu0 0
    %5621 = vmatpush.bf16.msra.mxu0 0
    %5622 = vmatpush.bf16.msra.mxu0 0
    %5623 = vmatpush.bf16.msra.mxu0 0
    %5624 = vmatpush.bf16.msra.mxu0 0
    %5625 = vmatpush.bf16.msra.mxu0 0
    %5626 = vmatpush.bf16.msra.mxu0 %v4738
    %5627 = vmatmul.bf16.gmra.mxu0 %v5084
    %v5628 = vpop.f32.mrf.mxu0
    %v5629 = vadd.f32 %v5616, %v5628
    %v5630 = vpop.f32.mrf.mxu0
    %5631 = vdwg.mxu0
    %5632 = vmatpush.bf16.msra.mxu0 %v4452
    %5633 = vmatpush.bf16.msra.mxu0 %v4445
    %5634 = vmatpush.bf16.msra.mxu0 %v4438
    %5635 = vmatpush.bf16.msra.mxu0 %v4431
    %5636 = vmatpush.bf16.msra.mxu0 %v4424
    %5637 = vmatpush.bf16.msra.mxu0 %v4417
    %5638 = vmatpush.bf16.msra.mxu0 %v4410
    %5639 = vmatpush.bf16.msra.mxu0 %v4403
    %5640 = vmatmul.bf16.gmra.mxu0 %v2919
    %v5641 = vpop.f32.mrf.mxu0
    %v5642 = vadd.f32 0.0, %v5641
    %v5643 = vpop.f32.mrf.mxu0
    %5644 = vdwg.mxu0
    %5645 = vmatpush.bf16.msra.mxu0 %v4508
    %5646 = vmatpush.bf16.msra.mxu0 %v4501
    %5647 = vmatpush.bf16.msra.mxu0 %v4494
    %5648 = vmatpush.bf16.msra.mxu0 %v4487
    %5649 = vmatpush.bf16.msra.mxu0 %v4480
    %5650 = vmatpush.bf16.msra.mxu0 %v4473
    %5651 = vmatpush.bf16.msra.mxu0 %v4466
    %5652 = vmatpush.bf16.msra.mxu0 %v4459
    %5653 = vmatmul.bf16.gmra.mxu0 %v2920
    %v5654 = vpop.f32.mrf.mxu0
    %v5655 = vadd.f32 %v5642, %v5654
    %v5656 = vpop.f32.mrf.mxu0
    %5657 = vdwg.mxu0
    %5658 = vmatpush.bf16.msra.mxu0 %v4564
    %5659 = vmatpush.bf16.msra.mxu0 %v4557
    %5660 = vmatpush.bf16.msra.mxu0 %v4550
    %5661 = vmatpush.bf16.msra.mxu0 %v4543
    %5662 = vmatpush.bf16.msra.mxu0 %v4536
    %5663 = vmatpush.bf16.msra.mxu0 %v4529
    %5664 = vmatpush.bf16.msra.mxu0 %v4522
    %5665 = vmatpush.bf16.msra.mxu0 %v4515
    %5666 = vmatmul.bf16.gmra.mxu0 %v2921
    %v5667 = vpop.f32.mrf.mxu0
    %v5668 = vadd.f32 %v5655, %v5667
    %v5669 = vpop.f32.mrf.mxu0
    %5670 = vdwg.mxu0
    %5671 = vmatpush.bf16.msra.mxu0 %v4620
    %5672 = vmatpush.bf16.msra.mxu0 %v4613
    %5673 = vmatpush.bf16.msra.mxu0 %v4606
    %5674 = vmatpush.bf16.msra.mxu0 %v4599
    %5675 = vmatpush.bf16.msra.mxu0 %v4592
    %5676 = vmatpush.bf16.msra.mxu0 %v4585
    %5677 = vmatpush.bf16.msra.mxu0 %v4578
    %5678 = vmatpush.bf16.msra.mxu0 %v4571
    %5679 = vmatmul.bf16.gmra.mxu0 %v2922
    %v5680 = vpop.f32.mrf.mxu0
    %v5681 = vadd.f32 %v5668, %v5680
    %v5682 = vpop.f32.mrf.mxu0
    %5683 = vdwg.mxu0
    %5684 = vmatpush.bf16.msra.mxu0 %v4676
    %5685 = vmatpush.bf16.msra.mxu0 %v4669
    %5686 = vmatpush.bf16.msra.mxu0 %v4662
    %5687 = vmatpush.bf16.msra.mxu0 %v4655
    %5688 = vmatpush.bf16.msra.mxu0 %v4648
    %5689 = vmatpush.bf16.msra.mxu0 %v4641
    %5690 = vmatpush.bf16.msra.mxu0 %v4634
    %5691 = vmatpush.bf16.msra.mxu0 %v4627
    %5692 = vmatmul.bf16.gmra.mxu0 %v2923
    %v5693 = vpop.f32.mrf.mxu0
    %v5694 = vadd.f32 %v5681, %v5693
    %v5695 = vpop.f32.mrf.mxu0
    %5696 = vdwg.mxu0
    %5697 = vmatpush.bf16.msra.mxu0 %v4732
    %5698 = vmatpush.bf16.msra.mxu0 %v4725
    %5699 = vmatpush.bf16.msra.mxu0 %v4718
    %5700 = vmatpush.bf16.msra.mxu0 %v4711
    %5701 = vmatpush.bf16.msra.mxu0 %v4704
    %5702 = vmatpush.bf16.msra.mxu0 %v4697
    %5703 = vmatpush.bf16.msra.mxu0 %v4690
    %5704 = vmatpush.bf16.msra.mxu0 %v4683
    %5705 = vmatmul.bf16.gmra.mxu0 %v2924
    %v5706 = vpop.f32.mrf.mxu0
    %v5707 = vadd.f32 %v5694, %v5706
    %v5708 = vpop.f32.mrf.mxu0
    %5709 = vdwg.mxu0
    %5710 = vmatpush.bf16.msra.mxu0 0
    %5711 = vmatpush.bf16.msra.mxu0 0
    %5712 = vmatpush.bf16.msra.mxu0 0
    %5713 = vmatpush.bf16.msra.mxu0 0
    %5714 = vmatpush.bf16.msra.mxu0 0
    %5715 = vmatpush.bf16.msra.mxu0 0
    %5716 = vmatpush.bf16.msra.mxu0 0
    %5717 = vmatpush.bf16.msra.mxu0 %v4739
    %5718 = vmatmul.bf16.gmra.mxu0 %v5084
    %v5719 = vpop.f32.mrf.mxu0
    %v5720 = vadd.f32 %v5707, %v5719
    %v5721 = vpop.f32.mrf.mxu0
    %5722 = vdwg.mxu0
    %vm5723 = vcmp.ge.f32.partialorder %v5174, 0.0
    %vm5724 = vcmp.ge.f32.partialorder %v5265, 0.0
    %vm5725 = vcmp.ge.f32.partialorder %v5356, 0.0
    %vm5726 = vcmp.ge.f32.partialorder %v5447, 0.0
    %vm5727 = vcmp.ge.f32.partialorder %v5538, 0.0
    %vm5728 = vcmp.ge.f32.partialorder %v5629, 0.0
    %vm5729 = vcmp.ge.f32.partialorder %v5720, 0.0
    %v5730 = vmul.f32 %v2904, %v5174
    %v5731 = vmul.f32 %v2904, %v5265
    %v5732 = vmul.f32 %v2904, %v5356
    %v5733 = vmul.f32 %v2904, %v5447
    %v5734 = vmul.f32 %v2904, %v5538
    %v5735 = vmul.f32 %v2904, %v5629
    %v5736 = vmul.f32 %v2904, %v5720
    %v5737 = vsel %vm5723, %v5174, %v5730
    %v5738 = vsel %vm5724, %v5265, %v5731
    %v5739 = vsel %vm5725, %v5356, %v5732
    %v5740 = vsel %vm5726, %v5447, %v5733
    %v5741 = vsel %vm5727, %v5538, %v5734
    %v5742 = vsel %vm5728, %v5629, %v5735
    %v5743 = vsel %vm5729, %v5720, %v5736
    %v5744 = vpack.c.bf16 %v5737, %v5737
    %v5745 = vpack.c.bf16 %v5738, %v5738
    %v5746 = vpack.c.bf16 %v5739, %v5739
    %v5747 = vpack.c.bf16 %v5740, %v5740
    %v5748 = vpack.c.bf16 %v5741, %v5741
    %v5749 = vpack.c.bf16 %v5742, %v5742
    %v5750 = vpack.c.bf16 %v5743, %v5743
    %s5751 = scalar_lea.vmem [#allocation6], 5488
    %v5752 = vld [vmem:[%s5751] sm:$0xff]
    %v5753 = vld [vmem:[%s5751 + $0x8] sm:$0xff]
    %v5754 = vld [vmem:[%s5751 + $0x10] sm:$0xff]
    %v5755 = vld [vmem:[%s5751 + $0x18] sm:$0xf]
    %v5756 = vld [vmem:[%s5751 + $0x1c] sm:$0xff]
    %v5757 = vld [vmem:[%s5751 + $0x24] sm:$0xff]
    %v5758 = vld [vmem:[%s5751 + $0x2c] sm:$0xff]
    %v5759 = vld [vmem:[%s5751 + $0x34] sm:$0xf]
    %v5760 = vld [vmem:[%s5751 + $0x38] sm:$0xff]
    %v5761 = vld [vmem:[%s5751 + $0x40] sm:$0xff]
    %v5762 = vld [vmem:[%s5751 + $0x48] sm:$0xff]
    %v5763 = vld [vmem:[%s5751 + $0x50] sm:$0xf]
    %v5764 = vld [vmem:[%s5751 + $0x54] sm:$0xff]
    %v5765 = vld [vmem:[%s5751 + $0x5c] sm:$0xff]
    %v5766 = vld [vmem:[%s5751 + $0x64] sm:$0xff]
    %v5767 = vld [vmem:[%s5751 + $0x6c] sm:$0xf]
    %v5768 = vld [vmem:[%s5751 + $0x70] sm:$0xff]
    %v5769 = vld [vmem:[%s5751 + $0x78] sm:$0xff]
    %v5770 = vld [vmem:[%s5751 + $0x80] sm:$0xff]
    %v5771 = vld [vmem:[%s5751 + $0x88] sm:$0xf]
    %v5772 = vld [vmem:[%s5751 + $0x8c] sm:$0xff]
    %v5773 = vld [vmem:[%s5751 + $0x94] sm:$0xff]
    %v5774 = vld [vmem:[%s5751 + $0x9c] sm:$0xff]
    %v5775 = vld [vmem:[%s5751 + $0xa4] sm:$0xf]
    %v5776 = vld [vmem:[%s5751 + $0xa8] sm:$0xff]
    %v5777 = vld [vmem:[%s5751 + $0xb0] sm:$0xff]
    %v5778 = vld [vmem:[%s5751 + $0xb8] sm:$0xff]
    %v5779 = vld [vmem:[%s5751 + $0xc0] sm:$0xf]
    %v5780 = vld [vmem:[%s5751 + $0xc4] sm:$0xff]
    %v5781 = vld [vmem:[%s5751 + $0xcc] sm:$0xff]
    %v5782 = vld [vmem:[%s5751 + $0xd4] sm:$0xff]
    %v5783 = vld [vmem:[%s5751 + $0xdc] sm:$0xf]
    %v5784 = vld [vmem:[%s5751 + $0xe0] sm:$0xff]
    %v5785 = vld [vmem:[%s5751 + $0xe8] sm:$0xff]
    %v5786 = vld [vmem:[%s5751 + $0xf0] sm:$0xff]
    %v5787 = vld [vmem:[%s5751 + $0xf8] sm:$0xf]
    %v5788 = vld [vmem:[%s5751 + $0xfc] sm:$0xff]
    %v5789 = vld [vmem:[%s5751 + $0x104] sm:$0xff]
    %v5790 = vld [vmem:[%s5751 + $0x10c] sm:$0xff]
    %v5791 = vld [vmem:[%s5751 + $0x114] sm:$0xf]
    %v5792 = vld [vmem:[%s5751 + $0x118] sm:$0xff]
    %v5793 = vld [vmem:[%s5751 + $0x120] sm:$0xff]
    %v5794 = vld [vmem:[%s5751 + $0x128] sm:$0xff]
    %v5795 = vld [vmem:[%s5751 + $0x130] sm:$0xf]
    %v5796 = vld [vmem:[%s5751 + $0x134] sm:$0xff]
    %v5797 = vld [vmem:[%s5751 + $0x13c] sm:$0xff]
    %v5798 = vld [vmem:[%s5751 + $0x144] sm:$0xff]
    %v5799 = vld [vmem:[%s5751 + $0x14c] sm:$0xf]
    %v5800 = vld [vmem:[%s5751 + $0x150] sm:$0xff]
    %v5801 = vld [vmem:[%s5751 + $0x158] sm:$0xff]
    %v5802 = vld [vmem:[%s5751 + $0x160] sm:$0xff]
    %v5803 = vld [vmem:[%s5751 + $0x168] sm:$0xf]
    %v5804 = vld [vmem:[%s5751 + $0x16c] sm:$0xff]
    %v5805 = vld [vmem:[%s5751 + $0x174] sm:$0xff]
    %v5806 = vld [vmem:[%s5751 + $0x17c] sm:$0xff]
    %v5807 = vld [vmem:[%s5751 + $0x184] sm:$0xf]
    %v5808 = vld [vmem:[%s5751 + $0x188] sm:$0xff]
    %v5809 = vld [vmem:[%s5751 + $0x190] sm:$0xff]
    %v5810 = vld [vmem:[%s5751 + $0x198] sm:$0xff]
    %v5811 = vld [vmem:[%s5751 + $0x1a0] sm:$0xf]
    %v5812 = vld [vmem:[%s5751 + $0x1a4] sm:$0xff]
    %v5813 = vld [vmem:[%s5751 + $0x1ac] sm:$0xff]
    %v5814 = vld [vmem:[%s5751 + $0x1b4] sm:$0xff]
    %v5815 = vld [vmem:[%s5751 + $0x1bc] sm:$0xf]
    %v5816 = vld [vmem:[%s5751 + $0x1c0] sm:$0xff]
    %v5817 = vld [vmem:[%s5751 + $0x1c8] sm:$0xff]
    %v5818 = vld [vmem:[%s5751 + $0x1d0] sm:$0xff]
    %v5819 = vld [vmem:[%s5751 + $0x1d8] sm:$0xf]
    %v5820 = vld [vmem:[%s5751 + $0x1dc] sm:$0xff]
    %v5821 = vld [vmem:[%s5751 + $0x1e4] sm:$0xff]
    %v5822 = vld [vmem:[%s5751 + $0x1ec] sm:$0xff]
    %v5823 = vld [vmem:[%s5751 + $0x1f4] sm:$0xf]
    %v5824 = vld [vmem:[%s5751 + $0x1f8] sm:$0xff]
    %v5825 = vld [vmem:[%s5751 + $0x200] sm:$0xff]
    %v5826 = vld [vmem:[%s5751 + $0x208] sm:$0xff]
    %v5827 = vld [vmem:[%s5751 + $0x210] sm:$0xf]
    %v5828 = vld [vmem:[%s5751 + $0x214] sm:$0xff]
    %v5829 = vld [vmem:[%s5751 + $0x21c] sm:$0xff]
    %v5830 = vld [vmem:[%s5751 + $0x224] sm:$0xff]
    %v5831 = vld [vmem:[%s5751 + $0x22c] sm:$0xf]
    %v5832 = vld [vmem:[%s5751 + $0x230] sm:$0xff]
    %v5833 = vld [vmem:[%s5751 + $0x238] sm:$0xff]
    %v5834 = vld [vmem:[%s5751 + $0x240] sm:$0xff]
    %v5835 = vld [vmem:[%s5751 + $0x248] sm:$0xf]
    %v5836 = vld [vmem:[%s5751 + $0x24c] sm:$0xff]
    %v5837 = vld [vmem:[%s5751 + $0x254] sm:$0xff]
    %v5838 = vld [vmem:[%s5751 + $0x25c] sm:$0xff]
    %v5839 = vld [vmem:[%s5751 + $0x264] sm:$0xf]
    %v5840 = vld [vmem:[%s5751 + $0x268] sm:$0xff]
    %v5841 = vld [vmem:[%s5751 + $0x270] sm:$0xff]
    %v5842 = vld [vmem:[%s5751 + $0x278] sm:$0xff]
    %v5843 = vld [vmem:[%s5751 + $0x280] sm:$0xf]
    %v5844 = vld [vmem:[%s5751 + $0x284] sm:$0xff]
    %v5845 = vld [vmem:[%s5751 + $0x28c] sm:$0xff]
    %v5846 = vld [vmem:[%s5751 + $0x294] sm:$0xff]
    %v5847 = vld [vmem:[%s5751 + $0x29c] sm:$0xf]
    %v5848 = vld [vmem:[%s5751 + $0x2a0] sm:$0xff]
    %v5849 = vld [vmem:[%s5751 + $0x2a8] sm:$0xff]
    %v5850 = vld [vmem:[%s5751 + $0x2b0] sm:$0xff]
    %v5851 = vld [vmem:[%s5751 + $0x2b8] sm:$0xf]
    %v5852 = vld [vmem:[%s5751 + $0x2bc] sm:$0xff]
    %v5853 = vld [vmem:[%s5751 + $0x2c4] sm:$0xff]
    %v5854 = vld [vmem:[%s5751 + $0x2cc] sm:$0xff]
    %v5855 = vld [vmem:[%s5751 + $0x2d4] sm:$0xf]
    %v5856 = vld [vmem:[%s5751 + $0x2d8] sm:$0xff]
    %v5857 = vld [vmem:[%s5751 + $0x2e0] sm:$0xff]
    %v5858 = vld [vmem:[%s5751 + $0x2e8] sm:$0xff]
    %v5859 = vld [vmem:[%s5751 + $0x2f0] sm:$0xf]
    %v5860 = vld [vmem:[%s5751 + $0x2f4] sm:$0xff]
    %v5861 = vld [vmem:[%s5751 + $0x2fc] sm:$0xff]
    %v5862 = vld [vmem:[%s5751 + $0x304] sm:$0xff]
    %v5863 = vld [vmem:[%s5751 + $0x30c] sm:$0xf]
    %v5864 = vld [vmem:[%s5751 + $0x310] sm:$0xff]
    %v5865 = vld [vmem:[%s5751 + $0x318] sm:$0xff]
    %v5866 = vld [vmem:[%s5751 + $0x320] sm:$0xff]
    %v5867 = vld [vmem:[%s5751 + $0x328] sm:$0xf]
    %v5868 = vld [vmem:[%s5751 + $0x32c] sm:$0xff]
    %v5869 = vld [vmem:[%s5751 + $0x334] sm:$0xff]
    %v5870 = vld [vmem:[%s5751 + $0x33c] sm:$0xff]
    %v5871 = vld [vmem:[%s5751 + $0x344] sm:$0xf]
    %v5872 = vld [vmem:[%s5751 + $0x348] sm:$0xff]
    %v5873 = vld [vmem:[%s5751 + $0x350] sm:$0xff]
    %v5874 = vld [vmem:[%s5751 + $0x358] sm:$0xff]
    %v5875 = vld [vmem:[%s5751 + $0x360] sm:$0xf]
    %v5876 = vld [vmem:[%s5751 + $0x364] sm:$0xff]
    %v5877 = vld [vmem:[%s5751 + $0x36c] sm:$0xff]
    %v5878 = vld [vmem:[%s5751 + $0x374] sm:$0xff]
    %v5879 = vld [vmem:[%s5751 + $0x37c] sm:$0xf]
    %v5880 = vld [vmem:[%s5751 + $0x380] sm:$0xff]
    %v5881 = vld [vmem:[%s5751 + $0x388] sm:$0xff]
    %v5882 = vld [vmem:[%s5751 + $0x390] sm:$0xff]
    %v5883 = vld [vmem:[%s5751 + $0x398] sm:$0xf]
    %v5884 = vld [vmem:[%s5751 + $0x39c] sm:$0xff]
    %v5885 = vld [vmem:[%s5751 + $0x3a4] sm:$0xff]
    %v5886 = vld [vmem:[%s5751 + $0x3ac] sm:$0xff]
    %v5887 = vld [vmem:[%s5751 + $0x3b4] sm:$0xf]
    %v5888 = vld [vmem:[%s5751 + $0x3b8] sm:$0xff]
    %v5889 = vld [vmem:[%s5751 + $0x3c0] sm:$0xff]
    %v5890 = vld [vmem:[%s5751 + $0x3c8] sm:$0xff]
    %v5891 = vld [vmem:[%s5751 + $0x3d0] sm:$0xf]
    %v5892 = vld [vmem:[%s5751 + $0x3d4] sm:$0xff]
    %v5893 = vld [vmem:[%s5751 + $0x3dc] sm:$0xff]
    %v5894 = vld [vmem:[%s5751 + $0x3e4] sm:$0xff]
    %v5895 = vld [vmem:[%s5751 + $0x3ec] sm:$0xf]
    %v5896 = vld [vmem:[%s5751 + $0x3f0] sm:$0xff]
    %v5897 = vld [vmem:[%s5751 + $0x3f8] sm:$0xff]
    %v5898 = vld [vmem:[%s5751 + $0x400] sm:$0xff]
    %v5899 = vld [vmem:[%s5751 + $0x408] sm:$0xf]
    %v5900 = vld [vmem:[%s5751 + $0x40c] sm:$0xff]
    %v5901 = vld [vmem:[%s5751 + $0x414] sm:$0xff]
    %v5902 = vld [vmem:[%s5751 + $0x41c] sm:$0xff]
    %v5903 = vld [vmem:[%s5751 + $0x424] sm:$0xf]
    %v5904 = vld [vmem:[%s5751 + $0x428] sm:$0xff]
    %v5905 = vld [vmem:[%s5751 + $0x430] sm:$0xff]
    %v5906 = vld [vmem:[%s5751 + $0x438] sm:$0xff]
    %v5907 = vld [vmem:[%s5751 + $0x440] sm:$0xf]
    %v5908 = vld [vmem:[%s5751 + $0x444] sm:$0xff]
    %v5909 = vld [vmem:[%s5751 + $0x44c] sm:$0xff]
    %v5910 = vld [vmem:[%s5751 + $0x454] sm:$0xff]
    %v5911 = vld [vmem:[%s5751 + $0x45c] sm:$0xf]
    %v5912 = vld [vmem:[%s5751 + $0x460] sm:$0xff]
    %v5913 = vld [vmem:[%s5751 + $0x468] sm:$0xff]
    %v5914 = vld [vmem:[%s5751 + $0x470] sm:$0xff]
    %v5915 = vld [vmem:[%s5751 + $0x478] sm:$0xf]
    %v5916 = vld [vmem:[%s5751 + $0x47c] sm:$0xff]
    %v5917 = vld [vmem:[%s5751 + $0x484] sm:$0xff]
    %v5918 = vld [vmem:[%s5751 + $0x48c] sm:$0xff]
    %v5919 = vld [vmem:[%s5751 + $0x494] sm:$0xf]
    %v5920 = vld [vmem:[%s5751 + $0x498] sm:$0xff]
    %v5921 = vld [vmem:[%s5751 + $0x4a0] sm:$0xff]
    %v5922 = vld [vmem:[%s5751 + $0x4a8] sm:$0xff]
    %v5923 = vld [vmem:[%s5751 + $0x4b0] sm:$0xf]
    %v5924 = vld [vmem:[%s5751 + $0x4b4] sm:$0xff]
    %v5925 = vld [vmem:[%s5751 + $0x4bc] sm:$0xff]
    %v5926 = vld [vmem:[%s5751 + $0x4c4] sm:$0xff]
    %v5927 = vld [vmem:[%s5751 + $0x4cc] sm:$0xf]
    %v5928 = vld [vmem:[%s5751 + $0x4d0] sm:$0xff]
    %v5929 = vld [vmem:[%s5751 + $0x4d8] sm:$0xff]
    %v5930 = vld [vmem:[%s5751 + $0x4e0] sm:$0xff]
    %v5931 = vld [vmem:[%s5751 + $0x4e8] sm:$0xf]
    %v5932 = vld [vmem:[%s5751 + $0x4ec] sm:$0xff]
    %v5933 = vld [vmem:[%s5751 + $0x4f4] sm:$0xff]
    %v5934 = vld [vmem:[%s5751 + $0x4fc] sm:$0xff]
    %v5935 = vld [vmem:[%s5751 + $0x504] sm:$0xf]
    %v5936 = vld [vmem:[%s5751 + $0x508] sm:$0xff]
    %v5937 = vld [vmem:[%s5751 + $0x510] sm:$0xff]
    %v5938 = vld [vmem:[%s5751 + $0x518] sm:$0xff]
    %v5939 = vld [vmem:[%s5751 + $0x520] sm:$0xf]
    %v5940 = vld [vmem:[%s5751 + $0x524] sm:$0xff]
    %v5941 = vld [vmem:[%s5751 + $0x52c] sm:$0xff]
    %v5942 = vld [vmem:[%s5751 + $0x534] sm:$0xff]
    %v5943 = vld [vmem:[%s5751 + $0x53c] sm:$0xf]
    %v5944 = vld [vmem:[%s5751 + $0x540] sm:$0xff]
    %v5945 = vld [vmem:[%s5751 + $0x548] sm:$0xff]
    %v5946 = vld [vmem:[%s5751 + $0x550] sm:$0xff]
    %v5947 = vld [vmem:[%s5751 + $0x558] sm:$0xf]
    %v5948 = vld [vmem:[%s5751 + $0x55c] sm:$0xff]
    %v5949 = vld [vmem:[%s5751 + $0x564] sm:$0xff]
    %v5950 = vld [vmem:[%s5751 + $0x56c] sm:$0xff]
    %v5951 = vld [vmem:[%s5751 + $0x574] sm:$0xf]
    %v5952 = vld [vmem:[%s5751 + $0x578] sm:$0xff]
    %v5953 = vld [vmem:[%s5751 + $0x580] sm:$0xff]
    %v5954 = vld [vmem:[%s5751 + $0x588] sm:$0xff]
    %v5955 = vld [vmem:[%s5751 + $0x590] sm:$0xf]
    %v5956 = vld [vmem:[%s5751 + $0x594] sm:$0xff]
    %v5957 = vld [vmem:[%s5751 + $0x59c] sm:$0xff]
    %v5958 = vld [vmem:[%s5751 + $0x5a4] sm:$0xff]
    %v5959 = vld [vmem:[%s5751 + $0x5ac] sm:$0xf]
    %v5960 = vld [vmem:[%s5751 + $0x5b0] sm:$0xff]
    %v5961 = vld [vmem:[%s5751 + $0x5b8] sm:$0xff]
    %v5962 = vld [vmem:[%s5751 + $0x5c0] sm:$0xff]
    %v5963 = vld [vmem:[%s5751 + $0x5c8] sm:$0xf]
    %v5964 = vld [vmem:[%s5751 + $0x5cc] sm:$0xff]
    %v5965 = vld [vmem:[%s5751 + $0x5d4] sm:$0xff]
    %v5966 = vld [vmem:[%s5751 + $0x5dc] sm:$0xff]
    %v5967 = vld [vmem:[%s5751 + $0x5e4] sm:$0xf]
    %v5968 = vld [vmem:[%s5751 + $0x5e8] sm:$0xff]
    %v5969 = vld [vmem:[%s5751 + $0x5f0] sm:$0xff]
    %v5970 = vld [vmem:[%s5751 + $0x5f8] sm:$0xff]
    %v5971 = vld [vmem:[%s5751 + $0x600] sm:$0xf]
    %v5972 = vld [vmem:[%s5751 + $0x604] sm:$0xff]
    %v5973 = vld [vmem:[%s5751 + $0x60c] sm:$0xff]
    %v5974 = vld [vmem:[%s5751 + $0x614] sm:$0xff]
    %v5975 = vld [vmem:[%s5751 + $0x61c] sm:$0xf]
    %v5976 = vld [vmem:[%s5751 + $0x620] sm:$0xff]
    %v5977 = vld [vmem:[%s5751 + $0x628] sm:$0xff]
    %v5978 = vld [vmem:[%s5751 + $0x630] sm:$0xff]
    %v5979 = vld [vmem:[%s5751 + $0x638] sm:$0xf]
    %v5980 = vld [vmem:[%s5751 + $0x63c] sm:$0xff]
    %v5981 = vld [vmem:[%s5751 + $0x644] sm:$0xff]
    %v5982 = vld [vmem:[%s5751 + $0x64c] sm:$0xff]
    %v5983 = vld [vmem:[%s5751 + $0x654] sm:$0xf]
    %v5984 = vld [vmem:[%s5751 + $0x658] sm:$0xff]
    %v5985 = vld [vmem:[%s5751 + $0x660] sm:$0xff]
    %v5986 = vld [vmem:[%s5751 + $0x668] sm:$0xff]
    %v5987 = vld [vmem:[%s5751 + $0x670] sm:$0xf]
    %v5988 = vld [vmem:[%s5751 + $0x674] sm:$0xff]
    %v5989 = vld [vmem:[%s5751 + $0x67c] sm:$0xff]
    %v5990 = vld [vmem:[%s5751 + $0x684] sm:$0xff]
    %v5991 = vld [vmem:[%s5751 + $0x68c] sm:$0xf]
    %v5992 = vld [vmem:[%s5751 + $0x690] sm:$0xff]
    %v5993 = vld [vmem:[%s5751 + $0x698] sm:$0xff]
    %v5994 = vld [vmem:[%s5751 + $0x6a0] sm:$0xff]
    %v5995 = vld [vmem:[%s5751 + $0x6a8] sm:$0xf]
    %v5996 = vld [vmem:[%s5751 + $0x6ac] sm:$0xff]
    %v5997 = vld [vmem:[%s5751 + $0x6b4] sm:$0xff]
    %v5998 = vld [vmem:[%s5751 + $0x6bc] sm:$0xff]
    %v5999 = vld [vmem:[%s5751 + $0x6c4] sm:$0xf]
    %v6000 = vld [vmem:[%s5751 + $0x6c8] sm:$0xff]
    %v6001 = vld [vmem:[%s5751 + $0x6d0] sm:$0xff]
    %v6002 = vld [vmem:[%s5751 + $0x6d8] sm:$0xff]
    %v6003 = vld [vmem:[%s5751 + $0x6e0] sm:$0xf]
    %v6004 = vld [vmem:[%s5751 + $0x6e4] sm:$0xff]
    %v6005 = vld [vmem:[%s5751 + $0x6ec] sm:$0xff]
    %v6006 = vld [vmem:[%s5751 + $0x6f4] sm:$0xff]
    %v6007 = vld [vmem:[%s5751 + $0x6fc] sm:$0xf]
    %v6008 = vld [vmem:[%s5751 + $0x700] sm:$0xff]
    %v6009 = vld [vmem:[%s5751 + $0x708] sm:$0xff]
    %v6010 = vld [vmem:[%s5751 + $0x710] sm:$0xff]
    %v6011 = vld [vmem:[%s5751 + $0x718] sm:$0xf]
    %v6012 = vld [vmem:[%s5751 + $0x71c] sm:$0xff]
    %v6013 = vld [vmem:[%s5751 + $0x724] sm:$0xff]
    %v6014 = vld [vmem:[%s5751 + $0x72c] sm:$0xff]
    %v6015 = vld [vmem:[%s5751 + $0x734] sm:$0xf]
    %v6016 = vld [vmem:[%s5751 + $0x738] sm:$0xff]
    %v6017 = vld [vmem:[%s5751 + $0x740] sm:$0xff]
    %v6018 = vld [vmem:[%s5751 + $0x748] sm:$0xff]
    %v6019 = vld [vmem:[%s5751 + $0x750] sm:$0xf]
    %v6020 = vld [vmem:[%s5751 + $0x754] sm:$0xff]
    %v6021 = vld [vmem:[%s5751 + $0x75c] sm:$0xff]
    %v6022 = vld [vmem:[%s5751 + $0x764] sm:$0xff]
    %v6023 = vld [vmem:[%s5751 + $0x76c] sm:$0xf]
    %v6024 = vld [vmem:[%s5751 + $0x770] sm:$0xff]
    %v6025 = vld [vmem:[%s5751 + $0x778] sm:$0xff]
    %v6026 = vld [vmem:[%s5751 + $0x780] sm:$0xff]
    %v6027 = vld [vmem:[%s5751 + $0x788] sm:$0xf]
    %v6028 = vld [vmem:[%s5751 + $0x78c] sm:$0xff]
    %v6029 = vld [vmem:[%s5751 + $0x794] sm:$0xff]
    %v6030 = vld [vmem:[%s5751 + $0x79c] sm:$0xff]
    %v6031 = vld [vmem:[%s5751 + $0x7a4] sm:$0xf]
    %v6032 = vld [vmem:[%s5751 + $0x7a8] sm:$0xff]
    %v6033 = vld [vmem:[%s5751 + $0x7b0] sm:$0xff]
    %v6034 = vld [vmem:[%s5751 + $0x7b8] sm:$0xff]
    %v6035 = vld [vmem:[%s5751 + $0x7c0] sm:$0xf]
    %v6036 = vld [vmem:[%s5751 + $0x7c4] sm:$0xff]
    %v6037 = vld [vmem:[%s5751 + $0x7cc] sm:$0xff]
    %v6038 = vld [vmem:[%s5751 + $0x7d4] sm:$0xff]
    %v6039 = vld [vmem:[%s5751 + $0x7dc] sm:$0xf]
    %v6040 = vld [vmem:[%s5751 + $0x7e0] sm:$0xff]
    %v6041 = vld [vmem:[%s5751 + $0x7e8] sm:$0xff]
    %v6042 = vld [vmem:[%s5751 + $0x7f0] sm:$0xff]
    %v6043 = vld [vmem:[%s5751 + $0x7f8] sm:$0xf]
    %v6044 = vld [vmem:[%s5751 + $0x7fc] sm:$0xff]
    %v6045 = vld [vmem:[%s5751 + $0x804] sm:$0xff]
    %v6046 = vld [vmem:[%s5751 + $0x80c] sm:$0xff]
    %v6047 = vld [vmem:[%s5751 + $0x814] sm:$0xf]
    %v6048 = vld [vmem:[%s5751 + $0x818] sm:$0xff]
    %v6049 = vld [vmem:[%s5751 + $0x820] sm:$0xff]
    %v6050 = vld [vmem:[%s5751 + $0x828] sm:$0xff]
    %v6051 = vld [vmem:[%s5751 + $0x830] sm:$0xf]
    %v6052 = vld [vmem:[%s5751 + $0x834] sm:$0xff]
    %v6053 = vld [vmem:[%s5751 + $0x83c] sm:$0xff]
    %v6054 = vld [vmem:[%s5751 + $0x844] sm:$0xff]
    %v6055 = vld [vmem:[%s5751 + $0x84c] sm:$0xf]
    %v6056 = vld [vmem:[%s5751 + $0x850] sm:$0xff]
    %v6057 = vld [vmem:[%s5751 + $0x858] sm:$0xff]
    %v6058 = vld [vmem:[%s5751 + $0x860] sm:$0xff]
    %v6059 = vld [vmem:[%s5751 + $0x868] sm:$0xf]
    %v6060 = vld [vmem:[%s5751 + $0x86c] sm:$0xff]
    %v6061 = vld [vmem:[%s5751 + $0x874] sm:$0xff]
    %v6062 = vld [vmem:[%s5751 + $0x87c] sm:$0xff]
    %v6063 = vld [vmem:[%s5751 + $0x884] sm:$0xf]
    %v6064 = vld [vmem:[%s5751 + $0x888] sm:$0xff]
    %v6065 = vld [vmem:[%s5751 + $0x890] sm:$0xff]
    %v6066 = vld [vmem:[%s5751 + $0x898] sm:$0xff]
    %v6067 = vld [vmem:[%s5751 + $0x8a0] sm:$0xf]
    %v6068 = vld [vmem:[%s5751 + $0x8a4] sm:$0xff]
    %v6069 = vld [vmem:[%s5751 + $0x8ac] sm:$0xff]
    %v6070 = vld [vmem:[%s5751 + $0x8b4] sm:$0xff]
    %v6071 = vld [vmem:[%s5751 + $0x8bc] sm:$0xf]
    %v6072 = vld [vmem:[%s5751 + $0x8c0] sm:$0xff]
    %v6073 = vld [vmem:[%s5751 + $0x8c8] sm:$0xff]
    %v6074 = vld [vmem:[%s5751 + $0x8d0] sm:$0xff]
    %v6075 = vld [vmem:[%s5751 + $0x8d8] sm:$0xf]
    %v6076 = vld [vmem:[%s5751 + $0x8dc] sm:$0xff]
    %v6077 = vld [vmem:[%s5751 + $0x8e4] sm:$0xff]
    %v6078 = vld [vmem:[%s5751 + $0x8ec] sm:$0xff]
    %v6079 = vld [vmem:[%s5751 + $0x8f4] sm:$0xf]
    %v6080 = vld [vmem:[%s5751 + $0x8f8] sm:$0xff]
    %v6081 = vld [vmem:[%s5751 + $0x900] sm:$0xff]
    %v6082 = vld [vmem:[%s5751 + $0x908] sm:$0xff]
    %v6083 = vld [vmem:[%s5751 + $0x910] sm:$0xf]
    %v6084 = vld [vmem:[%s5751 + $0x914] sm:$0xff]
    %v6085 = vld [vmem:[%s5751 + $0x91c] sm:$0xff]
    %v6086 = vld [vmem:[%s5751 + $0x924] sm:$0xff]
    %v6087 = vld [vmem:[%s5751 + $0x92c] sm:$0xf]
    %v6088 = vld [vmem:[%s5751 + $0x930] sm:$0xff]
    %v6089 = vld [vmem:[%s5751 + $0x938] sm:$0xff]
    %v6090 = vld [vmem:[%s5751 + $0x940] sm:$0xff]
    %v6091 = vld [vmem:[%s5751 + $0x948] sm:$0xf]
    %v6092 = vld [vmem:[%s5751 + $0x94c] sm:$0xff]
    %v6093 = vld [vmem:[%s5751 + $0x954] sm:$0xff]
    %v6094 = vld [vmem:[%s5751 + $0x95c] sm:$0xff]
    %v6095 = vld [vmem:[%s5751 + $0x964] sm:$0xf]
    %v6096 = vld [vmem:[%s5751 + $0x968] sm:$0xff]
    %v6097 = vld [vmem:[%s5751 + $0x970] sm:$0xff]
    %v6098 = vld [vmem:[%s5751 + $0x978] sm:$0xff]
    %v6099 = vld [vmem:[%s5751 + $0x980] sm:$0xf]
    %v6100 = vld [vmem:[%s5751 + $0x984] sm:$0xff]
    %v6101 = vld [vmem:[%s5751 + $0x98c] sm:$0xff]
    %v6102 = vld [vmem:[%s5751 + $0x994] sm:$0xff]
    %v6103 = vld [vmem:[%s5751 + $0x99c] sm:$0xf]
    %v6104 = vld [vmem:[%s5751 + $0x9a0] sm:$0xff]
    %v6105 = vld [vmem:[%s5751 + $0x9a8] sm:$0xff]
    %v6106 = vld [vmem:[%s5751 + $0x9b0] sm:$0xff]
    %v6107 = vld [vmem:[%s5751 + $0x9b8] sm:$0xf]
    %v6108 = vld [vmem:[%s5751 + $0x9bc] sm:$0xff]
    %v6109 = vld [vmem:[%s5751 + $0x9c4] sm:$0xff]
    %v6110 = vld [vmem:[%s5751 + $0x9cc] sm:$0xff]
    %v6111 = vld [vmem:[%s5751 + $0x9d4] sm:$0xf]
    %v6112 = vld [vmem:[%s5751 + $0x9d8] sm:$0xff]
    %v6113 = vld [vmem:[%s5751 + $0x9e0] sm:$0xff]
    %v6114 = vld [vmem:[%s5751 + $0x9e8] sm:$0xff]
    %v6115 = vld [vmem:[%s5751 + $0x9f0] sm:$0xf]
    %v6116 = vld [vmem:[%s5751 + $0x9f4] sm:$0xff]
    %v6117 = vld [vmem:[%s5751 + $0x9fc] sm:$0xff]
    %v6118 = vld [vmem:[%s5751 + $0xa04] sm:$0xff]
    %v6119 = vld [vmem:[%s5751 + $0xa0c] sm:$0xf]
    %v6120 = vld [vmem:[%s5751 + $0xa10] sm:$0xff]
    %v6121 = vld [vmem:[%s5751 + $0xa18] sm:$0xff]
    %v6122 = vld [vmem:[%s5751 + $0xa20] sm:$0xff]
    %v6123 = vld [vmem:[%s5751 + $0xa28] sm:$0xf]
    %v6124 = vld [vmem:[%s5751 + $0xa2c] sm:$0xff]
    %v6125 = vld [vmem:[%s5751 + $0xa34] sm:$0xff]
    %v6126 = vld [vmem:[%s5751 + $0xa3c] sm:$0xff]
    %v6127 = vld [vmem:[%s5751 + $0xa44] sm:$0xf]
    %v6128 = vld [vmem:[%s5751 + $0xa48] sm:$0xff]
    %v6129 = vld [vmem:[%s5751 + $0xa50] sm:$0xff]
    %v6130 = vld [vmem:[%s5751 + $0xa58] sm:$0xff]
    %v6131 = vld [vmem:[%s5751 + $0xa60] sm:$0xf]
    %v6132 = vld [vmem:[%s5751 + $0xa64] sm:$0xff]
    %v6133 = vld [vmem:[%s5751 + $0xa6c] sm:$0xff]
    %v6134 = vld [vmem:[%s5751 + $0xa74] sm:$0xff]
    %v6135 = vld [vmem:[%s5751 + $0xa7c] sm:$0xf]
    %v6136 = vld [vmem:[%s5751 + $0xa80] sm:$0xff]
    %v6137 = vld [vmem:[%s5751 + $0xa88] sm:$0xff]
    %v6138 = vld [vmem:[%s5751 + $0xa90] sm:$0xff]
    %v6139 = vld [vmem:[%s5751 + $0xa98] sm:$0xf]
    %v6140 = vld [vmem:[%s5751 + $0xa9c] sm:$0xff]
    %v6141 = vld [vmem:[%s5751 + $0xaa4] sm:$0xff]
    %v6142 = vld [vmem:[%s5751 + $0xaac] sm:$0xff]
    %v6143 = vld [vmem:[%s5751 + $0xab4] sm:$0xf]
    %v6536 = vunpack.c.l.b16 %v5752
    %v6537 = vunpack.c.h.b16 %v5752
    %v6538 = vunpack.c.l.b16 %v5753
    %v6539 = vunpack.c.h.b16 %v5753
    %v6540 = vunpack.c.l.b16 %v5754
    %v6541 = vunpack.c.h.b16 %v5754
    %v6542 = vunpack.c.l.b16 %v5755
    %v6543 = vunpack.c.l.b16 %v5756
    %v6544 = vunpack.c.h.b16 %v5756
    %v6545 = vunpack.c.l.b16 %v5757
    %v6546 = vunpack.c.h.b16 %v5757
    %v6547 = vunpack.c.l.b16 %v5758
    %v6548 = vunpack.c.h.b16 %v5758
    %v6549 = vunpack.c.l.b16 %v5759
    %v6550 = vunpack.c.l.b16 %v5760
    %v6551 = vunpack.c.h.b16 %v5760
    %v6552 = vunpack.c.l.b16 %v5761
    %v6553 = vunpack.c.h.b16 %v5761
    %v6554 = vunpack.c.l.b16 %v5762
    %v6555 = vunpack.c.h.b16 %v5762
    %v6556 = vunpack.c.l.b16 %v5763
    %v6557 = vunpack.c.l.b16 %v5764
    %v6558 = vunpack.c.h.b16 %v5764
    %v6559 = vunpack.c.l.b16 %v5765
    %v6560 = vunpack.c.h.b16 %v5765
    %v6561 = vunpack.c.l.b16 %v5766
    %v6562 = vunpack.c.h.b16 %v5766
    %v6563 = vunpack.c.l.b16 %v5767
    %v6564 = vunpack.c.l.b16 %v5768
    %v6565 = vunpack.c.h.b16 %v5768
    %v6566 = vunpack.c.l.b16 %v5769
    %v6567 = vunpack.c.h.b16 %v5769
    %v6568 = vunpack.c.l.b16 %v5770
    %v6569 = vunpack.c.h.b16 %v5770
    %v6570 = vunpack.c.l.b16 %v5771
    %v6571 = vunpack.c.l.b16 %v5772
    %v6572 = vunpack.c.h.b16 %v5772
    %v6573 = vunpack.c.l.b16 %v5773
    %v6574 = vunpack.c.h.b16 %v5773
    %v6575 = vunpack.c.l.b16 %v5774
    %v6576 = vunpack.c.h.b16 %v5774
    %v6577 = vunpack.c.l.b16 %v5775
    %v6578 = vunpack.c.l.b16 %v5776
    %v6579 = vunpack.c.h.b16 %v5776
    %v6580 = vunpack.c.l.b16 %v5777
    %v6581 = vunpack.c.h.b16 %v5777
    %v6582 = vunpack.c.l.b16 %v5778
    %v6583 = vunpack.c.h.b16 %v5778
    %v6584 = vunpack.c.l.b16 %v5779
    %v6585 = vunpack.c.l.b16 %v5780
    %v6586 = vunpack.c.h.b16 %v5780
    %v6587 = vunpack.c.l.b16 %v5781
    %v6588 = vunpack.c.h.b16 %v5781
    %v6589 = vunpack.c.l.b16 %v5782
    %v6590 = vunpack.c.h.b16 %v5782
    %v6591 = vunpack.c.l.b16 %v5783
    %v6592 = vunpack.c.l.b16 %v5784
    %v6593 = vunpack.c.h.b16 %v5784
    %v6594 = vunpack.c.l.b16 %v5785
    %v6595 = vunpack.c.h.b16 %v5785
    %v6596 = vunpack.c.l.b16 %v5786
    %v6597 = vunpack.c.h.b16 %v5786
    %v6598 = vunpack.c.l.b16 %v5787
    %v6599 = vunpack.c.l.b16 %v5788
    %v6600 = vunpack.c.h.b16 %v5788
    %v6601 = vunpack.c.l.b16 %v5789
    %v6602 = vunpack.c.h.b16 %v5789
    %v6603 = vunpack.c.l.b16 %v5790
    %v6604 = vunpack.c.h.b16 %v5790
    %v6605 = vunpack.c.l.b16 %v5791
    %v6606 = vunpack.c.l.b16 %v5792
    %v6607 = vunpack.c.h.b16 %v5792
    %v6608 = vunpack.c.l.b16 %v5793
    %v6609 = vunpack.c.h.b16 %v5793
    %v6610 = vunpack.c.l.b16 %v5794
    %v6611 = vunpack.c.h.b16 %v5794
    %v6612 = vunpack.c.l.b16 %v5795
    %v6613 = vunpack.c.l.b16 %v5796
    %v6614 = vunpack.c.h.b16 %v5796
    %v6615 = vunpack.c.l.b16 %v5797
    %v6616 = vunpack.c.h.b16 %v5797
    %v6617 = vunpack.c.l.b16 %v5798
    %v6618 = vunpack.c.h.b16 %v5798
    %v6619 = vunpack.c.l.b16 %v5799
    %v6620 = vunpack.c.l.b16 %v5800
    %v6621 = vunpack.c.h.b16 %v5800
    %v6622 = vunpack.c.l.b16 %v5801
    %v6623 = vunpack.c.h.b16 %v5801
    %v6624 = vunpack.c.l.b16 %v5802
    %v6625 = vunpack.c.h.b16 %v5802
    %v6626 = vunpack.c.l.b16 %v5803
    %v6627 = vunpack.c.l.b16 %v5804
    %v6628 = vunpack.c.h.b16 %v5804
    %v6629 = vunpack.c.l.b16 %v5805
    %v6630 = vunpack.c.h.b16 %v5805
    %v6631 = vunpack.c.l.b16 %v5806
    %v6632 = vunpack.c.h.b16 %v5806
    %v6633 = vunpack.c.l.b16 %v5807
    %v6634 = vunpack.c.l.b16 %v5808
    %v6635 = vunpack.c.h.b16 %v5808
    %v6636 = vunpack.c.l.b16 %v5809
    %v6637 = vunpack.c.h.b16 %v5809
    %v6638 = vunpack.c.l.b16 %v5810
    %v6639 = vunpack.c.h.b16 %v5810
    %v6640 = vunpack.c.l.b16 %v5811
    %v6641 = vunpack.c.l.b16 %v5812
    %v6642 = vunpack.c.h.b16 %v5812
    %v6643 = vunpack.c.l.b16 %v5813
    %v6644 = vunpack.c.h.b16 %v5813
    %v6645 = vunpack.c.l.b16 %v5814
    %v6646 = vunpack.c.h.b16 %v5814
    %v6647 = vunpack.c.l.b16 %v5815
    %v6648 = vunpack.c.l.b16 %v5816
    %v6649 = vunpack.c.h.b16 %v5816
    %v6650 = vunpack.c.l.b16 %v5817
    %v6651 = vunpack.c.h.b16 %v5817
    %v6652 = vunpack.c.l.b16 %v5818
    %v6653 = vunpack.c.h.b16 %v5818
    %v6654 = vunpack.c.l.b16 %v5819
    %v6655 = vunpack.c.l.b16 %v5820
    %v6656 = vunpack.c.h.b16 %v5820
    %v6657 = vunpack.c.l.b16 %v5821
    %v6658 = vunpack.c.h.b16 %v5821
    %v6659 = vunpack.c.l.b16 %v5822
    %v6660 = vunpack.c.h.b16 %v5822
    %v6661 = vunpack.c.l.b16 %v5823
    %v6662 = vunpack.c.l.b16 %v5824
    %v6663 = vunpack.c.h.b16 %v5824
    %v6664 = vunpack.c.l.b16 %v5825
    %v6665 = vunpack.c.h.b16 %v5825
    %v6666 = vunpack.c.l.b16 %v5826
    %v6667 = vunpack.c.h.b16 %v5826
    %v6668 = vunpack.c.l.b16 %v5827
    %v6669 = vunpack.c.l.b16 %v5828
    %v6670 = vunpack.c.h.b16 %v5828
    %v6671 = vunpack.c.l.b16 %v5829
    %v6672 = vunpack.c.h.b16 %v5829
    %v6673 = vunpack.c.l.b16 %v5830
    %v6674 = vunpack.c.h.b16 %v5830
    %v6675 = vunpack.c.l.b16 %v5831
    %v6676 = vunpack.c.l.b16 %v5832
    %v6677 = vunpack.c.h.b16 %v5832
    %v6678 = vunpack.c.l.b16 %v5833
    %v6679 = vunpack.c.h.b16 %v5833
    %v6680 = vunpack.c.l.b16 %v5834
    %v6681 = vunpack.c.h.b16 %v5834
    %v6682 = vunpack.c.l.b16 %v5835
    %v6683 = vunpack.c.l.b16 %v5836
    %v6684 = vunpack.c.h.b16 %v5836
    %v6685 = vunpack.c.l.b16 %v5837
    %v6686 = vunpack.c.h.b16 %v5837
    %v6687 = vunpack.c.l.b16 %v5838
    %v6688 = vunpack.c.h.b16 %v5838
    %v6689 = vunpack.c.l.b16 %v5839
    %v6690 = vunpack.c.l.b16 %v5840
    %v6691 = vunpack.c.h.b16 %v5840
    %v6692 = vunpack.c.l.b16 %v5841
    %v6693 = vunpack.c.h.b16 %v5841
    %v6694 = vunpack.c.l.b16 %v5842
    %v6695 = vunpack.c.h.b16 %v5842
    %v6696 = vunpack.c.l.b16 %v5843
    %v6697 = vunpack.c.l.b16 %v5844
    %v6698 = vunpack.c.h.b16 %v5844
    %v6699 = vunpack.c.l.b16 %v5845
    %v6700 = vunpack.c.h.b16 %v5845
    %v6701 = vunpack.c.l.b16 %v5846
    %v6702 = vunpack.c.h.b16 %v5846
    %v6703 = vunpack.c.l.b16 %v5847
    %v6704 = vunpack.c.l.b16 %v5848
    %v6705 = vunpack.c.h.b16 %v5848
    %v6706 = vunpack.c.l.b16 %v5849
    %v6707 = vunpack.c.h.b16 %v5849
    %v6708 = vunpack.c.l.b16 %v5850
    %v6709 = vunpack.c.h.b16 %v5850
    %v6710 = vunpack.c.l.b16 %v5851
    %v6711 = vunpack.c.l.b16 %v5852
    %v6712 = vunpack.c.h.b16 %v5852
    %v6713 = vunpack.c.l.b16 %v5853
    %v6714 = vunpack.c.h.b16 %v5853
    %v6715 = vunpack.c.l.b16 %v5854
    %v6716 = vunpack.c.h.b16 %v5854
    %v6717 = vunpack.c.l.b16 %v5855
    %v6718 = vunpack.c.l.b16 %v5856
    %v6719 = vunpack.c.h.b16 %v5856
    %v6720 = vunpack.c.l.b16 %v5857
    %v6721 = vunpack.c.h.b16 %v5857
    %v6722 = vunpack.c.l.b16 %v5858
    %v6723 = vunpack.c.h.b16 %v5858
    %v6724 = vunpack.c.l.b16 %v5859
    %v6725 = vunpack.c.l.b16 %v5860
    %v6726 = vunpack.c.h.b16 %v5860
    %v6727 = vunpack.c.l.b16 %v5861
    %v6728 = vunpack.c.h.b16 %v5861
    %v6729 = vunpack.c.l.b16 %v5862
    %v6730 = vunpack.c.h.b16 %v5862
    %v6731 = vunpack.c.l.b16 %v5863
    %v6732 = vunpack.c.l.b16 %v5864
    %v6733 = vunpack.c.h.b16 %v5864
    %v6734 = vunpack.c.l.b16 %v5865
    %v6735 = vunpack.c.h.b16 %v5865
    %v6736 = vunpack.c.l.b16 %v5866
    %v6737 = vunpack.c.h.b16 %v5866
    %v6738 = vunpack.c.l.b16 %v5867
    %v6739 = vunpack.c.l.b16 %v5868
    %v6740 = vunpack.c.h.b16 %v5868
    %v6741 = vunpack.c.l.b16 %v5869
    %v6742 = vunpack.c.h.b16 %v5869
    %v6743 = vunpack.c.l.b16 %v5870
    %v6744 = vunpack.c.h.b16 %v5870
    %v6745 = vunpack.c.l.b16 %v5871
    %v6746 = vunpack.c.l.b16 %v5872
    %v6747 = vunpack.c.h.b16 %v5872
    %v6748 = vunpack.c.l.b16 %v5873
    %v6749 = vunpack.c.h.b16 %v5873
    %v6750 = vunpack.c.l.b16 %v5874
    %v6751 = vunpack.c.h.b16 %v5874
    %v6752 = vunpack.c.l.b16 %v5875
    %v6753 = vunpack.c.l.b16 %v5876
    %v6754 = vunpack.c.h.b16 %v5876
    %v6755 = vunpack.c.l.b16 %v5877
    %v6756 = vunpack.c.h.b16 %v5877
    %v6757 = vunpack.c.l.b16 %v5878
    %v6758 = vunpack.c.h.b16 %v5878
    %v6759 = vunpack.c.l.b16 %v5879
    %v6760 = vunpack.c.l.b16 %v5880
    %v6761 = vunpack.c.h.b16 %v5880
    %v6762 = vunpack.c.l.b16 %v5881
    %v6763 = vunpack.c.h.b16 %v5881
    %v6764 = vunpack.c.l.b16 %v5882
    %v6765 = vunpack.c.h.b16 %v5882
    %v6766 = vunpack.c.l.b16 %v5883
    %v6767 = vunpack.c.l.b16 %v5884
    %v6768 = vunpack.c.h.b16 %v5884
    %v6769 = vunpack.c.l.b16 %v5885
    %v6770 = vunpack.c.h.b16 %v5885
    %v6771 = vunpack.c.l.b16 %v5886
    %v6772 = vunpack.c.h.b16 %v5886
    %v6773 = vunpack.c.l.b16 %v5887
    %v6774 = vunpack.c.l.b16 %v5888
    %v6775 = vunpack.c.h.b16 %v5888
    %v6776 = vunpack.c.l.b16 %v5889
    %v6777 = vunpack.c.h.b16 %v5889
    %v6778 = vunpack.c.l.b16 %v5890
    %v6779 = vunpack.c.h.b16 %v5890
    %v6780 = vunpack.c.l.b16 %v5891
    %v6781 = vunpack.c.l.b16 %v5892
    %v6782 = vunpack.c.h.b16 %v5892
    %v6783 = vunpack.c.l.b16 %v5893
    %v6784 = vunpack.c.h.b16 %v5893
    %v6785 = vunpack.c.l.b16 %v5894
    %v6786 = vunpack.c.h.b16 %v5894
    %v6787 = vunpack.c.l.b16 %v5895
    %v6788 = vunpack.c.l.b16 %v5896
    %v6789 = vunpack.c.h.b16 %v5896
    %v6790 = vunpack.c.l.b16 %v5897
    %v6791 = vunpack.c.h.b16 %v5897
    %v6792 = vunpack.c.l.b16 %v5898
    %v6793 = vunpack.c.h.b16 %v5898
    %v6794 = vunpack.c.l.b16 %v5899
    %v6795 = vunpack.c.l.b16 %v5900
    %v6796 = vunpack.c.h.b16 %v5900
    %v6797 = vunpack.c.l.b16 %v5901
    %v6798 = vunpack.c.h.b16 %v5901
    %v6799 = vunpack.c.l.b16 %v5902
    %v6800 = vunpack.c.h.b16 %v5902
    %v6801 = vunpack.c.l.b16 %v5903
    %v6802 = vunpack.c.l.b16 %v5904
    %v6803 = vunpack.c.h.b16 %v5904
    %v6804 = vunpack.c.l.b16 %v5905
    %v6805 = vunpack.c.h.b16 %v5905
    %v6806 = vunpack.c.l.b16 %v5906
    %v6807 = vunpack.c.h.b16 %v5906
    %v6808 = vunpack.c.l.b16 %v5907
    %v6809 = vunpack.c.l.b16 %v5908
    %v6810 = vunpack.c.h.b16 %v5908
    %v6811 = vunpack.c.l.b16 %v5909
    %v6812 = vunpack.c.h.b16 %v5909
    %v6813 = vunpack.c.l.b16 %v5910
    %v6814 = vunpack.c.h.b16 %v5910
    %v6815 = vunpack.c.l.b16 %v5911
    %v6816 = vunpack.c.l.b16 %v5912
    %v6817 = vunpack.c.h.b16 %v5912
    %v6818 = vunpack.c.l.b16 %v5913
    %v6819 = vunpack.c.h.b16 %v5913
    %v6820 = vunpack.c.l.b16 %v5914
    %v6821 = vunpack.c.h.b16 %v5914
    %v6822 = vunpack.c.l.b16 %v5915
    %v6823 = vunpack.c.l.b16 %v5916
    %v6824 = vunpack.c.h.b16 %v5916
    %v6825 = vunpack.c.l.b16 %v5917
    %v6826 = vunpack.c.h.b16 %v5917
    %v6827 = vunpack.c.l.b16 %v5918
    %v6828 = vunpack.c.h.b16 %v5918
    %v6829 = vunpack.c.l.b16 %v5919
    %v6830 = vunpack.c.l.b16 %v5920
    %v6831 = vunpack.c.h.b16 %v5920
    %v6832 = vunpack.c.l.b16 %v5921
    %v6833 = vunpack.c.h.b16 %v5921
    %v6834 = vunpack.c.l.b16 %v5922
    %v6835 = vunpack.c.h.b16 %v5922
    %v6836 = vunpack.c.l.b16 %v5923
    %v6837 = vunpack.c.l.b16 %v5924
    %v6838 = vunpack.c.h.b16 %v5924
    %v6839 = vunpack.c.l.b16 %v5925
    %v6840 = vunpack.c.h.b16 %v5925
    %v6841 = vunpack.c.l.b16 %v5926
    %v6842 = vunpack.c.h.b16 %v5926
    %v6843 = vunpack.c.l.b16 %v5927
    %v6844 = vunpack.c.l.b16 %v5928
    %v6845 = vunpack.c.h.b16 %v5928
    %v6846 = vunpack.c.l.b16 %v5929
    %v6847 = vunpack.c.h.b16 %v5929
    %v6848 = vunpack.c.l.b16 %v5930
    %v6849 = vunpack.c.h.b16 %v5930
    %v6850 = vunpack.c.l.b16 %v5931
    %v6851 = vunpack.c.l.b16 %v5932
    %v6852 = vunpack.c.h.b16 %v5932
    %v6853 = vunpack.c.l.b16 %v5933
    %v6854 = vunpack.c.h.b16 %v5933
    %v6855 = vunpack.c.l.b16 %v5934
    %v6856 = vunpack.c.h.b16 %v5934
    %v6857 = vunpack.c.l.b16 %v5935
    %v6858 = vunpack.c.l.b16 %v5936
    %v6859 = vunpack.c.h.b16 %v5936
    %v6860 = vunpack.c.l.b16 %v5937
    %v6861 = vunpack.c.h.b16 %v5937
    %v6862 = vunpack.c.l.b16 %v5938
    %v6863 = vunpack.c.h.b16 %v5938
    %v6864 = vunpack.c.l.b16 %v5939
    %v6865 = vunpack.c.l.b16 %v5940
    %v6866 = vunpack.c.h.b16 %v5940
    %v6867 = vunpack.c.l.b16 %v5941
    %v6868 = vunpack.c.h.b16 %v5941
    %v6869 = vunpack.c.l.b16 %v5942
    %v6870 = vunpack.c.h.b16 %v5942
    %v6871 = vunpack.c.l.b16 %v5943
    %v6872 = vunpack.c.l.b16 %v5944
    %v6873 = vunpack.c.h.b16 %v5944
    %v6874 = vunpack.c.l.b16 %v5945
    %v6875 = vunpack.c.h.b16 %v5945
    %v6876 = vunpack.c.l.b16 %v5946
    %v6877 = vunpack.c.h.b16 %v5946
    %v6878 = vunpack.c.l.b16 %v5947
    %v6879 = vunpack.c.l.b16 %v5948
    %v6880 = vunpack.c.h.b16 %v5948
    %v6881 = vunpack.c.l.b16 %v5949
    %v6882 = vunpack.c.h.b16 %v5949
    %v6883 = vunpack.c.l.b16 %v5950
    %v6884 = vunpack.c.h.b16 %v5950
    %v6885 = vunpack.c.l.b16 %v5951
    %v6886 = vunpack.c.l.b16 %v5952
    %v6887 = vunpack.c.h.b16 %v5952
    %v6888 = vunpack.c.l.b16 %v5953
    %v6889 = vunpack.c.h.b16 %v5953
    %v6890 = vunpack.c.l.b16 %v5954
    %v6891 = vunpack.c.h.b16 %v5954
    %v6892 = vunpack.c.l.b16 %v5955
    %v6893 = vunpack.c.l.b16 %v5956
    %v6894 = vunpack.c.h.b16 %v5956
    %v6895 = vunpack.c.l.b16 %v5957
    %v6896 = vunpack.c.h.b16 %v5957
    %v6897 = vunpack.c.l.b16 %v5958
    %v6898 = vunpack.c.h.b16 %v5958
    %v6899 = vunpack.c.l.b16 %v5959
    %v6900 = vunpack.c.l.b16 %v5960
    %v6901 = vunpack.c.h.b16 %v5960
    %v6902 = vunpack.c.l.b16 %v5961
    %v6903 = vunpack.c.h.b16 %v5961
    %v6904 = vunpack.c.l.b16 %v5962
    %v6905 = vunpack.c.h.b16 %v5962
    %v6906 = vunpack.c.l.b16 %v5963
    %v6907 = vunpack.c.l.b16 %v5964
    %v6908 = vunpack.c.h.b16 %v5964
    %v6909 = vunpack.c.l.b16 %v5965
    %v6910 = vunpack.c.h.b16 %v5965
    %v6911 = vunpack.c.l.b16 %v5966
    %v6912 = vunpack.c.h.b16 %v5966
    %v6913 = vunpack.c.l.b16 %v5967
    %v6914 = vunpack.c.l.b16 %v5968
    %v6915 = vunpack.c.h.b16 %v5968
    %v6916 = vunpack.c.l.b16 %v5969
    %v6917 = vunpack.c.h.b16 %v5969
    %v6918 = vunpack.c.l.b16 %v5970
    %v6919 = vunpack.c.h.b16 %v5970
    %v6920 = vunpack.c.l.b16 %v5971
    %v6921 = vunpack.c.l.b16 %v5972
    %v6922 = vunpack.c.h.b16 %v5972
    %v6923 = vunpack.c.l.b16 %v5973
    %v6924 = vunpack.c.h.b16 %v5973
    %v6925 = vunpack.c.l.b16 %v5974
    %v6926 = vunpack.c.h.b16 %v5974
    %v6927 = vunpack.c.l.b16 %v5975
    %v6928 = vunpack.c.l.b16 %v5976
    %v6929 = vunpack.c.h.b16 %v5976
    %v6930 = vunpack.c.l.b16 %v5977
    %v6931 = vunpack.c.h.b16 %v5977
    %v6932 = vunpack.c.l.b16 %v5978
    %v6933 = vunpack.c.h.b16 %v5978
    %v6934 = vunpack.c.l.b16 %v5979
    %v6935 = vunpack.c.l.b16 %v5980
    %v6936 = vunpack.c.h.b16 %v5980
    %v6937 = vunpack.c.l.b16 %v5981
    %v6938 = vunpack.c.h.b16 %v5981
    %v6939 = vunpack.c.l.b16 %v5982
    %v6940 = vunpack.c.h.b16 %v5982
    %v6941 = vunpack.c.l.b16 %v5983
    %v6942 = vunpack.c.l.b16 %v5984
    %v6943 = vunpack.c.h.b16 %v5984
    %v6944 = vunpack.c.l.b16 %v5985
    %v6945 = vunpack.c.h.b16 %v5985
    %v6946 = vunpack.c.l.b16 %v5986
    %v6947 = vunpack.c.h.b16 %v5986
    %v6948 = vunpack.c.l.b16 %v5987
    %v6949 = vunpack.c.l.b16 %v5988
    %v6950 = vunpack.c.h.b16 %v5988
    %v6951 = vunpack.c.l.b16 %v5989
    %v6952 = vunpack.c.h.b16 %v5989
    %v6953 = vunpack.c.l.b16 %v5990
    %v6954 = vunpack.c.h.b16 %v5990
    %v6955 = vunpack.c.l.b16 %v5991
    %v6956 = vunpack.c.l.b16 %v5992
    %v6957 = vunpack.c.h.b16 %v5992
    %v6958 = vunpack.c.l.b16 %v5993
    %v6959 = vunpack.c.h.b16 %v5993
    %v6960 = vunpack.c.l.b16 %v5994
    %v6961 = vunpack.c.h.b16 %v5994
    %v6962 = vunpack.c.l.b16 %v5995
    %v6963 = vunpack.c.l.b16 %v5996
    %v6964 = vunpack.c.h.b16 %v5996
    %v6965 = vunpack.c.l.b16 %v5997
    %v6966 = vunpack.c.h.b16 %v5997
    %v6967 = vunpack.c.l.b16 %v5998
    %v6968 = vunpack.c.h.b16 %v5998
    %v6969 = vunpack.c.l.b16 %v5999
    %v6970 = vunpack.c.l.b16 %v6000
    %v6971 = vunpack.c.h.b16 %v6000
    %v6972 = vunpack.c.l.b16 %v6001
    %v6973 = vunpack.c.h.b16 %v6001
    %v6974 = vunpack.c.l.b16 %v6002
    %v6975 = vunpack.c.h.b16 %v6002
    %v6976 = vunpack.c.l.b16 %v6003
    %v6977 = vunpack.c.l.b16 %v6004
    %v6978 = vunpack.c.h.b16 %v6004
    %v6979 = vunpack.c.l.b16 %v6005
    %v6980 = vunpack.c.h.b16 %v6005
    %v6981 = vunpack.c.l.b16 %v6006
    %v6982 = vunpack.c.h.b16 %v6006
    %v6983 = vunpack.c.l.b16 %v6007
    %v6984 = vunpack.c.l.b16 %v6008
    %v6985 = vunpack.c.h.b16 %v6008
    %v6986 = vunpack.c.l.b16 %v6009
    %v6987 = vunpack.c.h.b16 %v6009
    %v6988 = vunpack.c.l.b16 %v6010
    %v6989 = vunpack.c.h.b16 %v6010
    %v6990 = vunpack.c.l.b16 %v6011
    %v6991 = vunpack.c.l.b16 %v6012
    %v6992 = vunpack.c.h.b16 %v6012
    %v6993 = vunpack.c.l.b16 %v6013
    %v6994 = vunpack.c.h.b16 %v6013
    %v6995 = vunpack.c.l.b16 %v6014
    %v6996 = vunpack.c.h.b16 %v6014
    %v6997 = vunpack.c.l.b16 %v6015
    %v6998 = vunpack.c.l.b16 %v6016
    %v6999 = vunpack.c.h.b16 %v6016
    %v7000 = vunpack.c.l.b16 %v6017
    %v7001 = vunpack.c.h.b16 %v6017
    %v7002 = vunpack.c.l.b16 %v6018
    %v7003 = vunpack.c.h.b16 %v6018
    %v7004 = vunpack.c.l.b16 %v6019
    %v7005 = vunpack.c.l.b16 %v6020
    %v7006 = vunpack.c.h.b16 %v6020
    %v7007 = vunpack.c.l.b16 %v6021
    %v7008 = vunpack.c.h.b16 %v6021
    %v7009 = vunpack.c.l.b16 %v6022
    %v7010 = vunpack.c.h.b16 %v6022
    %v7011 = vunpack.c.l.b16 %v6023
    %v7012 = vunpack.c.l.b16 %v6024
    %v7013 = vunpack.c.h.b16 %v6024
    %v7014 = vunpack.c.l.b16 %v6025
    %v7015 = vunpack.c.h.b16 %v6025
    %v7016 = vunpack.c.l.b16 %v6026
    %v7017 = vunpack.c.h.b16 %v6026
    %v7018 = vunpack.c.l.b16 %v6027
    %v7019 = vunpack.c.l.b16 %v6028
    %v7020 = vunpack.c.h.b16 %v6028
    %v7021 = vunpack.c.l.b16 %v6029
    %v7022 = vunpack.c.h.b16 %v6029
    %v7023 = vunpack.c.l.b16 %v6030
    %v7024 = vunpack.c.h.b16 %v6030
    %v7025 = vunpack.c.l.b16 %v6031
    %v7026 = vunpack.c.l.b16 %v6032
    %v7027 = vunpack.c.h.b16 %v6032
    %v7028 = vunpack.c.l.b16 %v6033
    %v7029 = vunpack.c.h.b16 %v6033
    %v7030 = vunpack.c.l.b16 %v6034
    %v7031 = vunpack.c.h.b16 %v6034
    %v7032 = vunpack.c.l.b16 %v6035
    %v7033 = vunpack.c.l.b16 %v6036
    %v7034 = vunpack.c.h.b16 %v6036
    %v7035 = vunpack.c.l.b16 %v6037
    %v7036 = vunpack.c.h.b16 %v6037
    %v7037 = vunpack.c.l.b16 %v6038
    %v7038 = vunpack.c.h.b16 %v6038
    %v7039 = vunpack.c.l.b16 %v6039
    %v7040 = vunpack.c.l.b16 %v6040
    %v7041 = vunpack.c.h.b16 %v6040
    %v7042 = vunpack.c.l.b16 %v6041
    %v7043 = vunpack.c.h.b16 %v6041
    %v7044 = vunpack.c.l.b16 %v6042
    %v7045 = vunpack.c.h.b16 %v6042
    %v7046 = vunpack.c.l.b16 %v6043
    %v7047 = vunpack.c.l.b16 %v6044
    %v7048 = vunpack.c.h.b16 %v6044
    %v7049 = vunpack.c.l.b16 %v6045
    %v7050 = vunpack.c.h.b16 %v6045
    %v7051 = vunpack.c.l.b16 %v6046
    %v7052 = vunpack.c.h.b16 %v6046
    %v7053 = vunpack.c.l.b16 %v6047
    %v7054 = vunpack.c.l.b16 %v6048
    %v7055 = vunpack.c.h.b16 %v6048
    %v7056 = vunpack.c.l.b16 %v6049
    %v7057 = vunpack.c.h.b16 %v6049
    %v7058 = vunpack.c.l.b16 %v6050
    %v7059 = vunpack.c.h.b16 %v6050
    %v7060 = vunpack.c.l.b16 %v6051
    %v7061 = vunpack.c.l.b16 %v6052
    %v7062 = vunpack.c.h.b16 %v6052
    %v7063 = vunpack.c.l.b16 %v6053
    %v7064 = vunpack.c.h.b16 %v6053
    %v7065 = vunpack.c.l.b16 %v6054
    %v7066 = vunpack.c.h.b16 %v6054
    %v7067 = vunpack.c.l.b16 %v6055
    %v7068 = vunpack.c.l.b16 %v6056
    %v7069 = vunpack.c.h.b16 %v6056
    %v7070 = vunpack.c.l.b16 %v6057
    %v7071 = vunpack.c.h.b16 %v6057
    %v7072 = vunpack.c.l.b16 %v6058
    %v7073 = vunpack.c.h.b16 %v6058
    %v7074 = vunpack.c.l.b16 %v6059
    %v7075 = vunpack.c.l.b16 %v6060
    %v7076 = vunpack.c.h.b16 %v6060
    %v7077 = vunpack.c.l.b16 %v6061
    %v7078 = vunpack.c.h.b16 %v6061
    %v7079 = vunpack.c.l.b16 %v6062
    %v7080 = vunpack.c.h.b16 %v6062
    %v7081 = vunpack.c.l.b16 %v6063
    %v7082 = vunpack.c.l.b16 %v6064
    %v7083 = vunpack.c.h.b16 %v6064
    %v7084 = vunpack.c.l.b16 %v6065
    %v7085 = vunpack.c.h.b16 %v6065
    %v7086 = vunpack.c.l.b16 %v6066
    %v7087 = vunpack.c.h.b16 %v6066
    %v7088 = vunpack.c.l.b16 %v6067
    %v7089 = vunpack.c.l.b16 %v6068
    %v7090 = vunpack.c.h.b16 %v6068
    %v7091 = vunpack.c.l.b16 %v6069
    %v7092 = vunpack.c.h.b16 %v6069
    %v7093 = vunpack.c.l.b16 %v6070
    %v7094 = vunpack.c.h.b16 %v6070
    %v7095 = vunpack.c.l.b16 %v6071
    %v7096 = vunpack.c.l.b16 %v6072
    %v7097 = vunpack.c.h.b16 %v6072
    %v7098 = vunpack.c.l.b16 %v6073
    %v7099 = vunpack.c.h.b16 %v6073
    %v7100 = vunpack.c.l.b16 %v6074
    %v7101 = vunpack.c.h.b16 %v6074
    %v7102 = vunpack.c.l.b16 %v6075
    %v7103 = vunpack.c.l.b16 %v6076
    %v7104 = vunpack.c.h.b16 %v6076
    %v7105 = vunpack.c.l.b16 %v6077
    %v7106 = vunpack.c.h.b16 %v6077
    %v7107 = vunpack.c.l.b16 %v6078
    %v7108 = vunpack.c.h.b16 %v6078
    %v7109 = vunpack.c.l.b16 %v6079
    %v7110 = vunpack.c.l.b16 %v6080
    %v7111 = vunpack.c.h.b16 %v6080
    %v7112 = vunpack.c.l.b16 %v6081
    %v7113 = vunpack.c.h.b16 %v6081
    %v7114 = vunpack.c.l.b16 %v6082
    %v7115 = vunpack.c.h.b16 %v6082
    %v7116 = vunpack.c.l.b16 %v6083
    %v7117 = vunpack.c.l.b16 %v6084
    %v7118 = vunpack.c.h.b16 %v6084
    %v7119 = vunpack.c.l.b16 %v6085
    %v7120 = vunpack.c.h.b16 %v6085
    %v7121 = vunpack.c.l.b16 %v6086
    %v7122 = vunpack.c.h.b16 %v6086
    %v7123 = vunpack.c.l.b16 %v6087
    %v7124 = vunpack.c.l.b16 %v6088
    %v7125 = vunpack.c.h.b16 %v6088
    %v7126 = vunpack.c.l.b16 %v6089
    %v7127 = vunpack.c.h.b16 %v6089
    %v7128 = vunpack.c.l.b16 %v6090
    %v7129 = vunpack.c.h.b16 %v6090
    %v7130 = vunpack.c.l.b16 %v6091
    %v7131 = vunpack.c.l.b16 %v6092
    %v7132 = vunpack.c.h.b16 %v6092
    %v7133 = vunpack.c.l.b16 %v6093
    %v7134 = vunpack.c.h.b16 %v6093
    %v7135 = vunpack.c.l.b16 %v6094
    %v7136 = vunpack.c.h.b16 %v6094
    %v7137 = vunpack.c.l.b16 %v6095
    %v7138 = vunpack.c.l.b16 %v6096
    %v7139 = vunpack.c.h.b16 %v6096
    %v7140 = vunpack.c.l.b16 %v6097
    %v7141 = vunpack.c.h.b16 %v6097
    %v7142 = vunpack.c.l.b16 %v6098
    %v7143 = vunpack.c.h.b16 %v6098
    %v7144 = vunpack.c.l.b16 %v6099
    %v7145 = vunpack.c.l.b16 %v6100
    %v7146 = vunpack.c.h.b16 %v6100
    %v7147 = vunpack.c.l.b16 %v6101
    %v7148 = vunpack.c.h.b16 %v6101
    %v7149 = vunpack.c.l.b16 %v6102
    %v7150 = vunpack.c.h.b16 %v6102
    %v7151 = vunpack.c.l.b16 %v6103
    %v7152 = vunpack.c.l.b16 %v6104
    %v7153 = vunpack.c.h.b16 %v6104
    %v7154 = vunpack.c.l.b16 %v6105
    %v7155 = vunpack.c.h.b16 %v6105
    %v7156 = vunpack.c.l.b16 %v6106
    %v7157 = vunpack.c.h.b16 %v6106
    %v7158 = vunpack.c.l.b16 %v6107
    %v7159 = vunpack.c.l.b16 %v6108
    %v7160 = vunpack.c.h.b16 %v6108
    %v7161 = vunpack.c.l.b16 %v6109
    %v7162 = vunpack.c.h.b16 %v6109
    %v7163 = vunpack.c.l.b16 %v6110
    %v7164 = vunpack.c.h.b16 %v6110
    %v7165 = vunpack.c.l.b16 %v6111
    %v7166 = vunpack.c.l.b16 %v6112
    %v7167 = vunpack.c.h.b16 %v6112
    %v7168 = vunpack.c.l.b16 %v6113
    %v7169 = vunpack.c.h.b16 %v6113
    %v7170 = vunpack.c.l.b16 %v6114
    %v7171 = vunpack.c.h.b16 %v6114
    %v7172 = vunpack.c.l.b16 %v6115
    %v7173 = vunpack.c.l.b16 %v6116
    %v7174 = vunpack.c.h.b16 %v6116
    %v7175 = vunpack.c.l.b16 %v6117
    %v7176 = vunpack.c.h.b16 %v6117
    %v7177 = vunpack.c.l.b16 %v6118
    %v7178 = vunpack.c.h.b16 %v6118
    %v7179 = vunpack.c.l.b16 %v6119
    %v7180 = vunpack.c.l.b16 %v6120
    %v7181 = vunpack.c.h.b16 %v6120
    %v7182 = vunpack.c.l.b16 %v6121
    %v7183 = vunpack.c.h.b16 %v6121
    %v7184 = vunpack.c.l.b16 %v6122
    %v7185 = vunpack.c.h.b16 %v6122
    %v7186 = vunpack.c.l.b16 %v6123
    %v7187 = vunpack.c.l.b16 %v6124
    %v7188 = vunpack.c.h.b16 %v6124
    %v7189 = vunpack.c.l.b16 %v6125
    %v7190 = vunpack.c.h.b16 %v6125
    %v7191 = vunpack.c.l.b16 %v6126
    %v7192 = vunpack.c.h.b16 %v6126
    %v7193 = vunpack.c.l.b16 %v6127
    %v7194 = vunpack.c.l.b16 %v6128
    %v7195 = vunpack.c.h.b16 %v6128
    %v7196 = vunpack.c.l.b16 %v6129
    %v7197 = vunpack.c.h.b16 %v6129
    %v7198 = vunpack.c.l.b16 %v6130
    %v7199 = vunpack.c.h.b16 %v6130
    %v7200 = vunpack.c.l.b16 %v6131
    %v7201 = vunpack.c.l.b16 %v6132
    %v7202 = vunpack.c.h.b16 %v6132
    %v7203 = vunpack.c.l.b16 %v6133
    %v7204 = vunpack.c.h.b16 %v6133
    %v7205 = vunpack.c.l.b16 %v6134
    %v7206 = vunpack.c.h.b16 %v6134
    %v7207 = vunpack.c.l.b16 %v6135
    %v7208 = vunpack.c.l.b16 %v6136
    %v7209 = vunpack.c.h.b16 %v6136
    %v7210 = vunpack.c.l.b16 %v6137
    %v7211 = vunpack.c.h.b16 %v6137
    %v7212 = vunpack.c.l.b16 %v6138
    %v7213 = vunpack.c.h.b16 %v6138
    %v7214 = vunpack.c.l.b16 %v6139
    %v7215 = vunpack.c.l.b16 %v6140
    %v7216 = vunpack.c.h.b16 %v6140
    %v7217 = vunpack.c.l.b16 %v6141
    %v7218 = vunpack.c.h.b16 %v6141
    %v7219 = vunpack.c.l.b16 %v6142
    %v7220 = vunpack.c.h.b16 %v6142
    %v7221 = vunpack.c.l.b16 %v6143
    %v7222 = vpack.c.b16 %v6543, %v6536
    %v7223 = vpack.c.b16 %v6544, %v6537
    %v7224 = vpack.c.b16 %v6545, %v6538
    %v7225 = vpack.c.b16 %v6546, %v6539
    %v7226 = vpack.c.b16 %v6547, %v6540
    %v7227 = vpack.c.b16 %v6548, %v6541
    %v7228 = vpack.c.b16 %v6549, %v6542
    %v7229 = vpack.c.b16 %v6557, %v6550
    %v7230 = vpack.c.b16 %v6558, %v6551
    %v7231 = vpack.c.b16 %v6559, %v6552
    %v7232 = vpack.c.b16 %v6560, %v6553
    %v7233 = vpack.c.b16 %v6561, %v6554
    %v7234 = vpack.c.b16 %v6562, %v6555
    %v7235 = vpack.c.b16 %v6563, %v6556
    %v7236 = vpack.c.b16 %v6571, %v6564
    %v7237 = vpack.c.b16 %v6572, %v6565
    %v7238 = vpack.c.b16 %v6573, %v6566
    %v7239 = vpack.c.b16 %v6574, %v6567
    %v7240 = vpack.c.b16 %v6575, %v6568
    %v7241 = vpack.c.b16 %v6576, %v6569
    %v7242 = vpack.c.b16 %v6577, %v6570
    %v7243 = vpack.c.b16 %v6585, %v6578
    %v7244 = vpack.c.b16 %v6586, %v6579
    %v7245 = vpack.c.b16 %v6587, %v6580
    %v7246 = vpack.c.b16 %v6588, %v6581
    %v7247 = vpack.c.b16 %v6589, %v6582
    %v7248 = vpack.c.b16 %v6590, %v6583
    %v7249 = vpack.c.b16 %v6591, %v6584
    %v7250 = vpack.c.b16 %v6599, %v6592
    %v7251 = vpack.c.b16 %v6600, %v6593
    %v7252 = vpack.c.b16 %v6601, %v6594
    %v7253 = vpack.c.b16 %v6602, %v6595
    %v7254 = vpack.c.b16 %v6603, %v6596
    %v7255 = vpack.c.b16 %v6604, %v6597
    %v7256 = vpack.c.b16 %v6605, %v6598
    %v7257 = vpack.c.b16 %v6613, %v6606
    %v7258 = vpack.c.b16 %v6614, %v6607
    %v7259 = vpack.c.b16 %v6615, %v6608
    %v7260 = vpack.c.b16 %v6616, %v6609
    %v7261 = vpack.c.b16 %v6617, %v6610
    %v7262 = vpack.c.b16 %v6618, %v6611
    %v7263 = vpack.c.b16 %v6619, %v6612
    %v7264 = vpack.c.b16 %v6627, %v6620
    %v7265 = vpack.c.b16 %v6628, %v6621
    %v7266 = vpack.c.b16 %v6629, %v6622
    %v7267 = vpack.c.b16 %v6630, %v6623
    %v7268 = vpack.c.b16 %v6631, %v6624
    %v7269 = vpack.c.b16 %v6632, %v6625
    %v7270 = vpack.c.b16 %v6633, %v6626
    %v7271 = vpack.c.b16 %v6641, %v6634
    %v7272 = vpack.c.b16 %v6642, %v6635
    %v7273 = vpack.c.b16 %v6643, %v6636
    %v7274 = vpack.c.b16 %v6644, %v6637
    %v7275 = vpack.c.b16 %v6645, %v6638
    %v7276 = vpack.c.b16 %v6646, %v6639
    %v7277 = vpack.c.b16 %v6647, %v6640
    %v7278 = vpack.c.b16 %v6655, %v6648
    %v7279 = vpack.c.b16 %v6656, %v6649
    %v7280 = vpack.c.b16 %v6657, %v6650
    %v7281 = vpack.c.b16 %v6658, %v6651
    %v7282 = vpack.c.b16 %v6659, %v6652
    %v7283 = vpack.c.b16 %v6660, %v6653
    %v7284 = vpack.c.b16 %v6661, %v6654
    %v7285 = vpack.c.b16 %v6669, %v6662
    %v7286 = vpack.c.b16 %v6670, %v6663
    %v7287 = vpack.c.b16 %v6671, %v6664
    %v7288 = vpack.c.b16 %v6672, %v6665
    %v7289 = vpack.c.b16 %v6673, %v6666
    %v7290 = vpack.c.b16 %v6674, %v6667
    %v7291 = vpack.c.b16 %v6675, %v6668
    %v7292 = vpack.c.b16 %v6683, %v6676
    %v7293 = vpack.c.b16 %v6684, %v6677
    %v7294 = vpack.c.b16 %v6685, %v6678
    %v7295 = vpack.c.b16 %v6686, %v6679
    %v7296 = vpack.c.b16 %v6687, %v6680
    %v7297 = vpack.c.b16 %v6688, %v6681
    %v7298 = vpack.c.b16 %v6689, %v6682
    %v7299 = vpack.c.b16 %v6697, %v6690
    %v7300 = vpack.c.b16 %v6698, %v6691
    %v7301 = vpack.c.b16 %v6699, %v6692
    %v7302 = vpack.c.b16 %v6700, %v6693
    %v7303 = vpack.c.b16 %v6701, %v6694
    %v7304 = vpack.c.b16 %v6702, %v6695
    %v7305 = vpack.c.b16 %v6703, %v6696
    %v7306 = vpack.c.b16 %v6711, %v6704
    %v7307 = vpack.c.b16 %v6712, %v6705
    %v7308 = vpack.c.b16 %v6713, %v6706
    %v7309 = vpack.c.b16 %v6714, %v6707
    %v7310 = vpack.c.b16 %v6715, %v6708
    %v7311 = vpack.c.b16 %v6716, %v6709
    %v7312 = vpack.c.b16 %v6717, %v6710
    %v7313 = vpack.c.b16 %v6725, %v6718
    %v7314 = vpack.c.b16 %v6726, %v6719
    %v7315 = vpack.c.b16 %v6727, %v6720
    %v7316 = vpack.c.b16 %v6728, %v6721
    %v7317 = vpack.c.b16 %v6729, %v6722
    %v7318 = vpack.c.b16 %v6730, %v6723
    %v7319 = vpack.c.b16 %v6731, %v6724
    %v7320 = vpack.c.b16 %v6739, %v6732
    %v7321 = vpack.c.b16 %v6740, %v6733
    %v7322 = vpack.c.b16 %v6741, %v6734
    %v7323 = vpack.c.b16 %v6742, %v6735
    %v7324 = vpack.c.b16 %v6743, %v6736
    %v7325 = vpack.c.b16 %v6744, %v6737
    %v7326 = vpack.c.b16 %v6745, %v6738
    %v7327 = vpack.c.b16 %v6753, %v6746
    %v7328 = vpack.c.b16 %v6754, %v6747
    %v7329 = vpack.c.b16 %v6755, %v6748
    %v7330 = vpack.c.b16 %v6756, %v6749
    %v7331 = vpack.c.b16 %v6757, %v6750
    %v7332 = vpack.c.b16 %v6758, %v6751
    %v7333 = vpack.c.b16 %v6759, %v6752
    %v7334 = vpack.c.b16 %v6767, %v6760
    %v7335 = vpack.c.b16 %v6768, %v6761
    %v7336 = vpack.c.b16 %v6769, %v6762
    %v7337 = vpack.c.b16 %v6770, %v6763
    %v7338 = vpack.c.b16 %v6771, %v6764
    %v7339 = vpack.c.b16 %v6772, %v6765
    %v7340 = vpack.c.b16 %v6773, %v6766
    %v7341 = vpack.c.b16 %v6781, %v6774
    %v7342 = vpack.c.b16 %v6782, %v6775
    %v7343 = vpack.c.b16 %v6783, %v6776
    %v7344 = vpack.c.b16 %v6784, %v6777
    %v7345 = vpack.c.b16 %v6785, %v6778
    %v7346 = vpack.c.b16 %v6786, %v6779
    %v7347 = vpack.c.b16 %v6787, %v6780
    %v7348 = vpack.c.b16 %v6795, %v6788
    %v7349 = vpack.c.b16 %v6796, %v6789
    %v7350 = vpack.c.b16 %v6797, %v6790
    %v7351 = vpack.c.b16 %v6798, %v6791
    %v7352 = vpack.c.b16 %v6799, %v6792
    %v7353 = vpack.c.b16 %v6800, %v6793
    %v7354 = vpack.c.b16 %v6801, %v6794
    %v7355 = vpack.c.b16 %v6809, %v6802
    %v7356 = vpack.c.b16 %v6810, %v6803
    %v7357 = vpack.c.b16 %v6811, %v6804
    %v7358 = vpack.c.b16 %v6812, %v6805
    %v7359 = vpack.c.b16 %v6813, %v6806
    %v7360 = vpack.c.b16 %v6814, %v6807
    %v7361 = vpack.c.b16 %v6815, %v6808
    %v7362 = vpack.c.b16 %v6823, %v6816
    %v7363 = vpack.c.b16 %v6824, %v6817
    %v7364 = vpack.c.b16 %v6825, %v6818
    %v7365 = vpack.c.b16 %v6826, %v6819
    %v7366 = vpack.c.b16 %v6827, %v6820
    %v7367 = vpack.c.b16 %v6828, %v6821
    %v7368 = vpack.c.b16 %v6829, %v6822
    %v7369 = vpack.c.b16 %v6837, %v6830
    %v7370 = vpack.c.b16 %v6838, %v6831
    %v7371 = vpack.c.b16 %v6839, %v6832
    %v7372 = vpack.c.b16 %v6840, %v6833
    %v7373 = vpack.c.b16 %v6841, %v6834
    %v7374 = vpack.c.b16 %v6842, %v6835
    %v7375 = vpack.c.b16 %v6843, %v6836
    %v7376 = vpack.c.b16 %v6851, %v6844
    %v7377 = vpack.c.b16 %v6852, %v6845
    %v7378 = vpack.c.b16 %v6853, %v6846
    %v7379 = vpack.c.b16 %v6854, %v6847
    %v7380 = vpack.c.b16 %v6855, %v6848
    %v7381 = vpack.c.b16 %v6856, %v6849
    %v7382 = vpack.c.b16 %v6857, %v6850
    %v7383 = vpack.c.b16 %v6865, %v6858
    %v7384 = vpack.c.b16 %v6866, %v6859
    %v7385 = vpack.c.b16 %v6867, %v6860
    %v7386 = vpack.c.b16 %v6868, %v6861
    %v7387 = vpack.c.b16 %v6869, %v6862
    %v7388 = vpack.c.b16 %v6870, %v6863
    %v7389 = vpack.c.b16 %v6871, %v6864
    %v7390 = vpack.c.b16 %v6879, %v6872
    %v7391 = vpack.c.b16 %v6880, %v6873
    %v7392 = vpack.c.b16 %v6881, %v6874
    %v7393 = vpack.c.b16 %v6882, %v6875
    %v7394 = vpack.c.b16 %v6883, %v6876
    %v7395 = vpack.c.b16 %v6884, %v6877
    %v7396 = vpack.c.b16 %v6885, %v6878
    %v7397 = vpack.c.b16 %v6893, %v6886
    %v7398 = vpack.c.b16 %v6894, %v6887
    %v7399 = vpack.c.b16 %v6895, %v6888
    %v7400 = vpack.c.b16 %v6896, %v6889
    %v7401 = vpack.c.b16 %v6897, %v6890
    %v7402 = vpack.c.b16 %v6898, %v6891
    %v7403 = vpack.c.b16 %v6899, %v6892
    %v7404 = vpack.c.b16 %v6907, %v6900
    %v7405 = vpack.c.b16 %v6908, %v6901
    %v7406 = vpack.c.b16 %v6909, %v6902
    %v7407 = vpack.c.b16 %v6910, %v6903
    %v7408 = vpack.c.b16 %v6911, %v6904
    %v7409 = vpack.c.b16 %v6912, %v6905
    %v7410 = vpack.c.b16 %v6913, %v6906
    %v7411 = vpack.c.b16 %v6921, %v6914
    %v7412 = vpack.c.b16 %v6922, %v6915
    %v7413 = vpack.c.b16 %v6923, %v6916
    %v7414 = vpack.c.b16 %v6924, %v6917
    %v7415 = vpack.c.b16 %v6925, %v6918
    %v7416 = vpack.c.b16 %v6926, %v6919
    %v7417 = vpack.c.b16 %v6927, %v6920
    %v7418 = vpack.c.b16 %v6935, %v6928
    %v7419 = vpack.c.b16 %v6936, %v6929
    %v7420 = vpack.c.b16 %v6937, %v6930
    %v7421 = vpack.c.b16 %v6938, %v6931
    %v7422 = vpack.c.b16 %v6939, %v6932
    %v7423 = vpack.c.b16 %v6940, %v6933
    %v7424 = vpack.c.b16 %v6941, %v6934
    %v7425 = vpack.c.b16 %v6949, %v6942
    %v7426 = vpack.c.b16 %v6950, %v6943
    %v7427 = vpack.c.b16 %v6951, %v6944
    %v7428 = vpack.c.b16 %v6952, %v6945
    %v7429 = vpack.c.b16 %v6953, %v6946
    %v7430 = vpack.c.b16 %v6954, %v6947
    %v7431 = vpack.c.b16 %v6955, %v6948
    %v7432 = vpack.c.b16 %v6963, %v6956
    %v7433 = vpack.c.b16 %v6964, %v6957
    %v7434 = vpack.c.b16 %v6965, %v6958
    %v7435 = vpack.c.b16 %v6966, %v6959
    %v7436 = vpack.c.b16 %v6967, %v6960
    %v7437 = vpack.c.b16 %v6968, %v6961
    %v7438 = vpack.c.b16 %v6969, %v6962
    %v7439 = vpack.c.b16 %v6977, %v6970
    %v7440 = vpack.c.b16 %v6978, %v6971
    %v7441 = vpack.c.b16 %v6979, %v6972
    %v7442 = vpack.c.b16 %v6980, %v6973
    %v7443 = vpack.c.b16 %v6981, %v6974
    %v7444 = vpack.c.b16 %v6982, %v6975
    %v7445 = vpack.c.b16 %v6983, %v6976
    %v7446 = vpack.c.b16 %v6991, %v6984
    %v7447 = vpack.c.b16 %v6992, %v6985
    %v7448 = vpack.c.b16 %v6993, %v6986
    %v7449 = vpack.c.b16 %v6994, %v6987
    %v7450 = vpack.c.b16 %v6995, %v6988
    %v7451 = vpack.c.b16 %v6996, %v6989
    %v7452 = vpack.c.b16 %v6997, %v6990
    %v7453 = vpack.c.b16 %v7005, %v6998
    %v7454 = vpack.c.b16 %v7006, %v6999
    %v7455 = vpack.c.b16 %v7007, %v7000
    %v7456 = vpack.c.b16 %v7008, %v7001
    %v7457 = vpack.c.b16 %v7009, %v7002
    %v7458 = vpack.c.b16 %v7010, %v7003
    %v7459 = vpack.c.b16 %v7011, %v7004
    %v7460 = vpack.c.b16 %v7019, %v7012
    %v7461 = vpack.c.b16 %v7020, %v7013
    %v7462 = vpack.c.b16 %v7021, %v7014
    %v7463 = vpack.c.b16 %v7022, %v7015
    %v7464 = vpack.c.b16 %v7023, %v7016
    %v7465 = vpack.c.b16 %v7024, %v7017
    %v7466 = vpack.c.b16 %v7025, %v7018
    %v7467 = vpack.c.b16 %v7033, %v7026
    %v7468 = vpack.c.b16 %v7034, %v7027
    %v7469 = vpack.c.b16 %v7035, %v7028
    %v7470 = vpack.c.b16 %v7036, %v7029
    %v7471 = vpack.c.b16 %v7037, %v7030
    %v7472 = vpack.c.b16 %v7038, %v7031
    %v7473 = vpack.c.b16 %v7039, %v7032
    %v7474 = vpack.c.b16 %v7047, %v7040
    %v7475 = vpack.c.b16 %v7048, %v7041
    %v7476 = vpack.c.b16 %v7049, %v7042
    %v7477 = vpack.c.b16 %v7050, %v7043
    %v7478 = vpack.c.b16 %v7051, %v7044
    %v7479 = vpack.c.b16 %v7052, %v7045
    %v7480 = vpack.c.b16 %v7053, %v7046
    %v7481 = vpack.c.b16 %v7061, %v7054
    %v7482 = vpack.c.b16 %v7062, %v7055
    %v7483 = vpack.c.b16 %v7063, %v7056
    %v7484 = vpack.c.b16 %v7064, %v7057
    %v7485 = vpack.c.b16 %v7065, %v7058
    %v7486 = vpack.c.b16 %v7066, %v7059
    %v7487 = vpack.c.b16 %v7067, %v7060
    %v7488 = vpack.c.b16 %v7075, %v7068
    %v7489 = vpack.c.b16 %v7076, %v7069
    %v7490 = vpack.c.b16 %v7077, %v7070
    %v7491 = vpack.c.b16 %v7078, %v7071
    %v7492 = vpack.c.b16 %v7079, %v7072
    %v7493 = vpack.c.b16 %v7080, %v7073
    %v7494 = vpack.c.b16 %v7081, %v7074
    %v7495 = vpack.c.b16 %v7089, %v7082
    %v7496 = vpack.c.b16 %v7090, %v7083
    %v7497 = vpack.c.b16 %v7091, %v7084
    %v7498 = vpack.c.b16 %v7092, %v7085
    %v7499 = vpack.c.b16 %v7093, %v7086
    %v7500 = vpack.c.b16 %v7094, %v7087
    %v7501 = vpack.c.b16 %v7095, %v7088
    %v7502 = vpack.c.b16 %v7103, %v7096
    %v7503 = vpack.c.b16 %v7104, %v7097
    %v7504 = vpack.c.b16 %v7105, %v7098
    %v7505 = vpack.c.b16 %v7106, %v7099
    %v7506 = vpack.c.b16 %v7107, %v7100
    %v7507 = vpack.c.b16 %v7108, %v7101
    %v7508 = vpack.c.b16 %v7109, %v7102
    %v7509 = vpack.c.b16 %v7117, %v7110
    %v7510 = vpack.c.b16 %v7118, %v7111
    %v7511 = vpack.c.b16 %v7119, %v7112
    %v7512 = vpack.c.b16 %v7120, %v7113
    %v7513 = vpack.c.b16 %v7121, %v7114
    %v7514 = vpack.c.b16 %v7122, %v7115
    %v7515 = vpack.c.b16 %v7123, %v7116
    %v7516 = vpack.c.b16 %v7131, %v7124
    %v7517 = vpack.c.b16 %v7132, %v7125
    %v7518 = vpack.c.b16 %v7133, %v7126
    %v7519 = vpack.c.b16 %v7134, %v7127
    %v7520 = vpack.c.b16 %v7135, %v7128
    %v7521 = vpack.c.b16 %v7136, %v7129
    %v7522 = vpack.c.b16 %v7137, %v7130
    %v7523 = vpack.c.b16 %v7145, %v7138
    %v7524 = vpack.c.b16 %v7146, %v7139
    %v7525 = vpack.c.b16 %v7147, %v7140
    %v7526 = vpack.c.b16 %v7148, %v7141
    %v7527 = vpack.c.b16 %v7149, %v7142
    %v7528 = vpack.c.b16 %v7150, %v7143
    %v7529 = vpack.c.b16 %v7151, %v7144
    %v7530 = vpack.c.b16 %v7159, %v7152
    %v7531 = vpack.c.b16 %v7160, %v7153
    %v7532 = vpack.c.b16 %v7161, %v7154
    %v7533 = vpack.c.b16 %v7162, %v7155
    %v7534 = vpack.c.b16 %v7163, %v7156
    %v7535 = vpack.c.b16 %v7164, %v7157
    %v7536 = vpack.c.b16 %v7165, %v7158
    %v7537 = vpack.c.b16 %v7173, %v7166
    %v7538 = vpack.c.b16 %v7174, %v7167
    %v7539 = vpack.c.b16 %v7175, %v7168
    %v7540 = vpack.c.b16 %v7176, %v7169
    %v7541 = vpack.c.b16 %v7177, %v7170
    %v7542 = vpack.c.b16 %v7178, %v7171
    %v7543 = vpack.c.b16 %v7179, %v7172
    %v7544 = vpack.c.b16 %v7187, %v7180
    %v7545 = vpack.c.b16 %v7188, %v7181
    %v7546 = vpack.c.b16 %v7189, %v7182
    %v7547 = vpack.c.b16 %v7190, %v7183
    %v7548 = vpack.c.b16 %v7191, %v7184
    %v7549 = vpack.c.b16 %v7192, %v7185
    %v7550 = vpack.c.b16 %v7193, %v7186
    %v7551 = vpack.c.b16 %v7201, %v7194
    %v7552 = vpack.c.b16 %v7202, %v7195
    %v7553 = vpack.c.b16 %v7203, %v7196
    %v7554 = vpack.c.b16 %v7204, %v7197
    %v7555 = vpack.c.b16 %v7205, %v7198
    %v7556 = vpack.c.b16 %v7206, %v7199
    %v7557 = vpack.c.b16 %v7207, %v7200
    %v7558 = vpack.c.b16 %v7215, %v7208
    %v7559 = vpack.c.b16 %v7216, %v7209
    %v7560 = vpack.c.b16 %v7217, %v7210
    %v7561 = vpack.c.b16 %v7218, %v7211
    %v7562 = vpack.c.b16 %v7219, %v7212
    %v7563 = vpack.c.b16 %v7220, %v7213
    %v7564 = vpack.c.b16 %v7221, %v7214
    %v7909 = vsel %vm2256, %v5750, 0
    %7911 = vmatpush.bf16.msra.mxu0 %v7271
    %7912 = vmatpush.bf16.msra.mxu0 %v7264
    %7913 = vmatpush.bf16.msra.mxu0 %v7257
    %7914 = vmatpush.bf16.msra.mxu0 %v7250
    %7915 = vmatpush.bf16.msra.mxu0 %v7243
    %7916 = vmatpush.bf16.msra.mxu0 %v7236
    %7917 = vmatpush.bf16.msra.mxu0 %v7229
    %7918 = vmatpush.bf16.msra.mxu0 %v7222
    %7919 = vmatmul.bf16.gmra.mxu0 %v5744
    %v7920 = vpop.f32.mrf.mxu0
    %v7921 = vadd.f32 0.0, %v7920
    %v7922 = vpop.f32.mrf.mxu0
    %7923 = vdwg.mxu0
    %7924 = vmatpush.bf16.msra.mxu0 %v7327
    %7925 = vmatpush.bf16.msra.mxu0 %v7320
    %7926 = vmatpush.bf16.msra.mxu0 %v7313
    %7927 = vmatpush.bf16.msra.mxu0 %v7306
    %7928 = vmatpush.bf16.msra.mxu0 %v7299
    %7929 = vmatpush.bf16.msra.mxu0 %v7292
    %7930 = vmatpush.bf16.msra.mxu0 %v7285
    %7931 = vmatpush.bf16.msra.mxu0 %v7278
    %7932 = vmatmul.bf16.gmra.mxu0 %v5745
    %v7933 = vpop.f32.mrf.mxu0
    %v7934 = vadd.f32 %v7921, %v7933
    %v7935 = vpop.f32.mrf.mxu0
    %7936 = vdwg.mxu0
    %7937 = vmatpush.bf16.msra.mxu0 %v7383
    %7938 = vmatpush.bf16.msra.mxu0 %v7376
    %7939 = vmatpush.bf16.msra.mxu0 %v7369
    %7940 = vmatpush.bf16.msra.mxu0 %v7362
    %7941 = vmatpush.bf16.msra.mxu0 %v7355
    %7942 = vmatpush.bf16.msra.mxu0 %v7348
    %7943 = vmatpush.bf16.msra.mxu0 %v7341
    %7944 = vmatpush.bf16.msra.mxu0 %v7334
    %7945 = vmatmul.bf16.gmra.mxu0 %v5746
    %v7946 = vpop.f32.mrf.mxu0
    %v7947 = vadd.f32 %v7934, %v7946
    %v7948 = vpop.f32.mrf.mxu0
    %7949 = vdwg.mxu0
    %7950 = vmatpush.bf16.msra.mxu0 %v7439
    %7951 = vmatpush.bf16.msra.mxu0 %v7432
    %7952 = vmatpush.bf16.msra.mxu0 %v7425
    %7953 = vmatpush.bf16.msra.mxu0 %v7418
    %7954 = vmatpush.bf16.msra.mxu0 %v7411
    %7955 = vmatpush.bf16.msra.mxu0 %v7404
    %7956 = vmatpush.bf16.msra.mxu0 %v7397
    %7957 = vmatpush.bf16.msra.mxu0 %v7390
    %7958 = vmatmul.bf16.gmra.mxu0 %v5747
    %v7959 = vpop.f32.mrf.mxu0
    %v7960 = vadd.f32 %v7947, %v7959
    %v7961 = vpop.f32.mrf.mxu0
    %7962 = vdwg.mxu0
    %7963 = vmatpush.bf16.msra.mxu0 %v7495
    %7964 = vmatpush.bf16.msra.mxu0 %v7488
    %7965 = vmatpush.bf16.msra.mxu0 %v7481
    %7966 = vmatpush.bf16.msra.mxu0 %v7474
    %7967 = vmatpush.bf16.msra.mxu0 %v7467
    %7968 = vmatpush.bf16.msra.mxu0 %v7460
    %7969 = vmatpush.bf16.msra.mxu0 %v7453
    %7970 = vmatpush.bf16.msra.mxu0 %v7446
    %7971 = vmatmul.bf16.gmra.mxu0 %v5748
    %v7972 = vpop.f32.mrf.mxu0
    %v7973 = vadd.f32 %v7960, %v7972
    %v7974 = vpop.f32.mrf.mxu0
    %7975 = vdwg.mxu0
    %7976 = vmatpush.bf16.msra.mxu0 %v7551
    %7977 = vmatpush.bf16.msra.mxu0 %v7544
    %7978 = vmatpush.bf16.msra.mxu0 %v7537
    %7979 = vmatpush.bf16.msra.mxu0 %v7530
    %7980 = vmatpush.bf16.msra.mxu0 %v7523
    %7981 = vmatpush.bf16.msra.mxu0 %v7516
    %7982 = vmatpush.bf16.msra.mxu0 %v7509
    %7983 = vmatpush.bf16.msra.mxu0 %v7502
    %7984 = vmatmul.bf16.gmra.mxu0 %v5749
    %v7985 = vpop.f32.mrf.mxu0
    %v7986 = vadd.f32 %v7973, %v7985
    %v7987 = vpop.f32.mrf.mxu0
    %7988 = vdwg.mxu0
    %7989 = vmatpush.bf16.msra.mxu0 0
    %7990 = vmatpush.bf16.msra.mxu0 0
    %7991 = vmatpush.bf16.msra.mxu0 0
    %7992 = vmatpush.bf16.msra.mxu0 0
    %7993 = vmatpush.bf16.msra.mxu0 0
    %7994 = vmatpush.bf16.msra.mxu0 0
    %7995 = vmatpush.bf16.msra.mxu0 0
    %7996 = vmatpush.bf16.msra.mxu0 %v7558
    %7997 = vmatmul.bf16.gmra.mxu0 %v7909
    %v7998 = vpop.f32.mrf.mxu0
    %v7999 = vadd.f32 %v7986, %v7998
    %v8000 = vpop.f32.mrf.mxu0
    %8001 = vdwg.mxu0
    %8002 = vmatpush.bf16.msra.mxu0 %v7272
    %8003 = vmatpush.bf16.msra.mxu0 %v7265
    %8004 = vmatpush.bf16.msra.mxu0 %v7258
    %8005 = vmatpush.bf16.msra.mxu0 %v7251
    %8006 = vmatpush.bf16.msra.mxu0 %v7244
    %8007 = vmatpush.bf16.msra.mxu0 %v7237
    %8008 = vmatpush.bf16.msra.mxu0 %v7230
    %8009 = vmatpush.bf16.msra.mxu0 %v7223
    %8010 = vmatmul.bf16.gmra.mxu0 %v5744
    %v8011 = vpop.f32.mrf.mxu0
    %v8012 = vadd.f32 0.0, %v8011
    %v8013 = vpop.f32.mrf.mxu0
    %8014 = vdwg.mxu0
    %8015 = vmatpush.bf16.msra.mxu0 %v7328
    %8016 = vmatpush.bf16.msra.mxu0 %v7321
    %8017 = vmatpush.bf16.msra.mxu0 %v7314
    %8018 = vmatpush.bf16.msra.mxu0 %v7307
    %8019 = vmatpush.bf16.msra.mxu0 %v7300
    %8020 = vmatpush.bf16.msra.mxu0 %v7293
    %8021 = vmatpush.bf16.msra.mxu0 %v7286
    %8022 = vmatpush.bf16.msra.mxu0 %v7279
    %8023 = vmatmul.bf16.gmra.mxu0 %v5745
    %v8024 = vpop.f32.mrf.mxu0
    %v8025 = vadd.f32 %v8012, %v8024
    %v8026 = vpop.f32.mrf.mxu0
    %8027 = vdwg.mxu0
    %8028 = vmatpush.bf16.msra.mxu0 %v7384
    %8029 = vmatpush.bf16.msra.mxu0 %v7377
    %8030 = vmatpush.bf16.msra.mxu0 %v7370
    %8031 = vmatpush.bf16.msra.mxu0 %v7363
    %8032 = vmatpush.bf16.msra.mxu0 %v7356
    %8033 = vmatpush.bf16.msra.mxu0 %v7349
    %8034 = vmatpush.bf16.msra.mxu0 %v7342
    %8035 = vmatpush.bf16.msra.mxu0 %v7335
    %8036 = vmatmul.bf16.gmra.mxu0 %v5746
    %v8037 = vpop.f32.mrf.mxu0
    %v8038 = vadd.f32 %v8025, %v8037
    %v8039 = vpop.f32.mrf.mxu0
    %8040 = vdwg.mxu0
    %8041 = vmatpush.bf16.msra.mxu0 %v7440
    %8042 = vmatpush.bf16.msra.mxu0 %v7433
    %8043 = vmatpush.bf16.msra.mxu0 %v7426
    %8044 = vmatpush.bf16.msra.mxu0 %v7419
    %8045 = vmatpush.bf16.msra.mxu0 %v7412
    %8046 = vmatpush.bf16.msra.mxu0 %v7405
    %8047 = vmatpush.bf16.msra.mxu0 %v7398
    %8048 = vmatpush.bf16.msra.mxu0 %v7391
    %8049 = vmatmul.bf16.gmra.mxu0 %v5747
    %v8050 = vpop.f32.mrf.mxu0
    %v8051 = vadd.f32 %v8038, %v8050
    %v8052 = vpop.f32.mrf.mxu0
    %8053 = vdwg.mxu0
    %8054 = vmatpush.bf16.msra.mxu0 %v7496
    %8055 = vmatpush.bf16.msra.mxu0 %v7489
    %8056 = vmatpush.bf16.msra.mxu0 %v7482
    %8057 = vmatpush.bf16.msra.mxu0 %v7475
    %8058 = vmatpush.bf16.msra.mxu0 %v7468
    %8059 = vmatpush.bf16.msra.mxu0 %v7461
    %8060 = vmatpush.bf16.msra.mxu0 %v7454
    %8061 = vmatpush.bf16.msra.mxu0 %v7447
    %8062 = vmatmul.bf16.gmra.mxu0 %v5748
    %v8063 = vpop.f32.mrf.mxu0
    %v8064 = vadd.f32 %v8051, %v8063
    %v8065 = vpop.f32.mrf.mxu0
    %8066 = vdwg.mxu0
    %8067 = vmatpush.bf16.msra.mxu0 %v7552
    %8068 = vmatpush.bf16.msra.mxu0 %v7545
    %8069 = vmatpush.bf16.msra.mxu0 %v7538
    %8070 = vmatpush.bf16.msra.mxu0 %v7531
    %8071 = vmatpush.bf16.msra.mxu0 %v7524
    %8072 = vmatpush.bf16.msra.mxu0 %v7517
    %8073 = vmatpush.bf16.msra.mxu0 %v7510
    %8074 = vmatpush.bf16.msra.mxu0 %v7503
    %8075 = vmatmul.bf16.gmra.mxu0 %v5749
    %v8076 = vpop.f32.mrf.mxu0
    %v8077 = vadd.f32 %v8064, %v8076
    %v8078 = vpop.f32.mrf.mxu0
    %8079 = vdwg.mxu0
    %8080 = vmatpush.bf16.msra.mxu0 0
    %8081 = vmatpush.bf16.msra.mxu0 0
    %8082 = vmatpush.bf16.msra.mxu0 0
    %8083 = vmatpush.bf16.msra.mxu0 0
    %8084 = vmatpush.bf16.msra.mxu0 0
    %8085 = vmatpush.bf16.msra.mxu0 0
    %8086 = vmatpush.bf16.msra.mxu0 0
    %8087 = vmatpush.bf16.msra.mxu0 %v7559
    %8088 = vmatmul.bf16.gmra.mxu0 %v7909
    %v8089 = vpop.f32.mrf.mxu0
    %v8090 = vadd.f32 %v8077, %v8089
    %v8091 = vpop.f32.mrf.mxu0
    %8092 = vdwg.mxu0
    %8093 = vmatpush.bf16.msra.mxu0 %v7273
    %8094 = vmatpush.bf16.msra.mxu0 %v7266
    %8095 = vmatpush.bf16.msra.mxu0 %v7259
    %8096 = vmatpush.bf16.msra.mxu0 %v7252
    %8097 = vmatpush.bf16.msra.mxu0 %v7245
    %8098 = vmatpush.bf16.msra.mxu0 %v7238
    %8099 = vmatpush.bf16.msra.mxu0 %v7231
    %8100 = vmatpush.bf16.msra.mxu0 %v7224
    %8101 = vmatmul.bf16.gmra.mxu0 %v5744
    %v8102 = vpop.f32.mrf.mxu0
    %v8103 = vadd.f32 0.0, %v8102
    %v8104 = vpop.f32.mrf.mxu0
    %8105 = vdwg.mxu0
    %8106 = vmatpush.bf16.msra.mxu0 %v7329
    %8107 = vmatpush.bf16.msra.mxu0 %v7322
    %8108 = vmatpush.bf16.msra.mxu0 %v7315
    %8109 = vmatpush.bf16.msra.mxu0 %v7308
    %8110 = vmatpush.bf16.msra.mxu0 %v7301
    %8111 = vmatpush.bf16.msra.mxu0 %v7294
    %8112 = vmatpush.bf16.msra.mxu0 %v7287
    %8113 = vmatpush.bf16.msra.mxu0 %v7280
    %8114 = vmatmul.bf16.gmra.mxu0 %v5745
    %v8115 = vpop.f32.mrf.mxu0
    %v8116 = vadd.f32 %v8103, %v8115
    %v8117 = vpop.f32.mrf.mxu0
    %8118 = vdwg.mxu0
    %8119 = vmatpush.bf16.msra.mxu0 %v7385
    %8120 = vmatpush.bf16.msra.mxu0 %v7378
    %8121 = vmatpush.bf16.msra.mxu0 %v7371
    %8122 = vmatpush.bf16.msra.mxu0 %v7364
    %8123 = vmatpush.bf16.msra.mxu0 %v7357
    %8124 = vmatpush.bf16.msra.mxu0 %v7350
    %8125 = vmatpush.bf16.msra.mxu0 %v7343
    %8126 = vmatpush.bf16.msra.mxu0 %v7336
    %8127 = vmatmul.bf16.gmra.mxu0 %v5746
    %v8128 = vpop.f32.mrf.mxu0
    %v8129 = vadd.f32 %v8116, %v8128
    %v8130 = vpop.f32.mrf.mxu0
    %8131 = vdwg.mxu0
    %8132 = vmatpush.bf16.msra.mxu0 %v7441
    %8133 = vmatpush.bf16.msra.mxu0 %v7434
    %8134 = vmatpush.bf16.msra.mxu0 %v7427
    %8135 = vmatpush.bf16.msra.mxu0 %v7420
    %8136 = vmatpush.bf16.msra.mxu0 %v7413
    %8137 = vmatpush.bf16.msra.mxu0 %v7406
    %8138 = vmatpush.bf16.msra.mxu0 %v7399
    %8139 = vmatpush.bf16.msra.mxu0 %v7392
    %8140 = vmatmul.bf16.gmra.mxu0 %v5747
    %v8141 = vpop.f32.mrf.mxu0
    %v8142 = vadd.f32 %v8129, %v8141
    %v8143 = vpop.f32.mrf.mxu0
    %8144 = vdwg.mxu0
    %8145 = vmatpush.bf16.msra.mxu0 %v7497
    %8146 = vmatpush.bf16.msra.mxu0 %v7490
    %8147 = vmatpush.bf16.msra.mxu0 %v7483
    %8148 = vmatpush.bf16.msra.mxu0 %v7476
    %8149 = vmatpush.bf16.msra.mxu0 %v7469
    %8150 = vmatpush.bf16.msra.mxu0 %v7462
    %8151 = vmatpush.bf16.msra.mxu0 %v7455
    %8152 = vmatpush.bf16.msra.mxu0 %v7448
    %8153 = vmatmul.bf16.gmra.mxu0 %v5748
    %v8154 = vpop.f32.mrf.mxu0
    %v8155 = vadd.f32 %v8142, %v8154
    %v8156 = vpop.f32.mrf.mxu0
    %8157 = vdwg.mxu0
    %8158 = vmatpush.bf16.msra.mxu0 %v7553
    %8159 = vmatpush.bf16.msra.mxu0 %v7546
    %8160 = vmatpush.bf16.msra.mxu0 %v7539
    %8161 = vmatpush.bf16.msra.mxu0 %v7532
    %8162 = vmatpush.bf16.msra.mxu0 %v7525
    %8163 = vmatpush.bf16.msra.mxu0 %v7518
    %8164 = vmatpush.bf16.msra.mxu0 %v7511
    %8165 = vmatpush.bf16.msra.mxu0 %v7504
    %8166 = vmatmul.bf16.gmra.mxu0 %v5749
    %v8167 = vpop.f32.mrf.mxu0
    %v8168 = vadd.f32 %v8155, %v8167
    %v8169 = vpop.f32.mrf.mxu0
    %8170 = vdwg.mxu0
    %8171 = vmatpush.bf16.msra.mxu0 0
    %8172 = vmatpush.bf16.msra.mxu0 0
    %8173 = vmatpush.bf16.msra.mxu0 0
    %8174 = vmatpush.bf16.msra.mxu0 0
    %8175 = vmatpush.bf16.msra.mxu0 0
    %8176 = vmatpush.bf16.msra.mxu0 0
    %8177 = vmatpush.bf16.msra.mxu0 0
    %8178 = vmatpush.bf16.msra.mxu0 %v7560
    %8179 = vmatmul.bf16.gmra.mxu0 %v7909
    %v8180 = vpop.f32.mrf.mxu0
    %v8181 = vadd.f32 %v8168, %v8180
    %v8182 = vpop.f32.mrf.mxu0
    %8183 = vdwg.mxu0
    %8184 = vmatpush.bf16.msra.mxu0 %v7274
    %8185 = vmatpush.bf16.msra.mxu0 %v7267
    %8186 = vmatpush.bf16.msra.mxu0 %v7260
    %8187 = vmatpush.bf16.msra.mxu0 %v7253
    %8188 = vmatpush.bf16.msra.mxu0 %v7246
    %8189 = vmatpush.bf16.msra.mxu0 %v7239
    %8190 = vmatpush.bf16.msra.mxu0 %v7232
    %8191 = vmatpush.bf16.msra.mxu0 %v7225
    %8192 = vmatmul.bf16.gmra.mxu0 %v5744
    %v8193 = vpop.f32.mrf.mxu0
    %v8194 = vadd.f32 0.0, %v8193
    %v8195 = vpop.f32.mrf.mxu0
    %8196 = vdwg.mxu0
    %8197 = vmatpush.bf16.msra.mxu0 %v7330
    %8198 = vmatpush.bf16.msra.mxu0 %v7323
    %8199 = vmatpush.bf16.msra.mxu0 %v7316
    %8200 = vmatpush.bf16.msra.mxu0 %v7309
    %8201 = vmatpush.bf16.msra.mxu0 %v7302
    %8202 = vmatpush.bf16.msra.mxu0 %v7295
    %8203 = vmatpush.bf16.msra.mxu0 %v7288
    %8204 = vmatpush.bf16.msra.mxu0 %v7281
    %8205 = vmatmul.bf16.gmra.mxu0 %v5745
    %v8206 = vpop.f32.mrf.mxu0
    %v8207 = vadd.f32 %v8194, %v8206
    %v8208 = vpop.f32.mrf.mxu0
    %8209 = vdwg.mxu0
    %8210 = vmatpush.bf16.msra.mxu0 %v7386
    %8211 = vmatpush.bf16.msra.mxu0 %v7379
    %8212 = vmatpush.bf16.msra.mxu0 %v7372
    %8213 = vmatpush.bf16.msra.mxu0 %v7365
    %8214 = vmatpush.bf16.msra.mxu0 %v7358
    %8215 = vmatpush.bf16.msra.mxu0 %v7351
    %8216 = vmatpush.bf16.msra.mxu0 %v7344
    %8217 = vmatpush.bf16.msra.mxu0 %v7337
    %8218 = vmatmul.bf16.gmra.mxu0 %v5746
    %v8219 = vpop.f32.mrf.mxu0
    %v8220 = vadd.f32 %v8207, %v8219
    %v8221 = vpop.f32.mrf.mxu0
    %8222 = vdwg.mxu0
    %8223 = vmatpush.bf16.msra.mxu0 %v7442
    %8224 = vmatpush.bf16.msra.mxu0 %v7435
    %8225 = vmatpush.bf16.msra.mxu0 %v7428
    %8226 = vmatpush.bf16.msra.mxu0 %v7421
    %8227 = vmatpush.bf16.msra.mxu0 %v7414
    %8228 = vmatpush.bf16.msra.mxu0 %v7407
    %8229 = vmatpush.bf16.msra.mxu0 %v7400
    %8230 = vmatpush.bf16.msra.mxu0 %v7393
    %8231 = vmatmul.bf16.gmra.mxu0 %v5747
    %v8232 = vpop.f32.mrf.mxu0
    %v8233 = vadd.f32 %v8220, %v8232
    %v8234 = vpop.f32.mrf.mxu0
    %8235 = vdwg.mxu0
    %8236 = vmatpush.bf16.msra.mxu0 %v7498
    %8237 = vmatpush.bf16.msra.mxu0 %v7491
    %8238 = vmatpush.bf16.msra.mxu0 %v7484
    %8239 = vmatpush.bf16.msra.mxu0 %v7477
    %8240 = vmatpush.bf16.msra.mxu0 %v7470
    %8241 = vmatpush.bf16.msra.mxu0 %v7463
    %8242 = vmatpush.bf16.msra.mxu0 %v7456
    %8243 = vmatpush.bf16.msra.mxu0 %v7449
    %8244 = vmatmul.bf16.gmra.mxu0 %v5748
    %v8245 = vpop.f32.mrf.mxu0
    %v8246 = vadd.f32 %v8233, %v8245
    %v8247 = vpop.f32.mrf.mxu0
    %8248 = vdwg.mxu0
    %8249 = vmatpush.bf16.msra.mxu0 %v7554
    %8250 = vmatpush.bf16.msra.mxu0 %v7547
    %8251 = vmatpush.bf16.msra.mxu0 %v7540
    %8252 = vmatpush.bf16.msra.mxu0 %v7533
    %8253 = vmatpush.bf16.msra.mxu0 %v7526
    %8254 = vmatpush.bf16.msra.mxu0 %v7519
    %8255 = vmatpush.bf16.msra.mxu0 %v7512
    %8256 = vmatpush.bf16.msra.mxu0 %v7505
    %8257 = vmatmul.bf16.gmra.mxu0 %v5749
    %v8258 = vpop.f32.mrf.mxu0
    %v8259 = vadd.f32 %v8246, %v8258
    %v8260 = vpop.f32.mrf.mxu0
    %8261 = vdwg.mxu0
    %8262 = vmatpush.bf16.msra.mxu0 0
    %8263 = vmatpush.bf16.msra.mxu0 0
    %8264 = vmatpush.bf16.msra.mxu0 0
    %8265 = vmatpush.bf16.msra.mxu0 0
    %8266 = vmatpush.bf16.msra.mxu0 0
    %8267 = vmatpush.bf16.msra.mxu0 0
    %8268 = vmatpush.bf16.msra.mxu0 0
    %8269 = vmatpush.bf16.msra.mxu0 %v7561
    %8270 = vmatmul.bf16.gmra.mxu0 %v7909
    %v8271 = vpop.f32.mrf.mxu0
    %v8272 = vadd.f32 %v8259, %v8271
    %v8273 = vpop.f32.mrf.mxu0
    %8274 = vdwg.mxu0
    %8275 = vmatpush.bf16.msra.mxu0 %v7275
    %8276 = vmatpush.bf16.msra.mxu0 %v7268
    %8277 = vmatpush.bf16.msra.mxu0 %v7261
    %8278 = vmatpush.bf16.msra.mxu0 %v7254
    %8279 = vmatpush.bf16.msra.mxu0 %v7247
    %8280 = vmatpush.bf16.msra.mxu0 %v7240
    %8281 = vmatpush.bf16.msra.mxu0 %v7233
    %8282 = vmatpush.bf16.msra.mxu0 %v7226
    %8283 = vmatmul.bf16.gmra.mxu0 %v5744
    %v8284 = vpop.f32.mrf.mxu0
    %v8285 = vadd.f32 0.0, %v8284
    %v8286 = vpop.f32.mrf.mxu0
    %8287 = vdwg.mxu0
    %8288 = vmatpush.bf16.msra.mxu0 %v7331
    %8289 = vmatpush.bf16.msra.mxu0 %v7324
    %8290 = vmatpush.bf16.msra.mxu0 %v7317
    %8291 = vmatpush.bf16.msra.mxu0 %v7310
    %8292 = vmatpush.bf16.msra.mxu0 %v7303
    %8293 = vmatpush.bf16.msra.mxu0 %v7296
    %8294 = vmatpush.bf16.msra.mxu0 %v7289
    %8295 = vmatpush.bf16.msra.mxu0 %v7282
    %8296 = vmatmul.bf16.gmra.mxu0 %v5745
    %v8297 = vpop.f32.mrf.mxu0
    %v8298 = vadd.f32 %v8285, %v8297
    %v8299 = vpop.f32.mrf.mxu0
    %8300 = vdwg.mxu0
    %8301 = vmatpush.bf16.msra.mxu0 %v7387
    %8302 = vmatpush.bf16.msra.mxu0 %v7380
    %8303 = vmatpush.bf16.msra.mxu0 %v7373
    %8304 = vmatpush.bf16.msra.mxu0 %v7366
    %8305 = vmatpush.bf16.msra.mxu0 %v7359
    %8306 = vmatpush.bf16.msra.mxu0 %v7352
    %8307 = vmatpush.bf16.msra.mxu0 %v7345
    %8308 = vmatpush.bf16.msra.mxu0 %v7338
    %8309 = vmatmul.bf16.gmra.mxu0 %v5746
    %v8310 = vpop.f32.mrf.mxu0
    %v8311 = vadd.f32 %v8298, %v8310
    %v8312 = vpop.f32.mrf.mxu0
    %8313 = vdwg.mxu0
    %8314 = vmatpush.bf16.msra.mxu0 %v7443
    %8315 = vmatpush.bf16.msra.mxu0 %v7436
    %8316 = vmatpush.bf16.msra.mxu0 %v7429
    %8317 = vmatpush.bf16.msra.mxu0 %v7422
    %8318 = vmatpush.bf16.msra.mxu0 %v7415
    %8319 = vmatpush.bf16.msra.mxu0 %v7408
    %8320 = vmatpush.bf16.msra.mxu0 %v7401
    %8321 = vmatpush.bf16.msra.mxu0 %v7394
    %8322 = vmatmul.bf16.gmra.mxu0 %v5747
    %v8323 = vpop.f32.mrf.mxu0
    %v8324 = vadd.f32 %v8311, %v8323
    %v8325 = vpop.f32.mrf.mxu0
    %8326 = vdwg.mxu0
    %8327 = vmatpush.bf16.msra.mxu0 %v7499
    %8328 = vmatpush.bf16.msra.mxu0 %v7492
    %8329 = vmatpush.bf16.msra.mxu0 %v7485
    %8330 = vmatpush.bf16.msra.mxu0 %v7478
    %8331 = vmatpush.bf16.msra.mxu0 %v7471
    %8332 = vmatpush.bf16.msra.mxu0 %v7464
    %8333 = vmatpush.bf16.msra.mxu0 %v7457
    %8334 = vmatpush.bf16.msra.mxu0 %v7450
    %8335 = vmatmul.bf16.gmra.mxu0 %v5748
    %v8336 = vpop.f32.mrf.mxu0
    %v8337 = vadd.f32 %v8324, %v8336
    %v8338 = vpop.f32.mrf.mxu0
    %8339 = vdwg.mxu0
    %8340 = vmatpush.bf16.msra.mxu0 %v7555
    %8341 = vmatpush.bf16.msra.mxu0 %v7548
    %8342 = vmatpush.bf16.msra.mxu0 %v7541
    %8343 = vmatpush.bf16.msra.mxu0 %v7534
    %8344 = vmatpush.bf16.msra.mxu0 %v7527
    %8345 = vmatpush.bf16.msra.mxu0 %v7520
    %8346 = vmatpush.bf16.msra.mxu0 %v7513
    %8347 = vmatpush.bf16.msra.mxu0 %v7506
    %8348 = vmatmul.bf16.gmra.mxu0 %v5749
    %v8349 = vpop.f32.mrf.mxu0
    %v8350 = vadd.f32 %v8337, %v8349
    %v8351 = vpop.f32.mrf.mxu0
    %8352 = vdwg.mxu0
    %8353 = vmatpush.bf16.msra.mxu0 0
    %8354 = vmatpush.bf16.msra.mxu0 0
    %8355 = vmatpush.bf16.msra.mxu0 0
    %8356 = vmatpush.bf16.msra.mxu0 0
    %8357 = vmatpush.bf16.msra.mxu0 0
    %8358 = vmatpush.bf16.msra.mxu0 0
    %8359 = vmatpush.bf16.msra.mxu0 0
    %8360 = vmatpush.bf16.msra.mxu0 %v7562
    %8361 = vmatmul.bf16.gmra.mxu0 %v7909
    %v8362 = vpop.f32.mrf.mxu0
    %v8363 = vadd.f32 %v8350, %v8362
    %v8364 = vpop.f32.mrf.mxu0
    %8365 = vdwg.mxu0
    %8366 = vmatpush.bf16.msra.mxu0 %v7276
    %8367 = vmatpush.bf16.msra.mxu0 %v7269
    %8368 = vmatpush.bf16.msra.mxu0 %v7262
    %8369 = vmatpush.bf16.msra.mxu0 %v7255
    %8370 = vmatpush.bf16.msra.mxu0 %v7248
    %8371 = vmatpush.bf16.msra.mxu0 %v7241
    %8372 = vmatpush.bf16.msra.mxu0 %v7234
    %8373 = vmatpush.bf16.msra.mxu0 %v7227
    %8374 = vmatmul.bf16.gmra.mxu0 %v5744
    %v8375 = vpop.f32.mrf.mxu0
    %v8376 = vadd.f32 0.0, %v8375
    %v8377 = vpop.f32.mrf.mxu0
    %8378 = vdwg.mxu0
    %8379 = vmatpush.bf16.msra.mxu0 %v7332
    %8380 = vmatpush.bf16.msra.mxu0 %v7325
    %8381 = vmatpush.bf16.msra.mxu0 %v7318
    %8382 = vmatpush.bf16.msra.mxu0 %v7311
    %8383 = vmatpush.bf16.msra.mxu0 %v7304
    %8384 = vmatpush.bf16.msra.mxu0 %v7297
    %8385 = vmatpush.bf16.msra.mxu0 %v7290
    %8386 = vmatpush.bf16.msra.mxu0 %v7283
    %8387 = vmatmul.bf16.gmra.mxu0 %v5745
    %v8388 = vpop.f32.mrf.mxu0
    %v8389 = vadd.f32 %v8376, %v8388
    %v8390 = vpop.f32.mrf.mxu0
    %8391 = vdwg.mxu0
    %8392 = vmatpush.bf16.msra.mxu0 %v7388
    %8393 = vmatpush.bf16.msra.mxu0 %v7381
    %8394 = vmatpush.bf16.msra.mxu0 %v7374
    %8395 = vmatpush.bf16.msra.mxu0 %v7367
    %8396 = vmatpush.bf16.msra.mxu0 %v7360
    %8397 = vmatpush.bf16.msra.mxu0 %v7353
    %8398 = vmatpush.bf16.msra.mxu0 %v7346
    %8399 = vmatpush.bf16.msra.mxu0 %v7339
    %8400 = vmatmul.bf16.gmra.mxu0 %v5746
    %v8401 = vpop.f32.mrf.mxu0
    %v8402 = vadd.f32 %v8389, %v8401
    %v8403 = vpop.f32.mrf.mxu0
    %8404 = vdwg.mxu0
    %8405 = vmatpush.bf16.msra.mxu0 %v7444
    %8406 = vmatpush.bf16.msra.mxu0 %v7437
    %8407 = vmatpush.bf16.msra.mxu0 %v7430
    %8408 = vmatpush.bf16.msra.mxu0 %v7423
    %8409 = vmatpush.bf16.msra.mxu0 %v7416
    %8410 = vmatpush.bf16.msra.mxu0 %v7409
    %8411 = vmatpush.bf16.msra.mxu0 %v7402
    %8412 = vmatpush.bf16.msra.mxu0 %v7395
    %8413 = vmatmul.bf16.gmra.mxu0 %v5747
    %v8414 = vpop.f32.mrf.mxu0
    %v8415 = vadd.f32 %v8402, %v8414
    %v8416 = vpop.f32.mrf.mxu0
    %8417 = vdwg.mxu0
    %8418 = vmatpush.bf16.msra.mxu0 %v7500
    %8419 = vmatpush.bf16.msra.mxu0 %v7493
    %8420 = vmatpush.bf16.msra.mxu0 %v7486
    %8421 = vmatpush.bf16.msra.mxu0 %v7479
    %8422 = vmatpush.bf16.msra.mxu0 %v7472
    %8423 = vmatpush.bf16.msra.mxu0 %v7465
    %8424 = vmatpush.bf16.msra.mxu0 %v7458
    %8425 = vmatpush.bf16.msra.mxu0 %v7451
    %8426 = vmatmul.bf16.gmra.mxu0 %v5748
    %v8427 = vpop.f32.mrf.mxu0
    %v8428 = vadd.f32 %v8415, %v8427
    %v8429 = vpop.f32.mrf.mxu0
    %8430 = vdwg.mxu0
    %8431 = vmatpush.bf16.msra.mxu0 %v7556
    %8432 = vmatpush.bf16.msra.mxu0 %v7549
    %8433 = vmatpush.bf16.msra.mxu0 %v7542
    %8434 = vmatpush.bf16.msra.mxu0 %v7535
    %8435 = vmatpush.bf16.msra.mxu0 %v7528
    %8436 = vmatpush.bf16.msra.mxu0 %v7521
    %8437 = vmatpush.bf16.msra.mxu0 %v7514
    %8438 = vmatpush.bf16.msra.mxu0 %v7507
    %8439 = vmatmul.bf16.gmra.mxu0 %v5749
    %v8440 = vpop.f32.mrf.mxu0
    %v8441 = vadd.f32 %v8428, %v8440
    %v8442 = vpop.f32.mrf.mxu0
    %8443 = vdwg.mxu0
    %8444 = vmatpush.bf16.msra.mxu0 0
    %8445 = vmatpush.bf16.msra.mxu0 0
    %8446 = vmatpush.bf16.msra.mxu0 0
    %8447 = vmatpush.bf16.msra.mxu0 0
    %8448 = vmatpush.bf16.msra.mxu0 0
    %8449 = vmatpush.bf16.msra.mxu0 0
    %8450 = vmatpush.bf16.msra.mxu0 0
    %8451 = vmatpush.bf16.msra.mxu0 %v7563
    %8452 = vmatmul.bf16.gmra.mxu0 %v7909
    %v8453 = vpop.f32.mrf.mxu0
    %v8454 = vadd.f32 %v8441, %v8453
    %v8455 = vpop.f32.mrf.mxu0
    %8456 = vdwg.mxu0
    %8457 = vmatpush.bf16.msra.mxu0 %v7277
    %8458 = vmatpush.bf16.msra.mxu0 %v7270
    %8459 = vmatpush.bf16.msra.mxu0 %v7263
    %8460 = vmatpush.bf16.msra.mxu0 %v7256
    %8461 = vmatpush.bf16.msra.mxu0 %v7249
    %8462 = vmatpush.bf16.msra.mxu0 %v7242
    %8463 = vmatpush.bf16.msra.mxu0 %v7235
    %8464 = vmatpush.bf16.msra.mxu0 %v7228
    %8465 = vmatmul.bf16.gmra.mxu0 %v5744
    %v8466 = vpop.f32.mrf.mxu0
    %v8467 = vadd.f32 0.0, %v8466
    %v8468 = vpop.f32.mrf.mxu0
    %8469 = vdwg.mxu0
    %8470 = vmatpush.bf16.msra.mxu0 %v7333
    %8471 = vmatpush.bf16.msra.mxu0 %v7326
    %8472 = vmatpush.bf16.msra.mxu0 %v7319
    %8473 = vmatpush.bf16.msra.mxu0 %v7312
    %8474 = vmatpush.bf16.msra.mxu0 %v7305
    %8475 = vmatpush.bf16.msra.mxu0 %v7298
    %8476 = vmatpush.bf16.msra.mxu0 %v7291
    %8477 = vmatpush.bf16.msra.mxu0 %v7284
    %8478 = vmatmul.bf16.gmra.mxu0 %v5745
    %v8479 = vpop.f32.mrf.mxu0
    %v8480 = vadd.f32 %v8467, %v8479
    %v8481 = vpop.f32.mrf.mxu0
    %8482 = vdwg.mxu0
    %8483 = vmatpush.bf16.msra.mxu0 %v7389
    %8484 = vmatpush.bf16.msra.mxu0 %v7382
    %8485 = vmatpush.bf16.msra.mxu0 %v7375
    %8486 = vmatpush.bf16.msra.mxu0 %v7368
    %8487 = vmatpush.bf16.msra.mxu0 %v7361
    %8488 = vmatpush.bf16.msra.mxu0 %v7354
    %8489 = vmatpush.bf16.msra.mxu0 %v7347
    %8490 = vmatpush.bf16.msra.mxu0 %v7340
    %8491 = vmatmul.bf16.gmra.mxu0 %v5746
    %v8492 = vpop.f32.mrf.mxu0
    %v8493 = vadd.f32 %v8480, %v8492
    %v8494 = vpop.f32.mrf.mxu0
    %8495 = vdwg.mxu0
    %8496 = vmatpush.bf16.msra.mxu0 %v7445
    %8497 = vmatpush.bf16.msra.mxu0 %v7438
    %8498 = vmatpush.bf16.msra.mxu0 %v7431
    %8499 = vmatpush.bf16.msra.mxu0 %v7424
    %8500 = vmatpush.bf16.msra.mxu0 %v7417
    %8501 = vmatpush.bf16.msra.mxu0 %v7410
    %8502 = vmatpush.bf16.msra.mxu0 %v7403
    %8503 = vmatpush.bf16.msra.mxu0 %v7396
    %8504 = vmatmul.bf16.gmra.mxu0 %v5747
    %v8505 = vpop.f32.mrf.mxu0
    %v8506 = vadd.f32 %v8493, %v8505
    %v8507 = vpop.f32.mrf.mxu0
    %8508 = vdwg.mxu0
    %8509 = vmatpush.bf16.msra.mxu0 %v7501
    %8510 = vmatpush.bf16.msra.mxu0 %v7494
    %8511 = vmatpush.bf16.msra.mxu0 %v7487
    %8512 = vmatpush.bf16.msra.mxu0 %v7480
    %8513 = vmatpush.bf16.msra.mxu0 %v7473
    %8514 = vmatpush.bf16.msra.mxu0 %v7466
    %8515 = vmatpush.bf16.msra.mxu0 %v7459
    %8516 = vmatpush.bf16.msra.mxu0 %v7452
    %8517 = vmatmul.bf16.gmra.mxu0 %v5748
    %v8518 = vpop.f32.mrf.mxu0
    %v8519 = vadd.f32 %v8506, %v8518
    %v8520 = vpop.f32.mrf.mxu0
    %8521 = vdwg.mxu0
    %8522 = vmatpush.bf16.msra.mxu0 %v7557
    %8523 = vmatpush.bf16.msra.mxu0 %v7550
    %8524 = vmatpush.bf16.msra.mxu0 %v7543
    %8525 = vmatpush.bf16.msra.mxu0 %v7536
    %8526 = vmatpush.bf16.msra.mxu0 %v7529
    %8527 = vmatpush.bf16.msra.mxu0 %v7522
    %8528 = vmatpush.bf16.msra.mxu0 %v7515
    %8529 = vmatpush.bf16.msra.mxu0 %v7508
    %8530 = vmatmul.bf16.gmra.mxu0 %v5749
    %v8531 = vpop.f32.mrf.mxu0
    %v8532 = vadd.f32 %v8519, %v8531
    %v8533 = vpop.f32.mrf.mxu0
    %8534 = vdwg.mxu0
    %8535 = vmatpush.bf16.msra.mxu0 0
    %8536 = vmatpush.bf16.msra.mxu0 0
    %8537 = vmatpush.bf16.msra.mxu0 0
    %8538 = vmatpush.bf16.msra.mxu0 0
    %8539 = vmatpush.bf16.msra.mxu0 0
    %8540 = vmatpush.bf16.msra.mxu0 0
    %8541 = vmatpush.bf16.msra.mxu0 0
    %8542 = vmatpush.bf16.msra.mxu0 %v7564
    %8543 = vmatmul.bf16.gmra.mxu0 %v7909
    %v8544 = vpop.f32.mrf.mxu0
    %v8545 = vadd.f32 %v8532, %v8544
    %v8546 = vpop.f32.mrf.mxu0
    %8547 = vdwg.mxu0
    %vm8548 = vcmp.ge.f32.partialorder %v7999, 0.0
    %vm8549 = vcmp.ge.f32.partialorder %v8090, 0.0
    %vm8550 = vcmp.ge.f32.partialorder %v8181, 0.0
    %vm8551 = vcmp.ge.f32.partialorder %v8272, 0.0
    %vm8552 = vcmp.ge.f32.partialorder %v8363, 0.0
    %vm8553 = vcmp.ge.f32.partialorder %v8454, 0.0
    %vm8554 = vcmp.ge.f32.partialorder %v8545, 0.0
    %v8555 = vmul.f32 %v2904, %v7999
    %v8556 = vmul.f32 %v2904, %v8090
    %v8557 = vmul.f32 %v2904, %v8181
    %v8558 = vmul.f32 %v2904, %v8272
    %v8559 = vmul.f32 %v2904, %v8363
    %v8560 = vmul.f32 %v2904, %v8454
    %v8561 = vmul.f32 %v2904, %v8545
    %v8562 = vsel %vm8548, %v7999, %v8555
    %v8563 = vsel %vm8549, %v8090, %v8556
    %v8564 = vsel %vm8550, %v8181, %v8557
    %v8565 = vsel %vm8551, %v8272, %v8558
    %v8566 = vsel %vm8552, %v8363, %v8559
    %v8567 = vsel %vm8553, %v8454, %v8560
    %v8568 = vsel %vm8554, %v8545, %v8561
    %8569 = vst [vmem:[#allocation12] sm:$0xff] %v8562
    %8570 = vst [vmem:[#allocation12 + $0x8] sm:$0xff] %v8563
    %8571 = vst [vmem:[#allocation12 + $0x10] sm:$0xff] %v8564
    %8572 = vst [vmem:[#allocation12 + $0x18] sm:$0xff] %v8565
    %8573 = vst [vmem:[#allocation12 + $0x20] sm:$0xff] %v8566
    %8574 = vst [vmem:[#allocation12 + $0x28] sm:$0xff] %v8567
    %8575 = vst.msk [vmem:[#allocation12 + $0x30] sm:$0xff] %vm2256, %v8568
    %v8576 = vpack.c.bf16 %v8562, %v8562
    %v8577 = vpack.c.bf16 %v8563, %v8563
    %v8578 = vpack.c.bf16 %v8564, %v8564
    %v8579 = vpack.c.bf16 %v8565, %v8565
    %v8580 = vpack.c.bf16 %v8566, %v8566
    %v8581 = vpack.c.bf16 %v8567, %v8567
    %v8582 = vpack.c.bf16 %v8568, %v8568
    %v8583 = vld [vmem:[#allocation8] sm:$0xf]
    %v8584 = vld [vmem:[#allocation8 + $0x4] sm:$0xf]
    %v8585 = vld [vmem:[#allocation8 + $0x8] sm:$0xf]
    %v8586 = vld [vmem:[#allocation8 + $0xc] sm:$0xf]
    %v8587 = vld [vmem:[#allocation8 + $0x10] sm:$0xf]
    %v8588 = vld [vmem:[#allocation8 + $0x14] sm:$0xf]
    %v8589 = vld [vmem:[#allocation8 + $0x18] sm:$0xf]
    %v8590 = vld [vmem:[#allocation8 + $0x1c] sm:$0xf]
    %v8591 = vld [vmem:[#allocation8 + $0x20] sm:$0xf]
    %v8592 = vld [vmem:[#allocation8 + $0x24] sm:$0xf]
    %v8593 = vld [vmem:[#allocation8 + $0x28] sm:$0xf]
    %v8594 = vld [vmem:[#allocation8 + $0x2c] sm:$0xf]
    %v8595 = vld [vmem:[#allocation8 + $0x30] sm:$0xf]
    %v8596 = vld [vmem:[#allocation8 + $0x34] sm:$0xf]
    %v8597 = vld [vmem:[#allocation8 + $0x38] sm:$0xf]
    %v8598 = vld [vmem:[#allocation8 + $0x3c] sm:$0xf]
    %v8599 = vld [vmem:[#allocation8 + $0x40] sm:$0xf]
    %v8600 = vld [vmem:[#allocation8 + $0x44] sm:$0xf]
    %v8601 = vld [vmem:[#allocation8 + $0x48] sm:$0xf]
    %v8602 = vld [vmem:[#allocation8 + $0x4c] sm:$0xf]
    %v8603 = vld [vmem:[#allocation8 + $0x50] sm:$0xf]
    %v8604 = vld [vmem:[#allocation8 + $0x54] sm:$0xf]
    %v8605 = vld [vmem:[#allocation8 + $0x58] sm:$0xf]
    %v8606 = vld [vmem:[#allocation8 + $0x5c] sm:$0xf]
    %v8607 = vld [vmem:[#allocation8 + $0x60] sm:$0xf]
    %v8608 = vld [vmem:[#allocation8 + $0x64] sm:$0xf]
    %v8609 = vld [vmem:[#allocation8 + $0x68] sm:$0xf]
    %v8610 = vld [vmem:[#allocation8 + $0x6c] sm:$0xf]
    %v8611 = vld [vmem:[#allocation8 + $0x70] sm:$0xf]
    %v8612 = vld [vmem:[#allocation8 + $0x74] sm:$0xf]
    %v8613 = vld [vmem:[#allocation8 + $0x78] sm:$0xf]
    %v8614 = vld [vmem:[#allocation8 + $0x7c] sm:$0xf]
    %v8615 = vld [vmem:[#allocation8 + $0x80] sm:$0xf]
    %v8616 = vld [vmem:[#allocation8 + $0x84] sm:$0xf]
    %v8617 = vld [vmem:[#allocation8 + $0x88] sm:$0xf]
    %v8618 = vld [vmem:[#allocation8 + $0x8c] sm:$0xf]
    %v8619 = vld [vmem:[#allocation8 + $0x90] sm:$0xf]
    %v8620 = vld [vmem:[#allocation8 + $0x94] sm:$0xf]
    %v8621 = vld [vmem:[#allocation8 + $0x98] sm:$0xf]
    %v8622 = vld [vmem:[#allocation8 + $0x9c] sm:$0xf]
    %v8623 = vld [vmem:[#allocation8 + $0xa0] sm:$0xf]
    %v8624 = vld [vmem:[#allocation8 + $0xa4] sm:$0xf]
    %v8625 = vld [vmem:[#allocation8 + $0xa8] sm:$0xf]
    %v8626 = vld [vmem:[#allocation8 + $0xac] sm:$0xf]
    %v8627 = vld [vmem:[#allocation8 + $0xb0] sm:$0xf]
    %v8628 = vld [vmem:[#allocation8 + $0xb4] sm:$0xf]
    %v8629 = vld [vmem:[#allocation8 + $0xb8] sm:$0xf]
    %v8630 = vld [vmem:[#allocation8 + $0xbc] sm:$0xf]
    %v8631 = vld [vmem:[#allocation8 + $0xc0] sm:$0xf]
    %v8632 = vld [vmem:[#allocation8 + $0xc4] sm:$0xf]
    %v8633 = vld [vmem:[#allocation8 + $0xc8] sm:$0xf]
    %v8634 = vld [vmem:[#allocation8 + $0xcc] sm:$0xf]
    %v8635 = vld [vmem:[#allocation8 + $0xd0] sm:$0xf]
    %v8636 = vld [vmem:[#allocation8 + $0xd4] sm:$0xf]
    %v8637 = vld [vmem:[#allocation8 + $0xd8] sm:$0xf]
    %v8638 = vld [vmem:[#allocation8 + $0xdc] sm:$0xf]
    %v8639 = vld [vmem:[#allocation8 + $0xe0] sm:$0xf]
    %v8640 = vld [vmem:[#allocation8 + $0xe4] sm:$0xf]
    %v8641 = vld [vmem:[#allocation8 + $0xe8] sm:$0xf]
    %v8642 = vld [vmem:[#allocation8 + $0xec] sm:$0xf]
    %v8643 = vld [vmem:[#allocation8 + $0xf0] sm:$0xf]
    %v8644 = vld [vmem:[#allocation8 + $0xf4] sm:$0xf]
    %v8645 = vld [vmem:[#allocation8 + $0xf8] sm:$0xf]
    %v8646 = vld [vmem:[#allocation8 + $0xfc] sm:$0xf]
    %v8647 = vld [vmem:[#allocation8 + $0x100] sm:$0xf]
    %v8648 = vld [vmem:[#allocation8 + $0x104] sm:$0xf]
    %v8649 = vld [vmem:[#allocation8 + $0x108] sm:$0xf]
    %v8650 = vld [vmem:[#allocation8 + $0x10c] sm:$0xf]
    %v8651 = vld [vmem:[#allocation8 + $0x110] sm:$0xf]
    %v8652 = vld [vmem:[#allocation8 + $0x114] sm:$0xf]
    %v8653 = vld [vmem:[#allocation8 + $0x118] sm:$0xf]
    %v8654 = vld [vmem:[#allocation8 + $0x11c] sm:$0xf]
    %v8655 = vld [vmem:[#allocation8 + $0x120] sm:$0xf]
    %v8656 = vld [vmem:[#allocation8 + $0x124] sm:$0xf]
    %v8657 = vld [vmem:[#allocation8 + $0x128] sm:$0xf]
    %v8658 = vld [vmem:[#allocation8 + $0x12c] sm:$0xf]
    %v8659 = vld [vmem:[#allocation8 + $0x130] sm:$0xf]
    %v8660 = vld [vmem:[#allocation8 + $0x134] sm:$0xf]
    %v8661 = vld [vmem:[#allocation8 + $0x138] sm:$0xf]
    %v8662 = vld [vmem:[#allocation8 + $0x13c] sm:$0xf]
    %v8663 = vld [vmem:[#allocation8 + $0x140] sm:$0xf]
    %v8664 = vld [vmem:[#allocation8 + $0x144] sm:$0xf]
    %v8665 = vld [vmem:[#allocation8 + $0x148] sm:$0xf]
    %v8666 = vld [vmem:[#allocation8 + $0x14c] sm:$0xf]
    %v8667 = vld [vmem:[#allocation8 + $0x150] sm:$0xf]
    %v8668 = vld [vmem:[#allocation8 + $0x154] sm:$0xf]
    %v8669 = vld [vmem:[#allocation8 + $0x158] sm:$0xf]
    %v8670 = vld [vmem:[#allocation8 + $0x15c] sm:$0xf]
    %v8671 = vld [vmem:[#allocation8 + $0x160] sm:$0xf]
    %v8672 = vld [vmem:[#allocation8 + $0x164] sm:$0xf]
    %v8673 = vld [vmem:[#allocation8 + $0x168] sm:$0xf]
    %v8674 = vld [vmem:[#allocation8 + $0x16c] sm:$0xf]
    %v8675 = vld [vmem:[#allocation8 + $0x170] sm:$0xf]
    %v8676 = vld [vmem:[#allocation8 + $0x174] sm:$0xf]
    %v8677 = vld [vmem:[#allocation8 + $0x178] sm:$0xf]
    %v8678 = vld [vmem:[#allocation8 + $0x17c] sm:$0xf]
    %v8679 = vld [vmem:[#allocation8 + $0x180] sm:$0xf]
    %v8680 = vld [vmem:[#allocation8 + $0x184] sm:$0xf]
    %v8681 = vld [vmem:[#allocation9] sm:$0x1]
    %v8683 = vperm.slane %v8681, 0
    %v8783 = vunpack.c.l.b16 %v8583
    %v8784 = vunpack.c.l.b16 %v8584
    %v8785 = vunpack.c.l.b16 %v8585
    %v8786 = vunpack.c.l.b16 %v8586
    %v8787 = vunpack.c.l.b16 %v8587
    %v8788 = vunpack.c.l.b16 %v8588
    %v8789 = vunpack.c.l.b16 %v8589
    %v8790 = vunpack.c.l.b16 %v8590
    %v8791 = vunpack.c.l.b16 %v8591
    %v8792 = vunpack.c.l.b16 %v8592
    %v8793 = vunpack.c.l.b16 %v8593
    %v8794 = vunpack.c.l.b16 %v8594
    %v8795 = vunpack.c.l.b16 %v8595
    %v8796 = vunpack.c.l.b16 %v8596
    %v8797 = vunpack.c.l.b16 %v8597
    %v8798 = vunpack.c.l.b16 %v8598
    %v8799 = vunpack.c.l.b16 %v8599
    %v8800 = vunpack.c.l.b16 %v8600
    %v8801 = vunpack.c.l.b16 %v8601
    %v8802 = vunpack.c.l.b16 %v8602
    %v8803 = vunpack.c.l.b16 %v8603
    %v8804 = vunpack.c.l.b16 %v8604
    %v8805 = vunpack.c.l.b16 %v8605
    %v8806 = vunpack.c.l.b16 %v8606
    %v8807 = vunpack.c.l.b16 %v8607
    %v8808 = vunpack.c.l.b16 %v8608
    %v8809 = vunpack.c.l.b16 %v8609
    %v8810 = vunpack.c.l.b16 %v8610
    %v8811 = vunpack.c.l.b16 %v8611
    %v8812 = vunpack.c.l.b16 %v8612
    %v8813 = vunpack.c.l.b16 %v8613
    %v8814 = vunpack.c.l.b16 %v8614
    %v8815 = vunpack.c.l.b16 %v8615
    %v8816 = vunpack.c.l.b16 %v8616
    %v8817 = vunpack.c.l.b16 %v8617
    %v8818 = vunpack.c.l.b16 %v8618
    %v8819 = vunpack.c.l.b16 %v8619
    %v8820 = vunpack.c.l.b16 %v8620
    %v8821 = vunpack.c.l.b16 %v8621
    %v8822 = vunpack.c.l.b16 %v8622
    %v8823 = vunpack.c.l.b16 %v8623
    %v8824 = vunpack.c.l.b16 %v8624
    %v8825 = vunpack.c.l.b16 %v8625
    %v8826 = vunpack.c.l.b16 %v8626
    %v8827 = vunpack.c.l.b16 %v8627
    %v8828 = vunpack.c.l.b16 %v8628
    %v8829 = vunpack.c.l.b16 %v8629
    %v8830 = vunpack.c.l.b16 %v8630
    %v8831 = vunpack.c.l.b16 %v8631
    %v8832 = vunpack.c.l.b16 %v8632
    %v8833 = vunpack.c.l.b16 %v8633
    %v8834 = vunpack.c.l.b16 %v8634
    %v8835 = vunpack.c.l.b16 %v8635
    %v8836 = vunpack.c.l.b16 %v8636
    %v8837 = vunpack.c.l.b16 %v8637
    %v8838 = vunpack.c.l.b16 %v8638
    %v8839 = vunpack.c.l.b16 %v8639
    %v8840 = vunpack.c.l.b16 %v8640
    %v8841 = vunpack.c.l.b16 %v8641
    %v8842 = vunpack.c.l.b16 %v8642
    %v8843 = vunpack.c.l.b16 %v8643
    %v8844 = vunpack.c.l.b16 %v8644
    %v8845 = vunpack.c.l.b16 %v8645
    %v8846 = vunpack.c.l.b16 %v8646
    %v8847 = vunpack.c.l.b16 %v8647
    %v8848 = vunpack.c.l.b16 %v8648
    %v8849 = vunpack.c.l.b16 %v8649
    %v8850 = vunpack.c.l.b16 %v8650
    %v8851 = vunpack.c.l.b16 %v8651
    %v8852 = vunpack.c.l.b16 %v8652
    %v8853 = vunpack.c.l.b16 %v8653
    %v8854 = vunpack.c.l.b16 %v8654
    %v8855 = vunpack.c.l.b16 %v8655
    %v8856 = vunpack.c.l.b16 %v8656
    %v8857 = vunpack.c.l.b16 %v8657
    %v8858 = vunpack.c.l.b16 %v8658
    %v8859 = vunpack.c.l.b16 %v8659
    %v8860 = vunpack.c.l.b16 %v8660
    %v8861 = vunpack.c.l.b16 %v8661
    %v8862 = vunpack.c.l.b16 %v8662
    %v8863 = vunpack.c.l.b16 %v8663
    %v8864 = vunpack.c.l.b16 %v8664
    %v8865 = vunpack.c.l.b16 %v8665
    %v8866 = vunpack.c.l.b16 %v8666
    %v8867 = vunpack.c.l.b16 %v8667
    %v8868 = vunpack.c.l.b16 %v8668
    %v8869 = vunpack.c.l.b16 %v8669
    %v8870 = vunpack.c.l.b16 %v8670
    %v8871 = vunpack.c.l.b16 %v8671
    %v8872 = vunpack.c.l.b16 %v8672
    %v8873 = vunpack.c.l.b16 %v8673
    %v8874 = vunpack.c.l.b16 %v8674
    %v8875 = vunpack.c.l.b16 %v8675
    %v8876 = vunpack.c.l.b16 %v8676
    %v8877 = vunpack.c.l.b16 %v8677
    %v8878 = vunpack.c.l.b16 %v8678
    %v8879 = vunpack.c.l.b16 %v8679
    %v8880 = vunpack.c.l.b16 %v8680
    %v8881 = vpack.c.b16 %v8784, %v8783
    %v8882 = vpack.c.b16 %v8786, %v8785
    %v8883 = vpack.c.b16 %v8788, %v8787
    %v8884 = vpack.c.b16 %v8790, %v8789
    %v8885 = vpack.c.b16 %v8792, %v8791
    %v8886 = vpack.c.b16 %v8794, %v8793
    %v8887 = vpack.c.b16 %v8796, %v8795
    %v8888 = vpack.c.b16 %v8798, %v8797
    %v8889 = vpack.c.b16 %v8800, %v8799
    %v8890 = vpack.c.b16 %v8802, %v8801
    %v8891 = vpack.c.b16 %v8804, %v8803
    %v8892 = vpack.c.b16 %v8806, %v8805
    %v8893 = vpack.c.b16 %v8808, %v8807
    %v8894 = vpack.c.b16 %v8810, %v8809
    %v8895 = vpack.c.b16 %v8812, %v8811
    %v8896 = vpack.c.b16 %v8814, %v8813
    %v8897 = vpack.c.b16 %v8816, %v8815
    %v8898 = vpack.c.b16 %v8818, %v8817
    %v8899 = vpack.c.b16 %v8820, %v8819
    %v8900 = vpack.c.b16 %v8822, %v8821
    %v8901 = vpack.c.b16 %v8824, %v8823
    %v8902 = vpack.c.b16 %v8826, %v8825
    %v8903 = vpack.c.b16 %v8828, %v8827
    %v8904 = vpack.c.b16 %v8830, %v8829
    %v8905 = vpack.c.b16 %v8832, %v8831
    %v8906 = vpack.c.b16 %v8834, %v8833
    %v8907 = vpack.c.b16 %v8836, %v8835
    %v8908 = vpack.c.b16 %v8838, %v8837
    %v8909 = vpack.c.b16 %v8840, %v8839
    %v8910 = vpack.c.b16 %v8842, %v8841
    %v8911 = vpack.c.b16 %v8844, %v8843
    %v8912 = vpack.c.b16 %v8846, %v8845
    %v8913 = vpack.c.b16 %v8848, %v8847
    %v8914 = vpack.c.b16 %v8850, %v8849
    %v8915 = vpack.c.b16 %v8852, %v8851
    %v8916 = vpack.c.b16 %v8854, %v8853
    %v8917 = vpack.c.b16 %v8856, %v8855
    %v8918 = vpack.c.b16 %v8858, %v8857
    %v8919 = vpack.c.b16 %v8860, %v8859
    %v8920 = vpack.c.b16 %v8862, %v8861
    %v8921 = vpack.c.b16 %v8864, %v8863
    %v8922 = vpack.c.b16 %v8866, %v8865
    %v8923 = vpack.c.b16 %v8868, %v8867
    %v8924 = vpack.c.b16 %v8870, %v8869
    %v8925 = vpack.c.b16 %v8872, %v8871
    %v8926 = vpack.c.b16 %v8874, %v8873
    %v8927 = vpack.c.b16 %v8876, %v8875
    %v8928 = vpack.c.b16 %v8878, %v8877
    %v8929 = vpack.c.b16 %v8880, %v8879
    %v8980 = vsel %vm2256, %v8582, 0
    %8982 = vmatpush.bf16.msra.mxu0 %v8888
    %8983 = vmatpush.bf16.msra.mxu0 %v8887
    %8984 = vmatpush.bf16.msra.mxu0 %v8886
    %8985 = vmatpush.bf16.msra.mxu0 %v8885
    %8986 = vmatpush.bf16.msra.mxu0 %v8884
    %8987 = vmatpush.bf16.msra.mxu0 %v8883
    %8988 = vmatpush.bf16.msra.mxu0 %v8882
    %8989 = vmatpush.bf16.msra.mxu0 %v8881
    %8990 = vmatmul.bf16.gmra.mxu0 %v8576
    %v8991 = vpop.f32.mrf.mxu0
    %v8992 = vadd.f32 %v8683, %v8991
    %v8993 = vpop.f32.mrf.mxu0
    %8994 = vdwg.mxu0
    %8995 = vmatpush.bf16.msra.mxu0 %v8896
    %8996 = vmatpush.bf16.msra.mxu0 %v8895
    %8997 = vmatpush.bf16.msra.mxu0 %v8894
    %8998 = vmatpush.bf16.msra.mxu0 %v8893
    %8999 = vmatpush.bf16.msra.mxu0 %v8892
    %9000 = vmatpush.bf16.msra.mxu0 %v8891
    %9001 = vmatpush.bf16.msra.mxu0 %v8890
    %9002 = vmatpush.bf16.msra.mxu0 %v8889
    %9003 = vmatmul.bf16.gmra.mxu0 %v8577
    %v9004 = vpop.f32.mrf.mxu0
    %v9005 = vadd.f32 %v8992, %v9004
    %v9006 = vpop.f32.mrf.mxu0
    %9007 = vdwg.mxu0
    %9008 = vmatpush.bf16.msra.mxu0 %v8904
    %9009 = vmatpush.bf16.msra.mxu0 %v8903
    %9010 = vmatpush.bf16.msra.mxu0 %v8902
    %9011 = vmatpush.bf16.msra.mxu0 %v8901
    %9012 = vmatpush.bf16.msra.mxu0 %v8900
    %9013 = vmatpush.bf16.msra.mxu0 %v8899
    %9014 = vmatpush.bf16.msra.mxu0 %v8898
    %9015 = vmatpush.bf16.msra.mxu0 %v8897
    %9016 = vmatmul.bf16.gmra.mxu0 %v8578
    %v9017 = vpop.f32.mrf.mxu0
    %v9018 = vadd.f32 %v9005, %v9017
    %v9019 = vpop.f32.mrf.mxu0
    %9020 = vdwg.mxu0
    %9021 = vmatpush.bf16.msra.mxu0 %v8912
    %9022 = vmatpush.bf16.msra.mxu0 %v8911
    %9023 = vmatpush.bf16.msra.mxu0 %v8910
    %9024 = vmatpush.bf16.msra.mxu0 %v8909
    %9025 = vmatpush.bf16.msra.mxu0 %v8908
    %9026 = vmatpush.bf16.msra.mxu0 %v8907
    %9027 = vmatpush.bf16.msra.mxu0 %v8906
    %9028 = vmatpush.bf16.msra.mxu0 %v8905
    %9029 = vmatmul.bf16.gmra.mxu0 %v8579
    %v9030 = vpop.f32.mrf.mxu0
    %v9031 = vadd.f32 %v9018, %v9030
    %v9032 = vpop.f32.mrf.mxu0
    %9033 = vdwg.mxu0
    %9034 = vmatpush.bf16.msra.mxu0 %v8920
    %9035 = vmatpush.bf16.msra.mxu0 %v8919
    %9036 = vmatpush.bf16.msra.mxu0 %v8918
    %9037 = vmatpush.bf16.msra.mxu0 %v8917
    %9038 = vmatpush.bf16.msra.mxu0 %v8916
    %9039 = vmatpush.bf16.msra.mxu0 %v8915
    %9040 = vmatpush.bf16.msra.mxu0 %v8914
    %9041 = vmatpush.bf16.msra.mxu0 %v8913
    %9042 = vmatmul.bf16.gmra.mxu0 %v8580
    %v9043 = vpop.f32.mrf.mxu0
    %v9044 = vadd.f32 %v9031, %v9043
    %v9045 = vpop.f32.mrf.mxu0
    %9046 = vdwg.mxu0
    %9047 = vmatpush.bf16.msra.mxu0 %v8928
    %9048 = vmatpush.bf16.msra.mxu0 %v8927
    %9049 = vmatpush.bf16.msra.mxu0 %v8926
    %9050 = vmatpush.bf16.msra.mxu0 %v8925
    %9051 = vmatpush.bf16.msra.mxu0 %v8924
    %9052 = vmatpush.bf16.msra.mxu0 %v8923
    %9053 = vmatpush.bf16.msra.mxu0 %v8922
    %9054 = vmatpush.bf16.msra.mxu0 %v8921
    %9055 = vmatmul.bf16.gmra.mxu0 %v8581
    %v9056 = vpop.f32.mrf.mxu0
    %v9057 = vadd.f32 %v9044, %v9056
    %v9058 = vpop.f32.mrf.mxu0
    %9059 = vdwg.mxu0
    %9060 = vmatpush.bf16.msra.mxu0 0
    %9061 = vmatpush.bf16.msra.mxu0 0
    %9062 = vmatpush.bf16.msra.mxu0 0
    %9063 = vmatpush.bf16.msra.mxu0 0
    %9064 = vmatpush.bf16.msra.mxu0 0
    %9065 = vmatpush.bf16.msra.mxu0 0
    %9066 = vmatpush.bf16.msra.mxu0 0
    %9067 = vmatpush.bf16.msra.mxu0 %v8929
    %9068 = vmatmul.bf16.gmra.mxu0 %v8980
    %v9069 = vpop.f32.mrf.mxu0
    %v9070 = vadd.f32 %v9057, %v9069
    %v9071 = vpop.f32.mrf.mxu0
    %9072 = vdwg.mxu0
    %9073 = vst [vmem:[#allocation11] sm:$0xff] %v9070
    // Predicated region
    $region38: #{tpu_custom_call.1} parent=1 // pred_check
      _
    $region39: #{tpu_custom_call.1} parent=1 // pred_check_branch
      %9075 = sbr.rel (0) target = $region41
    $region40: #{tpu_custom_call.1} parent=1 // pred_region
      %9077 = vsyncadd [#allocation5], 0
      %s9079 = sshll.u32 [#allocation11], 4
      %s9080 = int_to_ptr.vmem [resolvable:$true] %s9079
      %s9081 = sshll.u32 %s5, 4
      %s9082 = int_to_ptr.hbm [resolvable:$true] %s9081
      %9084 = dma.vmem_to_hbm [thread:$0]  %s9080, 128, %s9082, [#allocation5]
    $region41: #{tpu_custom_call.1} parent=1 // pred_fallthru
      _
    // Predicated region
    $region42: #{tpu_custom_call.1} parent=1 // pred_check
      _
    $region43: #{tpu_custom_call.1} parent=1 // pred_check_branch
      %9086 = sbr.rel (0) target = $region45
    $region44: #{tpu_custom_call.1} parent=1 // pred_region
      %9088 = vsyncadd [#allocation13], 0
      %s9090 = sshll.u32 [#allocation12], 4
      %s9091 = int_to_ptr.vmem [resolvable:$true] %s9090
      %s9092 = sshll.u32 %s6, 4
      %s9093 = int_to_ptr.hbm [resolvable:$true] %s9092
      %9095 = dma.vmem_to_hbm [thread:$0]  %s9091, 896, %s9093, [#allocation13]
    $region45: #{tpu_custom_call.1} parent=1 // pred_fallthru
      _
    // Predicated region
    $region46: #{tpu_custom_call.1} parent=1 // pred_check
      _
    $region47: #{tpu_custom_call.1} parent=1 // pred_check_branch
      %9097 = sbr.rel (0) target = $region49
    $region48: #{tpu_custom_call.1} parent=1 // pred_region
      %9099 = dma.done [#allocation5], 128
    $region49: #{tpu_custom_call.1} parent=1 // pred_fallthru
      _
    // Predicated region
    $region50: #{tpu_custom_call.1} parent=1 // pred_check
      _
    $region51: #{tpu_custom_call.1} parent=1 // pred_check_branch
      %9101 = sbr.rel (0) target = $region53
    $region52: #{tpu_custom_call.1} parent=1 // pred_region
      %9103 = dma.done [#allocation13], 896
    $region53: #{tpu_custom_call.1} parent=1 // pred_fallthru
      _
    %9104 = vsyncpa [#allocation4], 1
    %9105 = vsyncpa [#allocation7], 1
    %9106 = vsyncpa [#allocation10], 1
    %9107 = vsyncpa [#allocation5], 1
    %9108 = vsyncpa [#allocation13], 1

</llo_original>
